<compile_context>
chip_gen: v7x
topology: tpu7x:2x2x1
jax: 0.10.0
libtpu: 0.0.40
codegen_flags: <defaults>
</compile_context>

<pallas_src>
import math
import functools

import jax
import jax.numpy as jnp
from jax.experimental import pallas as pl
from jax.experimental.pallas import tpu as pltpu


# ----------------------------- in-kernel helpers -----------------------------

def _layernorm(x, gamma, beta, eps):
    mu = jnp.mean(x, axis=-1, keepdims=True)
    var = jnp.mean((x - mu) ** 2, axis=-1, keepdims=True)
    return (x - mu) * jax.lax.rsqrt(var + eps) * gamma + beta


def _const_spec(shape, single_buffer):
    """Full-array block with a constant index map -> weights stay VMEM-resident
    across grid steps (single DMA).  single_buffer=True additionally disables the
    (useless, 2x VMEM) double-buffering of these never-changing blocks."""
    ndim = len(shape)

    def idx(i):
        return (0,) * ndim

    if single_buffer:
        return pl.BlockSpec(shape, idx, pipeline_mode=pl.Buffered(1))
    return pl.BlockSpec(shape, idx)


# --------------------------- fused encoder kernel ----------------------------

def _fused_encoder_kernel(
        x_ref,
        in_w_ref, in_b_ref, in_g_ref, in_be_ref, pe_ref,
        wqkv_ref, bqkv_ref, wo_ref, bo_ref, g1_ref, b1_ref,
        w1_ref, bf1_ref, w2_ref, bf2_ref, g2_ref, b2_ref,
        fg_ref, fb_ref,
        o_ref,
        *, n_heads, n_layers, dk, seq_len, batch_tile, mxu_dtype):
    D = n_heads * dk
    T = seq_len
    BT = batch_tile * T
    scale = jnp.float32(1.0 / math.sqrt(dk))

    def mxu(a, w):
        # MXU matmul; operands in mxu_dtype (bf16 on all TPU generations is the
        # fast path), accumulation always f32.
        return jnp.dot(a.astype(mxu_dtype), w, preferred_element_type=jnp.float32)

    # ---- input layer: Linear -> LayerNorm(1e-5) -> ReLU -> PositionalEncoding ----
    # sqrt(adim) scale already folded into in_g/in_be at param-prep time.
    # All Dropout layers (input 0.1, attention 0.2, FFN 0.2, residual 0.1) are
    # identity in eval-mode forward and therefore omitted.
    h = mxu(x_ref[...], in_w_ref[...]) + in_b_ref[...]            # (BT, D) f32
    h = _layernorm(h, in_g_ref[...], in_be_ref[...], 1e-5)
    h = jnp.maximum(h, 0.0) + pe_ref[...]                         # PE pre-tiled to (BT, D)

    # ---- elayers x post-norm EncoderLayer; activation stays resident ----
    def layer_body(l, h):
        # One wide fused Q/K/V projection: (BT, D) @ (D, 3D).
        qkv = mxu(h, wqkv_ref[l]) + bqkv_ref[l]                   # (BT, 3D) f32

        # Per-head scaled dot-product attention (mask=None).  Heads are static
        # lane slices of the wide QKV result; per-sequence view via leading-dim
        # reshape (sublane split on an 8-row boundary, layout-friendly).
        ctx_heads = []
        for hh in range(n_heads):
            qh = qkv[:, hh * dk:(hh + 1) * dk].reshape(batch_tile, T, dk).astype(mxu_dtype)
            kh = qkv[:, D + hh * dk:D + (hh + 1) * dk].reshape(batch_tile, T, dk).astype(mxu_dtype)
            vh = qkv[:, 2 * D + hh * dk:2 * D + (hh + 1) * dk].reshape(batch_tile, T, dk).astype(mxu_dtype)

            s = jnp.einsum("btd,bud->btu", qh, kh,
                           preferred_element_type=jnp.float32) * scale
            s = s - jnp.max(s, axis=-1, keepdims=True)
            e = jnp.exp(s)
            p = e * pl.reciprocal(jnp.sum(e, axis=-1, keepdims=True), approx=True)
            c = jnp.einsum("btu,bud->btd", p.astype(mxu_dtype), vh,
                           preferred_element_type=jnp.float32)    # (B_tile, T, dk)
            ctx_heads.append(c.reshape(BT, dk))

        ctx = jnp.concatenate(ctx_heads, axis=-1)                 # (BT, D), head-major lanes

        # One wide output projection: (BT, D) @ (D, D).
        att = mxu(ctx, wo_ref[l]) + bo_ref[l]

        # post-norm (normalize_before=False), ESPnet LayerNorm eps=1e-12
        x1 = _layernorm(h + att, g1_ref[l], b1_ref[l], 1e-12)

        f = jnp.maximum(mxu(x1, w1_ref[l]) + bf1_ref[l], 0.0)
        f = mxu(f, w2_ref[l]) + bf2_ref[l]
        return _layernorm(x1 + f, g2_ref[l], b2_ref[l], 1e-12)

    # unroll=True is fine at shallow depth; drop it (or move the layer axis to the
    # grid / stream weights) for 12+ layer production stacks.
    h = jax.lax.fori_loop(0, n_layers, layer_body, h, unroll=True)

    # ---- final LayerNorm ----
    o_ref[...] = _layernorm(h, fg_ref[...], fb_ref[...], 1e-12)


# ------------------------- parameter packing (one-time) -----------------------

def pack_params(params, n_heads, mxu_dtype=jnp.bfloat16):
    """Constant-fold / repack raw parameters into the fused-kernel layout.

    Done once outside the kernel: sqrt(adim) folded into the input-LN affine,
    Wq/Wk/Wv lane-concatenated into one (D, 3D) Wqkv per layer, per-layer tensors
    stacked along a leading layer axis, MXU weights cast to mxu_dtype (bf16 is the
    fast path on v5e/v6e/v7x; LayerNorm/bias params stay f32)."""
    adim = params["in_w"].shape[1]
    sqrt_d = math.sqrt(adim)
    wdt = mxu_dtype

    packed = {
        "in_w": params["in_w"].astype(wdt),
        "in_b": params["in_b"],
        "in_g": params["in_g"] * sqrt_d,     # fold PositionalEncoding scale (ReLU pos-homogeneous)
        "in_be": params["in_be"] * sqrt_d,
        "pe": params["pe"],
        "fg": params["fin_g"], "fb": params["fin_b"],
    }

    stacks = {k: [] for k in ("wqkv", "bqkv", "wo", "bo", "g1", "b1",
                              "w1", "bf1", "w2", "bf2", "g2", "b2")}
    for lp in params["layers"]:
        stacks["wqkv"].append(jnp.concatenate([lp["wq"], lp["wk"], lp["wv"]], axis=-1))  # (D, 3D)
        stacks["bqkv"].append(jnp.concatenate([lp["bq"], lp["bk"], lp["bv"]], axis=-1))  # (1, 3D)
        stacks["wo"].append(lp["wo"])
        stacks["bo"].append(lp["bo"])
        stacks["g1"].append(lp["g1"]); stacks["b1"].append(lp["b1"])
        stacks["w1"].append(lp["w1"]); stacks["bf1"].append(lp["bf1"])
        stacks["w2"].append(lp["w2"]); stacks["bf2"].append(lp["bf2"])
        stacks["g2"].append(lp["g2"]); stacks["b2"].append(lp["b2"])

    for k, v in stacks.items():
        arr = jnp.stack(v, axis=0)
        if k in ("wqkv", "wo", "w1", "w2"):
            arr = arr.astype(wdt)
        packed[k] = arr
    return packed


# --------------------------------- forward -----------------------------------

def encoder_forward(x, packed, n_heads, n_layers, mask=None, *,
                    mxu_dtype=jnp.bfloat16, batch_tile=None, vmem_limit_bytes=None):
    B, T, idim = x.shape
    adim = packed["in_b"].shape[-1]
    dk = adim // n_heads

    if batch_tile is None:
        # Pack whole sequences per grid step so blocks are sublane-dense (>=16 rows)
        # and per-step overhead is amortized.  At toy scale the whole batch fits in
        # one step; at larger B keep token tiles modest (and >=2 "parallel" steps so
        # both v7x TensorCores are used).
        batch_tile = B
        while batch_tile > 1 and batch_tile * T > 1024:
            batch_tile -= 1
        while B % batch_tile:
            batch_tile -= 1
    assert B % batch_tile == 0
    n_steps = B // batch_tile
    bt_rows = batch_tile * T

    # Flatten tokens; cast activations to the MXU dtype once in the wrapper
    # (halves the per-step input DMA when bf16).
    x2 = x.reshape(B * T, idim).astype(mxu_dtype)
    pe_tiled = jnp.tile(packed["pe"], (batch_tile, 1))            # (bt_rows, adim)

    names = ("in_w", "in_b", "in_g", "in_be", "pe",
             "wqkv", "bqkv", "wo", "bo", "g1", "b1",
             "w1", "bf1", "w2", "bf2", "g2", "b2", "fg", "fb")
    args = [pe_tiled if k == "pe" else packed[k] for k in names]

    kernel = functools.partial(
        _fused_encoder_kernel, n_heads=n_heads, n_layers=n_layers, dk=dk,
        seq_len=T, batch_tile=batch_tile, mxu_dtype=mxu_dtype)

    def call(single_buffer_weights):
        in_specs = ([pl.BlockSpec((bt_rows, idim), lambda i: (i, 0))]
                    + [_const_spec(a.shape, single_buffer_weights) for a in args])
        return pl.pallas_call(
            kernel,
            out_shape=jax.ShapeDtypeStruct((B * T, adim), jnp.float32),
            grid=(n_steps,),
            in_specs=in_specs,
            out_specs=pl.BlockSpec((bt_rows, adim), lambda i: (i, 0)),
            compiler_params=pltpu.CompilerParams(
                dimension_semantics=("parallel",),
                vmem_limit_bytes=vmem_limit_bytes),
        )(x2, *args)

    try:
        # Preferred: single-buffered resident weights (pl.Buffered(1)) — the block
        # index never changes, so double-buffering them is pure VMEM waste.
        out = call(True)
    except Exception:
        # Fallback for jax versions where pipeline_mode on BlockSpec is not
        # supported by the TPU lowering; any other genuine error re-raises here.
        out = call(False)

    return out.reshape(B, T, adim), mask


# ----------------------------- wrapper utilities ------------------------------

def sinusoidal_pe(T, d):
    pos = jnp.arange(T, dtype=jnp.float32)[:, None]
    div = jnp.exp(jnp.arange(0, d, 2, dtype=jnp.float32) * (-math.log(10000.0) / d))
    pe = jnp.zeros((T, d), jnp.float32)
    pe = pe.at[:, 0::2].set(jnp.sin(pos * div))
    pe = pe.at[:, 1::2].set(jnp.cos(pos * div))
    return pe


def encoder_reference(x, params, n_heads):
    """Pure-JAX f32 reference of the eval-mode forward, for a correctness check."""
    def ln(a, g, b, eps):
        mu = a.mean(-1, keepdims=True)
        var = ((a - mu) ** 2).mean(-1, keepdims=True)
        return (a - mu) / jnp.sqrt(var + eps) * g + b

    adim = params["in_w"].shape[1]
    h = x @ params["in_w"] + params["in_b"]
    h = ln(h, params["in_g"], params["in_be"], 1e-5)
    h = jnp.maximum(h, 0.0)
    h = h * math.sqrt(adim) + params["pe"]
    B, T, D = h.shape
    dk = D // n_heads
    for lp in params["layers"]:
        q = (h @ lp["wq"] + lp["bq"]).reshape(B, T, n_heads, dk).transpose(0, 2, 1, 3)
        k = (h @ lp["wk"] + lp["bk"]).reshape(B, T, n_heads, dk).transpose(0, 2, 1, 3)
        v = (h @ lp["wv"] + lp["bv"]).reshape(B, T, n_heads, dk).transpose(0, 2, 1, 3)
        s = jnp.einsum("bhtd,bhud->bhtu", q, k) / math.sqrt(dk)
        p = jax.nn.softmax(s, axis=-1)
        ctx = jnp.einsum("bhtu,bhud->bhtd", p, v).transpose(0, 2, 1, 3).reshape(B, T, D)
        att = ctx @ lp["wo"] + lp["bo"]
        h = ln(h + att, lp["g1"], lp["b1"], 1e-12)
        f = jnp.maximum(h @ lp["w1"] + lp["bf1"], 0.0) @ lp["w2"] + lp["bf2"]
        h = ln(h + f, lp["g2"], lp["b2"], 1e-12)
    return ln(h, params["fin_g"], params["fin_b"], 1e-12)


# ----------------------------------- demo -------------------------------------

if __name__ == "__main__":
    # args: adim=32, aheads=4, eunits=64, elayers=2, dropout_rate=0.1 (eval -> identity)
    B, T, idim = 2, 8, 16
    adim, aheads, eunits, elayers = 32, 4, 64, 2

    keys = list(jax.random.split(jax.random.PRNGKey(0), 64))
    kit = iter(keys[1:])

    def nrm(k, shape, scale=0.02):
        return scale * jax.random.normal(k, shape, jnp.float32)

    params = {
        "in_w": nrm(next(kit), (idim, adim)),
        "in_b": jnp.zeros((1, adim), jnp.float32),
        "in_g": jnp.ones((1, adim), jnp.float32),
        "in_be": jnp.zeros((1, adim), jnp.float32),
        "pe": sinusoidal_pe(T, adim),
        "fin_g": jnp.ones((1, adim), jnp.float32),
        "fin_b": jnp.zeros((1, adim), jnp.float32),
        "layers": [],
    }
    for _ in range(elayers):
        params["layers"].append({
            "wq": nrm(next(kit), (adim, adim)), "bq": jnp.zeros((1, adim), jnp.float32),
            "wk": nrm(next(kit), (adim, adim)), "bk": jnp.zeros((1, adim), jnp.float32),
            "wv": nrm(next(kit), (adim, adim)), "bv": jnp.zeros((1, adim), jnp.float32),
            "wo": nrm(next(kit), (adim, adim)), "bo": jnp.zeros((1, adim), jnp.float32),
            "g1": jnp.ones((1, adim), jnp.float32), "b1": jnp.zeros((1, adim), jnp.float32),
            "w1": nrm(next(kit), (adim, eunits)), "bf1": jnp.zeros((1, eunits), jnp.float32),
            "w2": nrm(next(kit), (eunits, adim)), "bf2": jnp.zeros((1, adim), jnp.float32),
            "g2": jnp.ones((1, adim), jnp.float32), "b2": jnp.zeros((1, adim), jnp.float32),
        })

    x = jax.random.normal(keys[0], (B, T, idim), jnp.float32)

    # bf16 MXU operands are the fast path on every TPU generation (v5e/v6e/v7x);
    # accumulation, LayerNorm and softmax stay f32.  Use jnp.float32 here instead
    # if bit-closeness to the PyTorch reference matters.
    MXU_DTYPE = jnp.bfloat16

    packed = pack_params(params, aheads, mxu_dtype=MXU_DTYPE)
    out, mask = encoder_forward(x, packed, aheads, elayers, mask=None,
                                mxu_dtype=MXU_DTYPE)
    jax.block_until_ready(out)

    assert out.shape == (B, T, adim) and out.dtype == jnp.float32
    assert mask is None

    ref = encoder_reference(x, params, aheads)
    # bf16 matmul operands + approx softmax reciprocal introduce O(1e-2) deviation
    # vs the f32 reference; f32 path is bit-close.
    tol = 2e-2 if MXU_DTYPE == jnp.float32 else 1.5e-1
    max_diff = float(jnp.max(jnp.abs(out - ref)))
    assert max_diff < tol, f"kernel/reference mismatch: max|diff|={max_diff}"

    print("KERNEL_OK")
</pallas_src>

<mosaic_0001>
module attributes {stable_mosaic.version = 11 : i64} {
  func.func @_fused_encoder_kernel(%arg0: i32, %arg1: memref<16x16xbf16, #tpu.memory_space<vmem>>, %arg2: memref<16x32xbf16, #tpu.memory_space<vmem>>, %arg3: memref<1x32xf32, #tpu.memory_space<vmem>>, %arg4: memref<1x32xf32, #tpu.memory_space<vmem>>, %arg5: memref<1x32xf32, #tpu.memory_space<vmem>>, %arg6: memref<16x32xf32, #tpu.memory_space<vmem>>, %arg7: memref<2x32x96xbf16, #tpu.memory_space<vmem>>, %arg8: memref<2x1x96xf32, #tpu.memory_space<vmem>>, %arg9: memref<2x32x32xbf16, #tpu.memory_space<vmem>>, %arg10: memref<2x1x32xf32, #tpu.memory_space<vmem>>, %arg11: memref<2x1x32xf32, #tpu.memory_space<vmem>>, %arg12: memref<2x1x32xf32, #tpu.memory_space<vmem>>, %arg13: memref<2x32x64xbf16, #tpu.memory_space<vmem>>, %arg14: memref<2x1x64xf32, #tpu.memory_space<vmem>>, %arg15: memref<2x64x32xbf16, #tpu.memory_space<vmem>>, %arg16: memref<2x1x32xf32, #tpu.memory_space<vmem>>, %arg17: memref<2x1x32xf32, #tpu.memory_space<vmem>>, %arg18: memref<2x1x32xf32, #tpu.memory_space<vmem>>, %arg19: memref<1x32xf32, #tpu.memory_space<vmem>>, %arg20: memref<1x32xf32, #tpu.memory_space<vmem>>, %arg21: memref<16x32xf32, #tpu.memory_space<vmem>>) attributes {dimension_semantics = [#tpu.dimension_semantics<parallel>], iteration_bounds = array<i64: 1>, scalar_prefetch = 0 : i64, scratch_operands = 0 : i64, tpu.core_type = #tpu.core_type<tc>, window_params = [{transform_indices = @transform_0, window_bounds = array<i64: 16, 16>}, {pipeline_mode = #tpu.pipeline_mode<synchronous>, transform_indices = @transform_1, window_bounds = array<i64: 16, 32>}, {pipeline_mode = #tpu.pipeline_mode<synchronous>, transform_indices = @transform_2, window_bounds = array<i64: 1, 32>}, {pipeline_mode = #tpu.pipeline_mode<synchronous>, transform_indices = @transform_3, window_bounds = array<i64: 1, 32>}, {pipeline_mode = #tpu.pipeline_mode<synchronous>, transform_indices = @transform_4, window_bounds = array<i64: 1, 32>}, {pipeline_mode = #tpu.pipeline_mode<synchronous>, transform_indices = @transform_5, window_bounds = array<i64: 16, 32>}, {pipeline_mode = #tpu.pipeline_mode<synchronous>, transform_indices = @transform_6, window_bounds = array<i64: 2, 32, 96>}, {pipeline_mode = #tpu.pipeline_mode<synchronous>, transform_indices = @transform_7, window_bounds = array<i64: 2, 1, 96>}, {pipeline_mode = #tpu.pipeline_mode<synchronous>, transform_indices = @transform_8, window_bounds = array<i64: 2, 32, 32>}, {pipeline_mode = #tpu.pipeline_mode<synchronous>, transform_indices = @transform_9, window_bounds = array<i64: 2, 1, 32>}, {pipeline_mode = #tpu.pipeline_mode<synchronous>, transform_indices = @transform_10, window_bounds = array<i64: 2, 1, 32>}, {pipeline_mode = #tpu.pipeline_mode<synchronous>, transform_indices = @transform_11, window_bounds = array<i64: 2, 1, 32>}, {pipeline_mode = #tpu.pipeline_mode<synchronous>, transform_indices = @transform_12, window_bounds = array<i64: 2, 32, 64>}, {pipeline_mode = #tpu.pipeline_mode<synchronous>, transform_indices = @transform_13, window_bounds = array<i64: 2, 1, 64>}, {pipeline_mode = #tpu.pipeline_mode<synchronous>, transform_indices = @transform_14, window_bounds = array<i64: 2, 64, 32>}, {pipeline_mode = #tpu.pipeline_mode<synchronous>, transform_indices = @transform_15, window_bounds = array<i64: 2, 1, 32>}, {pipeline_mode = #tpu.pipeline_mode<synchronous>, transform_indices = @transform_16, window_bounds = array<i64: 2, 1, 32>}, {pipeline_mode = #tpu.pipeline_mode<synchronous>, transform_indices = @transform_17, window_bounds = array<i64: 2, 1, 32>}, {pipeline_mode = #tpu.pipeline_mode<synchronous>, transform_indices = @transform_18, window_bounds = array<i64: 1, 32>}, {pipeline_mode = #tpu.pipeline_mode<synchronous>, transform_indices = @transform_19, window_bounds = array<i64: 1, 32>}, {transform_indices = @transform_20, window_bounds = array<i64: 16, 32>}]} {
    %c0 = arith.constant 0 : index
    %c0_0 = arith.constant 0 : index
    %0 = vector.load %arg1[%c0, %c0_0] : memref<16x16xbf16, #tpu.memory_space<vmem>>, vector<16x16xbf16>
    %c0_1 = arith.constant 0 : index
    %c0_2 = arith.constant 0 : index
    %1 = vector.load %arg2[%c0_1, %c0_2] : memref<16x32xbf16, #tpu.memory_space<vmem>>, vector<16x32xbf16>
    %cst = arith.constant dense<0.000000e+00> : vector<16x32xf32>
    %2 = tpu.matmul %0, %1, %cst {dimension_numbers = #tpu.dot_dimension_numbers<[1], [0], [0], [1], [0, 0, 1, 1], [], []>} : vector<16x16xbf16>, vector<16x32xbf16>, vector<16x32xf32> -> vector<16x32xf32>
    %c0_3 = arith.constant 0 : index
    %c0_4 = arith.constant 0 : index
    %3 = vector.load %arg3[%c0_3, %c0_4] : memref<1x32xf32, #tpu.memory_space<vmem>>, vector<1x32xf32>
    %4 = vector.broadcast %3 : vector<1x32xf32> to vector<16x32xf32>
    %5 = arith.addf %2, %4 : vector<16x32xf32>
    %c0_5 = arith.constant 0 : index
    %c0_6 = arith.constant 0 : index
    %6 = vector.load %arg4[%c0_5, %c0_6] : memref<1x32xf32, #tpu.memory_space<vmem>>, vector<1x32xf32>
    %c0_7 = arith.constant 0 : index
    %c0_8 = arith.constant 0 : index
    %7 = vector.load %arg5[%c0_7, %c0_8] : memref<1x32xf32, #tpu.memory_space<vmem>>, vector<1x32xf32>
    %cst_9 = arith.constant dense<0.000000e+00> : vector<16xf32>
    %8 = vector.multi_reduction <add>, %5, %cst_9 [1] : vector<16x32xf32> to vector<16xf32>
    %9 = vector.shape_cast %8 : vector<16xf32> to vector<16x1xf32>
    %cst_10 = arith.constant 3.200000e+01 : f32
    %10 = vector.broadcast %cst_10 : f32 to vector<16x1xf32>
    %11 = arith.divf %9, %10 : vector<16x1xf32>
    %12 = vector.broadcast %11 : vector<16x1xf32> to vector<16x32xf32>
    %13 = arith.subf %5, %12 : vector<16x32xf32>
    %14 = arith.mulf %13, %13 : vector<16x32xf32>
    %cst_11 = arith.constant dense<0.000000e+00> : vector<16xf32>
    %15 = vector.multi_reduction <add>, %14, %cst_11 [1] : vector<16x32xf32> to vector<16xf32>
    %16 = vector.shape_cast %15 : vector<16xf32> to vector<16x1xf32>
    %cst_12 = arith.constant 3.200000e+01 : f32
    %17 = vector.broadcast %cst_12 : f32 to vector<16x1xf32>
    %18 = arith.divf %16, %17 : vector<16x1xf32>
    %19 = vector.broadcast %11 : vector<16x1xf32> to vector<16x32xf32>
    %20 = arith.subf %5, %19 : vector<16x32xf32>
    %cst_13 = arith.constant 9.99999974E-6 : f32
    %21 = vector.broadcast %cst_13 : f32 to vector<16x1xf32>
    %22 = arith.addf %18, %21 : vector<16x1xf32>
    %23 = math.rsqrt %22 : vector<16x1xf32>
    %24 = vector.broadcast %23 : vector<16x1xf32> to vector<16x32xf32>
    %25 = arith.mulf %20, %24 : vector<16x32xf32>
    %26 = vector.broadcast %6 : vector<1x32xf32> to vector<16x32xf32>
    %27 = arith.mulf %25, %26 : vector<16x32xf32>
    %28 = vector.broadcast %7 : vector<1x32xf32> to vector<16x32xf32>
    %29 = arith.addf %27, %28 : vector<16x32xf32>
    %cst_14 = arith.constant 0.000000e+00 : f32
    %30 = vector.broadcast %cst_14 : f32 to vector<16x32xf32>
    %31 = arith.maximumf %29, %30 : vector<16x32xf32>
    %c0_15 = arith.constant 0 : index
    %c0_16 = arith.constant 0 : index
    %32 = vector.load %arg6[%c0_15, %c0_16] : memref<16x32xf32, #tpu.memory_space<vmem>>, vector<16x32xf32>
    %33 = arith.addf %31, %32 : vector<16x32xf32>
    %cst_17 = arith.constant 0.353553385 : f32
    %c0_i32 = arith.constant 0 : i32
    %34 = arith.index_cast %c0_i32 : i32 to index
    %c0_18 = arith.constant 0 : index
    %c0_19 = arith.constant 0 : index
    %35 = vector.load %arg7[%34, %c0_18, %c0_19] : memref<2x32x96xbf16, #tpu.memory_space<vmem>>, vector<1x32x96xbf16>
    %36 = vector.shape_cast %35 : vector<1x32x96xbf16> to vector<32x96xbf16>
    %37 = arith.truncf %33 : vector<16x32xf32> to vector<16x32xbf16>
    %cst_20 = arith.constant dense<0.000000e+00> : vector<16x96xf32>
    %38 = tpu.matmul %37, %36, %cst_20 {dimension_numbers = #tpu.dot_dimension_numbers<[1], [0], [0], [1], [0, 0, 1, 1], [], []>} : vector<16x32xbf16>, vector<32x96xbf16>, vector<16x96xf32> -> vector<16x96xf32>
    %39 = arith.index_cast %c0_i32 : i32 to index
    %c0_21 = arith.constant 0 : index
    %c0_22 = arith.constant 0 : index
    %40 = vector.load %arg8[%39, %c0_21, %c0_22] : memref<2x1x96xf32, #tpu.memory_space<vmem>>, vector<1x1x96xf32>
    %41 = vector.shape_cast %40 : vector<1x1x96xf32> to vector<1x96xf32>
    %42 = vector.broadcast %41 : vector<1x96xf32> to vector<16x96xf32>
    %43 = arith.addf %38, %42 : vector<16x96xf32>
    %44 = vector.extract_strided_slice %43 {offsets = [0, 0], sizes = [16, 8], strides = [1, 1]} : vector<16x96xf32> to vector<16x8xf32>
    %45 = vector.shape_cast %44 : vector<16x8xf32> to vector<2x8x8xf32>
    %46 = arith.truncf %45 : vector<2x8x8xf32> to vector<2x8x8xbf16>
    %47 = vector.extract_strided_slice %43 {offsets = [0, 32], sizes = [16, 8], strides = [1, 1]} : vector<16x96xf32> to vector<16x8xf32>
    %48 = vector.shape_cast %47 : vector<16x8xf32> to vector<2x8x8xf32>
    %49 = arith.truncf %48 : vector<2x8x8xf32> to vector<2x8x8xbf16>
    %50 = vector.extract_strided_slice %43 {offsets = [0, 64], sizes = [16, 8], strides = [1, 1]} : vector<16x96xf32> to vector<16x8xf32>
    %51 = vector.shape_cast %50 : vector<16x8xf32> to vector<2x8x8xf32>
    %52 = arith.truncf %51 : vector<2x8x8xf32> to vector<2x8x8xbf16>
    "tpu.trace_start"() <{level = 10 : i32, message = "btd,bud->btu"}> : () -> ()
    %cst_23 = arith.constant dense<0.000000e+00> : vector<2x8x8xf32>
    %53 = tpu.matmul %46, %49, %cst_23 {dimension_numbers = #tpu.dot_dimension_numbers<[2], [2], [1], [1], [0, 0, 0, 1, 1, 1], [0], [0]>} : vector<2x8x8xbf16>, vector<2x8x8xbf16>, vector<2x8x8xf32> -> vector<2x8x8xf32>
    "tpu.trace_stop"() : () -> ()
    %54 = vector.broadcast %cst_17 : f32 to vector<2x8x8xf32>
    %55 = arith.mulf %53, %54 : vector<2x8x8xf32>
    %cst_24 = arith.constant dense<0xFF800000> : vector<2x8xf32>
    %56 = vector.multi_reduction <maximumf>, %55, %cst_24 [2] : vector<2x8x8xf32> to vector<2x8xf32>
    %57 = vector.shape_cast %56 : vector<2x8xf32> to vector<2x8x1xf32>
    %58 = vector.broadcast %57 : vector<2x8x1xf32> to vector<2x8x8xf32>
    %59 = arith.subf %55, %58 : vector<2x8x8xf32>
    %60 = math.exp %59 : vector<2x8x8xf32>
    %cst_25 = arith.constant dense<0.000000e+00> : vector<2x8xf32>
    %61 = vector.multi_reduction <add>, %60, %cst_25 [2] : vector<2x8x8xf32> to vector<2x8xf32>
    %62 = vector.shape_cast %61 : vector<2x8xf32> to vector<2x8x1xf32>
    %63 = tpu.reciprocal %62 {approx = true} : vector<2x8x1xf32> -> vector<2x8x1xf32>
    %64 = vector.broadcast %63 : vector<2x8x1xf32> to vector<2x8x8xf32>
    %65 = arith.mulf %60, %64 : vector<2x8x8xf32>
    %66 = arith.truncf %65 : vector<2x8x8xf32> to vector<2x8x8xbf16>
    "tpu.trace_start"() <{level = 10 : i32, message = "btu,bud->btd"}> : () -> ()
    %cst_26 = arith.constant dense<0.000000e+00> : vector<2x8x8xf32>
    %67 = tpu.matmul %66, %52, %cst_26 {dimension_numbers = #tpu.dot_dimension_numbers<[2], [1], [1], [2], [0, 0, 0, 1, 1, 2], [0], [0]>} : vector<2x8x8xbf16>, vector<2x8x8xbf16>, vector<2x8x8xf32> -> vector<2x8x8xf32>
    "tpu.trace_stop"() : () -> ()
    %68 = vector.shape_cast %67 : vector<2x8x8xf32> to vector<16x8xf32>
    %69 = vector.extract_strided_slice %43 {offsets = [0, 8], sizes = [16, 8], strides = [1, 1]} : vector<16x96xf32> to vector<16x8xf32>
    %70 = vector.shape_cast %69 : vector<16x8xf32> to vector<2x8x8xf32>
    %71 = arith.truncf %70 : vector<2x8x8xf32> to vector<2x8x8xbf16>
    %72 = vector.extract_strided_slice %43 {offsets = [0, 40], sizes = [16, 8], strides = [1, 1]} : vector<16x96xf32> to vector<16x8xf32>
    %73 = vector.shape_cast %72 : vector<16x8xf32> to vector<2x8x8xf32>
    %74 = arith.truncf %73 : vector<2x8x8xf32> to vector<2x8x8xbf16>
    %75 = vector.extract_strided_slice %43 {offsets = [0, 72], sizes = [16, 8], strides = [1, 1]} : vector<16x96xf32> to vector<16x8xf32>
    %76 = vector.shape_cast %75 : vector<16x8xf32> to vector<2x8x8xf32>
    %77 = arith.truncf %76 : vector<2x8x8xf32> to vector<2x8x8xbf16>
    "tpu.trace_start"() <{level = 10 : i32, message = "btd,bud->btu"}> : () -> ()
    %cst_27 = arith.constant dense<0.000000e+00> : vector<2x8x8xf32>
    %78 = tpu.matmul %71, %74, %cst_27 {dimension_numbers = #tpu.dot_dimension_numbers<[2], [2], [1], [1], [0, 0, 0, 1, 1, 1], [0], [0]>} : vector<2x8x8xbf16>, vector<2x8x8xbf16>, vector<2x8x8xf32> -> vector<2x8x8xf32>
    "tpu.trace_stop"() : () -> ()
    %79 = vector.broadcast %cst_17 : f32 to vector<2x8x8xf32>
    %80 = arith.mulf %78, %79 : vector<2x8x8xf32>
    %cst_28 = arith.constant dense<0xFF800000> : vector<2x8xf32>
    %81 = vector.multi_reduction <maximumf>, %80, %cst_28 [2] : vector<2x8x8xf32> to vector<2x8xf32>
    %82 = vector.shape_cast %81 : vector<2x8xf32> to vector<2x8x1xf32>
    %83 = vector.broadcast %82 : vector<2x8x1xf32> to vector<2x8x8xf32>
    %84 = arith.subf %80, %83 : vector<2x8x8xf32>
    %85 = math.exp %84 : vector<2x8x8xf32>
    %cst_29 = arith.constant dense<0.000000e+00> : vector<2x8xf32>
    %86 = vector.multi_reduction <add>, %85, %cst_29 [2] : vector<2x8x8xf32> to vector<2x8xf32>
    %87 = vector.shape_cast %86 : vector<2x8xf32> to vector<2x8x1xf32>
    %88 = tpu.reciprocal %87 {approx = true} : vector<2x8x1xf32> -> vector<2x8x1xf32>
    %89 = vector.broadcast %88 : vector<2x8x1xf32> to vector<2x8x8xf32>
    %90 = arith.mulf %85, %89 : vector<2x8x8xf32>
    %91 = arith.truncf %90 : vector<2x8x8xf32> to vector<2x8x8xbf16>
    "tpu.trace_start"() <{level = 10 : i32, message = "btu,bud->btd"}> : () -> ()
    %cst_30 = arith.constant dense<0.000000e+00> : vector<2x8x8xf32>
    %92 = tpu.matmul %91, %77, %cst_30 {dimension_numbers = #tpu.dot_dimension_numbers<[2], [1], [1], [2], [0, 0, 0, 1, 1, 2], [0], [0]>} : vector<2x8x8xbf16>, vector<2x8x8xbf16>, vector<2x8x8xf32> -> vector<2x8x8xf32>
    "tpu.trace_stop"() : () -> ()
    %93 = vector.shape_cast %92 : vector<2x8x8xf32> to vector<16x8xf32>
    %94 = vector.extract_strided_slice %43 {offsets = [0, 16], sizes = [16, 8], strides = [1, 1]} : vector<16x96xf32> to vector<16x8xf32>
    %95 = vector.shape_cast %94 : vector<16x8xf32> to vector<2x8x8xf32>
    %96 = arith.truncf %95 : vector<2x8x8xf32> to vector<2x8x8xbf16>
    %97 = vector.extract_strided_slice %43 {offsets = [0, 48], sizes = [16, 8], strides = [1, 1]} : vector<16x96xf32> to vector<16x8xf32>
    %98 = vector.shape_cast %97 : vector<16x8xf32> to vector<2x8x8xf32>
    %99 = arith.truncf %98 : vector<2x8x8xf32> to vector<2x8x8xbf16>
    %100 = vector.extract_strided_slice %43 {offsets = [0, 80], sizes = [16, 8], strides = [1, 1]} : vector<16x96xf32> to vector<16x8xf32>
    %101 = vector.shape_cast %100 : vector<16x8xf32> to vector<2x8x8xf32>
    %102 = arith.truncf %101 : vector<2x8x8xf32> to vector<2x8x8xbf16>
    "tpu.trace_start"() <{level = 10 : i32, message = "btd,bud->btu"}> : () -> ()
    %cst_31 = arith.constant dense<0.000000e+00> : vector<2x8x8xf32>
    %103 = tpu.matmul %96, %99, %cst_31 {dimension_numbers = #tpu.dot_dimension_numbers<[2], [2], [1], [1], [0, 0, 0, 1, 1, 1], [0], [0]>} : vector<2x8x8xbf16>, vector<2x8x8xbf16>, vector<2x8x8xf32> -> vector<2x8x8xf32>
    "tpu.trace_stop"() : () -> ()
    %104 = vector.broadcast %cst_17 : f32 to vector<2x8x8xf32>
    %105 = arith.mulf %103, %104 : vector<2x8x8xf32>
    %cst_32 = arith.constant dense<0xFF800000> : vector<2x8xf32>
    %106 = vector.multi_reduction <maximumf>, %105, %cst_32 [2] : vector<2x8x8xf32> to vector<2x8xf32>
    %107 = vector.shape_cast %106 : vector<2x8xf32> to vector<2x8x1xf32>
    %108 = vector.broadcast %107 : vector<2x8x1xf32> to vector<2x8x8xf32>
    %109 = arith.subf %105, %108 : vector<2x8x8xf32>
    %110 = math.exp %109 : vector<2x8x8xf32>
    %cst_33 = arith.constant dense<0.000000e+00> : vector<2x8xf32>
    %111 = vector.multi_reduction <add>, %110, %cst_33 [2] : vector<2x8x8xf32> to vector<2x8xf32>
    %112 = vector.shape_cast %111 : vector<2x8xf32> to vector<2x8x1xf32>
    %113 = tpu.reciprocal %112 {approx = true} : vector<2x8x1xf32> -> vector<2x8x1xf32>
    %114 = vector.broadcast %113 : vector<2x8x1xf32> to vector<2x8x8xf32>
    %115 = arith.mulf %110, %114 : vector<2x8x8xf32>
    %116 = arith.truncf %115 : vector<2x8x8xf32> to vector<2x8x8xbf16>
    "tpu.trace_start"() <{level = 10 : i32, message = "btu,bud->btd"}> : () -> ()
    %cst_34 = arith.constant dense<0.000000e+00> : vector<2x8x8xf32>
    %117 = tpu.matmul %116, %102, %cst_34 {dimension_numbers = #tpu.dot_dimension_numbers<[2], [1], [1], [2], [0, 0, 0, 1, 1, 2], [0], [0]>} : vector<2x8x8xbf16>, vector<2x8x8xbf16>, vector<2x8x8xf32> -> vector<2x8x8xf32>
    "tpu.trace_stop"() : () -> ()
    %118 = vector.shape_cast %117 : vector<2x8x8xf32> to vector<16x8xf32>
    %119 = vector.extract_strided_slice %43 {offsets = [0, 24], sizes = [16, 8], strides = [1, 1]} : vector<16x96xf32> to vector<16x8xf32>
    %120 = vector.shape_cast %119 : vector<16x8xf32> to vector<2x8x8xf32>
    %121 = arith.truncf %120 : vector<2x8x8xf32> to vector<2x8x8xbf16>
    %122 = vector.extract_strided_slice %43 {offsets = [0, 56], sizes = [16, 8], strides = [1, 1]} : vector<16x96xf32> to vector<16x8xf32>
    %123 = vector.shape_cast %122 : vector<16x8xf32> to vector<2x8x8xf32>
    %124 = arith.truncf %123 : vector<2x8x8xf32> to vector<2x8x8xbf16>
    %125 = vector.extract_strided_slice %43 {offsets = [0, 88], sizes = [16, 8], strides = [1, 1]} : vector<16x96xf32> to vector<16x8xf32>
    %126 = vector.shape_cast %125 : vector<16x8xf32> to vector<2x8x8xf32>
    %127 = arith.truncf %126 : vector<2x8x8xf32> to vector<2x8x8xbf16>
    "tpu.trace_start"() <{level = 10 : i32, message = "btd,bud->btu"}> : () -> ()
    %cst_35 = arith.constant dense<0.000000e+00> : vector<2x8x8xf32>
    %128 = tpu.matmul %121, %124, %cst_35 {dimension_numbers = #tpu.dot_dimension_numbers<[2], [2], [1], [1], [0, 0, 0, 1, 1, 1], [0], [0]>} : vector<2x8x8xbf16>, vector<2x8x8xbf16>, vector<2x8x8xf32> -> vector<2x8x8xf32>
    "tpu.trace_stop"() : () -> ()
    %129 = vector.broadcast %cst_17 : f32 to vector<2x8x8xf32>
    %130 = arith.mulf %128, %129 : vector<2x8x8xf32>
    %cst_36 = arith.constant dense<0xFF800000> : vector<2x8xf32>
    %131 = vector.multi_reduction <maximumf>, %130, %cst_36 [2] : vector<2x8x8xf32> to vector<2x8xf32>
    %132 = vector.shape_cast %131 : vector<2x8xf32> to vector<2x8x1xf32>
    %133 = vector.broadcast %132 : vector<2x8x1xf32> to vector<2x8x8xf32>
    %134 = arith.subf %130, %133 : vector<2x8x8xf32>
    %135 = math.exp %134 : vector<2x8x8xf32>
    %cst_37 = arith.constant dense<0.000000e+00> : vector<2x8xf32>
    %136 = vector.multi_reduction <add>, %135, %cst_37 [2] : vector<2x8x8xf32> to vector<2x8xf32>
    %137 = vector.shape_cast %136 : vector<2x8xf32> to vector<2x8x1xf32>
    %138 = tpu.reciprocal %137 {approx = true} : vector<2x8x1xf32> -> vector<2x8x1xf32>
    %139 = vector.broadcast %138 : vector<2x8x1xf32> to vector<2x8x8xf32>
    %140 = arith.mulf %135, %139 : vector<2x8x8xf32>
    %141 = arith.truncf %140 : vector<2x8x8xf32> to vector<2x8x8xbf16>
    "tpu.trace_start"() <{level = 10 : i32, message = "btu,bud->btd"}> : () -> ()
    %cst_38 = arith.constant dense<0.000000e+00> : vector<2x8x8xf32>
    %142 = tpu.matmul %141, %127, %cst_38 {dimension_numbers = #tpu.dot_dimension_numbers<[2], [1], [1], [2], [0, 0, 0, 1, 1, 2], [0], [0]>} : vector<2x8x8xbf16>, vector<2x8x8xbf16>, vector<2x8x8xf32> -> vector<2x8x8xf32>
    "tpu.trace_stop"() : () -> ()
    %143 = vector.shape_cast %142 : vector<2x8x8xf32> to vector<16x8xf32>
    %144 = tpu.concatenate %68, %93, %118, %143 in 1 : vector<16x8xf32>, vector<16x8xf32>, vector<16x8xf32>, vector<16x8xf32> -> vector<16x32xf32>
    %145 = arith.index_cast %c0_i32 : i32 to index
    %c0_39 = arith.constant 0 : index
    %c0_40 = arith.constant 0 : index
    %146 = vector.load %arg9[%145, %c0_39, %c0_40] : memref<2x32x32xbf16, #tpu.memory_space<vmem>>, vector<1x32x32xbf16>
    %147 = vector.shape_cast %146 : vector<1x32x32xbf16> to vector<32x32xbf16>
    %148 = arith.truncf %144 : vector<16x32xf32> to vector<16x32xbf16>
    %cst_41 = arith.constant dense<0.000000e+00> : vector<16x32xf32>
    %149 = tpu.matmul %148, %147, %cst_41 {dimension_numbers = #tpu.dot_dimension_numbers<[1], [0], [0], [1], [0, 0, 1, 1], [], []>} : vector<16x32xbf16>, vector<32x32xbf16>, vector<16x32xf32> -> vector<16x32xf32>
    %150 = arith.index_cast %c0_i32 : i32 to index
    %c0_42 = arith.constant 0 : index
    %c0_43 = arith.constant 0 : index
    %151 = vector.load %arg10[%150, %c0_42, %c0_43] : memref<2x1x32xf32, #tpu.memory_space<vmem>>, vector<1x1x32xf32>
    %152 = vector.shape_cast %151 : vector<1x1x32xf32> to vector<1x32xf32>
    %153 = vector.broadcast %152 : vector<1x32xf32> to vector<16x32xf32>
    %154 = arith.addf %149, %153 : vector<16x32xf32>
    %155 = arith.addf %33, %154 : vector<16x32xf32>
    %156 = arith.index_cast %c0_i32 : i32 to index
    %c0_44 = arith.constant 0 : index
    %c0_45 = arith.constant 0 : index
    %157 = vector.load %arg11[%156, %c0_44, %c0_45] : memref<2x1x32xf32, #tpu.memory_space<vmem>>, vector<1x1x32xf32>
    %158 = vector.shape_cast %157 : vector<1x1x32xf32> to vector<1x32xf32>
    %159 = arith.index_cast %c0_i32 : i32 to index
    %c0_46 = arith.constant 0 : index
    %c0_47 = arith.constant 0 : index
    %160 = vector.load %arg12[%159, %c0_46, %c0_47] : memref<2x1x32xf32, #tpu.memory_space<vmem>>, vector<1x1x32xf32>
    %161 = vector.shape_cast %160 : vector<1x1x32xf32> to vector<1x32xf32>
    %cst_48 = arith.constant dense<0.000000e+00> : vector<16xf32>
    %162 = vector.multi_reduction <add>, %155, %cst_48 [1] : vector<16x32xf32> to vector<16xf32>
    %163 = vector.shape_cast %162 : vector<16xf32> to vector<16x1xf32>
    %cst_49 = arith.constant 3.200000e+01 : f32
    %164 = vector.broadcast %cst_49 : f32 to vector<16x1xf32>
    %165 = arith.divf %163, %164 : vector<16x1xf32>
    %166 = vector.broadcast %165 : vector<16x1xf32> to vector<16x32xf32>
    %167 = arith.subf %155, %166 : vector<16x32xf32>
    %168 = arith.mulf %167, %167 : vector<16x32xf32>
    %cst_50 = arith.constant dense<0.000000e+00> : vector<16xf32>
    %169 = vector.multi_reduction <add>, %168, %cst_50 [1] : vector<16x32xf32> to vector<16xf32>
    %170 = vector.shape_cast %169 : vector<16xf32> to vector<16x1xf32>
    %cst_51 = arith.constant 3.200000e+01 : f32
    %171 = vector.broadcast %cst_51 : f32 to vector<16x1xf32>
    %172 = arith.divf %170, %171 : vector<16x1xf32>
    %173 = vector.broadcast %165 : vector<16x1xf32> to vector<16x32xf32>
    %174 = arith.subf %155, %173 : vector<16x32xf32>
    %cst_52 = arith.constant 9.99999996E-13 : f32
    %175 = vector.broadcast %cst_52 : f32 to vector<16x1xf32>
    %176 = arith.addf %172, %175 : vector<16x1xf32>
    %177 = math.rsqrt %176 : vector<16x1xf32>
    %178 = vector.broadcast %177 : vector<16x1xf32> to vector<16x32xf32>
    %179 = arith.mulf %174, %178 : vector<16x32xf32>
    %180 = vector.broadcast %158 : vector<1x32xf32> to vector<16x32xf32>
    %181 = arith.mulf %179, %180 : vector<16x32xf32>
    %182 = vector.broadcast %161 : vector<1x32xf32> to vector<16x32xf32>
    %183 = arith.addf %181, %182 : vector<16x32xf32>
    %184 = arith.index_cast %c0_i32 : i32 to index
    %c0_53 = arith.constant 0 : index
    %c0_54 = arith.constant 0 : index
    %185 = vector.load %arg13[%184, %c0_53, %c0_54] : memref<2x32x64xbf16, #tpu.memory_space<vmem>>, vector<1x32x64xbf16>
    %186 = vector.shape_cast %185 : vector<1x32x64xbf16> to vector<32x64xbf16>
    %187 = arith.truncf %183 : vector<16x32xf32> to vector<16x32xbf16>
    %cst_55 = arith.constant dense<0.000000e+00> : vector<16x64xf32>
    %188 = tpu.matmul %187, %186, %cst_55 {dimension_numbers = #tpu.dot_dimension_numbers<[1], [0], [0], [1], [0, 0, 1, 1], [], []>} : vector<16x32xbf16>, vector<32x64xbf16>, vector<16x64xf32> -> vector<16x64xf32>
    %189 = arith.index_cast %c0_i32 : i32 to index
    %c0_56 = arith.constant 0 : index
    %c0_57 = arith.constant 0 : index
    %190 = vector.load %arg14[%189, %c0_56, %c0_57] : memref<2x1x64xf32, #tpu.memory_space<vmem>>, vector<1x1x64xf32>
    %191 = vector.shape_cast %190 : vector<1x1x64xf32> to vector<1x64xf32>
    %192 = vector.broadcast %191 : vector<1x64xf32> to vector<16x64xf32>
    %193 = arith.addf %188, %192 : vector<16x64xf32>
    %cst_58 = arith.constant 0.000000e+00 : f32
    %194 = vector.broadcast %cst_58 : f32 to vector<16x64xf32>
    %195 = arith.maximumf %193, %194 : vector<16x64xf32>
    %196 = arith.index_cast %c0_i32 : i32 to index
    %c0_59 = arith.constant 0 : index
    %c0_60 = arith.constant 0 : index
    %197 = vector.load %arg15[%196, %c0_59, %c0_60] : memref<2x64x32xbf16, #tpu.memory_space<vmem>>, vector<1x64x32xbf16>
    %198 = vector.shape_cast %197 : vector<1x64x32xbf16> to vector<64x32xbf16>
    %199 = arith.truncf %195 : vector<16x64xf32> to vector<16x64xbf16>
    %cst_61 = arith.constant dense<0.000000e+00> : vector<16x32xf32>
    %200 = tpu.matmul %199, %198, %cst_61 {dimension_numbers = #tpu.dot_dimension_numbers<[1], [0], [0], [1], [0, 0, 1, 1], [], []>} : vector<16x64xbf16>, vector<64x32xbf16>, vector<16x32xf32> -> vector<16x32xf32>
    %201 = arith.index_cast %c0_i32 : i32 to index
    %c0_62 = arith.constant 0 : index
    %c0_63 = arith.constant 0 : index
    %202 = vector.load %arg16[%201, %c0_62, %c0_63] : memref<2x1x32xf32, #tpu.memory_space<vmem>>, vector<1x1x32xf32>
    %203 = vector.shape_cast %202 : vector<1x1x32xf32> to vector<1x32xf32>
    %204 = vector.broadcast %203 : vector<1x32xf32> to vector<16x32xf32>
    %205 = arith.addf %200, %204 : vector<16x32xf32>
    %206 = arith.addf %183, %205 : vector<16x32xf32>
    %207 = arith.index_cast %c0_i32 : i32 to index
    %c0_64 = arith.constant 0 : index
    %c0_65 = arith.constant 0 : index
    %208 = vector.load %arg17[%207, %c0_64, %c0_65] : memref<2x1x32xf32, #tpu.memory_space<vmem>>, vector<1x1x32xf32>
    %209 = vector.shape_cast %208 : vector<1x1x32xf32> to vector<1x32xf32>
    %210 = arith.index_cast %c0_i32 : i32 to index
    %c0_66 = arith.constant 0 : index
    %c0_67 = arith.constant 0 : index
    %211 = vector.load %arg18[%210, %c0_66, %c0_67] : memref<2x1x32xf32, #tpu.memory_space<vmem>>, vector<1x1x32xf32>
    %212 = vector.shape_cast %211 : vector<1x1x32xf32> to vector<1x32xf32>
    %cst_68 = arith.constant dense<0.000000e+00> : vector<16xf32>
    %213 = vector.multi_reduction <add>, %206, %cst_68 [1] : vector<16x32xf32> to vector<16xf32>
    %214 = vector.shape_cast %213 : vector<16xf32> to vector<16x1xf32>
    %cst_69 = arith.constant 3.200000e+01 : f32
    %215 = vector.broadcast %cst_69 : f32 to vector<16x1xf32>
    %216 = arith.divf %214, %215 : vector<16x1xf32>
    %217 = vector.broadcast %216 : vector<16x1xf32> to vector<16x32xf32>
    %218 = arith.subf %206, %217 : vector<16x32xf32>
    %219 = arith.mulf %218, %218 : vector<16x32xf32>
    %cst_70 = arith.constant dense<0.000000e+00> : vector<16xf32>
    %220 = vector.multi_reduction <add>, %219, %cst_70 [1] : vector<16x32xf32> to vector<16xf32>
    %221 = vector.shape_cast %220 : vector<16xf32> to vector<16x1xf32>
    %cst_71 = arith.constant 3.200000e+01 : f32
    %222 = vector.broadcast %cst_71 : f32 to vector<16x1xf32>
    %223 = arith.divf %221, %222 : vector<16x1xf32>
    %224 = vector.broadcast %216 : vector<16x1xf32> to vector<16x32xf32>
    %225 = arith.subf %206, %224 : vector<16x32xf32>
    %cst_72 = arith.constant 9.99999996E-13 : f32
    %226 = vector.broadcast %cst_72 : f32 to vector<16x1xf32>
    %227 = arith.addf %223, %226 : vector<16x1xf32>
    %228 = math.rsqrt %227 : vector<16x1xf32>
    %229 = vector.broadcast %228 : vector<16x1xf32> to vector<16x32xf32>
    %230 = arith.mulf %225, %229 : vector<16x32xf32>
    %231 = vector.broadcast %209 : vector<1x32xf32> to vector<16x32xf32>
    %232 = arith.mulf %230, %231 : vector<16x32xf32>
    %233 = vector.broadcast %212 : vector<1x32xf32> to vector<16x32xf32>
    %234 = arith.addf %232, %233 : vector<16x32xf32>
    %c1_i32 = arith.constant 1 : i32
    %235 = arith.index_cast %c1_i32 : i32 to index
    %c0_73 = arith.constant 0 : index
    %c0_74 = arith.constant 0 : index
    %236 = vector.load %arg7[%235, %c0_73, %c0_74] : memref<2x32x96xbf16, #tpu.memory_space<vmem>>, vector<1x32x96xbf16>
    %237 = vector.shape_cast %236 : vector<1x32x96xbf16> to vector<32x96xbf16>
    %238 = arith.truncf %234 : vector<16x32xf32> to vector<16x32xbf16>
    %cst_75 = arith.constant dense<0.000000e+00> : vector<16x96xf32>
    %239 = tpu.matmul %238, %237, %cst_75 {dimension_numbers = #tpu.dot_dimension_numbers<[1], [0], [0], [1], [0, 0, 1, 1], [], []>} : vector<16x32xbf16>, vector<32x96xbf16>, vector<16x96xf32> -> vector<16x96xf32>
    %240 = arith.index_cast %c1_i32 : i32 to index
    %c0_76 = arith.constant 0 : index
    %c0_77 = arith.constant 0 : index
    %241 = vector.load %arg8[%240, %c0_76, %c0_77] : memref<2x1x96xf32, #tpu.memory_space<vmem>>, vector<1x1x96xf32>
    %242 = vector.shape_cast %241 : vector<1x1x96xf32> to vector<1x96xf32>
    %243 = vector.broadcast %242 : vector<1x96xf32> to vector<16x96xf32>
    %244 = arith.addf %239, %243 : vector<16x96xf32>
    %245 = vector.extract_strided_slice %244 {offsets = [0, 0], sizes = [16, 8], strides = [1, 1]} : vector<16x96xf32> to vector<16x8xf32>
    %246 = vector.shape_cast %245 : vector<16x8xf32> to vector<2x8x8xf32>
    %247 = arith.truncf %246 : vector<2x8x8xf32> to vector<2x8x8xbf16>
    %248 = vector.extract_strided_slice %244 {offsets = [0, 32], sizes = [16, 8], strides = [1, 1]} : vector<16x96xf32> to vector<16x8xf32>
    %249 = vector.shape_cast %248 : vector<16x8xf32> to vector<2x8x8xf32>
    %250 = arith.truncf %249 : vector<2x8x8xf32> to vector<2x8x8xbf16>
    %251 = vector.extract_strided_slice %244 {offsets = [0, 64], sizes = [16, 8], strides = [1, 1]} : vector<16x96xf32> to vector<16x8xf32>
    %252 = vector.shape_cast %251 : vector<16x8xf32> to vector<2x8x8xf32>
    %253 = arith.truncf %252 : vector<2x8x8xf32> to vector<2x8x8xbf16>
    "tpu.trace_start"() <{level = 10 : i32, message = "btd,bud->btu"}> : () -> ()
    %cst_78 = arith.constant dense<0.000000e+00> : vector<2x8x8xf32>
    %254 = tpu.matmul %247, %250, %cst_78 {dimension_numbers = #tpu.dot_dimension_numbers<[2], [2], [1], [1], [0, 0, 0, 1, 1, 1], [0], [0]>} : vector<2x8x8xbf16>, vector<2x8x8xbf16>, vector<2x8x8xf32> -> vector<2x8x8xf32>
    "tpu.trace_stop"() : () -> ()
    %255 = vector.broadcast %cst_17 : f32 to vector<2x8x8xf32>
    %256 = arith.mulf %254, %255 : vector<2x8x8xf32>
    %cst_79 = arith.constant dense<0xFF800000> : vector<2x8xf32>
    %257 = vector.multi_reduction <maximumf>, %256, %cst_79 [2] : vector<2x8x8xf32> to vector<2x8xf32>
    %258 = vector.shape_cast %257 : vector<2x8xf32> to vector<2x8x1xf32>
    %259 = vector.broadcast %258 : vector<2x8x1xf32> to vector<2x8x8xf32>
    %260 = arith.subf %256, %259 : vector<2x8x8xf32>
    %261 = math.exp %260 : vector<2x8x8xf32>
    %cst_80 = arith.constant dense<0.000000e+00> : vector<2x8xf32>
    %262 = vector.multi_reduction <add>, %261, %cst_80 [2] : vector<2x8x8xf32> to vector<2x8xf32>
    %263 = vector.shape_cast %262 : vector<2x8xf32> to vector<2x8x1xf32>
    %264 = tpu.reciprocal %263 {approx = true} : vector<2x8x1xf32> -> vector<2x8x1xf32>
    %265 = vector.broadcast %264 : vector<2x8x1xf32> to vector<2x8x8xf32>
    %266 = arith.mulf %261, %265 : vector<2x8x8xf32>
    %267 = arith.truncf %266 : vector<2x8x8xf32> to vector<2x8x8xbf16>
    "tpu.trace_start"() <{level = 10 : i32, message = "btu,bud->btd"}> : () -> ()
    %cst_81 = arith.constant dense<0.000000e+00> : vector<2x8x8xf32>
    %268 = tpu.matmul %267, %253, %cst_81 {dimension_numbers = #tpu.dot_dimension_numbers<[2], [1], [1], [2], [0, 0, 0, 1, 1, 2], [0], [0]>} : vector<2x8x8xbf16>, vector<2x8x8xbf16>, vector<2x8x8xf32> -> vector<2x8x8xf32>
    "tpu.trace_stop"() : () -> ()
    %269 = vector.shape_cast %268 : vector<2x8x8xf32> to vector<16x8xf32>
    %270 = vector.extract_strided_slice %244 {offsets = [0, 8], sizes = [16, 8], strides = [1, 1]} : vector<16x96xf32> to vector<16x8xf32>
    %271 = vector.shape_cast %270 : vector<16x8xf32> to vector<2x8x8xf32>
    %272 = arith.truncf %271 : vector<2x8x8xf32> to vector<2x8x8xbf16>
    %273 = vector.extract_strided_slice %244 {offsets = [0, 40], sizes = [16, 8], strides = [1, 1]} : vector<16x96xf32> to vector<16x8xf32>
    %274 = vector.shape_cast %273 : vector<16x8xf32> to vector<2x8x8xf32>
    %275 = arith.truncf %274 : vector<2x8x8xf32> to vector<2x8x8xbf16>
    %276 = vector.extract_strided_slice %244 {offsets = [0, 72], sizes = [16, 8], strides = [1, 1]} : vector<16x96xf32> to vector<16x8xf32>
    %277 = vector.shape_cast %276 : vector<16x8xf32> to vector<2x8x8xf32>
    %278 = arith.truncf %277 : vector<2x8x8xf32> to vector<2x8x8xbf16>
    "tpu.trace_start"() <{level = 10 : i32, message = "btd,bud->btu"}> : () -> ()
    %cst_82 = arith.constant dense<0.000000e+00> : vector<2x8x8xf32>
    %279 = tpu.matmul %272, %275, %cst_82 {dimension_numbers = #tpu.dot_dimension_numbers<[2], [2], [1], [1], [0, 0, 0, 1, 1, 1], [0], [0]>} : vector<2x8x8xbf16>, vector<2x8x8xbf16>, vector<2x8x8xf32> -> vector<2x8x8xf32>
    "tpu.trace_stop"() : () -> ()
    %280 = vector.broadcast %cst_17 : f32 to vector<2x8x8xf32>
    %281 = arith.mulf %279, %280 : vector<2x8x8xf32>
    %cst_83 = arith.constant dense<0xFF800000> : vector<2x8xf32>
    %282 = vector.multi_reduction <maximumf>, %281, %cst_83 [2] : vector<2x8x8xf32> to vector<2x8xf32>
    %283 = vector.shape_cast %282 : vector<2x8xf32> to vector<2x8x1xf32>
    %284 = vector.broadcast %283 : vector<2x8x1xf32> to vector<2x8x8xf32>
    %285 = arith.subf %281, %284 : vector<2x8x8xf32>
    %286 = math.exp %285 : vector<2x8x8xf32>
    %cst_84 = arith.constant dense<0.000000e+00> : vector<2x8xf32>
    %287 = vector.multi_reduction <add>, %286, %cst_84 [2] : vector<2x8x8xf32> to vector<2x8xf32>
    %288 = vector.shape_cast %287 : vector<2x8xf32> to vector<2x8x1xf32>
    %289 = tpu.reciprocal %288 {approx = true} : vector<2x8x1xf32> -> vector<2x8x1xf32>
    %290 = vector.broadcast %289 : vector<2x8x1xf32> to vector<2x8x8xf32>
    %291 = arith.mulf %286, %290 : vector<2x8x8xf32>
    %292 = arith.truncf %291 : vector<2x8x8xf32> to vector<2x8x8xbf16>
    "tpu.trace_start"() <{level = 10 : i32, message = "btu,bud->btd"}> : () -> ()
    %cst_85 = arith.constant dense<0.000000e+00> : vector<2x8x8xf32>
    %293 = tpu.matmul %292, %278, %cst_85 {dimension_numbers = #tpu.dot_dimension_numbers<[2], [1], [1], [2], [0, 0, 0, 1, 1, 2], [0], [0]>} : vector<2x8x8xbf16>, vector<2x8x8xbf16>, vector<2x8x8xf32> -> vector<2x8x8xf32>
    "tpu.trace_stop"() : () -> ()
    %294 = vector.shape_cast %293 : vector<2x8x8xf32> to vector<16x8xf32>
    %295 = vector.extract_strided_slice %244 {offsets = [0, 16], sizes = [16, 8], strides = [1, 1]} : vector<16x96xf32> to vector<16x8xf32>
    %296 = vector.shape_cast %295 : vector<16x8xf32> to vector<2x8x8xf32>
    %297 = arith.truncf %296 : vector<2x8x8xf32> to vector<2x8x8xbf16>
    %298 = vector.extract_strided_slice %244 {offsets = [0, 48], sizes = [16, 8], strides = [1, 1]} : vector<16x96xf32> to vector<16x8xf32>
    %299 = vector.shape_cast %298 : vector<16x8xf32> to vector<2x8x8xf32>
    %300 = arith.truncf %299 : vector<2x8x8xf32> to vector<2x8x8xbf16>
    %301 = vector.extract_strided_slice %244 {offsets = [0, 80], sizes = [16, 8], strides = [1, 1]} : vector<16x96xf32> to vector<16x8xf32>
    %302 = vector.shape_cast %301 : vector<16x8xf32> to vector<2x8x8xf32>
    %303 = arith.truncf %302 : vector<2x8x8xf32> to vector<2x8x8xbf16>
    "tpu.trace_start"() <{level = 10 : i32, message = "btd,bud->btu"}> : () -> ()
    %cst_86 = arith.constant dense<0.000000e+00> : vector<2x8x8xf32>
    %304 = tpu.matmul %297, %300, %cst_86 {dimension_numbers = #tpu.dot_dimension_numbers<[2], [2], [1], [1], [0, 0, 0, 1, 1, 1], [0], [0]>} : vector<2x8x8xbf16>, vector<2x8x8xbf16>, vector<2x8x8xf32> -> vector<2x8x8xf32>
    "tpu.trace_stop"() : () -> ()
    %305 = vector.broadcast %cst_17 : f32 to vector<2x8x8xf32>
    %306 = arith.mulf %304, %305 : vector<2x8x8xf32>
    %cst_87 = arith.constant dense<0xFF800000> : vector<2x8xf32>
    %307 = vector.multi_reduction <maximumf>, %306, %cst_87 [2] : vector<2x8x8xf32> to vector<2x8xf32>
    %308 = vector.shape_cast %307 : vector<2x8xf32> to vector<2x8x1xf32>
    %309 = vector.broadcast %308 : vector<2x8x1xf32> to vector<2x8x8xf32>
    %310 = arith.subf %306, %309 : vector<2x8x8xf32>
    %311 = math.exp %310 : vector<2x8x8xf32>
    %cst_88 = arith.constant dense<0.000000e+00> : vector<2x8xf32>
    %312 = vector.multi_reduction <add>, %311, %cst_88 [2] : vector<2x8x8xf32> to vector<2x8xf32>
    %313 = vector.shape_cast %312 : vector<2x8xf32> to vector<2x8x1xf32>
    %314 = tpu.reciprocal %313 {approx = true} : vector<2x8x1xf32> -> vector<2x8x1xf32>
    %315 = vector.broadcast %314 : vector<2x8x1xf32> to vector<2x8x8xf32>
    %316 = arith.mulf %311, %315 : vector<2x8x8xf32>
    %317 = arith.truncf %316 : vector<2x8x8xf32> to vector<2x8x8xbf16>
    "tpu.trace_start"() <{level = 10 : i32, message = "btu,bud->btd"}> : () -> ()
    %cst_89 = arith.constant dense<0.000000e+00> : vector<2x8x8xf32>
    %318 = tpu.matmul %317, %303, %cst_89 {dimension_numbers = #tpu.dot_dimension_numbers<[2], [1], [1], [2], [0, 0, 0, 1, 1, 2], [0], [0]>} : vector<2x8x8xbf16>, vector<2x8x8xbf16>, vector<2x8x8xf32> -> vector<2x8x8xf32>
    "tpu.trace_stop"() : () -> ()
    %319 = vector.shape_cast %318 : vector<2x8x8xf32> to vector<16x8xf32>
    %320 = vector.extract_strided_slice %244 {offsets = [0, 24], sizes = [16, 8], strides = [1, 1]} : vector<16x96xf32> to vector<16x8xf32>
    %321 = vector.shape_cast %320 : vector<16x8xf32> to vector<2x8x8xf32>
    %322 = arith.truncf %321 : vector<2x8x8xf32> to vector<2x8x8xbf16>
    %323 = vector.extract_strided_slice %244 {offsets = [0, 56], sizes = [16, 8], strides = [1, 1]} : vector<16x96xf32> to vector<16x8xf32>
    %324 = vector.shape_cast %323 : vector<16x8xf32> to vector<2x8x8xf32>
    %325 = arith.truncf %324 : vector<2x8x8xf32> to vector<2x8x8xbf16>
    %326 = vector.extract_strided_slice %244 {offsets = [0, 88], sizes = [16, 8], strides = [1, 1]} : vector<16x96xf32> to vector<16x8xf32>
    %327 = vector.shape_cast %326 : vector<16x8xf32> to vector<2x8x8xf32>
    %328 = arith.truncf %327 : vector<2x8x8xf32> to vector<2x8x8xbf16>
    "tpu.trace_start"() <{level = 10 : i32, message = "btd,bud->btu"}> : () -> ()
    %cst_90 = arith.constant dense<0.000000e+00> : vector<2x8x8xf32>
    %329 = tpu.matmul %322, %325, %cst_90 {dimension_numbers = #tpu.dot_dimension_numbers<[2], [2], [1], [1], [0, 0, 0, 1, 1, 1], [0], [0]>} : vector<2x8x8xbf16>, vector<2x8x8xbf16>, vector<2x8x8xf32> -> vector<2x8x8xf32>
    "tpu.trace_stop"() : () -> ()
    %330 = vector.broadcast %cst_17 : f32 to vector<2x8x8xf32>
    %331 = arith.mulf %329, %330 : vector<2x8x8xf32>
    %cst_91 = arith.constant dense<0xFF800000> : vector<2x8xf32>
    %332 = vector.multi_reduction <maximumf>, %331, %cst_91 [2] : vector<2x8x8xf32> to vector<2x8xf32>
    %333 = vector.shape_cast %332 : vector<2x8xf32> to vector<2x8x1xf32>
    %334 = vector.broadcast %333 : vector<2x8x1xf32> to vector<2x8x8xf32>
    %335 = arith.subf %331, %334 : vector<2x8x8xf32>
    %336 = math.exp %335 : vector<2x8x8xf32>
    %cst_92 = arith.constant dense<0.000000e+00> : vector<2x8xf32>
    %337 = vector.multi_reduction <add>, %336, %cst_92 [2] : vector<2x8x8xf32> to vector<2x8xf32>
    %338 = vector.shape_cast %337 : vector<2x8xf32> to vector<2x8x1xf32>
    %339 = tpu.reciprocal %338 {approx = true} : vector<2x8x1xf32> -> vector<2x8x1xf32>
    %340 = vector.broadcast %339 : vector<2x8x1xf32> to vector<2x8x8xf32>
    %341 = arith.mulf %336, %340 : vector<2x8x8xf32>
    %342 = arith.truncf %341 : vector<2x8x8xf32> to vector<2x8x8xbf16>
    "tpu.trace_start"() <{level = 10 : i32, message = "btu,bud->btd"}> : () -> ()
    %cst_93 = arith.constant dense<0.000000e+00> : vector<2x8x8xf32>
    %343 = tpu.matmul %342, %328, %cst_93 {dimension_numbers = #tpu.dot_dimension_numbers<[2], [1], [1], [2], [0, 0, 0, 1, 1, 2], [0], [0]>} : vector<2x8x8xbf16>, vector<2x8x8xbf16>, vector<2x8x8xf32> -> vector<2x8x8xf32>
    "tpu.trace_stop"() : () -> ()
    %344 = vector.shape_cast %343 : vector<2x8x8xf32> to vector<16x8xf32>
    %345 = tpu.concatenate %269, %294, %319, %344 in 1 : vector<16x8xf32>, vector<16x8xf32>, vector<16x8xf32>, vector<16x8xf32> -> vector<16x32xf32>
    %346 = arith.index_cast %c1_i32 : i32 to index
    %c0_94 = arith.constant 0 : index
    %c0_95 = arith.constant 0 : index
    %347 = vector.load %arg9[%346, %c0_94, %c0_95] : memref<2x32x32xbf16, #tpu.memory_space<vmem>>, vector<1x32x32xbf16>
    %348 = vector.shape_cast %347 : vector<1x32x32xbf16> to vector<32x32xbf16>
    %349 = arith.truncf %345 : vector<16x32xf32> to vector<16x32xbf16>
    %cst_96 = arith.constant dense<0.000000e+00> : vector<16x32xf32>
    %350 = tpu.matmul %349, %348, %cst_96 {dimension_numbers = #tpu.dot_dimension_numbers<[1], [0], [0], [1], [0, 0, 1, 1], [], []>} : vector<16x32xbf16>, vector<32x32xbf16>, vector<16x32xf32> -> vector<16x32xf32>
    %351 = arith.index_cast %c1_i32 : i32 to index
    %c0_97 = arith.constant 0 : index
    %c0_98 = arith.constant 0 : index
    %352 = vector.load %arg10[%351, %c0_97, %c0_98] : memref<2x1x32xf32, #tpu.memory_space<vmem>>, vector<1x1x32xf32>
    %353 = vector.shape_cast %352 : vector<1x1x32xf32> to vector<1x32xf32>
    %354 = vector.broadcast %353 : vector<1x32xf32> to vector<16x32xf32>
    %355 = arith.addf %350, %354 : vector<16x32xf32>
    %356 = arith.addf %234, %355 : vector<16x32xf32>
    %357 = arith.index_cast %c1_i32 : i32 to index
    %c0_99 = arith.constant 0 : index
    %c0_100 = arith.constant 0 : index
    %358 = vector.load %arg11[%357, %c0_99, %c0_100] : memref<2x1x32xf32, #tpu.memory_space<vmem>>, vector<1x1x32xf32>
    %359 = vector.shape_cast %358 : vector<1x1x32xf32> to vector<1x32xf32>
    %360 = arith.index_cast %c1_i32 : i32 to index
    %c0_101 = arith.constant 0 : index
    %c0_102 = arith.constant 0 : index
    %361 = vector.load %arg12[%360, %c0_101, %c0_102] : memref<2x1x32xf32, #tpu.memory_space<vmem>>, vector<1x1x32xf32>
    %362 = vector.shape_cast %361 : vector<1x1x32xf32> to vector<1x32xf32>
    %cst_103 = arith.constant dense<0.000000e+00> : vector<16xf32>
    %363 = vector.multi_reduction <add>, %356, %cst_103 [1] : vector<16x32xf32> to vector<16xf32>
    %364 = vector.shape_cast %363 : vector<16xf32> to vector<16x1xf32>
    %cst_104 = arith.constant 3.200000e+01 : f32
    %365 = vector.broadcast %cst_104 : f32 to vector<16x1xf32>
    %366 = arith.divf %364, %365 : vector<16x1xf32>
    %367 = vector.broadcast %366 : vector<16x1xf32> to vector<16x32xf32>
    %368 = arith.subf %356, %367 : vector<16x32xf32>
    %369 = arith.mulf %368, %368 : vector<16x32xf32>
    %cst_105 = arith.constant dense<0.000000e+00> : vector<16xf32>
    %370 = vector.multi_reduction <add>, %369, %cst_105 [1] : vector<16x32xf32> to vector<16xf32>
    %371 = vector.shape_cast %370 : vector<16xf32> to vector<16x1xf32>
    %cst_106 = arith.constant 3.200000e+01 : f32
    %372 = vector.broadcast %cst_106 : f32 to vector<16x1xf32>
    %373 = arith.divf %371, %372 : vector<16x1xf32>
    %374 = vector.broadcast %366 : vector<16x1xf32> to vector<16x32xf32>
    %375 = arith.subf %356, %374 : vector<16x32xf32>
    %cst_107 = arith.constant 9.99999996E-13 : f32
    %376 = vector.broadcast %cst_107 : f32 to vector<16x1xf32>
    %377 = arith.addf %373, %376 : vector<16x1xf32>
    %378 = math.rsqrt %377 : vector<16x1xf32>
    %379 = vector.broadcast %378 : vector<16x1xf32> to vector<16x32xf32>
    %380 = arith.mulf %375, %379 : vector<16x32xf32>
    %381 = vector.broadcast %359 : vector<1x32xf32> to vector<16x32xf32>
    %382 = arith.mulf %380, %381 : vector<16x32xf32>
    %383 = vector.broadcast %362 : vector<1x32xf32> to vector<16x32xf32>
    %384 = arith.addf %382, %383 : vector<16x32xf32>
    %385 = arith.index_cast %c1_i32 : i32 to index
    %c0_108 = arith.constant 0 : index
    %c0_109 = arith.constant 0 : index
    %386 = vector.load %arg13[%385, %c0_108, %c0_109] : memref<2x32x64xbf16, #tpu.memory_space<vmem>>, vector<1x32x64xbf16>
    %387 = vector.shape_cast %386 : vector<1x32x64xbf16> to vector<32x64xbf16>
    %388 = arith.truncf %384 : vector<16x32xf32> to vector<16x32xbf16>
    %cst_110 = arith.constant dense<0.000000e+00> : vector<16x64xf32>
    %389 = tpu.matmul %388, %387, %cst_110 {dimension_numbers = #tpu.dot_dimension_numbers<[1], [0], [0], [1], [0, 0, 1, 1], [], []>} : vector<16x32xbf16>, vector<32x64xbf16>, vector<16x64xf32> -> vector<16x64xf32>
    %390 = arith.index_cast %c1_i32 : i32 to index
    %c0_111 = arith.constant 0 : index
    %c0_112 = arith.constant 0 : index
    %391 = vector.load %arg14[%390, %c0_111, %c0_112] : memref<2x1x64xf32, #tpu.memory_space<vmem>>, vector<1x1x64xf32>
    %392 = vector.shape_cast %391 : vector<1x1x64xf32> to vector<1x64xf32>
    %393 = vector.broadcast %392 : vector<1x64xf32> to vector<16x64xf32>
    %394 = arith.addf %389, %393 : vector<16x64xf32>
    %cst_113 = arith.constant 0.000000e+00 : f32
    %395 = vector.broadcast %cst_113 : f32 to vector<16x64xf32>
    %396 = arith.maximumf %394, %395 : vector<16x64xf32>
    %397 = arith.index_cast %c1_i32 : i32 to index
    %c0_114 = arith.constant 0 : index
    %c0_115 = arith.constant 0 : index
    %398 = vector.load %arg15[%397, %c0_114, %c0_115] : memref<2x64x32xbf16, #tpu.memory_space<vmem>>, vector<1x64x32xbf16>
    %399 = vector.shape_cast %398 : vector<1x64x32xbf16> to vector<64x32xbf16>
    %400 = arith.truncf %396 : vector<16x64xf32> to vector<16x64xbf16>
    %cst_116 = arith.constant dense<0.000000e+00> : vector<16x32xf32>
    %401 = tpu.matmul %400, %399, %cst_116 {dimension_numbers = #tpu.dot_dimension_numbers<[1], [0], [0], [1], [0, 0, 1, 1], [], []>} : vector<16x64xbf16>, vector<64x32xbf16>, vector<16x32xf32> -> vector<16x32xf32>
    %402 = arith.index_cast %c1_i32 : i32 to index
    %c0_117 = arith.constant 0 : index
    %c0_118 = arith.constant 0 : index
    %403 = vector.load %arg16[%402, %c0_117, %c0_118] : memref<2x1x32xf32, #tpu.memory_space<vmem>>, vector<1x1x32xf32>
    %404 = vector.shape_cast %403 : vector<1x1x32xf32> to vector<1x32xf32>
    %405 = vector.broadcast %404 : vector<1x32xf32> to vector<16x32xf32>
    %406 = arith.addf %401, %405 : vector<16x32xf32>
    %407 = arith.addf %384, %406 : vector<16x32xf32>
    %408 = arith.index_cast %c1_i32 : i32 to index
    %c0_119 = arith.constant 0 : index
    %c0_120 = arith.constant 0 : index
    %409 = vector.load %arg17[%408, %c0_119, %c0_120] : memref<2x1x32xf32, #tpu.memory_space<vmem>>, vector<1x1x32xf32>
    %410 = vector.shape_cast %409 : vector<1x1x32xf32> to vector<1x32xf32>
    %411 = arith.index_cast %c1_i32 : i32 to index
    %c0_121 = arith.constant 0 : index
    %c0_122 = arith.constant 0 : index
    %412 = vector.load %arg18[%411, %c0_121, %c0_122] : memref<2x1x32xf32, #tpu.memory_space<vmem>>, vector<1x1x32xf32>
    %413 = vector.shape_cast %412 : vector<1x1x32xf32> to vector<1x32xf32>
    %cst_123 = arith.constant dense<0.000000e+00> : vector<16xf32>
    %414 = vector.multi_reduction <add>, %407, %cst_123 [1] : vector<16x32xf32> to vector<16xf32>
    %415 = vector.shape_cast %414 : vector<16xf32> to vector<16x1xf32>
    %cst_124 = arith.constant 3.200000e+01 : f32
    %416 = vector.broadcast %cst_124 : f32 to vector<16x1xf32>
    %417 = arith.divf %415, %416 : vector<16x1xf32>
    %418 = vector.broadcast %417 : vector<16x1xf32> to vector<16x32xf32>
    %419 = arith.subf %407, %418 : vector<16x32xf32>
    %420 = arith.mulf %419, %419 : vector<16x32xf32>
    %cst_125 = arith.constant dense<0.000000e+00> : vector<16xf32>
    %421 = vector.multi_reduction <add>, %420, %cst_125 [1] : vector<16x32xf32> to vector<16xf32>
    %422 = vector.shape_cast %421 : vector<16xf32> to vector<16x1xf32>
    %cst_126 = arith.constant 3.200000e+01 : f32
    %423 = vector.broadcast %cst_126 : f32 to vector<16x1xf32>
    %424 = arith.divf %422, %423 : vector<16x1xf32>
    %425 = vector.broadcast %417 : vector<16x1xf32> to vector<16x32xf32>
    %426 = arith.subf %407, %425 : vector<16x32xf32>
    %cst_127 = arith.constant 9.99999996E-13 : f32
    %427 = vector.broadcast %cst_127 : f32 to vector<16x1xf32>
    %428 = arith.addf %424, %427 : vector<16x1xf32>
    %429 = math.rsqrt %428 : vector<16x1xf32>
    %430 = vector.broadcast %429 : vector<16x1xf32> to vector<16x32xf32>
    %431 = arith.mulf %426, %430 : vector<16x32xf32>
    %432 = vector.broadcast %410 : vector<1x32xf32> to vector<16x32xf32>
    %433 = arith.mulf %431, %432 : vector<16x32xf32>
    %434 = vector.broadcast %413 : vector<1x32xf32> to vector<16x32xf32>
    %435 = arith.addf %433, %434 : vector<16x32xf32>
    %c2_i32 = arith.constant 2 : i32
    %c0_128 = arith.constant 0 : index
    %c0_129 = arith.constant 0 : index
    %436 = vector.load %arg19[%c0_128, %c0_129] : memref<1x32xf32, #tpu.memory_space<vmem>>, vector<1x32xf32>
    %c0_130 = arith.constant 0 : index
    %c0_131 = arith.constant 0 : index
    %437 = vector.load %arg20[%c0_130, %c0_131] : memref<1x32xf32, #tpu.memory_space<vmem>>, vector<1x32xf32>
    %cst_132 = arith.constant dense<0.000000e+00> : vector<16xf32>
    %438 = vector.multi_reduction <add>, %435, %cst_132 [1] : vector<16x32xf32> to vector<16xf32>
    %439 = vector.shape_cast %438 : vector<16xf32> to vector<16x1xf32>
    %cst_133 = arith.constant 3.200000e+01 : f32
    %440 = vector.broadcast %cst_133 : f32 to vector<16x1xf32>
    %441 = arith.divf %439, %440 : vector<16x1xf32>
    %442 = vector.broadcast %441 : vector<16x1xf32> to vector<16x32xf32>
    %443 = arith.subf %435, %442 : vector<16x32xf32>
    %444 = arith.mulf %443, %443 : vector<16x32xf32>
    %cst_134 = arith.constant dense<0.000000e+00> : vector<16xf32>
    %445 = vector.multi_reduction <add>, %444, %cst_134 [1] : vector<16x32xf32> to vector<16xf32>
    %446 = vector.shape_cast %445 : vector<16xf32> to vector<16x1xf32>
    %cst_135 = arith.constant 3.200000e+01 : f32
    %447 = vector.broadcast %cst_135 : f32 to vector<16x1xf32>
    %448 = arith.divf %446, %447 : vector<16x1xf32>
    %449 = vector.broadcast %441 : vector<16x1xf32> to vector<16x32xf32>
    %450 = arith.subf %435, %449 : vector<16x32xf32>
    %cst_136 = arith.constant 9.99999996E-13 : f32
    %451 = vector.broadcast %cst_136 : f32 to vector<16x1xf32>
    %452 = arith.addf %448, %451 : vector<16x1xf32>
    %453 = math.rsqrt %452 : vector<16x1xf32>
    %454 = vector.broadcast %453 : vector<16x1xf32> to vector<16x32xf32>
    %455 = arith.mulf %450, %454 : vector<16x32xf32>
    %456 = vector.broadcast %436 : vector<1x32xf32> to vector<16x32xf32>
    %457 = arith.mulf %455, %456 : vector<16x32xf32>
    %458 = vector.broadcast %437 : vector<1x32xf32> to vector<16x32xf32>
    %459 = arith.addf %457, %458 : vector<16x32xf32>
    %c0_137 = arith.constant 0 : index
    %c0_138 = arith.constant 0 : index
    %460 = vector.load %arg21[%c0_137, %c0_138] : memref<16x32xf32, #tpu.memory_space<vmem>>, vector<16x32xf32>
    tpu.vector_store %arg21[%c0_137, %c0_138], %459 {strides = array<i32>} : memref<16x32xf32, #tpu.memory_space<vmem>>, vector<16x32xf32>,
    return
  }
  func.func @transform_0(%arg0: i32) -> (i32, i32) {
    %c0_i32 = arith.constant 0 : i32
    %c0_i32_0 = arith.constant 0 : i32
    return %arg0, %c0_i32 : i32, i32
  }
  func.func @transform_1(%arg0: i32) -> (i32, i32) {
    %c0_i32 = arith.constant 0 : i32
    %c0_i32_0 = arith.constant 0 : i32
    %c0_i32_1 = arith.constant 0 : i32
    return %c0_i32, %c0_i32_0 : i32, i32
  }
  func.func @transform_2(%arg0: i32) -> (i32, i32) {
    %c0_i32 = arith.constant 0 : i32
    %c0_i32_0 = arith.constant 0 : i32
    %c0_i32_1 = arith.constant 0 : i32
    return %c0_i32, %c0_i32_0 : i32, i32
  }
  func.func @transform_3(%arg0: i32) -> (i32, i32) {
    %c0_i32 = arith.constant 0 : i32
    %c0_i32_0 = arith.constant 0 : i32
    %c0_i32_1 = arith.constant 0 : i32
    return %c0_i32, %c0_i32_0 : i32, i32
  }
  func.func @transform_4(%arg0: i32) -> (i32, i32) {
    %c0_i32 = arith.constant 0 : i32
    %c0_i32_0 = arith.constant 0 : i32
    %c0_i32_1 = arith.constant 0 : i32
    return %c0_i32, %c0_i32_0 : i32, i32
  }
  func.func @transform_5(%arg0: i32) -> (i32, i32) {
    %c0_i32 = arith.constant 0 : i32
    %c0_i32_0 = arith.constant 0 : i32
    %c0_i32_1 = arith.constant 0 : i32
    return %c0_i32, %c0_i32_0 : i32, i32
  }
  func.func @transform_6(%arg0: i32) -> (i32, i32, i32) {
    %c0_i32 = arith.constant 0 : i32
    %c0_i32_0 = arith.constant 0 : i32
    %c0_i32_1 = arith.constant 0 : i32
    %c0_i32_2 = arith.constant 0 : i32
    return %c0_i32, %c0_i32_0, %c0_i32_1 : i32, i32, i32
  }
  func.func @transform_7(%arg0: i32) -> (i32, i32, i32) {
    %c0_i32 = arith.constant 0 : i32
    %c0_i32_0 = arith.constant 0 : i32
    %c0_i32_1 = arith.constant 0 : i32
    %c0_i32_2 = arith.constant 0 : i32
    return %c0_i32, %c0_i32_0, %c0_i32_1 : i32, i32, i32
  }
  func.func @transform_8(%arg0: i32) -> (i32, i32, i32) {
    %c0_i32 = arith.constant 0 : i32
    %c0_i32_0 = arith.constant 0 : i32
    %c0_i32_1 = arith.constant 0 : i32
    %c0_i32_2 = arith.constant 0 : i32
    return %c0_i32, %c0_i32_0, %c0_i32_1 : i32, i32, i32
  }
  func.func @transform_9(%arg0: i32) -> (i32, i32, i32) {
    %c0_i32 = arith.constant 0 : i32
    %c0_i32_0 = arith.constant 0 : i32
    %c0_i32_1 = arith.constant 0 : i32
    %c0_i32_2 = arith.constant 0 : i32
    return %c0_i32, %c0_i32_0, %c0_i32_1 : i32, i32, i32
  }
  func.func @transform_10(%arg0: i32) -> (i32, i32, i32) {
    %c0_i32 = arith.constant 0 : i32
    %c0_i32_0 = arith.constant 0 : i32
    %c0_i32_1 = arith.constant 0 : i32
    %c0_i32_2 = arith.constant 0 : i32
    return %c0_i32, %c0_i32_0, %c0_i32_1 : i32, i32, i32
  }
  func.func @transform_11(%arg0: i32) -> (i32, i32, i32) {
    %c0_i32 = arith.constant 0 : i32
    %c0_i32_0 = arith.constant 0 : i32
    %c0_i32_1 = arith.constant 0 : i32
    %c0_i32_2 = arith.constant 0 : i32
    return %c0_i32, %c0_i32_0, %c0_i32_1 : i32, i32, i32
  }
  func.func @transform_12(%arg0: i32) -> (i32, i32, i32) {
    %c0_i32 = arith.constant 0 : i32
    %c0_i32_0 = arith.constant 0 : i32
    %c0_i32_1 = arith.constant 0 : i32
    %c0_i32_2 = arith.constant 0 : i32
    return %c0_i32, %c0_i32_0, %c0_i32_1 : i32, i32, i32
  }
  func.func @transform_13(%arg0: i32) -> (i32, i32, i32) {
    %c0_i32 = arith.constant 0 : i32
    %c0_i32_0 = arith.constant 0 : i32
    %c0_i32_1 = arith.constant 0 : i32
    %c0_i32_2 = arith.constant 0 : i32
    return %c0_i32, %c0_i32_0, %c0_i32_1 : i32, i32, i32
  }
  func.func @transform_14(%arg0: i32) -> (i32, i32, i32) {
    %c0_i32 = arith.constant 0 : i32
    %c0_i32_0 = arith.constant 0 : i32
    %c0_i32_1 = arith.constant 0 : i32
    %c0_i32_2 = arith.constant 0 : i32
    return %c0_i32, %c0_i32_0, %c0_i32_1 : i32, i32, i32
  }
  func.func @transform_15(%arg0: i32) -> (i32, i32, i32) {
    %c0_i32 = arith.constant 0 : i32
    %c0_i32_0 = arith.constant 0 : i32
    %c0_i32_1 = arith.constant 0 : i32
    %c0_i32_2 = arith.constant 0 : i32
    return %c0_i32, %c0_i32_0, %c0_i32_1 : i32, i32, i32
  }
  func.func @transform_16(%arg0: i32) -> (i32, i32, i32) {
    %c0_i32 = arith.constant 0 : i32
    %c0_i32_0 = arith.constant 0 : i32
    %c0_i32_1 = arith.constant 0 : i32
    %c0_i32_2 = arith.constant 0 : i32
    return %c0_i32, %c0_i32_0, %c0_i32_1 : i32, i32, i32
  }
  func.func @transform_17(%arg0: i32) -> (i32, i32, i32) {
    %c0_i32 = arith.constant 0 : i32
    %c0_i32_0 = arith.constant 0 : i32
    %c0_i32_1 = arith.constant 0 : i32
    %c0_i32_2 = arith.constant 0 : i32
    return %c0_i32, %c0_i32_0, %c0_i32_1 : i32, i32, i32
  }
  func.func @transform_18(%arg0: i32) -> (i32, i32) {
    %c0_i32 = arith.constant 0 : i32
    %c0_i32_0 = arith.constant 0 : i32
    %c0_i32_1 = arith.constant 0 : i32
    return %c0_i32, %c0_i32_0 : i32, i32
  }
  func.func @transform_19(%arg0: i32) -> (i32, i32) {
    %c0_i32 = arith.constant 0 : i32
    %c0_i32_0 = arith.constant 0 : i32
    %c0_i32_1 = arith.constant 0 : i32
    return %c0_i32, %c0_i32_0 : i32, i32
  }
  func.func @transform_20(%arg0: i32) -> (i32, i32) {
    %c0_i32 = arith.constant 0 : i32
    %c0_i32_0 = arith.constant 0 : i32
    return %arg0, %c0_i32 : i32, i32
  }
}

module attributes {stable_mosaic.version = 11 : i64} {
  func.func @_fused_encoder_kernel(%arg0: i32, %arg1: memref<16x16xbf16, #tpu.memory_space<vmem>>, %arg2: memref<16x32xbf16, #tpu.memory_space<vmem>>, %arg3: memref<1x32xf32, #tpu.memory_space<vmem>>, %arg4: memref<1x32xf32, #tpu.memory_space<vmem>>, %arg5: memref<1x32xf32, #tpu.memory_space<vmem>>, %arg6: memref<16x32xf32, #tpu.memory_space<vmem>>, %arg7: memref<2x32x96xbf16, #tpu.memory_space<vmem>>, %arg8: memref<2x1x96xf32, #tpu.memory_space<vmem>>, %arg9: memref<2x32x32xbf16, #tpu.memory_space<vmem>>, %arg10: memref<2x1x32xf32, #tpu.memory_space<vmem>>, %arg11: memref<2x1x32xf32, #tpu.memory_space<vmem>>, %arg12: memref<2x1x32xf32, #tpu.memory_space<vmem>>, %arg13: memref<2x32x64xbf16, #tpu.memory_space<vmem>>, %arg14: memref<2x1x64xf32, #tpu.memory_space<vmem>>, %arg15: memref<2x64x32xbf16, #tpu.memory_space<vmem>>, %arg16: memref<2x1x32xf32, #tpu.memory_space<vmem>>, %arg17: memref<2x1x32xf32, #tpu.memory_space<vmem>>, %arg18: memref<2x1x32xf32, #tpu.memory_space<vmem>>, %arg19: memref<1x32xf32, #tpu.memory_space<vmem>>, %arg20: memref<1x32xf32, #tpu.memory_space<vmem>>, %arg21: memref<16x32xf32, #tpu.memory_space<vmem>>) attributes {dimension_semantics = [#tpu.dimension_semantics<parallel>], iteration_bounds = array<i64: 1>, scalar_prefetch = 0 : i64, scratch_operands = 0 : i64, tpu.core_type = #tpu.core_type<tc>, window_params = [{transform_indices = @transform_0, window_bounds = array<i64: 16, 16>}, {pipeline_mode = #tpu.pipeline_mode<synchronous>, transform_indices = @transform_1, window_bounds = array<i64: 16, 32>}, {pipeline_mode = #tpu.pipeline_mode<synchronous>, transform_indices = @transform_2, window_bounds = array<i64: 1, 32>}, {pipeline_mode = #tpu.pipeline_mode<synchronous>, transform_indices = @transform_3, window_bounds = array<i64: 1, 32>}, {pipeline_mode = #tpu.pipeline_mode<synchronous>, transform_indices = @transform_4, window_bounds = array<i64: 1, 32>}, {pipeline_mode = #tpu.pipeline_mode<synchronous>, transform_indices = @transform_5, window_bounds = array<i64: 16, 32>}, {pipeline_mode = #tpu.pipeline_mode<synchronous>, transform_indices = @transform_6, window_bounds = array<i64: 2, 32, 96>}, {pipeline_mode = #tpu.pipeline_mode<synchronous>, transform_indices = @transform_7, window_bounds = array<i64: 2, 1, 96>}, {pipeline_mode = #tpu.pipeline_mode<synchronous>, transform_indices = @transform_8, window_bounds = array<i64: 2, 32, 32>}, {pipeline_mode = #tpu.pipeline_mode<synchronous>, transform_indices = @transform_9, window_bounds = array<i64: 2, 1, 32>}, {pipeline_mode = #tpu.pipeline_mode<synchronous>, transform_indices = @transform_10, window_bounds = array<i64: 2, 1, 32>}, {pipeline_mode = #tpu.pipeline_mode<synchronous>, transform_indices = @transform_11, window_bounds = array<i64: 2, 1, 32>}, {pipeline_mode = #tpu.pipeline_mode<synchronous>, transform_indices = @transform_12, window_bounds = array<i64: 2, 32, 64>}, {pipeline_mode = #tpu.pipeline_mode<synchronous>, transform_indices = @transform_13, window_bounds = array<i64: 2, 1, 64>}, {pipeline_mode = #tpu.pipeline_mode<synchronous>, transform_indices = @transform_14, window_bounds = array<i64: 2, 64, 32>}, {pipeline_mode = #tpu.pipeline_mode<synchronous>, transform_indices = @transform_15, window_bounds = array<i64: 2, 1, 32>}, {pipeline_mode = #tpu.pipeline_mode<synchronous>, transform_indices = @transform_16, window_bounds = array<i64: 2, 1, 32>}, {pipeline_mode = #tpu.pipeline_mode<synchronous>, transform_indices = @transform_17, window_bounds = array<i64: 2, 1, 32>}, {pipeline_mode = #tpu.pipeline_mode<synchronous>, transform_indices = @transform_18, window_bounds = array<i64: 1, 32>}, {pipeline_mode = #tpu.pipeline_mode<synchronous>, transform_indices = @transform_19, window_bounds = array<i64: 1, 32>}, {transform_indices = @transform_20, window_bounds = array<i64: 16, 32>}]} {
    %c0 = arith.constant 0 : index
    %c0_0 = arith.constant 0 : index
    %0 = vector.load %arg1[%c0, %c0_0] : memref<16x16xbf16, #tpu.memory_space<vmem>>, vector<16x16xbf16>
    %c0_1 = arith.constant 0 : index
    %c0_2 = arith.constant 0 : index
    %1 = vector.load %arg2[%c0_1, %c0_2] : memref<16x32xbf16, #tpu.memory_space<vmem>>, vector<16x32xbf16>
    %cst = arith.constant dense<0.000000e+00> : vector<16x32xf32>
    %2 = tpu.matmul %0, %1, %cst {dimension_numbers = #tpu.dot_dimension_numbers<[1], [0], [0], [1], [0, 0, 1, 1], [], []>} : vector<16x16xbf16>, vector<16x32xbf16>, vector<16x32xf32> -> vector<16x32xf32>
    %c0_3 = arith.constant 0 : index
    %c0_4 = arith.constant 0 : index
    %3 = vector.load %arg3[%c0_3, %c0_4] : memref<1x32xf32, #tpu.memory_space<vmem>>, vector<1x32xf32>
    %4 = vector.broadcast %3 : vector<1x32xf32> to vector<16x32xf32>
    %5 = arith.addf %2, %4 : vector<16x32xf32>
    %c0_5 = arith.constant 0 : index
    %c0_6 = arith.constant 0 : index
    %6 = vector.load %arg4[%c0_5, %c0_6] : memref<1x32xf32, #tpu.memory_space<vmem>>, vector<1x32xf32>
    %c0_7 = arith.constant 0 : index
    %c0_8 = arith.constant 0 : index
    %7 = vector.load %arg5[%c0_7, %c0_8] : memref<1x32xf32, #tpu.memory_space<vmem>>, vector<1x32xf32>
    %cst_9 = arith.constant dense<0.000000e+00> : vector<16xf32>
    %8 = vector.multi_reduction <add>, %5, %cst_9 [1] : vector<16x32xf32> to vector<16xf32>
    %9 = vector.shape_cast %8 : vector<16xf32> to vector<16x1xf32>
    %cst_10 = arith.constant 3.200000e+01 : f32
    %10 = vector.broadcast %cst_10 : f32 to vector<16x1xf32>
    %11 = arith.divf %9, %10 : vector<16x1xf32>
    %12 = vector.broadcast %11 : vector<16x1xf32> to vector<16x32xf32>
    %13 = arith.subf %5, %12 : vector<16x32xf32>
    %14 = arith.mulf %13, %13 : vector<16x32xf32>
    %cst_11 = arith.constant dense<0.000000e+00> : vector<16xf32>
    %15 = vector.multi_reduction <add>, %14, %cst_11 [1] : vector<16x32xf32> to vector<16xf32>
    %16 = vector.shape_cast %15 : vector<16xf32> to vector<16x1xf32>
    %cst_12 = arith.constant 3.200000e+01 : f32
    %17 = vector.broadcast %cst_12 : f32 to vector<16x1xf32>
    %18 = arith.divf %16, %17 : vector<16x1xf32>
    %19 = vector.broadcast %11 : vector<16x1xf32> to vector<16x32xf32>
    %20 = arith.subf %5, %19 : vector<16x32xf32>
    %cst_13 = arith.constant 9.99999974E-6 : f32
    %21 = vector.broadcast %cst_13 : f32 to vector<16x1xf32>
    %22 = arith.addf %18, %21 : vector<16x1xf32>
    %23 = math.rsqrt %22 : vector<16x1xf32>
    %24 = vector.broadcast %23 : vector<16x1xf32> to vector<16x32xf32>
    %25 = arith.mulf %20, %24 : vector<16x32xf32>
    %26 = vector.broadcast %6 : vector<1x32xf32> to vector<16x32xf32>
    %27 = arith.mulf %25, %26 : vector<16x32xf32>
    %28 = vector.broadcast %7 : vector<1x32xf32> to vector<16x32xf32>
    %29 = arith.addf %27, %28 : vector<16x32xf32>
    %cst_14 = arith.constant 0.000000e+00 : f32
    %30 = vector.broadcast %cst_14 : f32 to vector<16x32xf32>
    %31 = arith.maximumf %29, %30 : vector<16x32xf32>
    %c0_15 = arith.constant 0 : index
    %c0_16 = arith.constant 0 : index
    %32 = vector.load %arg6[%c0_15, %c0_16] : memref<16x32xf32, #tpu.memory_space<vmem>>, vector<16x32xf32>
    %33 = arith.addf %31, %32 : vector<16x32xf32>
    %cst_17 = arith.constant 0.353553385 : f32
    %c0_i32 = arith.constant 0 : i32
    %34 = arith.index_cast %c0_i32 : i32 to index
    %c0_18 = arith.constant 0 : index
    %c0_19 = arith.constant 0 : index
    %35 = vector.load %arg7[%34, %c0_18, %c0_19] : memref<2x32x96xbf16, #tpu.memory_space<vmem>>, vector<1x32x96xbf16>
    %36 = vector.shape_cast %35 : vector<1x32x96xbf16> to vector<32x96xbf16>
    %37 = arith.truncf %33 : vector<16x32xf32> to vector<16x32xbf16>
    %cst_20 = arith.constant dense<0.000000e+00> : vector<16x96xf32>
    %38 = tpu.matmul %37, %36, %cst_20 {dimension_numbers = #tpu.dot_dimension_numbers<[1], [0], [0], [1], [0, 0, 1, 1], [], []>} : vector<16x32xbf16>, vector<32x96xbf16>, vector<16x96xf32> -> vector<16x96xf32>
    %39 = arith.index_cast %c0_i32 : i32 to index
    %c0_21 = arith.constant 0 : index
    %c0_22 = arith.constant 0 : index
    %40 = vector.load %arg8[%39, %c0_21, %c0_22] : memref<2x1x96xf32, #tpu.memory_space<vmem>>, vector<1x1x96xf32>
    %41 = vector.shape_cast %40 : vector<1x1x96xf32> to vector<1x96xf32>
    %42 = vector.broadcast %41 : vector<1x96xf32> to vector<16x96xf32>
    %43 = arith.addf %38, %42 : vector<16x96xf32>
    %44 = vector.extract_strided_slice %43 {offsets = [0, 0], sizes = [16, 8], strides = [1, 1]} : vector<16x96xf32> to vector<16x8xf32>
    %45 = vector.shape_cast %44 : vector<16x8xf32> to vector<2x8x8xf32>
    %46 = arith.truncf %45 : vector<2x8x8xf32> to vector<2x8x8xbf16>
    %47 = vector.extract_strided_slice %43 {offsets = [0, 32], sizes = [16, 8], strides = [1, 1]} : vector<16x96xf32> to vector<16x8xf32>
    %48 = vector.shape_cast %47 : vector<16x8xf32> to vector<2x8x8xf32>
    %49 = arith.truncf %48 : vector<2x8x8xf32> to vector<2x8x8xbf16>
    %50 = vector.extract_strided_slice %43 {offsets = [0, 64], sizes = [16, 8], strides = [1, 1]} : vector<16x96xf32> to vector<16x8xf32>
    %51 = vector.shape_cast %50 : vector<16x8xf32> to vector<2x8x8xf32>
    %52 = arith.truncf %51 : vector<2x8x8xf32> to vector<2x8x8xbf16>
    "tpu.trace_start"() <{level = 10 : i32, message = "btd,bud->btu"}> : () -> ()
    %cst_23 = arith.constant dense<0.000000e+00> : vector<2x8x8xf32>
    %53 = tpu.matmul %46, %49, %cst_23 {dimension_numbers = #tpu.dot_dimension_numbers<[2], [2], [1], [1], [0, 0, 0, 1, 1, 1], [0], [0]>} : vector<2x8x8xbf16>, vector<2x8x8xbf16>, vector<2x8x8xf32> -> vector<2x8x8xf32>
    "tpu.trace_stop"() : () -> ()
    %54 = vector.broadcast %cst_17 : f32 to vector<2x8x8xf32>
    %55 = arith.mulf %53, %54 : vector<2x8x8xf32>
    %cst_24 = arith.constant dense<0xFF800000> : vector<2x8xf32>
    %56 = vector.multi_reduction <maximumf>, %55, %cst_24 [2] : vector<2x8x8xf32> to vector<2x8xf32>
    %57 = vector.shape_cast %56 : vector<2x8xf32> to vector<2x8x1xf32>
    %58 = vector.broadcast %57 : vector<2x8x1xf32> to vector<2x8x8xf32>
    %59 = arith.subf %55, %58 : vector<2x8x8xf32>
    %60 = math.exp %59 : vector<2x8x8xf32>
    %cst_25 = arith.constant dense<0.000000e+00> : vector<2x8xf32>
    %61 = vector.multi_reduction <add>, %60, %cst_25 [2] : vector<2x8x8xf32> to vector<2x8xf32>
    %62 = vector.shape_cast %61 : vector<2x8xf32> to vector<2x8x1xf32>
    %63 = tpu.reciprocal %62 {approx = true} : vector<2x8x1xf32> -> vector<2x8x1xf32>
    %64 = vector.broadcast %63 : vector<2x8x1xf32> to vector<2x8x8xf32>
    %65 = arith.mulf %60, %64 : vector<2x8x8xf32>
    %66 = arith.truncf %65 : vector<2x8x8xf32> to vector<2x8x8xbf16>
    "tpu.trace_start"() <{level = 10 : i32, message = "btu,bud->btd"}> : () -> ()
    %cst_26 = arith.constant dense<0.000000e+00> : vector<2x8x8xf32>
    %67 = tpu.matmul %66, %52, %cst_26 {dimension_numbers = #tpu.dot_dimension_numbers<[2], [1], [1], [2], [0, 0, 0, 1, 1, 2], [0], [0]>} : vector<2x8x8xbf16>, vector<2x8x8xbf16>, vector<2x8x8xf32> -> vector<2x8x8xf32>
    "tpu.trace_stop"() : () -> ()
    %68 = vector.shape_cast %67 : vector<2x8x8xf32> to vector<16x8xf32>
    %69 = vector.extract_strided_slice %43 {offsets = [0, 8], sizes = [16, 8], strides = [1, 1]} : vector<16x96xf32> to vector<16x8xf32>
    %70 = vector.shape_cast %69 : vector<16x8xf32> to vector<2x8x8xf32>
    %71 = arith.truncf %70 : vector<2x8x8xf32> to vector<2x8x8xbf16>
    %72 = vector.extract_strided_slice %43 {offsets = [0, 40], sizes = [16, 8], strides = [1, 1]} : vector<16x96xf32> to vector<16x8xf32>
    %73 = vector.shape_cast %72 : vector<16x8xf32> to vector<2x8x8xf32>
    %74 = arith.truncf %73 : vector<2x8x8xf32> to vector<2x8x8xbf16>
    %75 = vector.extract_strided_slice %43 {offsets = [0, 72], sizes = [16, 8], strides = [1, 1]} : vector<16x96xf32> to vector<16x8xf32>
    %76 = vector.shape_cast %75 : vector<16x8xf32> to vector<2x8x8xf32>
    %77 = arith.truncf %76 : vector<2x8x8xf32> to vector<2x8x8xbf16>
    "tpu.trace_start"() <{level = 10 : i32, message = "btd,bud->btu"}> : () -> ()
    %cst_27 = arith.constant dense<0.000000e+00> : vector<2x8x8xf32>
    %78 = tpu.matmul %71, %74, %cst_27 {dimension_numbers = #tpu.dot_dimension_numbers<[2], [2], [1], [1], [0, 0, 0, 1, 1, 1], [0], [0]>} : vector<2x8x8xbf16>, vector<2x8x8xbf16>, vector<2x8x8xf32> -> vector<2x8x8xf32>
    "tpu.trace_stop"() : () -> ()
    %79 = vector.broadcast %cst_17 : f32 to vector<2x8x8xf32>
    %80 = arith.mulf %78, %79 : vector<2x8x8xf32>
    %cst_28 = arith.constant dense<0xFF800000> : vector<2x8xf32>
    %81 = vector.multi_reduction <maximumf>, %80, %cst_28 [2] : vector<2x8x8xf32> to vector<2x8xf32>
    %82 = vector.shape_cast %81 : vector<2x8xf32> to vector<2x8x1xf32>
    %83 = vector.broadcast %82 : vector<2x8x1xf32> to vector<2x8x8xf32>
    %84 = arith.subf %80, %83 : vector<2x8x8xf32>
    %85 = math.exp %84 : vector<2x8x8xf32>
    %cst_29 = arith.constant dense<0.000000e+00> : vector<2x8xf32>
    %86 = vector.multi_reduction <add>, %85, %cst_29 [2] : vector<2x8x8xf32> to vector<2x8xf32>
    %87 = vector.shape_cast %86 : vector<2x8xf32> to vector<2x8x1xf32>
    %88 = tpu.reciprocal %87 {approx = true} : vector<2x8x1xf32> -> vector<2x8x1xf32>
    %89 = vector.broadcast %88 : vector<2x8x1xf32> to vector<2x8x8xf32>
    %90 = arith.mulf %85, %89 : vector<2x8x8xf32>
    %91 = arith.truncf %90 : vector<2x8x8xf32> to vector<2x8x8xbf16>
    "tpu.trace_start"() <{level = 10 : i32, message = "btu,bud->btd"}> : () -> ()
    %cst_30 = arith.constant dense<0.000000e+00> : vector<2x8x8xf32>
    %92 = tpu.matmul %91, %77, %cst_30 {dimension_numbers = #tpu.dot_dimension_numbers<[2], [1], [1], [2], [0, 0, 0, 1, 1, 2], [0], [0]>} : vector<2x8x8xbf16>, vector<2x8x8xbf16>, vector<2x8x8xf32> -> vector<2x8x8xf32>
    "tpu.trace_stop"() : () -> ()
    %93 = vector.shape_cast %92 : vector<2x8x8xf32> to vector<16x8xf32>
    %94 = vector.extract_strided_slice %43 {offsets = [0, 16], sizes = [16, 8], strides = [1, 1]} : vector<16x96xf32> to vector<16x8xf32>
    %95 = vector.shape_cast %94 : vector<16x8xf32> to vector<2x8x8xf32>
    %96 = arith.truncf %95 : vector<2x8x8xf32> to vector<2x8x8xbf16>
    %97 = vector.extract_strided_slice %43 {offsets = [0, 48], sizes = [16, 8], strides = [1, 1]} : vector<16x96xf32> to vector<16x8xf32>
    %98 = vector.shape_cast %97 : vector<16x8xf32> to vector<2x8x8xf32>
    %99 = arith.truncf %98 : vector<2x8x8xf32> to vector<2x8x8xbf16>
    %100 = vector.extract_strided_slice %43 {offsets = [0, 80], sizes = [16, 8], strides = [1, 1]} : vector<16x96xf32> to vector<16x8xf32>
    %101 = vector.shape_cast %100 : vector<16x8xf32> to vector<2x8x8xf32>
    %102 = arith.truncf %101 : vector<2x8x8xf32> to vector<2x8x8xbf16>
    "tpu.trace_start"() <{level = 10 : i32, message = "btd,bud->btu"}> : () -> ()
    %cst_31 = arith.constant dense<0.000000e+00> : vector<2x8x8xf32>
    %103 = tpu.matmul %96, %99, %cst_31 {dimension_numbers = #tpu.dot_dimension_numbers<[2], [2], [1], [1], [0, 0, 0, 1, 1, 1], [0], [0]>} : vector<2x8x8xbf16>, vector<2x8x8xbf16>, vector<2x8x8xf32> -> vector<2x8x8xf32>
    "tpu.trace_stop"() : () -> ()
    %104 = vector.broadcast %cst_17 : f32 to vector<2x8x8xf32>
    %105 = arith.mulf %103, %104 : vector<2x8x8xf32>
    %cst_32 = arith.constant dense<0xFF800000> : vector<2x8xf32>
    %106 = vector.multi_reduction <maximumf>, %105, %cst_32 [2] : vector<2x8x8xf32> to vector<2x8xf32>
    %107 = vector.shape_cast %106 : vector<2x8xf32> to vector<2x8x1xf32>
    %108 = vector.broadcast %107 : vector<2x8x1xf32> to vector<2x8x8xf32>
    %109 = arith.subf %105, %108 : vector<2x8x8xf32>
    %110 = math.exp %109 : vector<2x8x8xf32>
    %cst_33 = arith.constant dense<0.000000e+00> : vector<2x8xf32>
    %111 = vector.multi_reduction <add>, %110, %cst_33 [2] : vector<2x8x8xf32> to vector<2x8xf32>
    %112 = vector.shape_cast %111 : vector<2x8xf32> to vector<2x8x1xf32>
    %113 = tpu.reciprocal %112 {approx = true} : vector<2x8x1xf32> -> vector<2x8x1xf32>
    %114 = vector.broadcast %113 : vector<2x8x1xf32> to vector<2x8x8xf32>
    %115 = arith.mulf %110, %114 : vector<2x8x8xf32>
    %116 = arith.truncf %115 : vector<2x8x8xf32> to vector<2x8x8xbf16>
    "tpu.trace_start"() <{level = 10 : i32, message = "btu,bud->btd"}> : () -> ()
    %cst_34 = arith.constant dense<0.000000e+00> : vector<2x8x8xf32>
    %117 = tpu.matmul %116, %102, %cst_34 {dimension_numbers = #tpu.dot_dimension_numbers<[2], [1], [1], [2], [0, 0, 0, 1, 1, 2], [0], [0]>} : vector<2x8x8xbf16>, vector<2x8x8xbf16>, vector<2x8x8xf32> -> vector<2x8x8xf32>
    "tpu.trace_stop"() : () -> ()
    %118 = vector.shape_cast %117 : vector<2x8x8xf32> to vector<16x8xf32>
    %119 = vector.extract_strided_slice %43 {offsets = [0, 24], sizes = [16, 8], strides = [1, 1]} : vector<16x96xf32> to vector<16x8xf32>
    %120 = vector.shape_cast %119 : vector<16x8xf32> to vector<2x8x8xf32>
    %121 = arith.truncf %120 : vector<2x8x8xf32> to vector<2x8x8xbf16>
    %122 = vector.extract_strided_slice %43 {offsets = [0, 56], sizes = [16, 8], strides = [1, 1]} : vector<16x96xf32> to vector<16x8xf32>
    %123 = vector.shape_cast %122 : vector<16x8xf32> to vector<2x8x8xf32>
    %124 = arith.truncf %123 : vector<2x8x8xf32> to vector<2x8x8xbf16>
    %125 = vector.extract_strided_slice %43 {offsets = [0, 88], sizes = [16, 8], strides = [1, 1]} : vector<16x96xf32> to vector<16x8xf32>
    %126 = vector.shape_cast %125 : vector<16x8xf32> to vector<2x8x8xf32>
    %127 = arith.truncf %126 : vector<2x8x8xf32> to vector<2x8x8xbf16>
    "tpu.trace_start"() <{level = 10 : i32, message = "btd,bud->btu"}> : () -> ()
    %cst_35 = arith.constant dense<0.000000e+00> : vector<2x8x8xf32>
    %128 = tpu.matmul %121, %124, %cst_35 {dimension_numbers = #tpu.dot_dimension_numbers<[2], [2], [1], [1], [0, 0, 0, 1, 1, 1], [0], [0]>} : vector<2x8x8xbf16>, vector<2x8x8xbf16>, vector<2x8x8xf32> -> vector<2x8x8xf32>
    "tpu.trace_stop"() : () -> ()
    %129 = vector.broadcast %cst_17 : f32 to vector<2x8x8xf32>
    %130 = arith.mulf %128, %129 : vector<2x8x8xf32>
    %cst_36 = arith.constant dense<0xFF800000> : vector<2x8xf32>
    %131 = vector.multi_reduction <maximumf>, %130, %cst_36 [2] : vector<2x8x8xf32> to vector<2x8xf32>
    %132 = vector.shape_cast %131 : vector<2x8xf32> to vector<2x8x1xf32>
    %133 = vector.broadcast %132 : vector<2x8x1xf32> to vector<2x8x8xf32>
    %134 = arith.subf %130, %133 : vector<2x8x8xf32>
    %135 = math.exp %134 : vector<2x8x8xf32>
    %cst_37 = arith.constant dense<0.000000e+00> : vector<2x8xf32>
    %136 = vector.multi_reduction <add>, %135, %cst_37 [2] : vector<2x8x8xf32> to vector<2x8xf32>
    %137 = vector.shape_cast %136 : vector<2x8xf32> to vector<2x8x1xf32>
    %138 = tpu.reciprocal %137 {approx = true} : vector<2x8x1xf32> -> vector<2x8x1xf32>
    %139 = vector.broadcast %138 : vector<2x8x1xf32> to vector<2x8x8xf32>
    %140 = arith.mulf %135, %139 : vector<2x8x8xf32>
    %141 = arith.truncf %140 : vector<2x8x8xf32> to vector<2x8x8xbf16>
    "tpu.trace_start"() <{level = 10 : i32, message = "btu,bud->btd"}> : () -> ()
    %cst_38 = arith.constant dense<0.000000e+00> : vector<2x8x8xf32>
    %142 = tpu.matmul %141, %127, %cst_38 {dimension_numbers = #tpu.dot_dimension_numbers<[2], [1], [1], [2], [0, 0, 0, 1, 1, 2], [0], [0]>} : vector<2x8x8xbf16>, vector<2x8x8xbf16>, vector<2x8x8xf32> -> vector<2x8x8xf32>
    "tpu.trace_stop"() : () -> ()
    %143 = vector.shape_cast %142 : vector<2x8x8xf32> to vector<16x8xf32>
    %144 = tpu.concatenate %68, %93, %118, %143 in 1 : vector<16x8xf32>, vector<16x8xf32>, vector<16x8xf32>, vector<16x8xf32> -> vector<16x32xf32>
    %145 = arith.index_cast %c0_i32 : i32 to index
    %c0_39 = arith.constant 0 : index
    %c0_40 = arith.constant 0 : index
    %146 = vector.load %arg9[%145, %c0_39, %c0_40] : memref<2x32x32xbf16, #tpu.memory_space<vmem>>, vector<1x32x32xbf16>
    %147 = vector.shape_cast %146 : vector<1x32x32xbf16> to vector<32x32xbf16>
    %148 = arith.truncf %144 : vector<16x32xf32> to vector<16x32xbf16>
    %cst_41 = arith.constant dense<0.000000e+00> : vector<16x32xf32>
    %149 = tpu.matmul %148, %147, %cst_41 {dimension_numbers = #tpu.dot_dimension_numbers<[1], [0], [0], [1], [0, 0, 1, 1], [], []>} : vector<16x32xbf16>, vector<32x32xbf16>, vector<16x32xf32> -> vector<16x32xf32>
    %150 = arith.index_cast %c0_i32 : i32 to index
    %c0_42 = arith.constant 0 : index
    %c0_43 = arith.constant 0 : index
    %151 = vector.load %arg10[%150, %c0_42, %c0_43] : memref<2x1x32xf32, #tpu.memory_space<vmem>>, vector<1x1x32xf32>
    %152 = vector.shape_cast %151 : vector<1x1x32xf32> to vector<1x32xf32>
    %153 = vector.broadcast %152 : vector<1x32xf32> to vector<16x32xf32>
    %154 = arith.addf %149, %153 : vector<16x32xf32>
    %155 = arith.addf %33, %154 : vector<16x32xf32>
    %156 = arith.index_cast %c0_i32 : i32 to index
    %c0_44 = arith.constant 0 : index
    %c0_45 = arith.constant 0 : index
    %157 = vector.load %arg11[%156, %c0_44, %c0_45] : memref<2x1x32xf32, #tpu.memory_space<vmem>>, vector<1x1x32xf32>
    %158 = vector.shape_cast %157 : vector<1x1x32xf32> to vector<1x32xf32>
    %159 = arith.index_cast %c0_i32 : i32 to index
    %c0_46 = arith.constant 0 : index
    %c0_47 = arith.constant 0 : index
    %160 = vector.load %arg12[%159, %c0_46, %c0_47] : memref<2x1x32xf32, #tpu.memory_space<vmem>>, vector<1x1x32xf32>
    %161 = vector.shape_cast %160 : vector<1x1x32xf32> to vector<1x32xf32>
    %cst_48 = arith.constant dense<0.000000e+00> : vector<16xf32>
    %162 = vector.multi_reduction <add>, %155, %cst_48 [1] : vector<16x32xf32> to vector<16xf32>
    %163 = vector.shape_cast %162 : vector<16xf32> to vector<16x1xf32>
    %cst_49 = arith.constant 3.200000e+01 : f32
    %164 = vector.broadcast %cst_49 : f32 to vector<16x1xf32>
    %165 = arith.divf %163, %164 : vector<16x1xf32>
    %166 = vector.broadcast %165 : vector<16x1xf32> to vector<16x32xf32>
    %167 = arith.subf %155, %166 : vector<16x32xf32>
    %168 = arith.mulf %167, %167 : vector<16x32xf32>
    %cst_50 = arith.constant dense<0.000000e+00> : vector<16xf32>
    %169 = vector.multi_reduction <add>, %168, %cst_50 [1] : vector<16x32xf32> to vector<16xf32>
    %170 = vector.shape_cast %169 : vector<16xf32> to vector<16x1xf32>
    %cst_51 = arith.constant 3.200000e+01 : f32
    %171 = vector.broadcast %cst_51 : f32 to vector<16x1xf32>
    %172 = arith.divf %170, %171 : vector<16x1xf32>
    %173 = vector.broadcast %165 : vector<16x1xf32> to vector<16x32xf32>
    %174 = arith.subf %155, %173 : vector<16x32xf32>
    %cst_52 = arith.constant 9.99999996E-13 : f32
    %175 = vector.broadcast %cst_52 : f32 to vector<16x1xf32>
    %176 = arith.addf %172, %175 : vector<16x1xf32>
    %177 = math.rsqrt %176 : vector<16x1xf32>
    %178 = vector.broadcast %177 : vector<16x1xf32> to vector<16x32xf32>
    %179 = arith.mulf %174, %178 : vector<16x32xf32>
    %180 = vector.broadcast %158 : vector<1x32xf32> to vector<16x32xf32>
    %181 = arith.mulf %179, %180 : vector<16x32xf32>
    %182 = vector.broadcast %161 : vector<1x32xf32> to vector<16x32xf32>
    %183 = arith.addf %181, %182 : vector<16x32xf32>
    %184 = arith.index_cast %c0_i32 : i32 to index
    %c0_53 = arith.constant 0 : index
    %c0_54 = arith.constant 0 : index
    %185 = vector.load %arg13[%184, %c0_53, %c0_54] : memref<2x32x64xbf16, #tpu.memory_space<vmem>>, vector<1x32x64xbf16>
    %186 = vector.shape_cast %185 : vector<1x32x64xbf16> to vector<32x64xbf16>
    %187 = arith.truncf %183 : vector<16x32xf32> to vector<16x32xbf16>
    %cst_55 = arith.constant dense<0.000000e+00> : vector<16x64xf32>
    %188 = tpu.matmul %187, %186, %cst_55 {dimension_numbers = #tpu.dot_dimension_numbers<[1], [0], [0], [1], [0, 0, 1, 1], [], []>} : vector<16x32xbf16>, vector<32x64xbf16>, vector<16x64xf32> -> vector<16x64xf32>
    %189 = arith.index_cast %c0_i32 : i32 to index
    %c0_56 = arith.constant 0 : index
    %c0_57 = arith.constant 0 : index
    %190 = vector.load %arg14[%189, %c0_56, %c0_57] : memref<2x1x64xf32, #tpu.memory_space<vmem>>, vector<1x1x64xf32>
    %191 = vector.shape_cast %190 : vector<1x1x64xf32> to vector<1x64xf32>
    %192 = vector.broadcast %191 : vector<1x64xf32> to vector<16x64xf32>
    %193 = arith.addf %188, %192 : vector<16x64xf32>
    %cst_58 = arith.constant 0.000000e+00 : f32
    %194 = vector.broadcast %cst_58 : f32 to vector<16x64xf32>
    %195 = arith.maximumf %193, %194 : vector<16x64xf32>
    %196 = arith.index_cast %c0_i32 : i32 to index
    %c0_59 = arith.constant 0 : index
    %c0_60 = arith.constant 0 : index
    %197 = vector.load %arg15[%196, %c0_59, %c0_60] : memref<2x64x32xbf16, #tpu.memory_space<vmem>>, vector<1x64x32xbf16>
    %198 = vector.shape_cast %197 : vector<1x64x32xbf16> to vector<64x32xbf16>
    %199 = arith.truncf %195 : vector<16x64xf32> to vector<16x64xbf16>
    %cst_61 = arith.constant dense<0.000000e+00> : vector<16x32xf32>
    %200 = tpu.matmul %199, %198, %cst_61 {dimension_numbers = #tpu.dot_dimension_numbers<[1], [0], [0], [1], [0, 0, 1, 1], [], []>} : vector<16x64xbf16>, vector<64x32xbf16>, vector<16x32xf32> -> vector<16x32xf32>
    %201 = arith.index_cast %c0_i32 : i32 to index
    %c0_62 = arith.constant 0 : index
    %c0_63 = arith.constant 0 : index
    %202 = vector.load %arg16[%201, %c0_62, %c0_63] : memref<2x1x32xf32, #tpu.memory_space<vmem>>, vector<1x1x32xf32>
    %203 = vector.shape_cast %202 : vector<1x1x32xf32> to vector<1x32xf32>
    %204 = vector.broadcast %203 : vector<1x32xf32> to vector<16x32xf32>
    %205 = arith.addf %200, %204 : vector<16x32xf32>
    %206 = arith.addf %183, %205 : vector<16x32xf32>
    %207 = arith.index_cast %c0_i32 : i32 to index
    %c0_64 = arith.constant 0 : index
    %c0_65 = arith.constant 0 : index
    %208 = vector.load %arg17[%207, %c0_64, %c0_65] : memref<2x1x32xf32, #tpu.memory_space<vmem>>, vector<1x1x32xf32>
    %209 = vector.shape_cast %208 : vector<1x1x32xf32> to vector<1x32xf32>
    %210 = arith.index_cast %c0_i32 : i32 to index
    %c0_66 = arith.constant 0 : index
    %c0_67 = arith.constant 0 : index
    %211 = vector.load %arg18[%210, %c0_66, %c0_67] : memref<2x1x32xf32, #tpu.memory_space<vmem>>, vector<1x1x32xf32>
    %212 = vector.shape_cast %211 : vector<1x1x32xf32> to vector<1x32xf32>
    %cst_68 = arith.constant dense<0.000000e+00> : vector<16xf32>
    %213 = vector.multi_reduction <add>, %206, %cst_68 [1] : vector<16x32xf32> to vector<16xf32>
    %214 = vector.shape_cast %213 : vector<16xf32> to vector<16x1xf32>
    %cst_69 = arith.constant 3.200000e+01 : f32
    %215 = vector.broadcast %cst_69 : f32 to vector<16x1xf32>
    %216 = arith.divf %214, %215 : vector<16x1xf32>
    %217 = vector.broadcast %216 : vector<16x1xf32> to vector<16x32xf32>
    %218 = arith.subf %206, %217 : vector<16x32xf32>
    %219 = arith.mulf %218, %218 : vector<16x32xf32>
    %cst_70 = arith.constant dense<0.000000e+00> : vector<16xf32>
    %220 = vector.multi_reduction <add>, %219, %cst_70 [1] : vector<16x32xf32> to vector<16xf32>
    %221 = vector.shape_cast %220 : vector<16xf32> to vector<16x1xf32>
    %cst_71 = arith.constant 3.200000e+01 : f32
    %222 = vector.broadcast %cst_71 : f32 to vector<16x1xf32>
    %223 = arith.divf %221, %222 : vector<16x1xf32>
    %224 = vector.broadcast %216 : vector<16x1xf32> to vector<16x32xf32>
    %225 = arith.subf %206, %224 : vector<16x32xf32>
    %cst_72 = arith.constant 9.99999996E-13 : f32
    %226 = vector.broadcast %cst_72 : f32 to vector<16x1xf32>
    %227 = arith.addf %223, %226 : vector<16x1xf32>
    %228 = math.rsqrt %227 : vector<16x1xf32>
    %229 = vector.broadcast %228 : vector<16x1xf32> to vector<16x32xf32>
    %230 = arith.mulf %225, %229 : vector<16x32xf32>
    %231 = vector.broadcast %209 : vector<1x32xf32> to vector<16x32xf32>
    %232 = arith.mulf %230, %231 : vector<16x32xf32>
    %233 = vector.broadcast %212 : vector<1x32xf32> to vector<16x32xf32>
    %234 = arith.addf %232, %233 : vector<16x32xf32>
    %c1_i32 = arith.constant 1 : i32
    %235 = arith.index_cast %c1_i32 : i32 to index
    %c0_73 = arith.constant 0 : index
    %c0_74 = arith.constant 0 : index
    %236 = vector.load %arg7[%235, %c0_73, %c0_74] : memref<2x32x96xbf16, #tpu.memory_space<vmem>>, vector<1x32x96xbf16>
    %237 = vector.shape_cast %236 : vector<1x32x96xbf16> to vector<32x96xbf16>
    %238 = arith.truncf %234 : vector<16x32xf32> to vector<16x32xbf16>
    %cst_75 = arith.constant dense<0.000000e+00> : vector<16x96xf32>
    %239 = tpu.matmul %238, %237, %cst_75 {dimension_numbers = #tpu.dot_dimension_numbers<[1], [0], [0], [1], [0, 0, 1, 1], [], []>} : vector<16x32xbf16>, vector<32x96xbf16>, vector<16x96xf32> -> vector<16x96xf32>
    %240 = arith.index_cast %c1_i32 : i32 to index
    %c0_76 = arith.constant 0 : index
    %c0_77 = arith.constant 0 : index
    %241 = vector.load %arg8[%240, %c0_76, %c0_77] : memref<2x1x96xf32, #tpu.memory_space<vmem>>, vector<1x1x96xf32>
    %242 = vector.shape_cast %241 : vector<1x1x96xf32> to vector<1x96xf32>
    %243 = vector.broadcast %242 : vector<1x96xf32> to vector<16x96xf32>
    %244 = arith.addf %239, %243 : vector<16x96xf32>
    %245 = vector.extract_strided_slice %244 {offsets = [0, 0], sizes = [16, 8], strides = [1, 1]} : vector<16x96xf32> to vector<16x8xf32>
    %246 = vector.shape_cast %245 : vector<16x8xf32> to vector<2x8x8xf32>
    %247 = arith.truncf %246 : vector<2x8x8xf32> to vector<2x8x8xbf16>
    %248 = vector.extract_strided_slice %244 {offsets = [0, 32], sizes = [16, 8], strides = [1, 1]} : vector<16x96xf32> to vector<16x8xf32>
    %249 = vector.shape_cast %248 : vector<16x8xf32> to vector<2x8x8xf32>
    %250 = arith.truncf %249 : vector<2x8x8xf32> to vector<2x8x8xbf16>
    %251 = vector.extract_strided_slice %244 {offsets = [0, 64], sizes = [16, 8], strides = [1, 1]} : vector<16x96xf32> to vector<16x8xf32>
    %252 = vector.shape_cast %251 : vector<16x8xf32> to vector<2x8x8xf32>
    %253 = arith.truncf %252 : vector<2x8x8xf32> to vector<2x8x8xbf16>
    "tpu.trace_start"() <{level = 10 : i32, message = "btd,bud->btu"}> : () -> ()
    %cst_78 = arith.constant dense<0.000000e+00> : vector<2x8x8xf32>
    %254 = tpu.matmul %247, %250, %cst_78 {dimension_numbers = #tpu.dot_dimension_numbers<[2], [2], [1], [1], [0, 0, 0, 1, 1, 1], [0], [0]>} : vector<2x8x8xbf16>, vector<2x8x8xbf16>, vector<2x8x8xf32> -> vector<2x8x8xf32>
    "tpu.trace_stop"() : () -> ()
    %255 = vector.broadcast %cst_17 : f32 to vector<2x8x8xf32>
    %256 = arith.mulf %254, %255 : vector<2x8x8xf32>
    %cst_79 = arith.constant dense<0xFF800000> : vector<2x8xf32>
    %257 = vector.multi_reduction <maximumf>, %256, %cst_79 [2] : vector<2x8x8xf32> to vector<2x8xf32>
    %258 = vector.shape_cast %257 : vector<2x8xf32> to vector<2x8x1xf32>
    %259 = vector.broadcast %258 : vector<2x8x1xf32> to vector<2x8x8xf32>
    %260 = arith.subf %256, %259 : vector<2x8x8xf32>
    %261 = math.exp %260 : vector<2x8x8xf32>
    %cst_80 = arith.constant dense<0.000000e+00> : vector<2x8xf32>
    %262 = vector.multi_reduction <add>, %261, %cst_80 [2] : vector<2x8x8xf32> to vector<2x8xf32>
    %263 = vector.shape_cast %262 : vector<2x8xf32> to vector<2x8x1xf32>
    %264 = tpu.reciprocal %263 {approx = true} : vector<2x8x1xf32> -> vector<2x8x1xf32>
    %265 = vector.broadcast %264 : vector<2x8x1xf32> to vector<2x8x8xf32>
    %266 = arith.mulf %261, %265 : vector<2x8x8xf32>
    %267 = arith.truncf %266 : vector<2x8x8xf32> to vector<2x8x8xbf16>
    "tpu.trace_start"() <{level = 10 : i32, message = "btu,bud->btd"}> : () -> ()
    %cst_81 = arith.constant dense<0.000000e+00> : vector<2x8x8xf32>
    %268 = tpu.matmul %267, %253, %cst_81 {dimension_numbers = #tpu.dot_dimension_numbers<[2], [1], [1], [2], [0, 0, 0, 1, 1, 2], [0], [0]>} : vector<2x8x8xbf16>, vector<2x8x8xbf16>, vector<2x8x8xf32> -> vector<2x8x8xf32>
    "tpu.trace_stop"() : () -> ()
    %269 = vector.shape_cast %268 : vector<2x8x8xf32> to vector<16x8xf32>
    %270 = vector.extract_strided_slice %244 {offsets = [0, 8], sizes = [16, 8], strides = [1, 1]} : vector<16x96xf32> to vector<16x8xf32>
    %271 = vector.shape_cast %270 : vector<16x8xf32> to vector<2x8x8xf32>
    %272 = arith.truncf %271 : vector<2x8x8xf32> to vector<2x8x8xbf16>
    %273 = vector.extract_strided_slice %244 {offsets = [0, 40], sizes = [16, 8], strides = [1, 1]} : vector<16x96xf32> to vector<16x8xf32>
    %274 = vector.shape_cast %273 : vector<16x8xf32> to vector<2x8x8xf32>
    %275 = arith.truncf %274 : vector<2x8x8xf32> to vector<2x8x8xbf16>
    %276 = vector.extract_strided_slice %244 {offsets = [0, 72], sizes = [16, 8], strides = [1, 1]} : vector<16x96xf32> to vector<16x8xf32>
    %277 = vector.shape_cast %276 : vector<16x8xf32> to vector<2x8x8xf32>
    %278 = arith.truncf %277 : vector<2x8x8xf32> to vector<2x8x8xbf16>
    "tpu.trace_start"() <{level = 10 : i32, message = "btd,bud->btu"}> : () -> ()
    %cst_82 = arith.constant dense<0.000000e+00> : vector<2x8x8xf32>
    %279 = tpu.matmul %272, %275, %cst_82 {dimension_numbers = #tpu.dot_dimension_numbers<[2], [2], [1], [1], [0, 0, 0, 1, 1, 1], [0], [0]>} : vector<2x8x8xbf16>, vector<2x8x8xbf16>, vector<2x8x8xf32> -> vector<2x8x8xf32>
    "tpu.trace_stop"() : () -> ()
    %280 = vector.broadcast %cst_17 : f32 to vector<2x8x8xf32>
    %281 = arith.mulf %279, %280 : vector<2x8x8xf32>
    %cst_83 = arith.constant dense<0xFF800000> : vector<2x8xf32>
    %282 = vector.multi_reduction <maximumf>, %281, %cst_83 [2] : vector<2x8x8xf32> to vector<2x8xf32>
    %283 = vector.shape_cast %282 : vector<2x8xf32> to vector<2x8x1xf32>
    %284 = vector.broadcast %283 : vector<2x8x1xf32> to vector<2x8x8xf32>
    %285 = arith.subf %281, %284 : vector<2x8x8xf32>
    %286 = math.exp %285 : vector<2x8x8xf32>
    %cst_84 = arith.constant dense<0.000000e+00> : vector<2x8xf32>
    %287 = vector.multi_reduction <add>, %286, %cst_84 [2] : vector<2x8x8xf32> to vector<2x8xf32>
    %288 = vector.shape_cast %287 : vector<2x8xf32> to vector<2x8x1xf32>
    %289 = tpu.reciprocal %288 {approx = true} : vector<2x8x1xf32> -> vector<2x8x1xf32>
    %290 = vector.broadcast %289 : vector<2x8x1xf32> to vector<2x8x8xf32>
    %291 = arith.mulf %286, %290 : vector<2x8x8xf32>
    %292 = arith.truncf %291 : vector<2x8x8xf32> to vector<2x8x8xbf16>
    "tpu.trace_start"() <{level = 10 : i32, message = "btu,bud->btd"}> : () -> ()
    %cst_85 = arith.constant dense<0.000000e+00> : vector<2x8x8xf32>
    %293 = tpu.matmul %292, %278, %cst_85 {dimension_numbers = #tpu.dot_dimension_numbers<[2], [1], [1], [2], [0, 0, 0, 1, 1, 2], [0], [0]>} : vector<2x8x8xbf16>, vector<2x8x8xbf16>, vector<2x8x8xf32> -> vector<2x8x8xf32>
    "tpu.trace_stop"() : () -> ()
    %294 = vector.shape_cast %293 : vector<2x8x8xf32> to vector<16x8xf32>
    %295 = vector.extract_strided_slice %244 {offsets = [0, 16], sizes = [16, 8], strides = [1, 1]} : vector<16x96xf32> to vector<16x8xf32>
    %296 = vector.shape_cast %295 : vector<16x8xf32> to vector<2x8x8xf32>
    %297 = arith.truncf %296 : vector<2x8x8xf32> to vector<2x8x8xbf16>
    %298 = vector.extract_strided_slice %244 {offsets = [0, 48], sizes = [16, 8], strides = [1, 1]} : vector<16x96xf32> to vector<16x8xf32>
    %299 = vector.shape_cast %298 : vector<16x8xf32> to vector<2x8x8xf32>
    %300 = arith.truncf %299 : vector<2x8x8xf32> to vector<2x8x8xbf16>
    %301 = vector.extract_strided_slice %244 {offsets = [0, 80], sizes = [16, 8], strides = [1, 1]} : vector<16x96xf32> to vector<16x8xf32>
    %302 = vector.shape_cast %301 : vector<16x8xf32> to vector<2x8x8xf32>
    %303 = arith.truncf %302 : vector<2x8x8xf32> to vector<2x8x8xbf16>
    "tpu.trace_start"() <{level = 10 : i32, message = "btd,bud->btu"}> : () -> ()
    %cst_86 = arith.constant dense<0.000000e+00> : vector<2x8x8xf32>
    %304 = tpu.matmul %297, %300, %cst_86 {dimension_numbers = #tpu.dot_dimension_numbers<[2], [2], [1], [1], [0, 0, 0, 1, 1, 1], [0], [0]>} : vector<2x8x8xbf16>, vector<2x8x8xbf16>, vector<2x8x8xf32> -> vector<2x8x8xf32>
    "tpu.trace_stop"() : () -> ()
    %305 = vector.broadcast %cst_17 : f32 to vector<2x8x8xf32>
    %306 = arith.mulf %304, %305 : vector<2x8x8xf32>
    %cst_87 = arith.constant dense<0xFF800000> : vector<2x8xf32>
    %307 = vector.multi_reduction <maximumf>, %306, %cst_87 [2] : vector<2x8x8xf32> to vector<2x8xf32>
    %308 = vector.shape_cast %307 : vector<2x8xf32> to vector<2x8x1xf32>
    %309 = vector.broadcast %308 : vector<2x8x1xf32> to vector<2x8x8xf32>
    %310 = arith.subf %306, %309 : vector<2x8x8xf32>
    %311 = math.exp %310 : vector<2x8x8xf32>
    %cst_88 = arith.constant dense<0.000000e+00> : vector<2x8xf32>
    %312 = vector.multi_reduction <add>, %311, %cst_88 [2] : vector<2x8x8xf32> to vector<2x8xf32>
    %313 = vector.shape_cast %312 : vector<2x8xf32> to vector<2x8x1xf32>
    %314 = tpu.reciprocal %313 {approx = true} : vector<2x8x1xf32> -> vector<2x8x1xf32>
    %315 = vector.broadcast %314 : vector<2x8x1xf32> to vector<2x8x8xf32>
    %316 = arith.mulf %311, %315 : vector<2x8x8xf32>
    %317 = arith.truncf %316 : vector<2x8x8xf32> to vector<2x8x8xbf16>
    "tpu.trace_start"() <{level = 10 : i32, message = "btu,bud->btd"}> : () -> ()
    %cst_89 = arith.constant dense<0.000000e+00> : vector<2x8x8xf32>
    %318 = tpu.matmul %317, %303, %cst_89 {dimension_numbers = #tpu.dot_dimension_numbers<[2], [1], [1], [2], [0, 0, 0, 1, 1, 2], [0], [0]>} : vector<2x8x8xbf16>, vector<2x8x8xbf16>, vector<2x8x8xf32> -> vector<2x8x8xf32>
    "tpu.trace_stop"() : () -> ()
    %319 = vector.shape_cast %318 : vector<2x8x8xf32> to vector<16x8xf32>
    %320 = vector.extract_strided_slice %244 {offsets = [0, 24], sizes = [16, 8], strides = [1, 1]} : vector<16x96xf32> to vector<16x8xf32>
    %321 = vector.shape_cast %320 : vector<16x8xf32> to vector<2x8x8xf32>
    %322 = arith.truncf %321 : vector<2x8x8xf32> to vector<2x8x8xbf16>
    %323 = vector.extract_strided_slice %244 {offsets = [0, 56], sizes = [16, 8], strides = [1, 1]} : vector<16x96xf32> to vector<16x8xf32>
    %324 = vector.shape_cast %323 : vector<16x8xf32> to vector<2x8x8xf32>
    %325 = arith.truncf %324 : vector<2x8x8xf32> to vector<2x8x8xbf16>
    %326 = vector.extract_strided_slice %244 {offsets = [0, 88], sizes = [16, 8], strides = [1, 1]} : vector<16x96xf32> to vector<16x8xf32>
    %327 = vector.shape_cast %326 : vector<16x8xf32> to vector<2x8x8xf32>
    %328 = arith.truncf %327 : vector<2x8x8xf32> to vector<2x8x8xbf16>
    "tpu.trace_start"() <{level = 10 : i32, message = "btd,bud->btu"}> : () -> ()
    %cst_90 = arith.constant dense<0.000000e+00> : vector<2x8x8xf32>
    %329 = tpu.matmul %322, %325, %cst_90 {dimension_numbers = #tpu.dot_dimension_numbers<[2], [2], [1], [1], [0, 0, 0, 1, 1, 1], [0], [0]>} : vector<2x8x8xbf16>, vector<2x8x8xbf16>, vector<2x8x8xf32> -> vector<2x8x8xf32>
    "tpu.trace_stop"() : () -> ()
    %330 = vector.broadcast %cst_17 : f32 to vector<2x8x8xf32>
    %331 = arith.mulf %329, %330 : vector<2x8x8xf32>
    %cst_91 = arith.constant dense<0xFF800000> : vector<2x8xf32>
    %332 = vector.multi_reduction <maximumf>, %331, %cst_91 [2] : vector<2x8x8xf32> to vector<2x8xf32>
    %333 = vector.shape_cast %332 : vector<2x8xf32> to vector<2x8x1xf32>
    %334 = vector.broadcast %333 : vector<2x8x1xf32> to vector<2x8x8xf32>
    %335 = arith.subf %331, %334 : vector<2x8x8xf32>
    %336 = math.exp %335 : vector<2x8x8xf32>
    %cst_92 = arith.constant dense<0.000000e+00> : vector<2x8xf32>
    %337 = vector.multi_reduction <add>, %336, %cst_92 [2] : vector<2x8x8xf32> to vector<2x8xf32>
    %338 = vector.shape_cast %337 : vector<2x8xf32> to vector<2x8x1xf32>
    %339 = tpu.reciprocal %338 {approx = true} : vector<2x8x1xf32> -> vector<2x8x1xf32>
    %340 = vector.broadcast %339 : vector<2x8x1xf32> to vector<2x8x8xf32>
    %341 = arith.mulf %336, %340 : vector<2x8x8xf32>
    %342 = arith.truncf %341 : vector<2x8x8xf32> to vector<2x8x8xbf16>
    "tpu.trace_start"() <{level = 10 : i32, message = "btu,bud->btd"}> : () -> ()
    %cst_93 = arith.constant dense<0.000000e+00> : vector<2x8x8xf32>
    %343 = tpu.matmul %342, %328, %cst_93 {dimension_numbers = #tpu.dot_dimension_numbers<[2], [1], [1], [2], [0, 0, 0, 1, 1, 2], [0], [0]>} : vector<2x8x8xbf16>, vector<2x8x8xbf16>, vector<2x8x8xf32> -> vector<2x8x8xf32>
    "tpu.trace_stop"() : () -> ()
    %344 = vector.shape_cast %343 : vector<2x8x8xf32> to vector<16x8xf32>
    %345 = tpu.concatenate %269, %294, %319, %344 in 1 : vector<16x8xf32>, vector<16x8xf32>, vector<16x8xf32>, vector<16x8xf32> -> vector<16x32xf32>
    %346 = arith.index_cast %c1_i32 : i32 to index
    %c0_94 = arith.constant 0 : index
    %c0_95 = arith.constant 0 : index
    %347 = vector.load %arg9[%346, %c0_94, %c0_95] : memref<2x32x32xbf16, #tpu.memory_space<vmem>>, vector<1x32x32xbf16>
    %348 = vector.shape_cast %347 : vector<1x32x32xbf16> to vector<32x32xbf16>
    %349 = arith.truncf %345 : vector<16x32xf32> to vector<16x32xbf16>
    %cst_96 = arith.constant dense<0.000000e+00> : vector<16x32xf32>
    %350 = tpu.matmul %349, %348, %cst_96 {dimension_numbers = #tpu.dot_dimension_numbers<[1], [0], [0], [1], [0, 0, 1, 1], [], []>} : vector<16x32xbf16>, vector<32x32xbf16>, vector<16x32xf32> -> vector<16x32xf32>
    %351 = arith.index_cast %c1_i32 : i32 to index
    %c0_97 = arith.constant 0 : index
    %c0_98 = arith.constant 0 : index
    %352 = vector.load %arg10[%351, %c0_97, %c0_98] : memref<2x1x32xf32, #tpu.memory_space<vmem>>, vector<1x1x32xf32>
    %353 = vector.shape_cast %352 : vector<1x1x32xf32> to vector<1x32xf32>
    %354 = vector.broadcast %353 : vector<1x32xf32> to vector<16x32xf32>
    %355 = arith.addf %350, %354 : vector<16x32xf32>
    %356 = arith.addf %234, %355 : vector<16x32xf32>
    %357 = arith.index_cast %c1_i32 : i32 to index
    %c0_99 = arith.constant 0 : index
    %c0_100 = arith.constant 0 : index
    %358 = vector.load %arg11[%357, %c0_99, %c0_100] : memref<2x1x32xf32, #tpu.memory_space<vmem>>, vector<1x1x32xf32>
    %359 = vector.shape_cast %358 : vector<1x1x32xf32> to vector<1x32xf32>
    %360 = arith.index_cast %c1_i32 : i32 to index
    %c0_101 = arith.constant 0 : index
    %c0_102 = arith.constant 0 : index
    %361 = vector.load %arg12[%360, %c0_101, %c0_102] : memref<2x1x32xf32, #tpu.memory_space<vmem>>, vector<1x1x32xf32>
    %362 = vector.shape_cast %361 : vector<1x1x32xf32> to vector<1x32xf32>
    %cst_103 = arith.constant dense<0.000000e+00> : vector<16xf32>
    %363 = vector.multi_reduction <add>, %356, %cst_103 [1] : vector<16x32xf32> to vector<16xf32>
    %364 = vector.shape_cast %363 : vector<16xf32> to vector<16x1xf32>
    %cst_104 = arith.constant 3.200000e+01 : f32
    %365 = vector.broadcast %cst_104 : f32 to vector<16x1xf32>
    %366 = arith.divf %364, %365 : vector<16x1xf32>
    %367 = vector.broadcast %366 : vector<16x1xf32> to vector<16x32xf32>
    %368 = arith.subf %356, %367 : vector<16x32xf32>
    %369 = arith.mulf %368, %368 : vector<16x32xf32>
    %cst_105 = arith.constant dense<0.000000e+00> : vector<16xf32>
    %370 = vector.multi_reduction <add>, %369, %cst_105 [1] : vector<16x32xf32> to vector<16xf32>
    %371 = vector.shape_cast %370 : vector<16xf32> to vector<16x1xf32>
    %cst_106 = arith.constant 3.200000e+01 : f32
    %372 = vector.broadcast %cst_106 : f32 to vector<16x1xf32>
    %373 = arith.divf %371, %372 : vector<16x1xf32>
    %374 = vector.broadcast %366 : vector<16x1xf32> to vector<16x32xf32>
    %375 = arith.subf %356, %374 : vector<16x32xf32>
    %cst_107 = arith.constant 9.99999996E-13 : f32
    %376 = vector.broadcast %cst_107 : f32 to vector<16x1xf32>
    %377 = arith.addf %373, %376 : vector<16x1xf32>
    %378 = math.rsqrt %377 : vector<16x1xf32>
    %379 = vector.broadcast %378 : vector<16x1xf32> to vector<16x32xf32>
    %380 = arith.mulf %375, %379 : vector<16x32xf32>
    %381 = vector.broadcast %359 : vector<1x32xf32> to vector<16x32xf32>
    %382 = arith.mulf %380, %381 : vector<16x32xf32>
    %383 = vector.broadcast %362 : vector<1x32xf32> to vector<16x32xf32>
    %384 = arith.addf %382, %383 : vector<16x32xf32>
    %385 = arith.index_cast %c1_i32 : i32 to index
    %c0_108 = arith.constant 0 : index
    %c0_109 = arith.constant 0 : index
    %386 = vector.load %arg13[%385, %c0_108, %c0_109] : memref<2x32x64xbf16, #tpu.memory_space<vmem>>, vector<1x32x64xbf16>
    %387 = vector.shape_cast %386 : vector<1x32x64xbf16> to vector<32x64xbf16>
    %388 = arith.truncf %384 : vector<16x32xf32> to vector<16x32xbf16>
    %cst_110 = arith.constant dense<0.000000e+00> : vector<16x64xf32>
    %389 = tpu.matmul %388, %387, %cst_110 {dimension_numbers = #tpu.dot_dimension_numbers<[1], [0], [0], [1], [0, 0, 1, 1], [], []>} : vector<16x32xbf16>, vector<32x64xbf16>, vector<16x64xf32> -> vector<16x64xf32>
    %390 = arith.index_cast %c1_i32 : i32 to index
    %c0_111 = arith.constant 0 : index
    %c0_112 = arith.constant 0 : index
    %391 = vector.load %arg14[%390, %c0_111, %c0_112] : memref<2x1x64xf32, #tpu.memory_space<vmem>>, vector<1x1x64xf32>
    %392 = vector.shape_cast %391 : vector<1x1x64xf32> to vector<1x64xf32>
    %393 = vector.broadcast %392 : vector<1x64xf32> to vector<16x64xf32>
    %394 = arith.addf %389, %393 : vector<16x64xf32>
    %cst_113 = arith.constant 0.000000e+00 : f32
    %395 = vector.broadcast %cst_113 : f32 to vector<16x64xf32>
    %396 = arith.maximumf %394, %395 : vector<16x64xf32>
    %397 = arith.index_cast %c1_i32 : i32 to index
    %c0_114 = arith.constant 0 : index
    %c0_115 = arith.constant 0 : index
    %398 = vector.load %arg15[%397, %c0_114, %c0_115] : memref<2x64x32xbf16, #tpu.memory_space<vmem>>, vector<1x64x32xbf16>
    %399 = vector.shape_cast %398 : vector<1x64x32xbf16> to vector<64x32xbf16>
    %400 = arith.truncf %396 : vector<16x64xf32> to vector<16x64xbf16>
    %cst_116 = arith.constant dense<0.000000e+00> : vector<16x32xf32>
    %401 = tpu.matmul %400, %399, %cst_116 {dimension_numbers = #tpu.dot_dimension_numbers<[1], [0], [0], [1], [0, 0, 1, 1], [], []>} : vector<16x64xbf16>, vector<64x32xbf16>, vector<16x32xf32> -> vector<16x32xf32>
    %402 = arith.index_cast %c1_i32 : i32 to index
    %c0_117 = arith.constant 0 : index
    %c0_118 = arith.constant 0 : index
    %403 = vector.load %arg16[%402, %c0_117, %c0_118] : memref<2x1x32xf32, #tpu.memory_space<vmem>>, vector<1x1x32xf32>
    %404 = vector.shape_cast %403 : vector<1x1x32xf32> to vector<1x32xf32>
    %405 = vector.broadcast %404 : vector<1x32xf32> to vector<16x32xf32>
    %406 = arith.addf %401, %405 : vector<16x32xf32>
    %407 = arith.addf %384, %406 : vector<16x32xf32>
    %408 = arith.index_cast %c1_i32 : i32 to index
    %c0_119 = arith.constant 0 : index
    %c0_120 = arith.constant 0 : index
    %409 = vector.load %arg17[%408, %c0_119, %c0_120] : memref<2x1x32xf32, #tpu.memory_space<vmem>>, vector<1x1x32xf32>
    %410 = vector.shape_cast %409 : vector<1x1x32xf32> to vector<1x32xf32>
    %411 = arith.index_cast %c1_i32 : i32 to index
    %c0_121 = arith.constant 0 : index
    %c0_122 = arith.constant 0 : index
    %412 = vector.load %arg18[%411, %c0_121, %c0_122] : memref<2x1x32xf32, #tpu.memory_space<vmem>>, vector<1x1x32xf32>
    %413 = vector.shape_cast %412 : vector<1x1x32xf32> to vector<1x32xf32>
    %cst_123 = arith.constant dense<0.000000e+00> : vector<16xf32>
    %414 = vector.multi_reduction <add>, %407, %cst_123 [1] : vector<16x32xf32> to vector<16xf32>
    %415 = vector.shape_cast %414 : vector<16xf32> to vector<16x1xf32>
    %cst_124 = arith.constant 3.200000e+01 : f32
    %416 = vector.broadcast %cst_124 : f32 to vector<16x1xf32>
    %417 = arith.divf %415, %416 : vector<16x1xf32>
    %418 = vector.broadcast %417 : vector<16x1xf32> to vector<16x32xf32>
    %419 = arith.subf %407, %418 : vector<16x32xf32>
    %420 = arith.mulf %419, %419 : vector<16x32xf32>
    %cst_125 = arith.constant dense<0.000000e+00> : vector<16xf32>
    %421 = vector.multi_reduction <add>, %420, %cst_125 [1] : vector<16x32xf32> to vector<16xf32>
    %422 = vector.shape_cast %421 : vector<16xf32> to vector<16x1xf32>
    %cst_126 = arith.constant 3.200000e+01 : f32
    %423 = vector.broadcast %cst_126 : f32 to vector<16x1xf32>
    %424 = arith.divf %422, %423 : vector<16x1xf32>
    %425 = vector.broadcast %417 : vector<16x1xf32> to vector<16x32xf32>
    %426 = arith.subf %407, %425 : vector<16x32xf32>
    %cst_127 = arith.constant 9.99999996E-13 : f32
    %427 = vector.broadcast %cst_127 : f32 to vector<16x1xf32>
    %428 = arith.addf %424, %427 : vector<16x1xf32>
    %429 = math.rsqrt %428 : vector<16x1xf32>
    %430 = vector.broadcast %429 : vector<16x1xf32> to vector<16x32xf32>
    %431 = arith.mulf %426, %430 : vector<16x32xf32>
    %432 = vector.broadcast %410 : vector<1x32xf32> to vector<16x32xf32>
    %433 = arith.mulf %431, %432 : vector<16x32xf32>
    %434 = vector.broadcast %413 : vector<1x32xf32> to vector<16x32xf32>
    %435 = arith.addf %433, %434 : vector<16x32xf32>
    %c2_i32 = arith.constant 2 : i32
    %c0_128 = arith.constant 0 : index
    %c0_129 = arith.constant 0 : index
    %436 = vector.load %arg19[%c0_128, %c0_129] : memref<1x32xf32, #tpu.memory_space<vmem>>, vector<1x32xf32>
    %c0_130 = arith.constant 0 : index
    %c0_131 = arith.constant 0 : index
    %437 = vector.load %arg20[%c0_130, %c0_131] : memref<1x32xf32, #tpu.memory_space<vmem>>, vector<1x32xf32>
    %cst_132 = arith.constant dense<0.000000e+00> : vector<16xf32>
    %438 = vector.multi_reduction <add>, %435, %cst_132 [1] : vector<16x32xf32> to vector<16xf32>
    %439 = vector.shape_cast %438 : vector<16xf32> to vector<16x1xf32>
    %cst_133 = arith.constant 3.200000e+01 : f32
    %440 = vector.broadcast %cst_133 : f32 to vector<16x1xf32>
    %441 = arith.divf %439, %440 : vector<16x1xf32>
    %442 = vector.broadcast %441 : vector<16x1xf32> to vector<16x32xf32>
    %443 = arith.subf %435, %442 : vector<16x32xf32>
    %444 = arith.mulf %443, %443 : vector<16x32xf32>
    %cst_134 = arith.constant dense<0.000000e+00> : vector<16xf32>
    %445 = vector.multi_reduction <add>, %444, %cst_134 [1] : vector<16x32xf32> to vector<16xf32>
    %446 = vector.shape_cast %445 : vector<16xf32> to vector<16x1xf32>
    %cst_135 = arith.constant 3.200000e+01 : f32
    %447 = vector.broadcast %cst_135 : f32 to vector<16x1xf32>
    %448 = arith.divf %446, %447 : vector<16x1xf32>
    %449 = vector.broadcast %441 : vector<16x1xf32> to vector<16x32xf32>
    %450 = arith.subf %435, %449 : vector<16x32xf32>
    %cst_136 = arith.constant 9.99999996E-13 : f32
    %451 = vector.broadcast %cst_136 : f32 to vector<16x1xf32>
    %452 = arith.addf %448, %451 : vector<16x1xf32>
    %453 = math.rsqrt %452 : vector<16x1xf32>
    %454 = vector.broadcast %453 : vector<16x1xf32> to vector<16x32xf32>
    %455 = arith.mulf %450, %454 : vector<16x32xf32>
    %456 = vector.broadcast %436 : vector<1x32xf32> to vector<16x32xf32>
    %457 = arith.mulf %455, %456 : vector<16x32xf32>
    %458 = vector.broadcast %437 : vector<1x32xf32> to vector<16x32xf32>
    %459 = arith.addf %457, %458 : vector<16x32xf32>
    %c0_137 = arith.constant 0 : index
    %c0_138 = arith.constant 0 : index
    %460 = vector.load %arg21[%c0_137, %c0_138] : memref<16x32xf32, #tpu.memory_space<vmem>>, vector<16x32xf32>
    tpu.vector_store %arg21[%c0_137, %c0_138], %459 {strides = array<i32>} : memref<16x32xf32, #tpu.memory_space<vmem>>, vector<16x32xf32>,
    return
  }
  func.func @transform_0(%arg0: i32) -> (i32, i32) {
    %c0_i32 = arith.constant 0 : i32
    %c0_i32_0 = arith.constant 0 : i32
    return %arg0, %c0_i32 : i32, i32
  }
  func.func @transform_1(%arg0: i32) -> (i32, i32) {
    %c0_i32 = arith.constant 0 : i32
    %c0_i32_0 = arith.constant 0 : i32
    %c0_i32_1 = arith.constant 0 : i32
    return %c0_i32, %c0_i32_0 : i32, i32
  }
  func.func @transform_2(%arg0: i32) -> (i32, i32) {
    %c0_i32 = arith.constant 0 : i32
    %c0_i32_0 = arith.constant 0 : i32
    %c0_i32_1 = arith.constant 0 : i32
    return %c0_i32, %c0_i32_0 : i32, i32
  }
  func.func @transform_3(%arg0: i32) -> (i32, i32) {
    %c0_i32 = arith.constant 0 : i32
    %c0_i32_0 = arith.constant 0 : i32
    %c0_i32_1 = arith.constant 0 : i32
    return %c0_i32, %c0_i32_0 : i32, i32
  }
  func.func @transform_4(%arg0: i32) -> (i32, i32) {
    %c0_i32 = arith.constant 0 : i32
    %c0_i32_0 = arith.constant 0 : i32
    %c0_i32_1 = arith.constant 0 : i32
    return %c0_i32, %c0_i32_0 : i32, i32
  }
  func.func @transform_5(%arg0: i32) -> (i32, i32) {
    %c0_i32 = arith.constant 0 : i32
    %c0_i32_0 = arith.constant 0 : i32
    %c0_i32_1 = arith.constant 0 : i32
    return %c0_i32, %c0_i32_0 : i32, i32
  }
  func.func @transform_6(%arg0: i32) -> (i32, i32, i32) {
    %c0_i32 = arith.constant 0 : i32
    %c0_i32_0 = arith.constant 0 : i32
    %c0_i32_1 = arith.constant 0 : i32
    %c0_i32_2 = arith.constant 0 : i32
    return %c0_i32, %c0_i32_0, %c0_i32_1 : i32, i32, i32
  }
  func.func @transform_7(%arg0: i32) -> (i32, i32, i32) {
    %c0_i32 = arith.constant 0 : i32
    %c0_i32_0 = arith.constant 0 : i32
    %c0_i32_1 = arith.constant 0 : i32
    %c0_i32_2 = arith.constant 0 : i32
    return %c0_i32, %c0_i32_0, %c0_i32_1 : i32, i32, i32
  }
  func.func @transform_8(%arg0: i32) -> (i32, i32, i32) {
    %c0_i32 = arith.constant 0 : i32
    %c0_i32_0 = arith.constant 0 : i32
    %c0_i32_1 = arith.constant 0 : i32
    %c0_i32_2 = arith.constant 0 : i32
    return %c0_i32, %c0_i32_0, %c0_i32_1 : i32, i32, i32
  }
  func.func @transform_9(%arg0: i32) -> (i32, i32, i32) {
    %c0_i32 = arith.constant 0 : i32
    %c0_i32_0 = arith.constant 0 : i32
    %c0_i32_1 = arith.constant 0 : i32
    %c0_i32_2 = arith.constant 0 : i32
    return %c0_i32, %c0_i32_0, %c0_i32_1 : i32, i32, i32
  }
  func.func @transform_10(%arg0: i32) -> (i32, i32, i32) {
    %c0_i32 = arith.constant 0 : i32
    %c0_i32_0 = arith.constant 0 : i32
    %c0_i32_1 = arith.constant 0 : i32
    %c0_i32_2 = arith.constant 0 : i32
    return %c0_i32, %c0_i32_0, %c0_i32_1 : i32, i32, i32
  }
  func.func @transform_11(%arg0: i32) -> (i32, i32, i32) {
    %c0_i32 = arith.constant 0 : i32
    %c0_i32_0 = arith.constant 0 : i32
    %c0_i32_1 = arith.constant 0 : i32
    %c0_i32_2 = arith.constant 0 : i32
    return %c0_i32, %c0_i32_0, %c0_i32_1 : i32, i32, i32
  }
  func.func @transform_12(%arg0: i32) -> (i32, i32, i32) {
    %c0_i32 = arith.constant 0 : i32
    %c0_i32_0 = arith.constant 0 : i32
    %c0_i32_1 = arith.constant 0 : i32
    %c0_i32_2 = arith.constant 0 : i32
    return %c0_i32, %c0_i32_0, %c0_i32_1 : i32, i32, i32
  }
  func.func @transform_13(%arg0: i32) -> (i32, i32, i32) {
    %c0_i32 = arith.constant 0 : i32
    %c0_i32_0 = arith.constant 0 : i32
    %c0_i32_1 = arith.constant 0 : i32
    %c0_i32_2 = arith.constant 0 : i32
    return %c0_i32, %c0_i32_0, %c0_i32_1 : i32, i32, i32
  }
  func.func @transform_14(%arg0: i32) -> (i32, i32, i32) {
    %c0_i32 = arith.constant 0 : i32
    %c0_i32_0 = arith.constant 0 : i32
    %c0_i32_1 = arith.constant 0 : i32
    %c0_i32_2 = arith.constant 0 : i32
    return %c0_i32, %c0_i32_0, %c0_i32_1 : i32, i32, i32
  }
  func.func @transform_15(%arg0: i32) -> (i32, i32, i32) {
    %c0_i32 = arith.constant 0 : i32
    %c0_i32_0 = arith.constant 0 : i32
    %c0_i32_1 = arith.constant 0 : i32
    %c0_i32_2 = arith.constant 0 : i32
    return %c0_i32, %c0_i32_0, %c0_i32_1 : i32, i32, i32
  }
  func.func @transform_16(%arg0: i32) -> (i32, i32, i32) {
    %c0_i32 = arith.constant 0 : i32
    %c0_i32_0 = arith.constant 0 : i32
    %c0_i32_1 = arith.constant 0 : i32
    %c0_i32_2 = arith.constant 0 : i32
    return %c0_i32, %c0_i32_0, %c0_i32_1 : i32, i32, i32
  }
  func.func @transform_17(%arg0: i32) -> (i32, i32, i32) {
    %c0_i32 = arith.constant 0 : i32
    %c0_i32_0 = arith.constant 0 : i32
    %c0_i32_1 = arith.constant 0 : i32
    %c0_i32_2 = arith.constant 0 : i32
    return %c0_i32, %c0_i32_0, %c0_i32_1 : i32, i32, i32
  }
  func.func @transform_18(%arg0: i32) -> (i32, i32) {
    %c0_i32 = arith.constant 0 : i32
    %c0_i32_0 = arith.constant 0 : i32
    %c0_i32_1 = arith.constant 0 : i32
    return %c0_i32, %c0_i32_0 : i32, i32
  }
  func.func @transform_19(%arg0: i32) -> (i32, i32) {
    %c0_i32 = arith.constant 0 : i32
    %c0_i32_0 = arith.constant 0 : i32
    %c0_i32_1 = arith.constant 0 : i32
    return %c0_i32, %c0_i32_0 : i32, i32
  }
  func.func @transform_20(%arg0: i32) -> (i32, i32) {
    %c0_i32 = arith.constant 0 : i32
    %c0_i32_0 = arith.constant 0 : i32
    return %arg0, %c0_i32 : i32, i32
  }
}

</mosaic_0001>

<llo_original>
// kernel: tpu_custom_call.1
$region0: #{tpu_custom_call.1}
  #allocation0 [shape = 'u32[]', space=smem, size = 0x4, offset = 0x4, fixed_abs, tag = 'smem constant byte address 0x4 - core index']
  #allocation1 [shape = 'u32[144,128]{1,0:T(1,128)}', space=vmem, size = 0x12000, scoped, tag = 'internal scratch']
  %s0 = inlined_call_operand.hbm [shape: bf16[16,16], index: 0, kind: input, shape index: {}]
  %s1 = inlined_call_operand.hbm [shape: bf16[16,32], index: 1, kind: input, shape index: {}]
  %s2 = inlined_call_operand.hbm [shape: f32[1,32], index: 2, kind: input, shape index: {}]
  %s3 = inlined_call_operand.hbm [shape: f32[1,32], index: 3, kind: input, shape index: {}]
  %s4 = inlined_call_operand.hbm [shape: f32[1,32], index: 4, kind: input, shape index: {}]
  %s5 = inlined_call_operand.vmem [shape: f32[16,32], index: 5, kind: input, shape index: {}]
  %s6 = inlined_call_operand.vmem [shape: bf16[2,32,96], index: 6, kind: input, shape index: {}]
  %s7 = inlined_call_operand.vmem [shape: f32[2,1,96], index: 7, kind: input, shape index: {}]
  %s8 = inlined_call_operand.vmem [shape: bf16[2,32,32], index: 8, kind: input, shape index: {}]
  %s9 = inlined_call_operand.vmem [shape: f32[2,1,32], index: 9, kind: input, shape index: {}]
  %s10 = inlined_call_operand.hbm [shape: f32[2,1,32], index: 10, kind: input, shape index: {}]
  %s11 = inlined_call_operand.hbm [shape: f32[2,1,32], index: 11, kind: input, shape index: {}]
  %s12 = inlined_call_operand.vmem [shape: bf16[2,32,64], index: 12, kind: input, shape index: {}]
  %s13 = inlined_call_operand.hbm [shape: f32[2,1,64], index: 13, kind: input, shape index: {}]
  %s14 = inlined_call_operand.vmem [shape: bf16[2,64,32], index: 14, kind: input, shape index: {}]
  %s15 = inlined_call_operand.vmem [shape: f32[2,1,32], index: 15, kind: input, shape index: {}]
  %s16 = inlined_call_operand.vmem [shape: f32[2,1,32], index: 16, kind: input, shape index: {}]
  %s17 = inlined_call_operand.vmem [shape: f32[2,1,32], index: 17, kind: input, shape index: {}]
  %s18 = inlined_call_operand.vmem [shape: f32[1,32], index: 18, kind: input, shape index: {}]
  %s19 = inlined_call_operand.vmem [shape: f32[1,32], index: 19, kind: input, shape index: {}]
  %s20 = inlined_call_operand.hbm [shape: f32[16,32], index: 20, kind: output, shape index: {}]
  %s21 = sld [smem:[#allocation0]]
  $region122: #{tpu_custom_call.1} parent=0
    _
  %s23 = ssub.s32 1, %s21
  %s24 = scalar_select 0, %s23, %s21
  $region1: #{tpu_custom_call.1} parent=0
    #allocation2 [shape = 'u8[4096]{0}', space=vmem, size = 0x1000, scoped, tag = 'input window, operand 0, single buffered']
    #allocation3 [shape = 's32[1]{0}', space=sflag, size = 0x4, scoped, tag = 'scoped memory for tpu_custom_call.1']
    #allocation4 [shape = 's32[1]{0}', space=sflag, size = 0x4, scoped, tag = 'scoped memory for tpu_custom_call.1']
    #allocation5 [shape = 'u8[4096]{0}', space=vmem, size = 0x1000, scoped, tag = 'input window, operand 1, single buffered']
    #allocation6 [shape = 's32[1]{0}', space=sflag, size = 0x4, scoped, tag = 'scoped memory for tpu_custom_call.1']
    #allocation7 [shape = 'u8[512]{0}', space=vmem, size = 0x400, scoped, tag = 'input window, operand 2, single buffered']
    #allocation8 [shape = 'u8[512]{0}', space=vmem, size = 0x400, scoped, tag = 'input window, operand 3, single buffered']
    #allocation9 [shape = 's32[1]{0}', space=sflag, size = 0x4, scoped, tag = 'scoped memory for tpu_custom_call.1']
    #allocation10 [shape = 'u8[512]{0}', space=vmem, size = 0x400, scoped, tag = 'input window, operand 4, single buffered']
    #allocation11 [shape = 'u8[1024]{0}', space=vmem, size = 0x400, scoped, tag = 'input window, operand 10, single buffered']
    #allocation12 [shape = 's32[1]{0}', space=sflag, size = 0x4, scoped, tag = 'scoped memory for tpu_custom_call.1']
    #allocation13 [shape = 'u8[1024]{0}', space=vmem, size = 0x400, scoped, tag = 'input window, operand 11, single buffered']
    #allocation14 [shape = 'u8[1024]{0}', space=vmem, size = 0x400, scoped, tag = 'input window, operand 13, single buffered']
    #allocation15 [shape = 's32[1]{0}', space=sflag, size = 0x4, scoped, tag = 'scoped memory for tpu_custom_call.1']
    #allocation16 [shape = 'u8[8192]{0}', space=vmem, size = 0x2000, scoped, tag = 'output window, operand 0, single buffered']
    %25 = vsyncpa [#allocation3], 0
    %26 = vsyncpa [#allocation6], 0
    %27 = vsyncpa [#allocation9], 0
    %28 = vsyncpa [#allocation12], 0
    %29 = vsyncpa [#allocation15], 0
    %30 = vsyncpa [#allocation4], 0
    // Predicated region
    $region2: #{tpu_custom_call.1} parent=1 // pred_check
      _
    $region3: #{tpu_custom_call.1} parent=1 // pred_check_branch
      %32 = sbr.rel (0) target = $region5
    $region4: #{tpu_custom_call.1} parent=1 // pred_region
      %s34 = ssub.s32 128, 128
      %35 = vsyncadd [#allocation3], %s34
      %s36 = sshll.u32 [#allocation2], 4
      %s37 = int_to_ptr.vmem [resolvable:$true] %s36
      %42 = dma.hbm_to_vmem [thread:$0]  %s0, 128, %s37, [#allocation3], 64, 64, 4
    $region5: #{tpu_custom_call.1} parent=1 // pred_fallthru
      _
    // Predicated region
    $region6: #{tpu_custom_call.1} parent=1 // pred_check
      _
    $region7: #{tpu_custom_call.1} parent=1 // pred_check_branch
      %44 = sbr.rel (0) target = $region9
    $region8: #{tpu_custom_call.1} parent=1 // pred_region
      %s46 = ssub.s32 128, 128
      %47 = vsyncadd [#allocation6], %s46
      %s48 = sshll.u32 [#allocation5], 4
      %s49 = int_to_ptr.vmem [resolvable:$true] %s48
      %54 = dma.hbm_to_vmem [thread:$0]  %s1, 128, %s49, [#allocation6], 64, 64, 4
    $region9: #{tpu_custom_call.1} parent=1 // pred_fallthru
      _
    // Predicated region
    $region10: #{tpu_custom_call.1} parent=1 // pred_check
      _
    $region11: #{tpu_custom_call.1} parent=1 // pred_check_branch
      %56 = sbr.rel (0) target = $region13
    $region12: #{tpu_custom_call.1} parent=1 // pred_region
      %s58 = ssub.s32 16, 16
      %59 = vsyncadd [#allocation6], %s58
      %s61 = sshll.u32 [#allocation7], 4
      %s62 = int_to_ptr.vmem [resolvable:$true] %s61
      %64 = dma.hbm_to_vmem [thread:$0]  %s2, 16, %s62, [#allocation6]
    $region13: #{tpu_custom_call.1} parent=1 // pred_fallthru
      _
    // Predicated region
    $region14: #{tpu_custom_call.1} parent=1 // pred_check
      _
    $region15: #{tpu_custom_call.1} parent=1 // pred_check_branch
      %66 = sbr.rel (0) target = $region17
    $region16: #{tpu_custom_call.1} parent=1 // pred_region
      %s68 = ssub.s32 16, 16
      %69 = vsyncadd [#allocation9], %s68
      %s71 = sshll.u32 [#allocation8], 4
      %s72 = int_to_ptr.vmem [resolvable:$true] %s71
      %74 = dma.hbm_to_vmem [thread:$0]  %s3, 16, %s72, [#allocation9]
    $region17: #{tpu_custom_call.1} parent=1 // pred_fallthru
      _
    // Predicated region
    $region18: #{tpu_custom_call.1} parent=1 // pred_check
      _
    $region19: #{tpu_custom_call.1} parent=1 // pred_check_branch
      %76 = sbr.rel (0) target = $region21
    $region20: #{tpu_custom_call.1} parent=1 // pred_region
      %s78 = ssub.s32 16, 16
      %79 = vsyncadd [#allocation9], %s78
      %s81 = sshll.u32 [#allocation10], 4
      %s82 = int_to_ptr.vmem [resolvable:$true] %s81
      %84 = dma.hbm_to_vmem [thread:$0]  %s4, 16, %s82, [#allocation9]
    $region21: #{tpu_custom_call.1} parent=1 // pred_fallthru
      _
    // Predicated region
    $region22: #{tpu_custom_call.1} parent=1 // pred_check
      _
    $region23: #{tpu_custom_call.1} parent=1 // pred_check_branch
      %86 = sbr.rel (0) target = $region25
    $region24: #{tpu_custom_call.1} parent=1 // pred_region
      _
    $region25: #{tpu_custom_call.1} parent=1 // pred_fallthru
      _
    // Predicated region
    $region26: #{tpu_custom_call.1} parent=1 // pred_check
      _
    $region27: #{tpu_custom_call.1} parent=1 // pred_check_branch
      %88 = sbr.rel (0) target = $region29
    $region28: #{tpu_custom_call.1} parent=1 // pred_region
      _
    $region29: #{tpu_custom_call.1} parent=1 // pred_fallthru
      _
    // Predicated region
    $region30: #{tpu_custom_call.1} parent=1 // pred_check
      _
    $region31: #{tpu_custom_call.1} parent=1 // pred_check_branch
      %90 = sbr.rel (0) target = $region33
    $region32: #{tpu_custom_call.1} parent=1 // pred_region
      _
    $region33: #{tpu_custom_call.1} parent=1 // pred_fallthru
      _
    // Predicated region
    $region34: #{tpu_custom_call.1} parent=1 // pred_check
      _
    $region35: #{tpu_custom_call.1} parent=1 // pred_check_branch
      %92 = sbr.rel (0) target = $region37
    $region36: #{tpu_custom_call.1} parent=1 // pred_region
      _
    $region37: #{tpu_custom_call.1} parent=1 // pred_fallthru
      _
    // Predicated region
    $region38: #{tpu_custom_call.1} parent=1 // pred_check
      _
    $region39: #{tpu_custom_call.1} parent=1 // pred_check_branch
      %94 = sbr.rel (0) target = $region41
    $region40: #{tpu_custom_call.1} parent=1 // pred_region
      _
    $region41: #{tpu_custom_call.1} parent=1 // pred_fallthru
      _
    // Predicated region
    $region42: #{tpu_custom_call.1} parent=1 // pred_check
      _
    $region43: #{tpu_custom_call.1} parent=1 // pred_check_branch
      %96 = sbr.rel (0) target = $region45
    $region44: #{tpu_custom_call.1} parent=1 // pred_region
      %s98 = ssub.s32 32, 32
      %99 = vsyncadd [#allocation12], %s98
      %s100 = sshll.u32 [#allocation11], 4
      %s101 = int_to_ptr.vmem [resolvable:$true] %s100
      %106 = dma.hbm_to_vmem [thread:$0]  %s10, 32, %s101, [#allocation12], 16, 16, 1
    $region45: #{tpu_custom_call.1} parent=1 // pred_fallthru
      _
    // Predicated region
    $region46: #{tpu_custom_call.1} parent=1 // pred_check
      _
    $region47: #{tpu_custom_call.1} parent=1 // pred_check_branch
      %108 = sbr.rel (0) target = $region49
    $region48: #{tpu_custom_call.1} parent=1 // pred_region
      %s110 = ssub.s32 32, 32
      %111 = vsyncadd [#allocation12], %s110
      %s112 = sshll.u32 [#allocation13], 4
      %s113 = int_to_ptr.vmem [resolvable:$true] %s112
      %118 = dma.hbm_to_vmem [thread:$0]  %s11, 32, %s113, [#allocation12], 16, 16, 1
    $region49: #{tpu_custom_call.1} parent=1 // pred_fallthru
      _
    // Predicated region
    $region50: #{tpu_custom_call.1} parent=1 // pred_check
      _
    $region51: #{tpu_custom_call.1} parent=1 // pred_check_branch
      %120 = sbr.rel (0) target = $region53
    $region52: #{tpu_custom_call.1} parent=1 // pred_region
      _
    $region53: #{tpu_custom_call.1} parent=1 // pred_fallthru
      _
    // Predicated region
    $region54: #{tpu_custom_call.1} parent=1 // pred_check
      _
    $region55: #{tpu_custom_call.1} parent=1 // pred_check_branch
      %122 = sbr.rel (0) target = $region57
    $region56: #{tpu_custom_call.1} parent=1 // pred_region
      %s124 = ssub.s32 32, 32
      %125 = vsyncadd [#allocation15], %s124
      %s126 = sshll.u32 [#allocation14], 4
      %s127 = int_to_ptr.vmem [resolvable:$true] %s126
      %132 = dma.hbm_to_vmem [thread:$0]  %s13, 32, %s127, [#allocation15], 16, 16, 1
    $region57: #{tpu_custom_call.1} parent=1 // pred_fallthru
      _
    // Predicated region
    $region58: #{tpu_custom_call.1} parent=1 // pred_check
      _
    $region59: #{tpu_custom_call.1} parent=1 // pred_check_branch
      %134 = sbr.rel (0) target = $region61
    $region60: #{tpu_custom_call.1} parent=1 // pred_region
      _
    $region61: #{tpu_custom_call.1} parent=1 // pred_fallthru
      _
    // Predicated region
    $region62: #{tpu_custom_call.1} parent=1 // pred_check
      _
    $region63: #{tpu_custom_call.1} parent=1 // pred_check_branch
      %136 = sbr.rel (0) target = $region65
    $region64: #{tpu_custom_call.1} parent=1 // pred_region
      _
    $region65: #{tpu_custom_call.1} parent=1 // pred_fallthru
      _
    // Predicated region
    $region66: #{tpu_custom_call.1} parent=1 // pred_check
      _
    $region67: #{tpu_custom_call.1} parent=1 // pred_check_branch
      %138 = sbr.rel (0) target = $region69
    $region68: #{tpu_custom_call.1} parent=1 // pred_region
      _
    $region69: #{tpu_custom_call.1} parent=1 // pred_fallthru
      _
    // Predicated region
    $region70: #{tpu_custom_call.1} parent=1 // pred_check
      _
    $region71: #{tpu_custom_call.1} parent=1 // pred_check_branch
      %140 = sbr.rel (0) target = $region73
    $region72: #{tpu_custom_call.1} parent=1 // pred_region
      _
    $region73: #{tpu_custom_call.1} parent=1 // pred_fallthru
      _
    // Predicated region
    $region74: #{tpu_custom_call.1} parent=1 // pred_check
      _
    $region75: #{tpu_custom_call.1} parent=1 // pred_check_branch
      %142 = sbr.rel (0) target = $region77
    $region76: #{tpu_custom_call.1} parent=1 // pred_region
      _
    $region77: #{tpu_custom_call.1} parent=1 // pred_fallthru
      _
    // Predicated region
    $region78: #{tpu_custom_call.1} parent=1 // pred_check
      _
    $region79: #{tpu_custom_call.1} parent=1 // pred_check_branch
      %144 = sbr.rel (0) target = $region81
    $region80: #{tpu_custom_call.1} parent=1 // pred_region
      _
    $region81: #{tpu_custom_call.1} parent=1 // pred_fallthru
      _
    // Predicated region
    $region82: #{tpu_custom_call.1} parent=1 // pred_check
      _
    $region83: #{tpu_custom_call.1} parent=1 // pred_check_branch
      %146 = sbr.rel (0) target = $region85
    $region84: #{tpu_custom_call.1} parent=1 // pred_region
      %147 = dma.done [#allocation3], 128
    $region85: #{tpu_custom_call.1} parent=1 // pred_fallthru
      _
    // Predicated region
    $region86: #{tpu_custom_call.1} parent=1 // pred_check
      _
    $region87: #{tpu_custom_call.1} parent=1 // pred_check_branch
      %149 = sbr.rel (0) target = $region89
    $region88: #{tpu_custom_call.1} parent=1 // pred_region
      %150 = dma.done [#allocation6], 128
    $region89: #{tpu_custom_call.1} parent=1 // pred_fallthru
      _
    // Predicated region
    $region90: #{tpu_custom_call.1} parent=1 // pred_check
      _
    $region91: #{tpu_custom_call.1} parent=1 // pred_check_branch
      %152 = sbr.rel (0) target = $region93
    $region92: #{tpu_custom_call.1} parent=1 // pred_region
      %153 = dma.done [#allocation6], 16
    $region93: #{tpu_custom_call.1} parent=1 // pred_fallthru
      _
    // Predicated region
    $region94: #{tpu_custom_call.1} parent=1 // pred_check
      _
    $region95: #{tpu_custom_call.1} parent=1 // pred_check_branch
      %155 = sbr.rel (0) target = $region97
    $region96: #{tpu_custom_call.1} parent=1 // pred_region
      %156 = dma.done [#allocation9], 16
    $region97: #{tpu_custom_call.1} parent=1 // pred_fallthru
      _
    // Predicated region
    $region98: #{tpu_custom_call.1} parent=1 // pred_check
      _
    $region99: #{tpu_custom_call.1} parent=1 // pred_check_branch
      %158 = sbr.rel (0) target = $region101
    $region100: #{tpu_custom_call.1} parent=1 // pred_region
      %159 = dma.done [#allocation9], 16
    $region101: #{tpu_custom_call.1} parent=1 // pred_fallthru
      _
    // Predicated region
    $region102: #{tpu_custom_call.1} parent=1 // pred_check
      _
    $region103: #{tpu_custom_call.1} parent=1 // pred_check_branch
      %161 = sbr.rel (0) target = $region105
    $region104: #{tpu_custom_call.1} parent=1 // pred_region
      %162 = dma.done [#allocation12], 32
    $region105: #{tpu_custom_call.1} parent=1 // pred_fallthru
      _
    // Predicated region
    $region106: #{tpu_custom_call.1} parent=1 // pred_check
      _
    $region107: #{tpu_custom_call.1} parent=1 // pred_check_branch
      %164 = sbr.rel (0) target = $region109
    $region108: #{tpu_custom_call.1} parent=1 // pred_region
      %165 = dma.done [#allocation12], 32
    $region109: #{tpu_custom_call.1} parent=1 // pred_fallthru
      _
    // Predicated region
    $region110: #{tpu_custom_call.1} parent=1 // pred_check
      _
    $region111: #{tpu_custom_call.1} parent=1 // pred_check_branch
      %167 = sbr.rel (0) target = $region113
    $region112: #{tpu_custom_call.1} parent=1 // pred_region
      %168 = dma.done [#allocation15], 32
    $region113: #{tpu_custom_call.1} parent=1 // pred_fallthru
      _
    %v170 = vld [vmem:[#allocation2] sm:$0xf]
    %v171 = vld [vmem:[#allocation2 + $0x4] sm:$0xf]
    %v172 = vld [vmem:[#allocation5] sm:$0xf]
    %v173 = vld [vmem:[#allocation5 + $0x4] sm:$0xf]
    %v174 = vld [vmem:[#allocation7] sm:$0x1]
    %v176 = vlaneseq
    %v177 = vshrl.u32 %v176, 7
    %v178 = vsub.s32 0, %v177
    %v179 = vrot.slane %v174, %v178
    %v183 = vunpack.c.l.b16 %v170
    %v184 = vunpack.c.l.b16 %v171
    %v185 = vpack.c.b16 %v184, %v183
    %v188 = vunpack.c.l.b16 %v172
    %v189 = vunpack.c.l.b16 %v173
    %v190 = vpack.c.b16 %v189, %v188
    %vm192 = vcmask 130048
    %v194 = vsel %vm192, %v185, 0
    %196 = vmatprep.subr.bf16.mxu0 0
    %197 = vmatpush1.bf16.msra.mxu0 %v190
    %198 = vmatprep.subr.bf16.mxu0 0
    %199 = vmatpush1.bf16.msra.mxu0 0
    %200 = vmatprep.subr.bf16.mxu0 0
    %201 = vmatpush1.bf16.msra.mxu0 0
    %202 = vmatprep.subr.bf16.mxu0 0
    %203 = vmatpush1.bf16.msra.mxu0 0
    %204 = vmatprep.subr.bf16.mxu0 0
    %205 = vmatpush1.bf16.msra.mxu0 0
    %206 = vmatprep.subr.bf16.mxu0 0
    %207 = vmatpush1.bf16.msra.mxu0 0
    %208 = vmatprep.subr.bf16.mxu0 0
    %209 = vmatpush1.bf16.msra.mxu0 0
    %210 = vmatprep.subr.bf16.mxu0 0
    %211 = vmatpush1.bf16.msra.mxu0 0
    %212 = vmatprep.subr.bf16.mxu0 0
    %213 = vmatpush1.bf16.msra.mxu0 0
    %214 = vmatprep.subr.bf16.mxu0 0
    %215 = vmatpush1.bf16.msra.mxu0 0
    %216 = vmatprep.subr.bf16.mxu0 0
    %217 = vmatpush1.bf16.msra.mxu0 0
    %218 = vmatprep.subr.bf16.mxu0 0
    %219 = vmatpush1.bf16.msra.mxu0 0
    %220 = vmatprep.subr.bf16.mxu0 0
    %221 = vmatpush1.bf16.msra.mxu0 0
    %222 = vmatprep.subr.bf16.mxu0 0
    %223 = vmatpush1.bf16.msra.mxu0 0
    %224 = vmatprep.subr.bf16.mxu0 0
    %225 = vmatpush1.bf16.msra.mxu0 0
    %226 = vmatprep.subr.bf16.mxu0 0
    %227 = vmatpush1.bf16.msra.mxu0 0
    %228 = vmatprep.mubr.bf16.mxu0 0
    %229 = vmatmul.mubr.bf16.gmra.mrb[0].mxu0 %v194
    %v230 = vpop.f32.mrb[0].mxu0
    %v231 = vadd.f32 %v179, %v230
    %v232 = vpop.f32.mrb[0].mxu0
    %v233 = vpop.f32.mrb[0].mxu0
    %v234 = vadd.f32 %v179, %v233
    %v235 = vpop.f32.mrb[0].mxu0
    %236 = vdwg.mxu0
    %v237 = vld [vmem:[#allocation8] sm:$0x1]
    %v238 = vld [vmem:[#allocation10] sm:$0x1]
    %vm239 = vcmask 261120
    %v240 = vsel %vm239, %v231, 0.0
    %241 = vadd.xlane.f32.xlu0 %v240
    %v242 = vpop.xlane.xlu0 %241
    %v243 = vsel %vm239, %v234, 0.0
    %244 = vadd.xlane.f32.xlu0 %v243
    %v245 = vpop.xlane.xlu0 %244
    %v246 = vrcp.pop 32.0
    %v247 = vmul.f32 %v242, %v246
    %v248 = vmul.f32 %v245, %v246
    %v249 = vsub.f32 %v231, %v247
    %v250 = vsub.f32 %v234, %v248
    %v251 = vmul.f32 %v249, %v249
    %v252 = vmul.f32 %v250, %v250
    %v253 = vsel %vm239, %v251, 0.0
    %254 = vadd.xlane.f32.xlu0 %v253
    %v255 = vpop.xlane.xlu0 %254
    %v256 = vsel %vm239, %v252, 0.0
    %257 = vadd.xlane.f32.xlu0 %v256
    %v258 = vpop.xlane.xlu0 %257
    %v259 = vmul.f32 %v255, %v246
    %v260 = vmul.f32 %v258, %v246
    %v261 = vadd.f32 %v259, 1e-05
    %v262 = vadd.f32 %v260, 1e-05
    %v263 = vrsqrt.pop %v261
    %v264 = vrsqrt.pop %v262
    %v265 = vmul.f32 %v249, %v263
    %v266 = vmul.f32 %v250, %v264
    %v268 = vlaneseq
    %v269 = vshrl.u32 %v268, 7
    %v270 = vsub.s32 0, %v269
    %v271 = vrot.slane %v237, %v270
    %v273 = vmul.f32 %v265, %v271
    %v274 = vmul.f32 %v266, %v271
    %v276 = vlaneseq
    %v277 = vshrl.u32 %v276, 7
    %v278 = vsub.s32 0, %v277
    %v279 = vrot.slane %v238, %v278
    %v281 = vadd.f32 %v273, %v279
    %v282 = vadd.f32 %v274, %v279
    %v283 = vmax.f32 %v281, 0.0
    %v284 = vmax.f32 %v282, 0.0
    %v285 = vld [vmem:[%s5] sm:$0xff]
    %v286 = vld [vmem:[%s5 + $0x8] sm:$0xff]
    %v287 = vadd.f32 %v283, %v285
    %v288 = vadd.f32 %v284, %v286
    %v289 = vld [vmem:[%s6] sm:$0xf]
    %v290 = vld [vmem:[%s6 + $0x4] sm:$0xf]
    %v291 = vld [vmem:[%s6 + $0x8] sm:$0xf]
    %v292 = vld [vmem:[%s6 + $0xc] sm:$0xf]
    %v293 = vpack.c.bf16 %v288, %v287
    %v294 = vld [vmem:[%s7] sm:$0x1]
    %v296 = vlaneseq
    %v297 = vshrl.u32 %v296, 7
    %v298 = vsub.s32 0, %v297
    %v299 = vrot.slane %v294, %v298
    %v305 = vunpack.c.l.b16 %v289
    %v306 = vunpack.c.l.b16 %v290
    %v307 = vunpack.c.l.b16 %v291
    %v308 = vunpack.c.l.b16 %v292
    %v309 = vpack.c.b16 %v306, %v305
    %v310 = vpack.c.b16 %v308, %v307
    %v314 = vsel %vm239, %v293, 0
    %316 = vmatprep.subr.bf16.mxu0 0
    %317 = vmatpush1.bf16.msra.mxu0 %v309
    %318 = vmatprep.subr.bf16.mxu0 0
    %319 = vmatpush1.bf16.msra.mxu0 %v310
    %320 = vmatprep.subr.bf16.mxu0 0
    %321 = vmatpush1.bf16.msra.mxu0 0
    %322 = vmatprep.subr.bf16.mxu0 0
    %323 = vmatpush1.bf16.msra.mxu0 0
    %324 = vmatprep.subr.bf16.mxu0 0
    %325 = vmatpush1.bf16.msra.mxu0 0
    %326 = vmatprep.subr.bf16.mxu0 0
    %327 = vmatpush1.bf16.msra.mxu0 0
    %328 = vmatprep.subr.bf16.mxu0 0
    %329 = vmatpush1.bf16.msra.mxu0 0
    %330 = vmatprep.subr.bf16.mxu0 0
    %331 = vmatpush1.bf16.msra.mxu0 0
    %332 = vmatprep.subr.bf16.mxu0 0
    %333 = vmatpush1.bf16.msra.mxu0 0
    %334 = vmatprep.subr.bf16.mxu0 0
    %335 = vmatpush1.bf16.msra.mxu0 0
    %336 = vmatprep.subr.bf16.mxu0 0
    %337 = vmatpush1.bf16.msra.mxu0 0
    %338 = vmatprep.subr.bf16.mxu0 0
    %339 = vmatpush1.bf16.msra.mxu0 0
    %340 = vmatprep.subr.bf16.mxu0 0
    %341 = vmatpush1.bf16.msra.mxu0 0
    %342 = vmatprep.subr.bf16.mxu0 0
    %343 = vmatpush1.bf16.msra.mxu0 0
    %344 = vmatprep.subr.bf16.mxu0 0
    %345 = vmatpush1.bf16.msra.mxu0 0
    %346 = vmatprep.subr.bf16.mxu0 0
    %347 = vmatpush1.bf16.msra.mxu0 0
    %348 = vmatprep.mubr.bf16.mxu0 0
    %349 = vmatmul.mubr.bf16.gmra.mrb[0].mxu0 %v314
    %v350 = vpop.f32.mrb[0].mxu0
    %v351 = vadd.f32 %v299, %v350
    %v352 = vpop.f32.mrb[0].mxu0
    %v353 = vpop.f32.mrb[0].mxu0
    %v354 = vadd.f32 %v299, %v353
    %v355 = vpop.f32.mrb[0].mxu0
    %356 = vdwg.mxu0
    %v357 = vpack.c.bf16 %v351, %v351
    %v358 = vpack.c.bf16 %v354, %v354
    %360 = vrot.lane.b32.xlu0 %v357, 96
    %v361 = vpop.permute.xlu0 %360
    %vm362 = vcmask 64512
    %v364 = vsel %vm362, %v357, 0
    %v367 = vsel %vm362, %v361, 0
    %369 = vmatprep.subr.bf16.mxu0 0
    %370 = vmatpush1.bf16.xpose.msra.mxu0 %v367
    %371 = vmatprep.subr.bf16.mxu0 0
    %372 = vmatpush1.bf16.xpose.msra.mxu0 0
    %373 = vmatprep.subr.bf16.mxu0 0
    %374 = vmatpush1.bf16.xpose.msra.mxu0 0
    %375 = vmatprep.subr.bf16.mxu0 0
    %376 = vmatpush1.bf16.xpose.msra.mxu0 0
    %377 = vmatprep.subr.bf16.mxu0 0
    %378 = vmatpush1.bf16.xpose.msra.mxu0 0
    %379 = vmatprep.subr.bf16.mxu0 0
    %380 = vmatpush1.bf16.xpose.msra.mxu0 0
    %381 = vmatprep.subr.bf16.mxu0 0
    %382 = vmatpush1.bf16.xpose.msra.mxu0 0
    %383 = vmatprep.subr.bf16.mxu0 0
    %384 = vmatpush1.bf16.xpose.msra.mxu0 0
    %385 = vmatprep.subr.bf16.mxu0 0
    %386 = vmatpush1.bf16.xpose.msra.mxu0 0
    %387 = vmatprep.subr.bf16.mxu0 0
    %388 = vmatpush1.bf16.xpose.msra.mxu0 0
    %389 = vmatprep.subr.bf16.mxu0 0
    %390 = vmatpush1.bf16.xpose.msra.mxu0 0
    %391 = vmatprep.subr.bf16.mxu0 0
    %392 = vmatpush1.bf16.xpose.msra.mxu0 0
    %393 = vmatprep.subr.bf16.mxu0 0
    %394 = vmatpush1.bf16.xpose.msra.mxu0 0
    %395 = vmatprep.subr.bf16.mxu0 0
    %396 = vmatpush1.bf16.xpose.msra.mxu0 0
    %397 = vmatprep.subr.bf16.mxu0 0
    %398 = vmatpush1.bf16.xpose.msra.mxu0 0
    %399 = vmatprep.subr.bf16.mxu0 0
    %400 = vmatpush1.bf16.xpose.msra.mxu0 0
    %401 = vmatprep.mubr.bf16.mxu0 0
    %402 = vmatmul.mubr.bf16.gmra.mrb[0].mxu0 %v364
    %v403 = vpop.f32.mrb[0].mxu0
    %v404 = vadd.f32 0.0, %v403
    %v405 = vpop.f32.mrb[0].mxu0
    %v406 = vpop.f32.mrb[0].mxu0
    %v407 = vpop.f32.mrb[0].mxu0
    %408 = vdwg.mxu0
    %410 = vrot.lane.b32.xlu0 %v358, 96
    %v411 = vpop.permute.xlu0 %410
    %v413 = vsel %vm362, %v358, 0
    %v416 = vsel %vm362, %v411, 0
    %418 = vmatprep.subr.bf16.mxu0 0
    %419 = vmatpush1.bf16.xpose.msra.mxu0 %v416
    %420 = vmatprep.subr.bf16.mxu0 0
    %421 = vmatpush1.bf16.xpose.msra.mxu0 0
    %422 = vmatprep.subr.bf16.mxu0 0
    %423 = vmatpush1.bf16.xpose.msra.mxu0 0
    %424 = vmatprep.subr.bf16.mxu0 0
    %425 = vmatpush1.bf16.xpose.msra.mxu0 0
    %426 = vmatprep.subr.bf16.mxu0 0
    %427 = vmatpush1.bf16.xpose.msra.mxu0 0
    %428 = vmatprep.subr.bf16.mxu0 0
    %429 = vmatpush1.bf16.xpose.msra.mxu0 0
    %430 = vmatprep.subr.bf16.mxu0 0
    %431 = vmatpush1.bf16.xpose.msra.mxu0 0
    %432 = vmatprep.subr.bf16.mxu0 0
    %433 = vmatpush1.bf16.xpose.msra.mxu0 0
    %434 = vmatprep.subr.bf16.mxu0 0
    %435 = vmatpush1.bf16.xpose.msra.mxu0 0
    %436 = vmatprep.subr.bf16.mxu0 0
    %437 = vmatpush1.bf16.xpose.msra.mxu0 0
    %438 = vmatprep.subr.bf16.mxu0 0
    %439 = vmatpush1.bf16.xpose.msra.mxu0 0
    %440 = vmatprep.subr.bf16.mxu0 0
    %441 = vmatpush1.bf16.xpose.msra.mxu0 0
    %442 = vmatprep.subr.bf16.mxu0 0
    %443 = vmatpush1.bf16.xpose.msra.mxu0 0
    %444 = vmatprep.subr.bf16.mxu0 0
    %445 = vmatpush1.bf16.xpose.msra.mxu0 0
    %446 = vmatprep.subr.bf16.mxu0 0
    %447 = vmatpush1.bf16.xpose.msra.mxu0 0
    %448 = vmatprep.subr.bf16.mxu0 0
    %449 = vmatpush1.bf16.xpose.msra.mxu0 0
    %450 = vmatprep.mubr.bf16.mxu0 0
    %451 = vmatmul.mubr.bf16.gmra.mrb[0].mxu0 %v413
    %v452 = vpop.f32.mrb[0].mxu0
    %v453 = vadd.f32 0.0, %v452
    %v454 = vpop.f32.mrb[0].mxu0
    %v455 = vpop.f32.mrb[0].mxu0
    %v456 = vpop.f32.mrb[0].mxu0
    %457 = vdwg.mxu0
    %v458 = vmul.f32 %v404, 0.35355338
    %v459 = vmul.f32 %v453, 0.35355338
    %v460 = vsel %vm362, %v458, -inf
    %461 = vmax.xlane.f32.xlu0 %v460
    %v462 = vpop.xlane.xlu0 %461
    %v463 = vsel %vm362, %v459, -inf
    %464 = vmax.xlane.f32.xlu0 %v463
    %v465 = vpop.xlane.xlu0 %464
    %v466 = vsub.f32 %v458, %v462
    %v467 = vsub.f32 %v459, %v465
    %v468 = vmul.f32 %v466, 1.442695
    %v469 = vpow.pop %v468
    %v470 = vmul.f32 %v467, 1.442695
    %v471 = vpow.pop %v470
    %v472 = vsel %vm362, %v469, 0.0
    %473 = vadd.xlane.f32.xlu0 %v472
    %v474 = vpop.xlane.xlu0 %473
    %v475 = vsel %vm362, %v471, 0.0
    %476 = vadd.xlane.f32.xlu0 %v475
    %v477 = vpop.xlane.xlu0 %476
    %v478 = vrcp.pop %v474
    %v479 = vrcp.pop %v477
    %v480 = vmul.f32 %v469, %v478
    %v481 = vmul.f32 %v471, %v479
    %v482 = vpack.c.bf16 %v480, %v480
    %v483 = vpack.c.bf16 %v481, %v481
    %484 = vrot.lane.b32.xlu0 %v357, 64
    %v485 = vpop.permute.xlu0 %484
    %v487 = vsel %vm362, %v482, 0
    %vm489 = vcmask 1043456
    %v491 = vsel %vm489, %v485, 0
    %493 = vmatprep.subr.bf16.mxu0 0
    %494 = vmatpush1.bf16.msra.mxu0 %v491
    %495 = vmatprep.subr.bf16.mxu0 0
    %496 = vmatpush1.bf16.msra.mxu0 0
    %497 = vmatprep.subr.bf16.mxu0 0
    %498 = vmatpush1.bf16.msra.mxu0 0
    %499 = vmatprep.subr.bf16.mxu0 0
    %500 = vmatpush1.bf16.msra.mxu0 0
    %501 = vmatprep.subr.bf16.mxu0 0
    %502 = vmatpush1.bf16.msra.mxu0 0
    %503 = vmatprep.subr.bf16.mxu0 0
    %504 = vmatpush1.bf16.msra.mxu0 0
    %505 = vmatprep.subr.bf16.mxu0 0
    %506 = vmatpush1.bf16.msra.mxu0 0
    %507 = vmatprep.subr.bf16.mxu0 0
    %508 = vmatpush1.bf16.msra.mxu0 0
    %509 = vmatprep.subr.bf16.mxu0 0
    %510 = vmatpush1.bf16.msra.mxu0 0
    %511 = vmatprep.subr.bf16.mxu0 0
    %512 = vmatpush1.bf16.msra.mxu0 0
    %513 = vmatprep.subr.bf16.mxu0 0
    %514 = vmatpush1.bf16.msra.mxu0 0
    %515 = vmatprep.subr.bf16.mxu0 0
    %516 = vmatpush1.bf16.msra.mxu0 0
    %517 = vmatprep.subr.bf16.mxu0 0
    %518 = vmatpush1.bf16.msra.mxu0 0
    %519 = vmatprep.subr.bf16.mxu0 0
    %520 = vmatpush1.bf16.msra.mxu0 0
    %521 = vmatprep.subr.bf16.mxu0 0
    %522 = vmatpush1.bf16.msra.mxu0 0
    %523 = vmatprep.subr.bf16.mxu0 0
    %524 = vmatpush1.bf16.msra.mxu0 0
    %525 = vmatprep.mubr.bf16.mxu0 0
    %526 = vmatmul.mubr.bf16.gmra.mrb[0].mxu0 %v487
    %v527 = vpop.f32.mrb[0].mxu0
    %v528 = vadd.f32 0.0, %v527
    %v529 = vpop.f32.mrb[0].mxu0
    %v530 = vpop.f32.mrb[0].mxu0
    %v531 = vpop.f32.mrb[0].mxu0
    %532 = vdwg.mxu0
    %533 = vrot.lane.b32.xlu0 %v358, 64
    %v534 = vpop.permute.xlu0 %533
    %v536 = vsel %vm362, %v483, 0
    %v539 = vsel %vm489, %v534, 0
    %541 = vmatprep.subr.bf16.mxu0 0
    %542 = vmatpush1.bf16.msra.mxu0 %v539
    %543 = vmatprep.subr.bf16.mxu0 0
    %544 = vmatpush1.bf16.msra.mxu0 0
    %545 = vmatprep.subr.bf16.mxu0 0
    %546 = vmatpush1.bf16.msra.mxu0 0
    %547 = vmatprep.subr.bf16.mxu0 0
    %548 = vmatpush1.bf16.msra.mxu0 0
    %549 = vmatprep.subr.bf16.mxu0 0
    %550 = vmatpush1.bf16.msra.mxu0 0
    %551 = vmatprep.subr.bf16.mxu0 0
    %552 = vmatpush1.bf16.msra.mxu0 0
    %553 = vmatprep.subr.bf16.mxu0 0
    %554 = vmatpush1.bf16.msra.mxu0 0
    %555 = vmatprep.subr.bf16.mxu0 0
    %556 = vmatpush1.bf16.msra.mxu0 0
    %557 = vmatprep.subr.bf16.mxu0 0
    %558 = vmatpush1.bf16.msra.mxu0 0
    %559 = vmatprep.subr.bf16.mxu0 0
    %560 = vmatpush1.bf16.msra.mxu0 0
    %561 = vmatprep.subr.bf16.mxu0 0
    %562 = vmatpush1.bf16.msra.mxu0 0
    %563 = vmatprep.subr.bf16.mxu0 0
    %564 = vmatpush1.bf16.msra.mxu0 0
    %565 = vmatprep.subr.bf16.mxu0 0
    %566 = vmatpush1.bf16.msra.mxu0 0
    %567 = vmatprep.subr.bf16.mxu0 0
    %568 = vmatpush1.bf16.msra.mxu0 0
    %569 = vmatprep.subr.bf16.mxu0 0
    %570 = vmatpush1.bf16.msra.mxu0 0
    %571 = vmatprep.subr.bf16.mxu0 0
    %572 = vmatpush1.bf16.msra.mxu0 0
    %573 = vmatprep.mubr.bf16.mxu0 0
    %574 = vmatmul.mubr.bf16.gmra.mrb[0].mxu0 %v536
    %v575 = vpop.f32.mrb[0].mxu0
    %v576 = vadd.f32 0.0, %v575
    %v577 = vpop.f32.mrb[0].mxu0
    %v578 = vpop.f32.mrb[0].mxu0
    %v579 = vpop.f32.mrb[0].mxu0
    %580 = vdwg.mxu0
    %581 = vrot.lane.b32.xlu0 %v357, 120
    %v582 = vpop.permute.xlu0 %581
    %583 = vrot.lane.b32.xlu0 %v357, 88
    %v584 = vpop.permute.xlu0 %583
    %v586 = vsel %vm362, %v582, 0
    %v589 = vsel %vm362, %v584, 0
    %591 = vmatprep.subr.bf16.mxu0 0
    %592 = vmatpush1.bf16.xpose.msra.mxu0 %v589
    %593 = vmatprep.subr.bf16.mxu0 0
    %594 = vmatpush1.bf16.xpose.msra.mxu0 0
    %595 = vmatprep.subr.bf16.mxu0 0
    %596 = vmatpush1.bf16.xpose.msra.mxu0 0
    %597 = vmatprep.subr.bf16.mxu0 0
    %598 = vmatpush1.bf16.xpose.msra.mxu0 0
    %599 = vmatprep.subr.bf16.mxu0 0
    %600 = vmatpush1.bf16.xpose.msra.mxu0 0
    %601 = vmatprep.subr.bf16.mxu0 0
    %602 = vmatpush1.bf16.xpose.msra.mxu0 0
    %603 = vmatprep.subr.bf16.mxu0 0
    %604 = vmatpush1.bf16.xpose.msra.mxu0 0
    %605 = vmatprep.subr.bf16.mxu0 0
    %606 = vmatpush1.bf16.xpose.msra.mxu0 0
    %607 = vmatprep.subr.bf16.mxu0 0
    %608 = vmatpush1.bf16.xpose.msra.mxu0 0
    %609 = vmatprep.subr.bf16.mxu0 0
    %610 = vmatpush1.bf16.xpose.msra.mxu0 0
    %611 = vmatprep.subr.bf16.mxu0 0
    %612 = vmatpush1.bf16.xpose.msra.mxu0 0
    %613 = vmatprep.subr.bf16.mxu0 0
    %614 = vmatpush1.bf16.xpose.msra.mxu0 0
    %615 = vmatprep.subr.bf16.mxu0 0
    %616 = vmatpush1.bf16.xpose.msra.mxu0 0
    %617 = vmatprep.subr.bf16.mxu0 0
    %618 = vmatpush1.bf16.xpose.msra.mxu0 0
    %619 = vmatprep.subr.bf16.mxu0 0
    %620 = vmatpush1.bf16.xpose.msra.mxu0 0
    %621 = vmatprep.subr.bf16.mxu0 0
    %622 = vmatpush1.bf16.xpose.msra.mxu0 0
    %623 = vmatprep.mubr.bf16.mxu0 0
    %624 = vmatmul.mubr.bf16.gmra.mrb[0].mxu0 %v586
    %v625 = vpop.f32.mrb[0].mxu0
    %v626 = vadd.f32 0.0, %v625
    %v627 = vpop.f32.mrb[0].mxu0
    %v628 = vpop.f32.mrb[0].mxu0
    %v629 = vpop.f32.mrb[0].mxu0
    %630 = vdwg.mxu0
    %631 = vrot.lane.b32.xlu0 %v358, 120
    %v632 = vpop.permute.xlu0 %631
    %633 = vrot.lane.b32.xlu0 %v358, 88
    %v634 = vpop.permute.xlu0 %633
    %v636 = vsel %vm362, %v632, 0
    %v639 = vsel %vm362, %v634, 0
    %641 = vmatprep.subr.bf16.mxu0 0
    %642 = vmatpush1.bf16.xpose.msra.mxu0 %v639
    %643 = vmatprep.subr.bf16.mxu0 0
    %644 = vmatpush1.bf16.xpose.msra.mxu0 0
    %645 = vmatprep.subr.bf16.mxu0 0
    %646 = vmatpush1.bf16.xpose.msra.mxu0 0
    %647 = vmatprep.subr.bf16.mxu0 0
    %648 = vmatpush1.bf16.xpose.msra.mxu0 0
    %649 = vmatprep.subr.bf16.mxu0 0
    %650 = vmatpush1.bf16.xpose.msra.mxu0 0
    %651 = vmatprep.subr.bf16.mxu0 0
    %652 = vmatpush1.bf16.xpose.msra.mxu0 0
    %653 = vmatprep.subr.bf16.mxu0 0
    %654 = vmatpush1.bf16.xpose.msra.mxu0 0
    %655 = vmatprep.subr.bf16.mxu0 0
    %656 = vmatpush1.bf16.xpose.msra.mxu0 0
    %657 = vmatprep.subr.bf16.mxu0 0
    %658 = vmatpush1.bf16.xpose.msra.mxu0 0
    %659 = vmatprep.subr.bf16.mxu0 0
    %660 = vmatpush1.bf16.xpose.msra.mxu0 0
    %661 = vmatprep.subr.bf16.mxu0 0
    %662 = vmatpush1.bf16.xpose.msra.mxu0 0
    %663 = vmatprep.subr.bf16.mxu0 0
    %664 = vmatpush1.bf16.xpose.msra.mxu0 0
    %665 = vmatprep.subr.bf16.mxu0 0
    %666 = vmatpush1.bf16.xpose.msra.mxu0 0
    %667 = vmatprep.subr.bf16.mxu0 0
    %668 = vmatpush1.bf16.xpose.msra.mxu0 0
    %669 = vmatprep.subr.bf16.mxu0 0
    %670 = vmatpush1.bf16.xpose.msra.mxu0 0
    %671 = vmatprep.subr.bf16.mxu0 0
    %672 = vmatpush1.bf16.xpose.msra.mxu0 0
    %673 = vmatprep.mubr.bf16.mxu0 0
    %674 = vmatmul.mubr.bf16.gmra.mrb[0].mxu0 %v636
    %v675 = vpop.f32.mrb[0].mxu0
    %v676 = vadd.f32 0.0, %v675
    %v677 = vpop.f32.mrb[0].mxu0
    %v678 = vpop.f32.mrb[0].mxu0
    %v679 = vpop.f32.mrb[0].mxu0
    %680 = vdwg.mxu0
    %v681 = vmul.f32 %v626, 0.35355338
    %v682 = vmul.f32 %v676, 0.35355338
    %v683 = vsel %vm362, %v681, -inf
    %684 = vmax.xlane.f32.xlu0 %v683
    %v685 = vpop.xlane.xlu0 %684
    %v686 = vsel %vm362, %v682, -inf
    %687 = vmax.xlane.f32.xlu0 %v686
    %v688 = vpop.xlane.xlu0 %687
    %v689 = vsub.f32 %v681, %v685
    %v690 = vsub.f32 %v682, %v688
    %v691 = vmul.f32 %v689, 1.442695
    %v692 = vpow.pop %v691
    %v693 = vmul.f32 %v690, 1.442695
    %v694 = vpow.pop %v693
    %v695 = vsel %vm362, %v692, 0.0
    %696 = vadd.xlane.f32.xlu0 %v695
    %v697 = vpop.xlane.xlu0 %696
    %v698 = vsel %vm362, %v694, 0.0
    %699 = vadd.xlane.f32.xlu0 %v698
    %v700 = vpop.xlane.xlu0 %699
    %v701 = vrcp.pop %v697
    %v702 = vrcp.pop %v700
    %v703 = vmul.f32 %v692, %v701
    %v704 = vmul.f32 %v694, %v702
    %v705 = vpack.c.bf16 %v703, %v703
    %v706 = vpack.c.bf16 %v704, %v704
    %707 = vrot.lane.b32.xlu0 %v357, 56
    %v708 = vpop.permute.xlu0 %707
    %v710 = vsel %vm362, %v705, 0
    %v713 = vsel %vm489, %v708, 0
    %715 = vmatprep.subr.bf16.mxu0 0
    %716 = vmatpush1.bf16.msra.mxu0 %v713
    %717 = vmatprep.subr.bf16.mxu0 0
    %718 = vmatpush1.bf16.msra.mxu0 0
    %719 = vmatprep.subr.bf16.mxu0 0
    %720 = vmatpush1.bf16.msra.mxu0 0
    %721 = vmatprep.subr.bf16.mxu0 0
    %722 = vmatpush1.bf16.msra.mxu0 0
    %723 = vmatprep.subr.bf16.mxu0 0
    %724 = vmatpush1.bf16.msra.mxu0 0
    %725 = vmatprep.subr.bf16.mxu0 0
    %726 = vmatpush1.bf16.msra.mxu0 0
    %727 = vmatprep.subr.bf16.mxu0 0
    %728 = vmatpush1.bf16.msra.mxu0 0
    %729 = vmatprep.subr.bf16.mxu0 0
    %730 = vmatpush1.bf16.msra.mxu0 0
    %731 = vmatprep.subr.bf16.mxu0 0
    %732 = vmatpush1.bf16.msra.mxu0 0
    %733 = vmatprep.subr.bf16.mxu0 0
    %734 = vmatpush1.bf16.msra.mxu0 0
    %735 = vmatprep.subr.bf16.mxu0 0
    %736 = vmatpush1.bf16.msra.mxu0 0
    %737 = vmatprep.subr.bf16.mxu0 0
    %738 = vmatpush1.bf16.msra.mxu0 0
    %739 = vmatprep.subr.bf16.mxu0 0
    %740 = vmatpush1.bf16.msra.mxu0 0
    %741 = vmatprep.subr.bf16.mxu0 0
    %742 = vmatpush1.bf16.msra.mxu0 0
    %743 = vmatprep.subr.bf16.mxu0 0
    %744 = vmatpush1.bf16.msra.mxu0 0
    %745 = vmatprep.subr.bf16.mxu0 0
    %746 = vmatpush1.bf16.msra.mxu0 0
    %747 = vmatprep.mubr.bf16.mxu0 0
    %748 = vmatmul.mubr.bf16.gmra.mrb[0].mxu0 %v710
    %v749 = vpop.f32.mrb[0].mxu0
    %v750 = vadd.f32 0.0, %v749
    %v751 = vpop.f32.mrb[0].mxu0
    %v752 = vpop.f32.mrb[0].mxu0
    %v753 = vpop.f32.mrb[0].mxu0
    %754 = vdwg.mxu0
    %755 = vrot.lane.b32.xlu0 %v358, 56
    %v756 = vpop.permute.xlu0 %755
    %v758 = vsel %vm362, %v706, 0
    %v761 = vsel %vm489, %v756, 0
    %763 = vmatprep.subr.bf16.mxu0 0
    %764 = vmatpush1.bf16.msra.mxu0 %v761
    %765 = vmatprep.subr.bf16.mxu0 0
    %766 = vmatpush1.bf16.msra.mxu0 0
    %767 = vmatprep.subr.bf16.mxu0 0
    %768 = vmatpush1.bf16.msra.mxu0 0
    %769 = vmatprep.subr.bf16.mxu0 0
    %770 = vmatpush1.bf16.msra.mxu0 0
    %771 = vmatprep.subr.bf16.mxu0 0
    %772 = vmatpush1.bf16.msra.mxu0 0
    %773 = vmatprep.subr.bf16.mxu0 0
    %774 = vmatpush1.bf16.msra.mxu0 0
    %775 = vmatprep.subr.bf16.mxu0 0
    %776 = vmatpush1.bf16.msra.mxu0 0
    %777 = vmatprep.subr.bf16.mxu0 0
    %778 = vmatpush1.bf16.msra.mxu0 0
    %779 = vmatprep.subr.bf16.mxu0 0
    %780 = vmatpush1.bf16.msra.mxu0 0
    %781 = vmatprep.subr.bf16.mxu0 0
    %782 = vmatpush1.bf16.msra.mxu0 0
    %783 = vmatprep.subr.bf16.mxu0 0
    %784 = vmatpush1.bf16.msra.mxu0 0
    %785 = vmatprep.subr.bf16.mxu0 0
    %786 = vmatpush1.bf16.msra.mxu0 0
    %787 = vmatprep.subr.bf16.mxu0 0
    %788 = vmatpush1.bf16.msra.mxu0 0
    %789 = vmatprep.subr.bf16.mxu0 0
    %790 = vmatpush1.bf16.msra.mxu0 0
    %791 = vmatprep.subr.bf16.mxu0 0
    %792 = vmatpush1.bf16.msra.mxu0 0
    %793 = vmatprep.subr.bf16.mxu0 0
    %794 = vmatpush1.bf16.msra.mxu0 0
    %795 = vmatprep.mubr.bf16.mxu0 0
    %796 = vmatmul.mubr.bf16.gmra.mrb[0].mxu0 %v758
    %v797 = vpop.f32.mrb[0].mxu0
    %v798 = vadd.f32 0.0, %v797
    %v799 = vpop.f32.mrb[0].mxu0
    %v800 = vpop.f32.mrb[0].mxu0
    %v801 = vpop.f32.mrb[0].mxu0
    %802 = vdwg.mxu0
    %803 = vrot.lane.b32.xlu0 %v357, 112
    %v804 = vpop.permute.xlu0 %803
    %805 = vrot.lane.b32.xlu0 %v357, 80
    %v806 = vpop.permute.xlu0 %805
    %v808 = vsel %vm362, %v804, 0
    %v811 = vsel %vm362, %v806, 0
    %813 = vmatprep.subr.bf16.mxu0 0
    %814 = vmatpush1.bf16.xpose.msra.mxu0 %v811
    %815 = vmatprep.subr.bf16.mxu0 0
    %816 = vmatpush1.bf16.xpose.msra.mxu0 0
    %817 = vmatprep.subr.bf16.mxu0 0
    %818 = vmatpush1.bf16.xpose.msra.mxu0 0
    %819 = vmatprep.subr.bf16.mxu0 0
    %820 = vmatpush1.bf16.xpose.msra.mxu0 0
    %821 = vmatprep.subr.bf16.mxu0 0
    %822 = vmatpush1.bf16.xpose.msra.mxu0 0
    %823 = vmatprep.subr.bf16.mxu0 0
    %824 = vmatpush1.bf16.xpose.msra.mxu0 0
    %825 = vmatprep.subr.bf16.mxu0 0
    %826 = vmatpush1.bf16.xpose.msra.mxu0 0
    %827 = vmatprep.subr.bf16.mxu0 0
    %828 = vmatpush1.bf16.xpose.msra.mxu0 0
    %829 = vmatprep.subr.bf16.mxu0 0
    %830 = vmatpush1.bf16.xpose.msra.mxu0 0
    %831 = vmatprep.subr.bf16.mxu0 0
    %832 = vmatpush1.bf16.xpose.msra.mxu0 0
    %833 = vmatprep.subr.bf16.mxu0 0
    %834 = vmatpush1.bf16.xpose.msra.mxu0 0
    %835 = vmatprep.subr.bf16.mxu0 0
    %836 = vmatpush1.bf16.xpose.msra.mxu0 0
    %837 = vmatprep.subr.bf16.mxu0 0
    %838 = vmatpush1.bf16.xpose.msra.mxu0 0
    %839 = vmatprep.subr.bf16.mxu0 0
    %840 = vmatpush1.bf16.xpose.msra.mxu0 0
    %841 = vmatprep.subr.bf16.mxu0 0
    %842 = vmatpush1.bf16.xpose.msra.mxu0 0
    %843 = vmatprep.subr.bf16.mxu0 0
    %844 = vmatpush1.bf16.xpose.msra.mxu0 0
    %845 = vmatprep.mubr.bf16.mxu0 0
    %846 = vmatmul.mubr.bf16.gmra.mrb[0].mxu0 %v808
    %v847 = vpop.f32.mrb[0].mxu0
    %v848 = vadd.f32 0.0, %v847
    %v849 = vpop.f32.mrb[0].mxu0
    %v850 = vpop.f32.mrb[0].mxu0
    %v851 = vpop.f32.mrb[0].mxu0
    %852 = vdwg.mxu0
    %853 = vrot.lane.b32.xlu0 %v358, 112
    %v854 = vpop.permute.xlu0 %853
    %855 = vrot.lane.b32.xlu0 %v358, 80
    %v856 = vpop.permute.xlu0 %855
    %v858 = vsel %vm362, %v854, 0
    %v861 = vsel %vm362, %v856, 0
    %863 = vmatprep.subr.bf16.mxu0 0
    %864 = vmatpush1.bf16.xpose.msra.mxu0 %v861
    %865 = vmatprep.subr.bf16.mxu0 0
    %866 = vmatpush1.bf16.xpose.msra.mxu0 0
    %867 = vmatprep.subr.bf16.mxu0 0
    %868 = vmatpush1.bf16.xpose.msra.mxu0 0
    %869 = vmatprep.subr.bf16.mxu0 0
    %870 = vmatpush1.bf16.xpose.msra.mxu0 0
    %871 = vmatprep.subr.bf16.mxu0 0
    %872 = vmatpush1.bf16.xpose.msra.mxu0 0
    %873 = vmatprep.subr.bf16.mxu0 0
    %874 = vmatpush1.bf16.xpose.msra.mxu0 0
    %875 = vmatprep.subr.bf16.mxu0 0
    %876 = vmatpush1.bf16.xpose.msra.mxu0 0
    %877 = vmatprep.subr.bf16.mxu0 0
    %878 = vmatpush1.bf16.xpose.msra.mxu0 0
    %879 = vmatprep.subr.bf16.mxu0 0
    %880 = vmatpush1.bf16.xpose.msra.mxu0 0
    %881 = vmatprep.subr.bf16.mxu0 0
    %882 = vmatpush1.bf16.xpose.msra.mxu0 0
    %883 = vmatprep.subr.bf16.mxu0 0
    %884 = vmatpush1.bf16.xpose.msra.mxu0 0
    %885 = vmatprep.subr.bf16.mxu0 0
    %886 = vmatpush1.bf16.xpose.msra.mxu0 0
    %887 = vmatprep.subr.bf16.mxu0 0
    %888 = vmatpush1.bf16.xpose.msra.mxu0 0
    %889 = vmatprep.subr.bf16.mxu0 0
    %890 = vmatpush1.bf16.xpose.msra.mxu0 0
    %891 = vmatprep.subr.bf16.mxu0 0
    %892 = vmatpush1.bf16.xpose.msra.mxu0 0
    %893 = vmatprep.subr.bf16.mxu0 0
    %894 = vmatpush1.bf16.xpose.msra.mxu0 0
    %895 = vmatprep.mubr.bf16.mxu0 0
    %896 = vmatmul.mubr.bf16.gmra.mrb[0].mxu0 %v858
    %v897 = vpop.f32.mrb[0].mxu0
    %v898 = vadd.f32 0.0, %v897
    %v899 = vpop.f32.mrb[0].mxu0
    %v900 = vpop.f32.mrb[0].mxu0
    %v901 = vpop.f32.mrb[0].mxu0
    %902 = vdwg.mxu0
    %v903 = vmul.f32 %v848, 0.35355338
    %v904 = vmul.f32 %v898, 0.35355338
    %v905 = vsel %vm362, %v903, -inf
    %906 = vmax.xlane.f32.xlu0 %v905
    %v907 = vpop.xlane.xlu0 %906
    %v908 = vsel %vm362, %v904, -inf
    %909 = vmax.xlane.f32.xlu0 %v908
    %v910 = vpop.xlane.xlu0 %909
    %v911 = vsub.f32 %v903, %v907
    %v912 = vsub.f32 %v904, %v910
    %v913 = vmul.f32 %v911, 1.442695
    %v914 = vpow.pop %v913
    %v915 = vmul.f32 %v912, 1.442695
    %v916 = vpow.pop %v915
    %v917 = vsel %vm362, %v914, 0.0
    %918 = vadd.xlane.f32.xlu0 %v917
    %v919 = vpop.xlane.xlu0 %918
    %v920 = vsel %vm362, %v916, 0.0
    %921 = vadd.xlane.f32.xlu0 %v920
    %v922 = vpop.xlane.xlu0 %921
    %v923 = vrcp.pop %v919
    %v924 = vrcp.pop %v922
    %v925 = vmul.f32 %v914, %v923
    %v926 = vmul.f32 %v916, %v924
    %v927 = vpack.c.bf16 %v925, %v925
    %v928 = vpack.c.bf16 %v926, %v926
    %929 = vrot.lane.b32.xlu0 %v357, 48
    %v930 = vpop.permute.xlu0 %929
    %v932 = vsel %vm362, %v927, 0
    %v935 = vsel %vm489, %v930, 0
    %937 = vmatprep.subr.bf16.mxu0 0
    %938 = vmatpush1.bf16.msra.mxu0 %v935
    %939 = vmatprep.subr.bf16.mxu0 0
    %940 = vmatpush1.bf16.msra.mxu0 0
    %941 = vmatprep.subr.bf16.mxu0 0
    %942 = vmatpush1.bf16.msra.mxu0 0
    %943 = vmatprep.subr.bf16.mxu0 0
    %944 = vmatpush1.bf16.msra.mxu0 0
    %945 = vmatprep.subr.bf16.mxu0 0
    %946 = vmatpush1.bf16.msra.mxu0 0
    %947 = vmatprep.subr.bf16.mxu0 0
    %948 = vmatpush1.bf16.msra.mxu0 0
    %949 = vmatprep.subr.bf16.mxu0 0
    %950 = vmatpush1.bf16.msra.mxu0 0
    %951 = vmatprep.subr.bf16.mxu0 0
    %952 = vmatpush1.bf16.msra.mxu0 0
    %953 = vmatprep.subr.bf16.mxu0 0
    %954 = vmatpush1.bf16.msra.mxu0 0
    %955 = vmatprep.subr.bf16.mxu0 0
    %956 = vmatpush1.bf16.msra.mxu0 0
    %957 = vmatprep.subr.bf16.mxu0 0
    %958 = vmatpush1.bf16.msra.mxu0 0
    %959 = vmatprep.subr.bf16.mxu0 0
    %960 = vmatpush1.bf16.msra.mxu0 0
    %961 = vmatprep.subr.bf16.mxu0 0
    %962 = vmatpush1.bf16.msra.mxu0 0
    %963 = vmatprep.subr.bf16.mxu0 0
    %964 = vmatpush1.bf16.msra.mxu0 0
    %965 = vmatprep.subr.bf16.mxu0 0
    %966 = vmatpush1.bf16.msra.mxu0 0
    %967 = vmatprep.subr.bf16.mxu0 0
    %968 = vmatpush1.bf16.msra.mxu0 0
    %969 = vmatprep.mubr.bf16.mxu0 0
    %970 = vmatmul.mubr.bf16.gmra.mrb[0].mxu0 %v932
    %v971 = vpop.f32.mrb[0].mxu0
    %v972 = vadd.f32 0.0, %v971
    %v973 = vpop.f32.mrb[0].mxu0
    %v974 = vpop.f32.mrb[0].mxu0
    %v975 = vpop.f32.mrb[0].mxu0
    %976 = vdwg.mxu0
    %977 = vrot.lane.b32.xlu0 %v358, 48
    %v978 = vpop.permute.xlu0 %977
    %v980 = vsel %vm362, %v928, 0
    %v983 = vsel %vm489, %v978, 0
    %985 = vmatprep.subr.bf16.mxu0 0
    %986 = vmatpush1.bf16.msra.mxu0 %v983
    %987 = vmatprep.subr.bf16.mxu0 0
    %988 = vmatpush1.bf16.msra.mxu0 0
    %989 = vmatprep.subr.bf16.mxu0 0
    %990 = vmatpush1.bf16.msra.mxu0 0
    %991 = vmatprep.subr.bf16.mxu0 0
    %992 = vmatpush1.bf16.msra.mxu0 0
    %993 = vmatprep.subr.bf16.mxu0 0
    %994 = vmatpush1.bf16.msra.mxu0 0
    %995 = vmatprep.subr.bf16.mxu0 0
    %996 = vmatpush1.bf16.msra.mxu0 0
    %997 = vmatprep.subr.bf16.mxu0 0
    %998 = vmatpush1.bf16.msra.mxu0 0
    %999 = vmatprep.subr.bf16.mxu0 0
    %1000 = vmatpush1.bf16.msra.mxu0 0
    %1001 = vmatprep.subr.bf16.mxu0 0
    %1002 = vmatpush1.bf16.msra.mxu0 0
    %1003 = vmatprep.subr.bf16.mxu0 0
    %1004 = vmatpush1.bf16.msra.mxu0 0
    %1005 = vmatprep.subr.bf16.mxu0 0
    %1006 = vmatpush1.bf16.msra.mxu0 0
    %1007 = vmatprep.subr.bf16.mxu0 0
    %1008 = vmatpush1.bf16.msra.mxu0 0
    %1009 = vmatprep.subr.bf16.mxu0 0
    %1010 = vmatpush1.bf16.msra.mxu0 0
    %1011 = vmatprep.subr.bf16.mxu0 0
    %1012 = vmatpush1.bf16.msra.mxu0 0
    %1013 = vmatprep.subr.bf16.mxu0 0
    %1014 = vmatpush1.bf16.msra.mxu0 0
    %1015 = vmatprep.subr.bf16.mxu0 0
    %1016 = vmatpush1.bf16.msra.mxu0 0
    %1017 = vmatprep.mubr.bf16.mxu0 0
    %1018 = vmatmul.mubr.bf16.gmra.mrb[0].mxu0 %v980
    %v1019 = vpop.f32.mrb[0].mxu0
    %v1020 = vadd.f32 0.0, %v1019
    %v1021 = vpop.f32.mrb[0].mxu0
    %v1022 = vpop.f32.mrb[0].mxu0
    %v1023 = vpop.f32.mrb[0].mxu0
    %1024 = vdwg.mxu0
    %1025 = vrot.lane.b32.xlu0 %v357, 104
    %v1026 = vpop.permute.xlu0 %1025
    %1027 = vrot.lane.b32.xlu0 %v357, 72
    %v1028 = vpop.permute.xlu0 %1027
    %v1030 = vsel %vm362, %v1026, 0
    %v1033 = vsel %vm362, %v1028, 0
    %1035 = vmatprep.subr.bf16.mxu0 0
    %1036 = vmatpush1.bf16.xpose.msra.mxu0 %v1033
    %1037 = vmatprep.subr.bf16.mxu0 0
    %1038 = vmatpush1.bf16.xpose.msra.mxu0 0
    %1039 = vmatprep.subr.bf16.mxu0 0
    %1040 = vmatpush1.bf16.xpose.msra.mxu0 0
    %1041 = vmatprep.subr.bf16.mxu0 0
    %1042 = vmatpush1.bf16.xpose.msra.mxu0 0
    %1043 = vmatprep.subr.bf16.mxu0 0
    %1044 = vmatpush1.bf16.xpose.msra.mxu0 0
    %1045 = vmatprep.subr.bf16.mxu0 0
    %1046 = vmatpush1.bf16.xpose.msra.mxu0 0
    %1047 = vmatprep.subr.bf16.mxu0 0
    %1048 = vmatpush1.bf16.xpose.msra.mxu0 0
    %1049 = vmatprep.subr.bf16.mxu0 0
    %1050 = vmatpush1.bf16.xpose.msra.mxu0 0
    %1051 = vmatprep.subr.bf16.mxu0 0
    %1052 = vmatpush1.bf16.xpose.msra.mxu0 0
    %1053 = vmatprep.subr.bf16.mxu0 0
    %1054 = vmatpush1.bf16.xpose.msra.mxu0 0
    %1055 = vmatprep.subr.bf16.mxu0 0
    %1056 = vmatpush1.bf16.xpose.msra.mxu0 0
    %1057 = vmatprep.subr.bf16.mxu0 0
    %1058 = vmatpush1.bf16.xpose.msra.mxu0 0
    %1059 = vmatprep.subr.bf16.mxu0 0
    %1060 = vmatpush1.bf16.xpose.msra.mxu0 0
    %1061 = vmatprep.subr.bf16.mxu0 0
    %1062 = vmatpush1.bf16.xpose.msra.mxu0 0
    %1063 = vmatprep.subr.bf16.mxu0 0
    %1064 = vmatpush1.bf16.xpose.msra.mxu0 0
    %1065 = vmatprep.subr.bf16.mxu0 0
    %1066 = vmatpush1.bf16.xpose.msra.mxu0 0
    %1067 = vmatprep.mubr.bf16.mxu0 0
    %1068 = vmatmul.mubr.bf16.gmra.mrb[0].mxu0 %v1030
    %v1069 = vpop.f32.mrb[0].mxu0
    %v1070 = vadd.f32 0.0, %v1069
    %v1071 = vpop.f32.mrb[0].mxu0
    %v1072 = vpop.f32.mrb[0].mxu0
    %v1073 = vpop.f32.mrb[0].mxu0
    %1074 = vdwg.mxu0
    %1075 = vrot.lane.b32.xlu0 %v358, 104
    %v1076 = vpop.permute.xlu0 %1075
    %1077 = vrot.lane.b32.xlu0 %v358, 72
    %v1078 = vpop.permute.xlu0 %1077
    %v1080 = vsel %vm362, %v1076, 0
    %v1083 = vsel %vm362, %v1078, 0
    %1085 = vmatprep.subr.bf16.mxu0 0
    %1086 = vmatpush1.bf16.xpose.msra.mxu0 %v1083
    %1087 = vmatprep.subr.bf16.mxu0 0
    %1088 = vmatpush1.bf16.xpose.msra.mxu0 0
    %1089 = vmatprep.subr.bf16.mxu0 0
    %1090 = vmatpush1.bf16.xpose.msra.mxu0 0
    %1091 = vmatprep.subr.bf16.mxu0 0
    %1092 = vmatpush1.bf16.xpose.msra.mxu0 0
    %1093 = vmatprep.subr.bf16.mxu0 0
    %1094 = vmatpush1.bf16.xpose.msra.mxu0 0
    %1095 = vmatprep.subr.bf16.mxu0 0
    %1096 = vmatpush1.bf16.xpose.msra.mxu0 0
    %1097 = vmatprep.subr.bf16.mxu0 0
    %1098 = vmatpush1.bf16.xpose.msra.mxu0 0
    %1099 = vmatprep.subr.bf16.mxu0 0
    %1100 = vmatpush1.bf16.xpose.msra.mxu0 0
    %1101 = vmatprep.subr.bf16.mxu0 0
    %1102 = vmatpush1.bf16.xpose.msra.mxu0 0
    %1103 = vmatprep.subr.bf16.mxu0 0
    %1104 = vmatpush1.bf16.xpose.msra.mxu0 0
    %1105 = vmatprep.subr.bf16.mxu0 0
    %1106 = vmatpush1.bf16.xpose.msra.mxu0 0
    %1107 = vmatprep.subr.bf16.mxu0 0
    %1108 = vmatpush1.bf16.xpose.msra.mxu0 0
    %1109 = vmatprep.subr.bf16.mxu0 0
    %1110 = vmatpush1.bf16.xpose.msra.mxu0 0
    %1111 = vmatprep.subr.bf16.mxu0 0
    %1112 = vmatpush1.bf16.xpose.msra.mxu0 0
    %1113 = vmatprep.subr.bf16.mxu0 0
    %1114 = vmatpush1.bf16.xpose.msra.mxu0 0
    %1115 = vmatprep.subr.bf16.mxu0 0
    %1116 = vmatpush1.bf16.xpose.msra.mxu0 0
    %1117 = vmatprep.mubr.bf16.mxu0 0
    %1118 = vmatmul.mubr.bf16.gmra.mrb[0].mxu0 %v1080
    %v1119 = vpop.f32.mrb[0].mxu0
    %v1120 = vadd.f32 0.0, %v1119
    %v1121 = vpop.f32.mrb[0].mxu0
    %v1122 = vpop.f32.mrb[0].mxu0
    %v1123 = vpop.f32.mrb[0].mxu0
    %1124 = vdwg.mxu0
    %v1125 = vmul.f32 %v1070, 0.35355338
    %v1126 = vmul.f32 %v1120, 0.35355338
    %v1127 = vsel %vm362, %v1125, -inf
    %1128 = vmax.xlane.f32.xlu0 %v1127
    %v1129 = vpop.xlane.xlu0 %1128
    %v1130 = vsel %vm362, %v1126, -inf
    %1131 = vmax.xlane.f32.xlu0 %v1130
    %v1132 = vpop.xlane.xlu0 %1131
    %v1133 = vsub.f32 %v1125, %v1129
    %v1134 = vsub.f32 %v1126, %v1132
    %v1135 = vmul.f32 %v1133, 1.442695
    %v1136 = vpow.pop %v1135
    %v1137 = vmul.f32 %v1134, 1.442695
    %v1138 = vpow.pop %v1137
    %v1139 = vsel %vm362, %v1136, 0.0
    %1140 = vadd.xlane.f32.xlu0 %v1139
    %v1141 = vpop.xlane.xlu0 %1140
    %v1142 = vsel %vm362, %v1138, 0.0
    %1143 = vadd.xlane.f32.xlu0 %v1142
    %v1144 = vpop.xlane.xlu0 %1143
    %v1145 = vrcp.pop %v1141
    %v1146 = vrcp.pop %v1144
    %v1147 = vmul.f32 %v1136, %v1145
    %v1148 = vmul.f32 %v1138, %v1146
    %v1149 = vpack.c.bf16 %v1147, %v1147
    %v1150 = vpack.c.bf16 %v1148, %v1148
    %1151 = vrot.lane.b32.xlu0 %v357, 40
    %v1152 = vpop.permute.xlu0 %1151
    %v1154 = vsel %vm362, %v1149, 0
    %v1157 = vsel %vm489, %v1152, 0
    %1159 = vmatprep.subr.bf16.mxu0 0
    %1160 = vmatpush1.bf16.msra.mxu0 %v1157
    %1161 = vmatprep.subr.bf16.mxu0 0
    %1162 = vmatpush1.bf16.msra.mxu0 0
    %1163 = vmatprep.subr.bf16.mxu0 0
    %1164 = vmatpush1.bf16.msra.mxu0 0
    %1165 = vmatprep.subr.bf16.mxu0 0
    %1166 = vmatpush1.bf16.msra.mxu0 0
    %1167 = vmatprep.subr.bf16.mxu0 0
    %1168 = vmatpush1.bf16.msra.mxu0 0
    %1169 = vmatprep.subr.bf16.mxu0 0
    %1170 = vmatpush1.bf16.msra.mxu0 0
    %1171 = vmatprep.subr.bf16.mxu0 0
    %1172 = vmatpush1.bf16.msra.mxu0 0
    %1173 = vmatprep.subr.bf16.mxu0 0
    %1174 = vmatpush1.bf16.msra.mxu0 0
    %1175 = vmatprep.subr.bf16.mxu0 0
    %1176 = vmatpush1.bf16.msra.mxu0 0
    %1177 = vmatprep.subr.bf16.mxu0 0
    %1178 = vmatpush1.bf16.msra.mxu0 0
    %1179 = vmatprep.subr.bf16.mxu0 0
    %1180 = vmatpush1.bf16.msra.mxu0 0
    %1181 = vmatprep.subr.bf16.mxu0 0
    %1182 = vmatpush1.bf16.msra.mxu0 0
    %1183 = vmatprep.subr.bf16.mxu0 0
    %1184 = vmatpush1.bf16.msra.mxu0 0
    %1185 = vmatprep.subr.bf16.mxu0 0
    %1186 = vmatpush1.bf16.msra.mxu0 0
    %1187 = vmatprep.subr.bf16.mxu0 0
    %1188 = vmatpush1.bf16.msra.mxu0 0
    %1189 = vmatprep.subr.bf16.mxu0 0
    %1190 = vmatpush1.bf16.msra.mxu0 0
    %1191 = vmatprep.mubr.bf16.mxu0 0
    %1192 = vmatmul.mubr.bf16.gmra.mrb[0].mxu0 %v1154
    %v1193 = vpop.f32.mrb[0].mxu0
    %v1194 = vadd.f32 0.0, %v1193
    %v1195 = vpop.f32.mrb[0].mxu0
    %v1196 = vpop.f32.mrb[0].mxu0
    %v1197 = vpop.f32.mrb[0].mxu0
    %1198 = vdwg.mxu0
    %1199 = vrot.lane.b32.xlu0 %v358, 40
    %v1200 = vpop.permute.xlu0 %1199
    %v1202 = vsel %vm362, %v1150, 0
    %v1205 = vsel %vm489, %v1200, 0
    %1207 = vmatprep.subr.bf16.mxu0 0
    %1208 = vmatpush1.bf16.msra.mxu0 %v1205
    %1209 = vmatprep.subr.bf16.mxu0 0
    %1210 = vmatpush1.bf16.msra.mxu0 0
    %1211 = vmatprep.subr.bf16.mxu0 0
    %1212 = vmatpush1.bf16.msra.mxu0 0
    %1213 = vmatprep.subr.bf16.mxu0 0
    %1214 = vmatpush1.bf16.msra.mxu0 0
    %1215 = vmatprep.subr.bf16.mxu0 0
    %1216 = vmatpush1.bf16.msra.mxu0 0
    %1217 = vmatprep.subr.bf16.mxu0 0
    %1218 = vmatpush1.bf16.msra.mxu0 0
    %1219 = vmatprep.subr.bf16.mxu0 0
    %1220 = vmatpush1.bf16.msra.mxu0 0
    %1221 = vmatprep.subr.bf16.mxu0 0
    %1222 = vmatpush1.bf16.msra.mxu0 0
    %1223 = vmatprep.subr.bf16.mxu0 0
    %1224 = vmatpush1.bf16.msra.mxu0 0
    %1225 = vmatprep.subr.bf16.mxu0 0
    %1226 = vmatpush1.bf16.msra.mxu0 0
    %1227 = vmatprep.subr.bf16.mxu0 0
    %1228 = vmatpush1.bf16.msra.mxu0 0
    %1229 = vmatprep.subr.bf16.mxu0 0
    %1230 = vmatpush1.bf16.msra.mxu0 0
    %1231 = vmatprep.subr.bf16.mxu0 0
    %1232 = vmatpush1.bf16.msra.mxu0 0
    %1233 = vmatprep.subr.bf16.mxu0 0
    %1234 = vmatpush1.bf16.msra.mxu0 0
    %1235 = vmatprep.subr.bf16.mxu0 0
    %1236 = vmatpush1.bf16.msra.mxu0 0
    %1237 = vmatprep.subr.bf16.mxu0 0
    %1238 = vmatpush1.bf16.msra.mxu0 0
    %1239 = vmatprep.mubr.bf16.mxu0 0
    %1240 = vmatmul.mubr.bf16.gmra.mrb[0].mxu0 %v1202
    %v1241 = vpop.f32.mrb[0].mxu0
    %v1242 = vadd.f32 0.0, %v1241
    %v1243 = vpop.f32.mrb[0].mxu0
    %v1244 = vpop.f32.mrb[0].mxu0
    %v1245 = vpop.f32.mrb[0].mxu0
    %1246 = vdwg.mxu0
    %1249 = vrot.lane.b32.xlu0 %v750, 8
    %v1250 = vpop.permute.xlu0 %1249
    %1251 = vrot.lane.b32.xlu0 %v798, 8
    %v1252 = vpop.permute.xlu0 %1251
    %1257 = vrot.lane.b32.xlu0 %v972, 16
    %v1258 = vpop.permute.xlu0 %1257
    %1259 = vrot.lane.b32.xlu0 %v1020, 16
    %v1260 = vpop.permute.xlu0 %1259
    %1265 = vrot.lane.b32.xlu0 %v1194, 24
    %v1266 = vpop.permute.xlu0 %1265
    %1267 = vrot.lane.b32.xlu0 %v1242, 24
    %v1268 = vpop.permute.xlu0 %1267
    %v1271 = vsel %vm362, %v528, %v1250
    %v1272 = vsel %vm362, %v576, %v1252
    %v1273 = vsel %vm192, %v1271, %v1258
    %v1274 = vsel %vm192, %v1272, %v1260
    %vm1275 = vcmask 195584
    %v1276 = vsel %vm1275, %v1273, %v1266
    %v1277 = vsel %vm1275, %v1274, %v1268
    %v1278 = vld [vmem:[%s8] sm:$0xf]
    %v1279 = vld [vmem:[%s8 + $0x4] sm:$0xf]
    %v1280 = vld [vmem:[%s8 + $0x8] sm:$0xf]
    %v1281 = vld [vmem:[%s8 + $0xc] sm:$0xf]
    %v1282 = vpack.c.bf16 %v1277, %v1276
    %v1283 = vld [vmem:[%s9] sm:$0x1]
    %v1285 = vlaneseq
    %v1286 = vshrl.u32 %v1285, 7
    %v1287 = vsub.s32 0, %v1286
    %v1288 = vrot.slane %v1283, %v1287
    %v1294 = vunpack.c.l.b16 %v1278
    %v1295 = vunpack.c.l.b16 %v1279
    %v1296 = vunpack.c.l.b16 %v1280
    %v1297 = vunpack.c.l.b16 %v1281
    %v1298 = vpack.c.b16 %v1295, %v1294
    %v1299 = vpack.c.b16 %v1297, %v1296
    %v1303 = vsel %vm239, %v1282, 0
    %1305 = vmatprep.subr.bf16.mxu0 0
    %1306 = vmatpush1.bf16.msra.mxu0 %v1298
    %1307 = vmatprep.subr.bf16.mxu0 0
    %1308 = vmatpush1.bf16.msra.mxu0 %v1299
    %1309 = vmatprep.subr.bf16.mxu0 0
    %1310 = vmatpush1.bf16.msra.mxu0 0
    %1311 = vmatprep.subr.bf16.mxu0 0
    %1312 = vmatpush1.bf16.msra.mxu0 0
    %1313 = vmatprep.subr.bf16.mxu0 0
    %1314 = vmatpush1.bf16.msra.mxu0 0
    %1315 = vmatprep.subr.bf16.mxu0 0
    %1316 = vmatpush1.bf16.msra.mxu0 0
    %1317 = vmatprep.subr.bf16.mxu0 0
    %1318 = vmatpush1.bf16.msra.mxu0 0
    %1319 = vmatprep.subr.bf16.mxu0 0
    %1320 = vmatpush1.bf16.msra.mxu0 0
    %1321 = vmatprep.subr.bf16.mxu0 0
    %1322 = vmatpush1.bf16.msra.mxu0 0
    %1323 = vmatprep.subr.bf16.mxu0 0
    %1324 = vmatpush1.bf16.msra.mxu0 0
    %1325 = vmatprep.subr.bf16.mxu0 0
    %1326 = vmatpush1.bf16.msra.mxu0 0
    %1327 = vmatprep.subr.bf16.mxu0 0
    %1328 = vmatpush1.bf16.msra.mxu0 0
    %1329 = vmatprep.subr.bf16.mxu0 0
    %1330 = vmatpush1.bf16.msra.mxu0 0
    %1331 = vmatprep.subr.bf16.mxu0 0
    %1332 = vmatpush1.bf16.msra.mxu0 0
    %1333 = vmatprep.subr.bf16.mxu0 0
    %1334 = vmatpush1.bf16.msra.mxu0 0
    %1335 = vmatprep.subr.bf16.mxu0 0
    %1336 = vmatpush1.bf16.msra.mxu0 0
    %1337 = vmatprep.mubr.bf16.mxu0 0
    %1338 = vmatmul.mubr.bf16.gmra.mrb[0].mxu0 %v1303
    %v1339 = vpop.f32.mrb[0].mxu0
    %v1340 = vadd.f32 %v1288, %v1339
    %v1341 = vpop.f32.mrb[0].mxu0
    %v1342 = vpop.f32.mrb[0].mxu0
    %v1343 = vadd.f32 %v1288, %v1342
    %v1344 = vpop.f32.mrb[0].mxu0
    %1345 = vdwg.mxu0
    %v1346 = vadd.f32 %v287, %v1340
    %v1347 = vadd.f32 %v288, %v1343
    %v1348 = vld [vmem:[#allocation11] sm:$0x1]
    %v1349 = vld [vmem:[#allocation13] sm:$0x1]
    %v1350 = vsel %vm239, %v1346, 0.0
    %1351 = vadd.xlane.f32.xlu0 %v1350
    %v1352 = vpop.xlane.xlu0 %1351
    %v1353 = vsel %vm239, %v1347, 0.0
    %1354 = vadd.xlane.f32.xlu0 %v1353
    %v1355 = vpop.xlane.xlu0 %1354
    %v1356 = vmul.f32 %v1352, %v246
    %v1357 = vmul.f32 %v1355, %v246
    %v1358 = vsub.f32 %v1346, %v1356
    %v1359 = vsub.f32 %v1347, %v1357
    %v1360 = vmul.f32 %v1358, %v1358
    %v1361 = vmul.f32 %v1359, %v1359
    %v1362 = vsel %vm239, %v1360, 0.0
    %1363 = vadd.xlane.f32.xlu0 %v1362
    %v1364 = vpop.xlane.xlu0 %1363
    %v1365 = vsel %vm239, %v1361, 0.0
    %1366 = vadd.xlane.f32.xlu0 %v1365
    %v1367 = vpop.xlane.xlu0 %1366
    %v1368 = vmul.f32 %v1364, %v246
    %v1369 = vmul.f32 %v1367, %v246
    %v1370 = vadd.f32 %v1368, 1e-12
    %v1371 = vadd.f32 %v1369, 1e-12
    %v1372 = vrsqrt.pop %v1370
    %v1373 = vrsqrt.pop %v1371
    %v1374 = vmul.f32 %v1358, %v1372
    %v1375 = vmul.f32 %v1359, %v1373
    %v1377 = vlaneseq
    %v1378 = vshrl.u32 %v1377, 7
    %v1379 = vsub.s32 0, %v1378
    %v1380 = vrot.slane %v1348, %v1379
    %v1382 = vmul.f32 %v1374, %v1380
    %v1383 = vmul.f32 %v1375, %v1380
    %v1385 = vlaneseq
    %v1386 = vshrl.u32 %v1385, 7
    %v1387 = vsub.s32 0, %v1386
    %v1388 = vrot.slane %v1349, %v1387
    %v1390 = vadd.f32 %v1382, %v1388
    %v1391 = vadd.f32 %v1383, %v1388
    %v1392 = vld [vmem:[%s12] sm:$0xf]
    %v1393 = vld [vmem:[%s12 + $0x4] sm:$0xf]
    %v1394 = vld [vmem:[%s12 + $0x8] sm:$0xf]
    %v1395 = vld [vmem:[%s12 + $0xc] sm:$0xf]
    %v1396 = vpack.c.bf16 %v1391, %v1390
    %v1397 = vld [vmem:[#allocation14] sm:$0x1]
    %v1399 = vlaneseq
    %v1400 = vshrl.u32 %v1399, 7
    %v1401 = vsub.s32 0, %v1400
    %v1402 = vrot.slane %v1397, %v1401
    %v1408 = vunpack.c.l.b16 %v1392
    %v1409 = vunpack.c.l.b16 %v1393
    %v1410 = vunpack.c.l.b16 %v1394
    %v1411 = vunpack.c.l.b16 %v1395
    %v1412 = vpack.c.b16 %v1409, %v1408
    %v1413 = vpack.c.b16 %v1411, %v1410
    %v1417 = vsel %vm239, %v1396, 0
    %1419 = vmatprep.subr.bf16.mxu0 0
    %1420 = vmatpush1.bf16.msra.mxu0 %v1412
    %1421 = vmatprep.subr.bf16.mxu0 0
    %1422 = vmatpush1.bf16.msra.mxu0 %v1413
    %1423 = vmatprep.subr.bf16.mxu0 0
    %1424 = vmatpush1.bf16.msra.mxu0 0
    %1425 = vmatprep.subr.bf16.mxu0 0
    %1426 = vmatpush1.bf16.msra.mxu0 0
    %1427 = vmatprep.subr.bf16.mxu0 0
    %1428 = vmatpush1.bf16.msra.mxu0 0
    %1429 = vmatprep.subr.bf16.mxu0 0
    %1430 = vmatpush1.bf16.msra.mxu0 0
    %1431 = vmatprep.subr.bf16.mxu0 0
    %1432 = vmatpush1.bf16.msra.mxu0 0
    %1433 = vmatprep.subr.bf16.mxu0 0
    %1434 = vmatpush1.bf16.msra.mxu0 0
    %1435 = vmatprep.subr.bf16.mxu0 0
    %1436 = vmatpush1.bf16.msra.mxu0 0
    %1437 = vmatprep.subr.bf16.mxu0 0
    %1438 = vmatpush1.bf16.msra.mxu0 0
    %1439 = vmatprep.subr.bf16.mxu0 0
    %1440 = vmatpush1.bf16.msra.mxu0 0
    %1441 = vmatprep.subr.bf16.mxu0 0
    %1442 = vmatpush1.bf16.msra.mxu0 0
    %1443 = vmatprep.subr.bf16.mxu0 0
    %1444 = vmatpush1.bf16.msra.mxu0 0
    %1445 = vmatprep.subr.bf16.mxu0 0
    %1446 = vmatpush1.bf16.msra.mxu0 0
    %1447 = vmatprep.subr.bf16.mxu0 0
    %1448 = vmatpush1.bf16.msra.mxu0 0
    %1449 = vmatprep.subr.bf16.mxu0 0
    %1450 = vmatpush1.bf16.msra.mxu0 0
    %1451 = vmatprep.mubr.bf16.mxu0 0
    %1452 = vmatmul.mubr.bf16.gmra.mrb[0].mxu0 %v1417
    %v1453 = vpop.f32.mrb[0].mxu0
    %v1454 = vadd.f32 %v1402, %v1453
    %v1455 = vpop.f32.mrb[0].mxu0
    %v1456 = vpop.f32.mrb[0].mxu0
    %v1457 = vadd.f32 %v1402, %v1456
    %v1458 = vpop.f32.mrb[0].mxu0
    %1459 = vdwg.mxu0
    %v1460 = vmax.f32 %v1454, 0.0
    %v1461 = vmax.f32 %v1457, 0.0
    %v1462 = vld [vmem:[%s14] sm:$0xf]
    %v1463 = vld [vmem:[%s14 + $0x4] sm:$0xf]
    %v1464 = vld [vmem:[%s14 + $0x8] sm:$0xf]
    %v1465 = vld [vmem:[%s14 + $0xc] sm:$0xf]
    %v1466 = vld [vmem:[%s14 + $0x10] sm:$0xf]
    %v1467 = vld [vmem:[%s14 + $0x14] sm:$0xf]
    %v1468 = vld [vmem:[%s14 + $0x18] sm:$0xf]
    %v1469 = vld [vmem:[%s14 + $0x1c] sm:$0xf]
    %v1470 = vpack.c.bf16 %v1461, %v1460
    %v1471 = vld [vmem:[%s15] sm:$0x1]
    %v1473 = vlaneseq
    %v1474 = vshrl.u32 %v1473, 7
    %v1475 = vsub.s32 0, %v1474
    %v1476 = vrot.slane %v1471, %v1475
    %v1486 = vunpack.c.l.b16 %v1462
    %v1487 = vunpack.c.l.b16 %v1463
    %v1488 = vunpack.c.l.b16 %v1464
    %v1489 = vunpack.c.l.b16 %v1465
    %v1490 = vunpack.c.l.b16 %v1466
    %v1491 = vunpack.c.l.b16 %v1467
    %v1492 = vunpack.c.l.b16 %v1468
    %v1493 = vunpack.c.l.b16 %v1469
    %v1494 = vpack.c.b16 %v1487, %v1486
    %v1495 = vpack.c.b16 %v1489, %v1488
    %v1496 = vpack.c.b16 %v1491, %v1490
    %v1497 = vpack.c.b16 %v1493, %v1492
    %vm1502 = vcmask 523264
    %v1504 = vsel %vm1502, %v1470, 0
    %1506 = vmatprep.subr.bf16.mxu0 0
    %1507 = vmatpush1.bf16.msra.mxu0 %v1494
    %1508 = vmatprep.subr.bf16.mxu0 0
    %1509 = vmatpush1.bf16.msra.mxu0 %v1495
    %1510 = vmatprep.subr.bf16.mxu0 0
    %1511 = vmatpush1.bf16.msra.mxu0 %v1496
    %1512 = vmatprep.subr.bf16.mxu0 0
    %1513 = vmatpush1.bf16.msra.mxu0 %v1497
    %1514 = vmatprep.subr.bf16.mxu0 0
    %1515 = vmatpush1.bf16.msra.mxu0 0
    %1516 = vmatprep.subr.bf16.mxu0 0
    %1517 = vmatpush1.bf16.msra.mxu0 0
    %1518 = vmatprep.subr.bf16.mxu0 0
    %1519 = vmatpush1.bf16.msra.mxu0 0
    %1520 = vmatprep.subr.bf16.mxu0 0
    %1521 = vmatpush1.bf16.msra.mxu0 0
    %1522 = vmatprep.subr.bf16.mxu0 0
    %1523 = vmatpush1.bf16.msra.mxu0 0
    %1524 = vmatprep.subr.bf16.mxu0 0
    %1525 = vmatpush1.bf16.msra.mxu0 0
    %1526 = vmatprep.subr.bf16.mxu0 0
    %1527 = vmatpush1.bf16.msra.mxu0 0
    %1528 = vmatprep.subr.bf16.mxu0 0
    %1529 = vmatpush1.bf16.msra.mxu0 0
    %1530 = vmatprep.subr.bf16.mxu0 0
    %1531 = vmatpush1.bf16.msra.mxu0 0
    %1532 = vmatprep.subr.bf16.mxu0 0
    %1533 = vmatpush1.bf16.msra.mxu0 0
    %1534 = vmatprep.subr.bf16.mxu0 0
    %1535 = vmatpush1.bf16.msra.mxu0 0
    %1536 = vmatprep.subr.bf16.mxu0 0
    %1537 = vmatpush1.bf16.msra.mxu0 0
    %1538 = vmatprep.mubr.bf16.mxu0 0
    %1539 = vmatmul.mubr.bf16.gmra.mrb[0].mxu0 %v1504
    %v1540 = vpop.f32.mrb[0].mxu0
    %v1541 = vadd.f32 %v1476, %v1540
    %v1542 = vpop.f32.mrb[0].mxu0
    %v1543 = vpop.f32.mrb[0].mxu0
    %v1544 = vadd.f32 %v1476, %v1543
    %v1545 = vpop.f32.mrb[0].mxu0
    %1546 = vdwg.mxu0
    %v1547 = vadd.f32 %v1390, %v1541
    %v1548 = vadd.f32 %v1391, %v1544
    %v1549 = vld [vmem:[%s16] sm:$0x1]
    %v1550 = vld [vmem:[%s17] sm:$0x1]
    %v1551 = vsel %vm239, %v1547, 0.0
    %1552 = vadd.xlane.f32.xlu0 %v1551
    %v1553 = vpop.xlane.xlu0 %1552
    %v1554 = vsel %vm239, %v1548, 0.0
    %1555 = vadd.xlane.f32.xlu0 %v1554
    %v1556 = vpop.xlane.xlu0 %1555
    %v1557 = vmul.f32 %v1553, %v246
    %v1558 = vmul.f32 %v1556, %v246
    %v1559 = vsub.f32 %v1547, %v1557
    %v1560 = vsub.f32 %v1548, %v1558
    %v1561 = vmul.f32 %v1559, %v1559
    %v1562 = vmul.f32 %v1560, %v1560
    %v1563 = vsel %vm239, %v1561, 0.0
    %1564 = vadd.xlane.f32.xlu0 %v1563
    %v1565 = vpop.xlane.xlu0 %1564
    %v1566 = vsel %vm239, %v1562, 0.0
    %1567 = vadd.xlane.f32.xlu0 %v1566
    %v1568 = vpop.xlane.xlu0 %1567
    %v1569 = vmul.f32 %v1565, %v246
    %v1570 = vmul.f32 %v1568, %v246
    %v1571 = vadd.f32 %v1569, 1e-12
    %v1572 = vadd.f32 %v1570, 1e-12
    %v1573 = vrsqrt.pop %v1571
    %v1574 = vrsqrt.pop %v1572
    %v1575 = vmul.f32 %v1559, %v1573
    %v1576 = vmul.f32 %v1560, %v1574
    %v1578 = vlaneseq
    %v1579 = vshrl.u32 %v1578, 7
    %v1580 = vsub.s32 0, %v1579
    %v1581 = vrot.slane %v1549, %v1580
    %v1583 = vmul.f32 %v1575, %v1581
    %v1584 = vmul.f32 %v1576, %v1581
    %v1586 = vlaneseq
    %v1587 = vshrl.u32 %v1586, 7
    %v1588 = vsub.s32 0, %v1587
    %v1589 = vrot.slane %v1550, %v1588
    %v1591 = vadd.f32 %v1583, %v1589
    %v1592 = vadd.f32 %v1584, %v1589
    %s1593 = scalar_lea.vmem %s6, 16
    %v1594 = vld [vmem:[%s1593] sm:$0xf]
    %v1595 = vld [vmem:[%s1593 + $0x4] sm:$0xf]
    %v1596 = vld [vmem:[%s1593 + $0x8] sm:$0xf]
    %v1597 = vld [vmem:[%s1593 + $0xc] sm:$0xf]
    %v1598 = vpack.c.bf16 %v1592, %v1591
    %s1599 = scalar_lea.vmem %s7, 1
    %v1600 = vld [vmem:[%s1599] sm:$0x1]
    %v1602 = vlaneseq
    %v1603 = vshrl.u32 %v1602, 7
    %v1604 = vsub.s32 0, %v1603
    %v1605 = vrot.slane %v1600, %v1604
    %v1611 = vunpack.c.l.b16 %v1594
    %v1612 = vunpack.c.l.b16 %v1595
    %v1613 = vunpack.c.l.b16 %v1596
    %v1614 = vunpack.c.l.b16 %v1597
    %v1615 = vpack.c.b16 %v1612, %v1611
    %v1616 = vpack.c.b16 %v1614, %v1613
    %v1620 = vsel %vm239, %v1598, 0
    %1622 = vmatprep.subr.bf16.mxu0 0
    %1623 = vmatpush1.bf16.msra.mxu0 %v1615
    %1624 = vmatprep.subr.bf16.mxu0 0
    %1625 = vmatpush1.bf16.msra.mxu0 %v1616
    %1626 = vmatprep.subr.bf16.mxu0 0
    %1627 = vmatpush1.bf16.msra.mxu0 0
    %1628 = vmatprep.subr.bf16.mxu0 0
    %1629 = vmatpush1.bf16.msra.mxu0 0
    %1630 = vmatprep.subr.bf16.mxu0 0
    %1631 = vmatpush1.bf16.msra.mxu0 0
    %1632 = vmatprep.subr.bf16.mxu0 0
    %1633 = vmatpush1.bf16.msra.mxu0 0
    %1634 = vmatprep.subr.bf16.mxu0 0
    %1635 = vmatpush1.bf16.msra.mxu0 0
    %1636 = vmatprep.subr.bf16.mxu0 0
    %1637 = vmatpush1.bf16.msra.mxu0 0
    %1638 = vmatprep.subr.bf16.mxu0 0
    %1639 = vmatpush1.bf16.msra.mxu0 0
    %1640 = vmatprep.subr.bf16.mxu0 0
    %1641 = vmatpush1.bf16.msra.mxu0 0
    %1642 = vmatprep.subr.bf16.mxu0 0
    %1643 = vmatpush1.bf16.msra.mxu0 0
    %1644 = vmatprep.subr.bf16.mxu0 0
    %1645 = vmatpush1.bf16.msra.mxu0 0
    %1646 = vmatprep.subr.bf16.mxu0 0
    %1647 = vmatpush1.bf16.msra.mxu0 0
    %1648 = vmatprep.subr.bf16.mxu0 0
    %1649 = vmatpush1.bf16.msra.mxu0 0
    %1650 = vmatprep.subr.bf16.mxu0 0
    %1651 = vmatpush1.bf16.msra.mxu0 0
    %1652 = vmatprep.subr.bf16.mxu0 0
    %1653 = vmatpush1.bf16.msra.mxu0 0
    %1654 = vmatprep.mubr.bf16.mxu0 0
    %1655 = vmatmul.mubr.bf16.gmra.mrb[0].mxu0 %v1620
    %v1656 = vpop.f32.mrb[0].mxu0
    %v1657 = vadd.f32 %v1605, %v1656
    %v1658 = vpop.f32.mrb[0].mxu0
    %v1659 = vpop.f32.mrb[0].mxu0
    %v1660 = vadd.f32 %v1605, %v1659
    %v1661 = vpop.f32.mrb[0].mxu0
    %1662 = vdwg.mxu0
    %v1663 = vpack.c.bf16 %v1657, %v1657
    %v1664 = vpack.c.bf16 %v1660, %v1660
    %1666 = vrot.lane.b32.xlu0 %v1663, 96
    %v1667 = vpop.permute.xlu0 %1666
    %v1669 = vsel %vm362, %v1663, 0
    %v1672 = vsel %vm362, %v1667, 0
    %1674 = vmatprep.subr.bf16.mxu0 0
    %1675 = vmatpush1.bf16.xpose.msra.mxu0 %v1672
    %1676 = vmatprep.subr.bf16.mxu0 0
    %1677 = vmatpush1.bf16.xpose.msra.mxu0 0
    %1678 = vmatprep.subr.bf16.mxu0 0
    %1679 = vmatpush1.bf16.xpose.msra.mxu0 0
    %1680 = vmatprep.subr.bf16.mxu0 0
    %1681 = vmatpush1.bf16.xpose.msra.mxu0 0
    %1682 = vmatprep.subr.bf16.mxu0 0
    %1683 = vmatpush1.bf16.xpose.msra.mxu0 0
    %1684 = vmatprep.subr.bf16.mxu0 0
    %1685 = vmatpush1.bf16.xpose.msra.mxu0 0
    %1686 = vmatprep.subr.bf16.mxu0 0
    %1687 = vmatpush1.bf16.xpose.msra.mxu0 0
    %1688 = vmatprep.subr.bf16.mxu0 0
    %1689 = vmatpush1.bf16.xpose.msra.mxu0 0
    %1690 = vmatprep.subr.bf16.mxu0 0
    %1691 = vmatpush1.bf16.xpose.msra.mxu0 0
    %1692 = vmatprep.subr.bf16.mxu0 0
    %1693 = vmatpush1.bf16.xpose.msra.mxu0 0
    %1694 = vmatprep.subr.bf16.mxu0 0
    %1695 = vmatpush1.bf16.xpose.msra.mxu0 0
    %1696 = vmatprep.subr.bf16.mxu0 0
    %1697 = vmatpush1.bf16.xpose.msra.mxu0 0
    %1698 = vmatprep.subr.bf16.mxu0 0
    %1699 = vmatpush1.bf16.xpose.msra.mxu0 0
    %1700 = vmatprep.subr.bf16.mxu0 0
    %1701 = vmatpush1.bf16.xpose.msra.mxu0 0
    %1702 = vmatprep.subr.bf16.mxu0 0
    %1703 = vmatpush1.bf16.xpose.msra.mxu0 0
    %1704 = vmatprep.subr.bf16.mxu0 0
    %1705 = vmatpush1.bf16.xpose.msra.mxu0 0
    %1706 = vmatprep.mubr.bf16.mxu0 0
    %1707 = vmatmul.mubr.bf16.gmra.mrb[0].mxu0 %v1669
    %v1708 = vpop.f32.mrb[0].mxu0
    %v1709 = vadd.f32 0.0, %v1708
    %v1710 = vpop.f32.mrb[0].mxu0
    %v1711 = vpop.f32.mrb[0].mxu0
    %v1712 = vpop.f32.mrb[0].mxu0
    %1713 = vdwg.mxu0
    %1715 = vrot.lane.b32.xlu0 %v1664, 96
    %v1716 = vpop.permute.xlu0 %1715
    %v1718 = vsel %vm362, %v1664, 0
    %v1721 = vsel %vm362, %v1716, 0
    %1723 = vmatprep.subr.bf16.mxu0 0
    %1724 = vmatpush1.bf16.xpose.msra.mxu0 %v1721
    %1725 = vmatprep.subr.bf16.mxu0 0
    %1726 = vmatpush1.bf16.xpose.msra.mxu0 0
    %1727 = vmatprep.subr.bf16.mxu0 0
    %1728 = vmatpush1.bf16.xpose.msra.mxu0 0
    %1729 = vmatprep.subr.bf16.mxu0 0
    %1730 = vmatpush1.bf16.xpose.msra.mxu0 0
    %1731 = vmatprep.subr.bf16.mxu0 0
    %1732 = vmatpush1.bf16.xpose.msra.mxu0 0
    %1733 = vmatprep.subr.bf16.mxu0 0
    %1734 = vmatpush1.bf16.xpose.msra.mxu0 0
    %1735 = vmatprep.subr.bf16.mxu0 0
    %1736 = vmatpush1.bf16.xpose.msra.mxu0 0
    %1737 = vmatprep.subr.bf16.mxu0 0
    %1738 = vmatpush1.bf16.xpose.msra.mxu0 0
    %1739 = vmatprep.subr.bf16.mxu0 0
    %1740 = vmatpush1.bf16.xpose.msra.mxu0 0
    %1741 = vmatprep.subr.bf16.mxu0 0
    %1742 = vmatpush1.bf16.xpose.msra.mxu0 0
    %1743 = vmatprep.subr.bf16.mxu0 0
    %1744 = vmatpush1.bf16.xpose.msra.mxu0 0
    %1745 = vmatprep.subr.bf16.mxu0 0
    %1746 = vmatpush1.bf16.xpose.msra.mxu0 0
    %1747 = vmatprep.subr.bf16.mxu0 0
    %1748 = vmatpush1.bf16.xpose.msra.mxu0 0
    %1749 = vmatprep.subr.bf16.mxu0 0
    %1750 = vmatpush1.bf16.xpose.msra.mxu0 0
    %1751 = vmatprep.subr.bf16.mxu0 0
    %1752 = vmatpush1.bf16.xpose.msra.mxu0 0
    %1753 = vmatprep.subr.bf16.mxu0 0
    %1754 = vmatpush1.bf16.xpose.msra.mxu0 0
    %1755 = vmatprep.mubr.bf16.mxu0 0
    %1756 = vmatmul.mubr.bf16.gmra.mrb[0].mxu0 %v1718
    %v1757 = vpop.f32.mrb[0].mxu0
    %v1758 = vadd.f32 0.0, %v1757
    %v1759 = vpop.f32.mrb[0].mxu0
    %v1760 = vpop.f32.mrb[0].mxu0
    %v1761 = vpop.f32.mrb[0].mxu0
    %1762 = vdwg.mxu0
    %v1763 = vmul.f32 %v1709, 0.35355338
    %v1764 = vmul.f32 %v1758, 0.35355338
    %v1765 = vsel %vm362, %v1763, -inf
    %1766 = vmax.xlane.f32.xlu0 %v1765
    %v1767 = vpop.xlane.xlu0 %1766
    %v1768 = vsel %vm362, %v1764, -inf
    %1769 = vmax.xlane.f32.xlu0 %v1768
    %v1770 = vpop.xlane.xlu0 %1769
    %v1771 = vsub.f32 %v1763, %v1767
    %v1772 = vsub.f32 %v1764, %v1770
    %v1773 = vmul.f32 %v1771, 1.442695
    %v1774 = vpow.pop %v1773
    %v1775 = vmul.f32 %v1772, 1.442695
    %v1776 = vpow.pop %v1775
    %v1777 = vsel %vm362, %v1774, 0.0
    %1778 = vadd.xlane.f32.xlu0 %v1777
    %v1779 = vpop.xlane.xlu0 %1778
    %v1780 = vsel %vm362, %v1776, 0.0
    %1781 = vadd.xlane.f32.xlu0 %v1780
    %v1782 = vpop.xlane.xlu0 %1781
    %v1783 = vrcp.pop %v1779
    %v1784 = vrcp.pop %v1782
    %v1785 = vmul.f32 %v1774, %v1783
    %v1786 = vmul.f32 %v1776, %v1784
    %v1787 = vpack.c.bf16 %v1785, %v1785
    %v1788 = vpack.c.bf16 %v1786, %v1786
    %1789 = vrot.lane.b32.xlu0 %v1663, 64
    %v1790 = vpop.permute.xlu0 %1789
    %v1792 = vsel %vm362, %v1787, 0
    %v1795 = vsel %vm489, %v1790, 0
    %1797 = vmatprep.subr.bf16.mxu0 0
    %1798 = vmatpush1.bf16.msra.mxu0 %v1795
    %1799 = vmatprep.subr.bf16.mxu0 0
    %1800 = vmatpush1.bf16.msra.mxu0 0
    %1801 = vmatprep.subr.bf16.mxu0 0
    %1802 = vmatpush1.bf16.msra.mxu0 0
    %1803 = vmatprep.subr.bf16.mxu0 0
    %1804 = vmatpush1.bf16.msra.mxu0 0
    %1805 = vmatprep.subr.bf16.mxu0 0
    %1806 = vmatpush1.bf16.msra.mxu0 0
    %1807 = vmatprep.subr.bf16.mxu0 0
    %1808 = vmatpush1.bf16.msra.mxu0 0
    %1809 = vmatprep.subr.bf16.mxu0 0
    %1810 = vmatpush1.bf16.msra.mxu0 0
    %1811 = vmatprep.subr.bf16.mxu0 0
    %1812 = vmatpush1.bf16.msra.mxu0 0
    %1813 = vmatprep.subr.bf16.mxu0 0
    %1814 = vmatpush1.bf16.msra.mxu0 0
    %1815 = vmatprep.subr.bf16.mxu0 0
    %1816 = vmatpush1.bf16.msra.mxu0 0
    %1817 = vmatprep.subr.bf16.mxu0 0
    %1818 = vmatpush1.bf16.msra.mxu0 0
    %1819 = vmatprep.subr.bf16.mxu0 0
    %1820 = vmatpush1.bf16.msra.mxu0 0
    %1821 = vmatprep.subr.bf16.mxu0 0
    %1822 = vmatpush1.bf16.msra.mxu0 0
    %1823 = vmatprep.subr.bf16.mxu0 0
    %1824 = vmatpush1.bf16.msra.mxu0 0
    %1825 = vmatprep.subr.bf16.mxu0 0
    %1826 = vmatpush1.bf16.msra.mxu0 0
    %1827 = vmatprep.subr.bf16.mxu0 0
    %1828 = vmatpush1.bf16.msra.mxu0 0
    %1829 = vmatprep.mubr.bf16.mxu0 0
    %1830 = vmatmul.mubr.bf16.gmra.mrb[0].mxu0 %v1792
    %v1831 = vpop.f32.mrb[0].mxu0
    %v1832 = vadd.f32 0.0, %v1831
    %v1833 = vpop.f32.mrb[0].mxu0
    %v1834 = vpop.f32.mrb[0].mxu0
    %v1835 = vpop.f32.mrb[0].mxu0
    %1836 = vdwg.mxu0
    %1837 = vrot.lane.b32.xlu0 %v1664, 64
    %v1838 = vpop.permute.xlu0 %1837
    %v1840 = vsel %vm362, %v1788, 0
    %v1843 = vsel %vm489, %v1838, 0
    %1845 = vmatprep.subr.bf16.mxu0 0
    %1846 = vmatpush1.bf16.msra.mxu0 %v1843
    %1847 = vmatprep.subr.bf16.mxu0 0
    %1848 = vmatpush1.bf16.msra.mxu0 0
    %1849 = vmatprep.subr.bf16.mxu0 0
    %1850 = vmatpush1.bf16.msra.mxu0 0
    %1851 = vmatprep.subr.bf16.mxu0 0
    %1852 = vmatpush1.bf16.msra.mxu0 0
    %1853 = vmatprep.subr.bf16.mxu0 0
    %1854 = vmatpush1.bf16.msra.mxu0 0
    %1855 = vmatprep.subr.bf16.mxu0 0
    %1856 = vmatpush1.bf16.msra.mxu0 0
    %1857 = vmatprep.subr.bf16.mxu0 0
    %1858 = vmatpush1.bf16.msra.mxu0 0
    %1859 = vmatprep.subr.bf16.mxu0 0
    %1860 = vmatpush1.bf16.msra.mxu0 0
    %1861 = vmatprep.subr.bf16.mxu0 0
    %1862 = vmatpush1.bf16.msra.mxu0 0
    %1863 = vmatprep.subr.bf16.mxu0 0
    %1864 = vmatpush1.bf16.msra.mxu0 0
    %1865 = vmatprep.subr.bf16.mxu0 0
    %1866 = vmatpush1.bf16.msra.mxu0 0
    %1867 = vmatprep.subr.bf16.mxu0 0
    %1868 = vmatpush1.bf16.msra.mxu0 0
    %1869 = vmatprep.subr.bf16.mxu0 0
    %1870 = vmatpush1.bf16.msra.mxu0 0
    %1871 = vmatprep.subr.bf16.mxu0 0
    %1872 = vmatpush1.bf16.msra.mxu0 0
    %1873 = vmatprep.subr.bf16.mxu0 0
    %1874 = vmatpush1.bf16.msra.mxu0 0
    %1875 = vmatprep.subr.bf16.mxu0 0
    %1876 = vmatpush1.bf16.msra.mxu0 0
    %1877 = vmatprep.mubr.bf16.mxu0 0
    %1878 = vmatmul.mubr.bf16.gmra.mrb[0].mxu0 %v1840
    %v1879 = vpop.f32.mrb[0].mxu0
    %v1880 = vadd.f32 0.0, %v1879
    %v1881 = vpop.f32.mrb[0].mxu0
    %v1882 = vpop.f32.mrb[0].mxu0
    %v1883 = vpop.f32.mrb[0].mxu0
    %1884 = vdwg.mxu0
    %1885 = vrot.lane.b32.xlu0 %v1663, 120
    %v1886 = vpop.permute.xlu0 %1885
    %1887 = vrot.lane.b32.xlu0 %v1663, 88
    %v1888 = vpop.permute.xlu0 %1887
    %v1890 = vsel %vm362, %v1886, 0
    %v1893 = vsel %vm362, %v1888, 0
    %1895 = vmatprep.subr.bf16.mxu0 0
    %1896 = vmatpush1.bf16.xpose.msra.mxu0 %v1893
    %1897 = vmatprep.subr.bf16.mxu0 0
    %1898 = vmatpush1.bf16.xpose.msra.mxu0 0
    %1899 = vmatprep.subr.bf16.mxu0 0
    %1900 = vmatpush1.bf16.xpose.msra.mxu0 0
    %1901 = vmatprep.subr.bf16.mxu0 0
    %1902 = vmatpush1.bf16.xpose.msra.mxu0 0
    %1903 = vmatprep.subr.bf16.mxu0 0
    %1904 = vmatpush1.bf16.xpose.msra.mxu0 0
    %1905 = vmatprep.subr.bf16.mxu0 0
    %1906 = vmatpush1.bf16.xpose.msra.mxu0 0
    %1907 = vmatprep.subr.bf16.mxu0 0
    %1908 = vmatpush1.bf16.xpose.msra.mxu0 0
    %1909 = vmatprep.subr.bf16.mxu0 0
    %1910 = vmatpush1.bf16.xpose.msra.mxu0 0
    %1911 = vmatprep.subr.bf16.mxu0 0
    %1912 = vmatpush1.bf16.xpose.msra.mxu0 0
    %1913 = vmatprep.subr.bf16.mxu0 0
    %1914 = vmatpush1.bf16.xpose.msra.mxu0 0
    %1915 = vmatprep.subr.bf16.mxu0 0
    %1916 = vmatpush1.bf16.xpose.msra.mxu0 0
    %1917 = vmatprep.subr.bf16.mxu0 0
    %1918 = vmatpush1.bf16.xpose.msra.mxu0 0
    %1919 = vmatprep.subr.bf16.mxu0 0
    %1920 = vmatpush1.bf16.xpose.msra.mxu0 0
    %1921 = vmatprep.subr.bf16.mxu0 0
    %1922 = vmatpush1.bf16.xpose.msra.mxu0 0
    %1923 = vmatprep.subr.bf16.mxu0 0
    %1924 = vmatpush1.bf16.xpose.msra.mxu0 0
    %1925 = vmatprep.subr.bf16.mxu0 0
    %1926 = vmatpush1.bf16.xpose.msra.mxu0 0
    %1927 = vmatprep.mubr.bf16.mxu0 0
    %1928 = vmatmul.mubr.bf16.gmra.mrb[0].mxu0 %v1890
    %v1929 = vpop.f32.mrb[0].mxu0
    %v1930 = vadd.f32 0.0, %v1929
    %v1931 = vpop.f32.mrb[0].mxu0
    %v1932 = vpop.f32.mrb[0].mxu0
    %v1933 = vpop.f32.mrb[0].mxu0
    %1934 = vdwg.mxu0
    %1935 = vrot.lane.b32.xlu0 %v1664, 120
    %v1936 = vpop.permute.xlu0 %1935
    %1937 = vrot.lane.b32.xlu0 %v1664, 88
    %v1938 = vpop.permute.xlu0 %1937
    %v1940 = vsel %vm362, %v1936, 0
    %v1943 = vsel %vm362, %v1938, 0
    %1945 = vmatprep.subr.bf16.mxu0 0
    %1946 = vmatpush1.bf16.xpose.msra.mxu0 %v1943
    %1947 = vmatprep.subr.bf16.mxu0 0
    %1948 = vmatpush1.bf16.xpose.msra.mxu0 0
    %1949 = vmatprep.subr.bf16.mxu0 0
    %1950 = vmatpush1.bf16.xpose.msra.mxu0 0
    %1951 = vmatprep.subr.bf16.mxu0 0
    %1952 = vmatpush1.bf16.xpose.msra.mxu0 0
    %1953 = vmatprep.subr.bf16.mxu0 0
    %1954 = vmatpush1.bf16.xpose.msra.mxu0 0
    %1955 = vmatprep.subr.bf16.mxu0 0
    %1956 = vmatpush1.bf16.xpose.msra.mxu0 0
    %1957 = vmatprep.subr.bf16.mxu0 0
    %1958 = vmatpush1.bf16.xpose.msra.mxu0 0
    %1959 = vmatprep.subr.bf16.mxu0 0
    %1960 = vmatpush1.bf16.xpose.msra.mxu0 0
    %1961 = vmatprep.subr.bf16.mxu0 0
    %1962 = vmatpush1.bf16.xpose.msra.mxu0 0
    %1963 = vmatprep.subr.bf16.mxu0 0
    %1964 = vmatpush1.bf16.xpose.msra.mxu0 0
    %1965 = vmatprep.subr.bf16.mxu0 0
    %1966 = vmatpush1.bf16.xpose.msra.mxu0 0
    %1967 = vmatprep.subr.bf16.mxu0 0
    %1968 = vmatpush1.bf16.xpose.msra.mxu0 0
    %1969 = vmatprep.subr.bf16.mxu0 0
    %1970 = vmatpush1.bf16.xpose.msra.mxu0 0
    %1971 = vmatprep.subr.bf16.mxu0 0
    %1972 = vmatpush1.bf16.xpose.msra.mxu0 0
    %1973 = vmatprep.subr.bf16.mxu0 0
    %1974 = vmatpush1.bf16.xpose.msra.mxu0 0
    %1975 = vmatprep.subr.bf16.mxu0 0
    %1976 = vmatpush1.bf16.xpose.msra.mxu0 0
    %1977 = vmatprep.mubr.bf16.mxu0 0
    %1978 = vmatmul.mubr.bf16.gmra.mrb[0].mxu0 %v1940
    %v1979 = vpop.f32.mrb[0].mxu0
    %v1980 = vadd.f32 0.0, %v1979
    %v1981 = vpop.f32.mrb[0].mxu0
    %v1982 = vpop.f32.mrb[0].mxu0
    %v1983 = vpop.f32.mrb[0].mxu0
    %1984 = vdwg.mxu0
    %v1985 = vmul.f32 %v1930, 0.35355338
    %v1986 = vmul.f32 %v1980, 0.35355338
    %v1987 = vsel %vm362, %v1985, -inf
    %1988 = vmax.xlane.f32.xlu0 %v1987
    %v1989 = vpop.xlane.xlu0 %1988
    %v1990 = vsel %vm362, %v1986, -inf
    %1991 = vmax.xlane.f32.xlu0 %v1990
    %v1992 = vpop.xlane.xlu0 %1991
    %v1993 = vsub.f32 %v1985, %v1989
    %v1994 = vsub.f32 %v1986, %v1992
    %v1995 = vmul.f32 %v1993, 1.442695
    %v1996 = vpow.pop %v1995
    %v1997 = vmul.f32 %v1994, 1.442695
    %v1998 = vpow.pop %v1997
    %v1999 = vsel %vm362, %v1996, 0.0
    %2000 = vadd.xlane.f32.xlu0 %v1999
    %v2001 = vpop.xlane.xlu0 %2000
    %v2002 = vsel %vm362, %v1998, 0.0
    %2003 = vadd.xlane.f32.xlu0 %v2002
    %v2004 = vpop.xlane.xlu0 %2003
    %v2005 = vrcp.pop %v2001
    %v2006 = vrcp.pop %v2004
    %v2007 = vmul.f32 %v1996, %v2005
    %v2008 = vmul.f32 %v1998, %v2006
    %v2009 = vpack.c.bf16 %v2007, %v2007
    %v2010 = vpack.c.bf16 %v2008, %v2008
    %2011 = vrot.lane.b32.xlu0 %v1663, 56
    %v2012 = vpop.permute.xlu0 %2011
    %v2014 = vsel %vm362, %v2009, 0
    %v2017 = vsel %vm489, %v2012, 0
    %2019 = vmatprep.subr.bf16.mxu0 0
    %2020 = vmatpush1.bf16.msra.mxu0 %v2017
    %2021 = vmatprep.subr.bf16.mxu0 0
    %2022 = vmatpush1.bf16.msra.mxu0 0
    %2023 = vmatprep.subr.bf16.mxu0 0
    %2024 = vmatpush1.bf16.msra.mxu0 0
    %2025 = vmatprep.subr.bf16.mxu0 0
    %2026 = vmatpush1.bf16.msra.mxu0 0
    %2027 = vmatprep.subr.bf16.mxu0 0
    %2028 = vmatpush1.bf16.msra.mxu0 0
    %2029 = vmatprep.subr.bf16.mxu0 0
    %2030 = vmatpush1.bf16.msra.mxu0 0
    %2031 = vmatprep.subr.bf16.mxu0 0
    %2032 = vmatpush1.bf16.msra.mxu0 0
    %2033 = vmatprep.subr.bf16.mxu0 0
    %2034 = vmatpush1.bf16.msra.mxu0 0
    %2035 = vmatprep.subr.bf16.mxu0 0
    %2036 = vmatpush1.bf16.msra.mxu0 0
    %2037 = vmatprep.subr.bf16.mxu0 0
    %2038 = vmatpush1.bf16.msra.mxu0 0
    %2039 = vmatprep.subr.bf16.mxu0 0
    %2040 = vmatpush1.bf16.msra.mxu0 0
    %2041 = vmatprep.subr.bf16.mxu0 0
    %2042 = vmatpush1.bf16.msra.mxu0 0
    %2043 = vmatprep.subr.bf16.mxu0 0
    %2044 = vmatpush1.bf16.msra.mxu0 0
    %2045 = vmatprep.subr.bf16.mxu0 0
    %2046 = vmatpush1.bf16.msra.mxu0 0
    %2047 = vmatprep.subr.bf16.mxu0 0
    %2048 = vmatpush1.bf16.msra.mxu0 0
    %2049 = vmatprep.subr.bf16.mxu0 0
    %2050 = vmatpush1.bf16.msra.mxu0 0
    %2051 = vmatprep.mubr.bf16.mxu0 0
    %2052 = vmatmul.mubr.bf16.gmra.mrb[0].mxu0 %v2014
    %v2053 = vpop.f32.mrb[0].mxu0
    %v2054 = vadd.f32 0.0, %v2053
    %v2055 = vpop.f32.mrb[0].mxu0
    %v2056 = vpop.f32.mrb[0].mxu0
    %v2057 = vpop.f32.mrb[0].mxu0
    %2058 = vdwg.mxu0
    %2059 = vrot.lane.b32.xlu0 %v1664, 56
    %v2060 = vpop.permute.xlu0 %2059
    %v2062 = vsel %vm362, %v2010, 0
    %v2065 = vsel %vm489, %v2060, 0
    %2067 = vmatprep.subr.bf16.mxu0 0
    %2068 = vmatpush1.bf16.msra.mxu0 %v2065
    %2069 = vmatprep.subr.bf16.mxu0 0
    %2070 = vmatpush1.bf16.msra.mxu0 0
    %2071 = vmatprep.subr.bf16.mxu0 0
    %2072 = vmatpush1.bf16.msra.mxu0 0
    %2073 = vmatprep.subr.bf16.mxu0 0
    %2074 = vmatpush1.bf16.msra.mxu0 0
    %2075 = vmatprep.subr.bf16.mxu0 0
    %2076 = vmatpush1.bf16.msra.mxu0 0
    %2077 = vmatprep.subr.bf16.mxu0 0
    %2078 = vmatpush1.bf16.msra.mxu0 0
    %2079 = vmatprep.subr.bf16.mxu0 0
    %2080 = vmatpush1.bf16.msra.mxu0 0
    %2081 = vmatprep.subr.bf16.mxu0 0
    %2082 = vmatpush1.bf16.msra.mxu0 0
    %2083 = vmatprep.subr.bf16.mxu0 0
    %2084 = vmatpush1.bf16.msra.mxu0 0
    %2085 = vmatprep.subr.bf16.mxu0 0
    %2086 = vmatpush1.bf16.msra.mxu0 0
    %2087 = vmatprep.subr.bf16.mxu0 0
    %2088 = vmatpush1.bf16.msra.mxu0 0
    %2089 = vmatprep.subr.bf16.mxu0 0
    %2090 = vmatpush1.bf16.msra.mxu0 0
    %2091 = vmatprep.subr.bf16.mxu0 0
    %2092 = vmatpush1.bf16.msra.mxu0 0
    %2093 = vmatprep.subr.bf16.mxu0 0
    %2094 = vmatpush1.bf16.msra.mxu0 0
    %2095 = vmatprep.subr.bf16.mxu0 0
    %2096 = vmatpush1.bf16.msra.mxu0 0
    %2097 = vmatprep.subr.bf16.mxu0 0
    %2098 = vmatpush1.bf16.msra.mxu0 0
    %2099 = vmatprep.mubr.bf16.mxu0 0
    %2100 = vmatmul.mubr.bf16.gmra.mrb[0].mxu0 %v2062
    %v2101 = vpop.f32.mrb[0].mxu0
    %v2102 = vadd.f32 0.0, %v2101
    %v2103 = vpop.f32.mrb[0].mxu0
    %v2104 = vpop.f32.mrb[0].mxu0
    %v2105 = vpop.f32.mrb[0].mxu0
    %2106 = vdwg.mxu0
    %2107 = vrot.lane.b32.xlu0 %v1663, 112
    %v2108 = vpop.permute.xlu0 %2107
    %2109 = vrot.lane.b32.xlu0 %v1663, 80
    %v2110 = vpop.permute.xlu0 %2109
    %v2112 = vsel %vm362, %v2108, 0
    %v2115 = vsel %vm362, %v2110, 0
    %2117 = vmatprep.subr.bf16.mxu0 0
    %2118 = vmatpush1.bf16.xpose.msra.mxu0 %v2115
    %2119 = vmatprep.subr.bf16.mxu0 0
    %2120 = vmatpush1.bf16.xpose.msra.mxu0 0
    %2121 = vmatprep.subr.bf16.mxu0 0
    %2122 = vmatpush1.bf16.xpose.msra.mxu0 0
    %2123 = vmatprep.subr.bf16.mxu0 0
    %2124 = vmatpush1.bf16.xpose.msra.mxu0 0
    %2125 = vmatprep.subr.bf16.mxu0 0
    %2126 = vmatpush1.bf16.xpose.msra.mxu0 0
    %2127 = vmatprep.subr.bf16.mxu0 0
    %2128 = vmatpush1.bf16.xpose.msra.mxu0 0
    %2129 = vmatprep.subr.bf16.mxu0 0
    %2130 = vmatpush1.bf16.xpose.msra.mxu0 0
    %2131 = vmatprep.subr.bf16.mxu0 0
    %2132 = vmatpush1.bf16.xpose.msra.mxu0 0
    %2133 = vmatprep.subr.bf16.mxu0 0
    %2134 = vmatpush1.bf16.xpose.msra.mxu0 0
    %2135 = vmatprep.subr.bf16.mxu0 0
    %2136 = vmatpush1.bf16.xpose.msra.mxu0 0
    %2137 = vmatprep.subr.bf16.mxu0 0
    %2138 = vmatpush1.bf16.xpose.msra.mxu0 0
    %2139 = vmatprep.subr.bf16.mxu0 0
    %2140 = vmatpush1.bf16.xpose.msra.mxu0 0
    %2141 = vmatprep.subr.bf16.mxu0 0
    %2142 = vmatpush1.bf16.xpose.msra.mxu0 0
    %2143 = vmatprep.subr.bf16.mxu0 0
    %2144 = vmatpush1.bf16.xpose.msra.mxu0 0
    %2145 = vmatprep.subr.bf16.mxu0 0
    %2146 = vmatpush1.bf16.xpose.msra.mxu0 0
    %2147 = vmatprep.subr.bf16.mxu0 0
    %2148 = vmatpush1.bf16.xpose.msra.mxu0 0
    %2149 = vmatprep.mubr.bf16.mxu0 0
    %2150 = vmatmul.mubr.bf16.gmra.mrb[0].mxu0 %v2112
    %v2151 = vpop.f32.mrb[0].mxu0
    %v2152 = vadd.f32 0.0, %v2151
    %v2153 = vpop.f32.mrb[0].mxu0
    %v2154 = vpop.f32.mrb[0].mxu0
    %v2155 = vpop.f32.mrb[0].mxu0
    %2156 = vdwg.mxu0
    %2157 = vrot.lane.b32.xlu0 %v1664, 112
    %v2158 = vpop.permute.xlu0 %2157
    %2159 = vrot.lane.b32.xlu0 %v1664, 80
    %v2160 = vpop.permute.xlu0 %2159
    %v2162 = vsel %vm362, %v2158, 0
    %v2165 = vsel %vm362, %v2160, 0
    %2167 = vmatprep.subr.bf16.mxu0 0
    %2168 = vmatpush1.bf16.xpose.msra.mxu0 %v2165
    %2169 = vmatprep.subr.bf16.mxu0 0
    %2170 = vmatpush1.bf16.xpose.msra.mxu0 0
    %2171 = vmatprep.subr.bf16.mxu0 0
    %2172 = vmatpush1.bf16.xpose.msra.mxu0 0
    %2173 = vmatprep.subr.bf16.mxu0 0
    %2174 = vmatpush1.bf16.xpose.msra.mxu0 0
    %2175 = vmatprep.subr.bf16.mxu0 0
    %2176 = vmatpush1.bf16.xpose.msra.mxu0 0
    %2177 = vmatprep.subr.bf16.mxu0 0
    %2178 = vmatpush1.bf16.xpose.msra.mxu0 0
    %2179 = vmatprep.subr.bf16.mxu0 0
    %2180 = vmatpush1.bf16.xpose.msra.mxu0 0
    %2181 = vmatprep.subr.bf16.mxu0 0
    %2182 = vmatpush1.bf16.xpose.msra.mxu0 0
    %2183 = vmatprep.subr.bf16.mxu0 0
    %2184 = vmatpush1.bf16.xpose.msra.mxu0 0
    %2185 = vmatprep.subr.bf16.mxu0 0
    %2186 = vmatpush1.bf16.xpose.msra.mxu0 0
    %2187 = vmatprep.subr.bf16.mxu0 0
    %2188 = vmatpush1.bf16.xpose.msra.mxu0 0
    %2189 = vmatprep.subr.bf16.mxu0 0
    %2190 = vmatpush1.bf16.xpose.msra.mxu0 0
    %2191 = vmatprep.subr.bf16.mxu0 0
    %2192 = vmatpush1.bf16.xpose.msra.mxu0 0
    %2193 = vmatprep.subr.bf16.mxu0 0
    %2194 = vmatpush1.bf16.xpose.msra.mxu0 0
    %2195 = vmatprep.subr.bf16.mxu0 0
    %2196 = vmatpush1.bf16.xpose.msra.mxu0 0
    %2197 = vmatprep.subr.bf16.mxu0 0
    %2198 = vmatpush1.bf16.xpose.msra.mxu0 0
    %2199 = vmatprep.mubr.bf16.mxu0 0
    %2200 = vmatmul.mubr.bf16.gmra.mrb[0].mxu0 %v2162
    %v2201 = vpop.f32.mrb[0].mxu0
    %v2202 = vadd.f32 0.0, %v2201
    %v2203 = vpop.f32.mrb[0].mxu0
    %v2204 = vpop.f32.mrb[0].mxu0
    %v2205 = vpop.f32.mrb[0].mxu0
    %2206 = vdwg.mxu0
    %v2207 = vmul.f32 %v2152, 0.35355338
    %v2208 = vmul.f32 %v2202, 0.35355338
    %v2209 = vsel %vm362, %v2207, -inf
    %2210 = vmax.xlane.f32.xlu0 %v2209
    %v2211 = vpop.xlane.xlu0 %2210
    %v2212 = vsel %vm362, %v2208, -inf
    %2213 = vmax.xlane.f32.xlu0 %v2212
    %v2214 = vpop.xlane.xlu0 %2213
    %v2215 = vsub.f32 %v2207, %v2211
    %v2216 = vsub.f32 %v2208, %v2214
    %v2217 = vmul.f32 %v2215, 1.442695
    %v2218 = vpow.pop %v2217
    %v2219 = vmul.f32 %v2216, 1.442695
    %v2220 = vpow.pop %v2219
    %v2221 = vsel %vm362, %v2218, 0.0
    %2222 = vadd.xlane.f32.xlu0 %v2221
    %v2223 = vpop.xlane.xlu0 %2222
    %v2224 = vsel %vm362, %v2220, 0.0
    %2225 = vadd.xlane.f32.xlu0 %v2224
    %v2226 = vpop.xlane.xlu0 %2225
    %v2227 = vrcp.pop %v2223
    %v2228 = vrcp.pop %v2226
    %v2229 = vmul.f32 %v2218, %v2227
    %v2230 = vmul.f32 %v2220, %v2228
    %v2231 = vpack.c.bf16 %v2229, %v2229
    %v2232 = vpack.c.bf16 %v2230, %v2230
    %2233 = vrot.lane.b32.xlu0 %v1663, 48
    %v2234 = vpop.permute.xlu0 %2233
    %v2236 = vsel %vm362, %v2231, 0
    %v2239 = vsel %vm489, %v2234, 0
    %2241 = vmatprep.subr.bf16.mxu0 0
    %2242 = vmatpush1.bf16.msra.mxu0 %v2239
    %2243 = vmatprep.subr.bf16.mxu0 0
    %2244 = vmatpush1.bf16.msra.mxu0 0
    %2245 = vmatprep.subr.bf16.mxu0 0
    %2246 = vmatpush1.bf16.msra.mxu0 0
    %2247 = vmatprep.subr.bf16.mxu0 0
    %2248 = vmatpush1.bf16.msra.mxu0 0
    %2249 = vmatprep.subr.bf16.mxu0 0
    %2250 = vmatpush1.bf16.msra.mxu0 0
    %2251 = vmatprep.subr.bf16.mxu0 0
    %2252 = vmatpush1.bf16.msra.mxu0 0
    %2253 = vmatprep.subr.bf16.mxu0 0
    %2254 = vmatpush1.bf16.msra.mxu0 0
    %2255 = vmatprep.subr.bf16.mxu0 0
    %2256 = vmatpush1.bf16.msra.mxu0 0
    %2257 = vmatprep.subr.bf16.mxu0 0
    %2258 = vmatpush1.bf16.msra.mxu0 0
    %2259 = vmatprep.subr.bf16.mxu0 0
    %2260 = vmatpush1.bf16.msra.mxu0 0
    %2261 = vmatprep.subr.bf16.mxu0 0
    %2262 = vmatpush1.bf16.msra.mxu0 0
    %2263 = vmatprep.subr.bf16.mxu0 0
    %2264 = vmatpush1.bf16.msra.mxu0 0
    %2265 = vmatprep.subr.bf16.mxu0 0
    %2266 = vmatpush1.bf16.msra.mxu0 0
    %2267 = vmatprep.subr.bf16.mxu0 0
    %2268 = vmatpush1.bf16.msra.mxu0 0
    %2269 = vmatprep.subr.bf16.mxu0 0
    %2270 = vmatpush1.bf16.msra.mxu0 0
    %2271 = vmatprep.subr.bf16.mxu0 0
    %2272 = vmatpush1.bf16.msra.mxu0 0
    %2273 = vmatprep.mubr.bf16.mxu0 0
    %2274 = vmatmul.mubr.bf16.gmra.mrb[0].mxu0 %v2236
    %v2275 = vpop.f32.mrb[0].mxu0
    %v2276 = vadd.f32 0.0, %v2275
    %v2277 = vpop.f32.mrb[0].mxu0
    %v2278 = vpop.f32.mrb[0].mxu0
    %v2279 = vpop.f32.mrb[0].mxu0
    %2280 = vdwg.mxu0
    %2281 = vrot.lane.b32.xlu0 %v1664, 48
    %v2282 = vpop.permute.xlu0 %2281
    %v2284 = vsel %vm362, %v2232, 0
    %v2287 = vsel %vm489, %v2282, 0
    %2289 = vmatprep.subr.bf16.mxu0 0
    %2290 = vmatpush1.bf16.msra.mxu0 %v2287
    %2291 = vmatprep.subr.bf16.mxu0 0
    %2292 = vmatpush1.bf16.msra.mxu0 0
    %2293 = vmatprep.subr.bf16.mxu0 0
    %2294 = vmatpush1.bf16.msra.mxu0 0
    %2295 = vmatprep.subr.bf16.mxu0 0
    %2296 = vmatpush1.bf16.msra.mxu0 0
    %2297 = vmatprep.subr.bf16.mxu0 0
    %2298 = vmatpush1.bf16.msra.mxu0 0
    %2299 = vmatprep.subr.bf16.mxu0 0
    %2300 = vmatpush1.bf16.msra.mxu0 0
    %2301 = vmatprep.subr.bf16.mxu0 0
    %2302 = vmatpush1.bf16.msra.mxu0 0
    %2303 = vmatprep.subr.bf16.mxu0 0
    %2304 = vmatpush1.bf16.msra.mxu0 0
    %2305 = vmatprep.subr.bf16.mxu0 0
    %2306 = vmatpush1.bf16.msra.mxu0 0
    %2307 = vmatprep.subr.bf16.mxu0 0
    %2308 = vmatpush1.bf16.msra.mxu0 0
    %2309 = vmatprep.subr.bf16.mxu0 0
    %2310 = vmatpush1.bf16.msra.mxu0 0
    %2311 = vmatprep.subr.bf16.mxu0 0
    %2312 = vmatpush1.bf16.msra.mxu0 0
    %2313 = vmatprep.subr.bf16.mxu0 0
    %2314 = vmatpush1.bf16.msra.mxu0 0
    %2315 = vmatprep.subr.bf16.mxu0 0
    %2316 = vmatpush1.bf16.msra.mxu0 0
    %2317 = vmatprep.subr.bf16.mxu0 0
    %2318 = vmatpush1.bf16.msra.mxu0 0
    %2319 = vmatprep.subr.bf16.mxu0 0
    %2320 = vmatpush1.bf16.msra.mxu0 0
    %2321 = vmatprep.mubr.bf16.mxu0 0
    %2322 = vmatmul.mubr.bf16.gmra.mrb[0].mxu0 %v2284
    %v2323 = vpop.f32.mrb[0].mxu0
    %v2324 = vadd.f32 0.0, %v2323
    %v2325 = vpop.f32.mrb[0].mxu0
    %v2326 = vpop.f32.mrb[0].mxu0
    %v2327 = vpop.f32.mrb[0].mxu0
    %2328 = vdwg.mxu0
    %2329 = vrot.lane.b32.xlu0 %v1663, 104
    %v2330 = vpop.permute.xlu0 %2329
    %2331 = vrot.lane.b32.xlu0 %v1663, 72
    %v2332 = vpop.permute.xlu0 %2331
    %v2334 = vsel %vm362, %v2330, 0
    %v2337 = vsel %vm362, %v2332, 0
    %2339 = vmatprep.subr.bf16.mxu0 0
    %2340 = vmatpush1.bf16.xpose.msra.mxu0 %v2337
    %2341 = vmatprep.subr.bf16.mxu0 0
    %2342 = vmatpush1.bf16.xpose.msra.mxu0 0
    %2343 = vmatprep.subr.bf16.mxu0 0
    %2344 = vmatpush1.bf16.xpose.msra.mxu0 0
    %2345 = vmatprep.subr.bf16.mxu0 0
    %2346 = vmatpush1.bf16.xpose.msra.mxu0 0
    %2347 = vmatprep.subr.bf16.mxu0 0
    %2348 = vmatpush1.bf16.xpose.msra.mxu0 0
    %2349 = vmatprep.subr.bf16.mxu0 0
    %2350 = vmatpush1.bf16.xpose.msra.mxu0 0
    %2351 = vmatprep.subr.bf16.mxu0 0
    %2352 = vmatpush1.bf16.xpose.msra.mxu0 0
    %2353 = vmatprep.subr.bf16.mxu0 0
    %2354 = vmatpush1.bf16.xpose.msra.mxu0 0
    %2355 = vmatprep.subr.bf16.mxu0 0
    %2356 = vmatpush1.bf16.xpose.msra.mxu0 0
    %2357 = vmatprep.subr.bf16.mxu0 0
    %2358 = vmatpush1.bf16.xpose.msra.mxu0 0
    %2359 = vmatprep.subr.bf16.mxu0 0
    %2360 = vmatpush1.bf16.xpose.msra.mxu0 0
    %2361 = vmatprep.subr.bf16.mxu0 0
    %2362 = vmatpush1.bf16.xpose.msra.mxu0 0
    %2363 = vmatprep.subr.bf16.mxu0 0
    %2364 = vmatpush1.bf16.xpose.msra.mxu0 0
    %2365 = vmatprep.subr.bf16.mxu0 0
    %2366 = vmatpush1.bf16.xpose.msra.mxu0 0
    %2367 = vmatprep.subr.bf16.mxu0 0
    %2368 = vmatpush1.bf16.xpose.msra.mxu0 0
    %2369 = vmatprep.subr.bf16.mxu0 0
    %2370 = vmatpush1.bf16.xpose.msra.mxu0 0
    %2371 = vmatprep.mubr.bf16.mxu0 0
    %2372 = vmatmul.mubr.bf16.gmra.mrb[0].mxu0 %v2334
    %v2373 = vpop.f32.mrb[0].mxu0
    %v2374 = vadd.f32 0.0, %v2373
    %v2375 = vpop.f32.mrb[0].mxu0
    %v2376 = vpop.f32.mrb[0].mxu0
    %v2377 = vpop.f32.mrb[0].mxu0
    %2378 = vdwg.mxu0
    %2379 = vrot.lane.b32.xlu0 %v1664, 104
    %v2380 = vpop.permute.xlu0 %2379
    %2381 = vrot.lane.b32.xlu0 %v1664, 72
    %v2382 = vpop.permute.xlu0 %2381
    %v2384 = vsel %vm362, %v2380, 0
    %v2387 = vsel %vm362, %v2382, 0
    %2389 = vmatprep.subr.bf16.mxu0 0
    %2390 = vmatpush1.bf16.xpose.msra.mxu0 %v2387
    %2391 = vmatprep.subr.bf16.mxu0 0
    %2392 = vmatpush1.bf16.xpose.msra.mxu0 0
    %2393 = vmatprep.subr.bf16.mxu0 0
    %2394 = vmatpush1.bf16.xpose.msra.mxu0 0
    %2395 = vmatprep.subr.bf16.mxu0 0
    %2396 = vmatpush1.bf16.xpose.msra.mxu0 0
    %2397 = vmatprep.subr.bf16.mxu0 0
    %2398 = vmatpush1.bf16.xpose.msra.mxu0 0
    %2399 = vmatprep.subr.bf16.mxu0 0
    %2400 = vmatpush1.bf16.xpose.msra.mxu0 0
    %2401 = vmatprep.subr.bf16.mxu0 0
    %2402 = vmatpush1.bf16.xpose.msra.mxu0 0
    %2403 = vmatprep.subr.bf16.mxu0 0
    %2404 = vmatpush1.bf16.xpose.msra.mxu0 0
    %2405 = vmatprep.subr.bf16.mxu0 0
    %2406 = vmatpush1.bf16.xpose.msra.mxu0 0
    %2407 = vmatprep.subr.bf16.mxu0 0
    %2408 = vmatpush1.bf16.xpose.msra.mxu0 0
    %2409 = vmatprep.subr.bf16.mxu0 0
    %2410 = vmatpush1.bf16.xpose.msra.mxu0 0
    %2411 = vmatprep.subr.bf16.mxu0 0
    %2412 = vmatpush1.bf16.xpose.msra.mxu0 0
    %2413 = vmatprep.subr.bf16.mxu0 0
    %2414 = vmatpush1.bf16.xpose.msra.mxu0 0
    %2415 = vmatprep.subr.bf16.mxu0 0
    %2416 = vmatpush1.bf16.xpose.msra.mxu0 0
    %2417 = vmatprep.subr.bf16.mxu0 0
    %2418 = vmatpush1.bf16.xpose.msra.mxu0 0
    %2419 = vmatprep.subr.bf16.mxu0 0
    %2420 = vmatpush1.bf16.xpose.msra.mxu0 0
    %2421 = vmatprep.mubr.bf16.mxu0 0
    %2422 = vmatmul.mubr.bf16.gmra.mrb[0].mxu0 %v2384
    %v2423 = vpop.f32.mrb[0].mxu0
    %v2424 = vadd.f32 0.0, %v2423
    %v2425 = vpop.f32.mrb[0].mxu0
    %v2426 = vpop.f32.mrb[0].mxu0
    %v2427 = vpop.f32.mrb[0].mxu0
    %2428 = vdwg.mxu0
    %v2429 = vmul.f32 %v2374, 0.35355338
    %v2430 = vmul.f32 %v2424, 0.35355338
    %v2431 = vsel %vm362, %v2429, -inf
    %2432 = vmax.xlane.f32.xlu0 %v2431
    %v2433 = vpop.xlane.xlu0 %2432
    %v2434 = vsel %vm362, %v2430, -inf
    %2435 = vmax.xlane.f32.xlu0 %v2434
    %v2436 = vpop.xlane.xlu0 %2435
    %v2437 = vsub.f32 %v2429, %v2433
    %v2438 = vsub.f32 %v2430, %v2436
    %v2439 = vmul.f32 %v2437, 1.442695
    %v2440 = vpow.pop %v2439
    %v2441 = vmul.f32 %v2438, 1.442695
    %v2442 = vpow.pop %v2441
    %v2443 = vsel %vm362, %v2440, 0.0
    %2444 = vadd.xlane.f32.xlu0 %v2443
    %v2445 = vpop.xlane.xlu0 %2444
    %v2446 = vsel %vm362, %v2442, 0.0
    %2447 = vadd.xlane.f32.xlu0 %v2446
    %v2448 = vpop.xlane.xlu0 %2447
    %v2449 = vrcp.pop %v2445
    %v2450 = vrcp.pop %v2448
    %v2451 = vmul.f32 %v2440, %v2449
    %v2452 = vmul.f32 %v2442, %v2450
    %v2453 = vpack.c.bf16 %v2451, %v2451
    %v2454 = vpack.c.bf16 %v2452, %v2452
    %2455 = vrot.lane.b32.xlu0 %v1663, 40
    %v2456 = vpop.permute.xlu0 %2455
    %v2458 = vsel %vm362, %v2453, 0
    %v2461 = vsel %vm489, %v2456, 0
    %2463 = vmatprep.subr.bf16.mxu0 0
    %2464 = vmatpush1.bf16.msra.mxu0 %v2461
    %2465 = vmatprep.subr.bf16.mxu0 0
    %2466 = vmatpush1.bf16.msra.mxu0 0
    %2467 = vmatprep.subr.bf16.mxu0 0
    %2468 = vmatpush1.bf16.msra.mxu0 0
    %2469 = vmatprep.subr.bf16.mxu0 0
    %2470 = vmatpush1.bf16.msra.mxu0 0
    %2471 = vmatprep.subr.bf16.mxu0 0
    %2472 = vmatpush1.bf16.msra.mxu0 0
    %2473 = vmatprep.subr.bf16.mxu0 0
    %2474 = vmatpush1.bf16.msra.mxu0 0
    %2475 = vmatprep.subr.bf16.mxu0 0
    %2476 = vmatpush1.bf16.msra.mxu0 0
    %2477 = vmatprep.subr.bf16.mxu0 0
    %2478 = vmatpush1.bf16.msra.mxu0 0
    %2479 = vmatprep.subr.bf16.mxu0 0
    %2480 = vmatpush1.bf16.msra.mxu0 0
    %2481 = vmatprep.subr.bf16.mxu0 0
    %2482 = vmatpush1.bf16.msra.mxu0 0
    %2483 = vmatprep.subr.bf16.mxu0 0
    %2484 = vmatpush1.bf16.msra.mxu0 0
    %2485 = vmatprep.subr.bf16.mxu0 0
    %2486 = vmatpush1.bf16.msra.mxu0 0
    %2487 = vmatprep.subr.bf16.mxu0 0
    %2488 = vmatpush1.bf16.msra.mxu0 0
    %2489 = vmatprep.subr.bf16.mxu0 0
    %2490 = vmatpush1.bf16.msra.mxu0 0
    %2491 = vmatprep.subr.bf16.mxu0 0
    %2492 = vmatpush1.bf16.msra.mxu0 0
    %2493 = vmatprep.subr.bf16.mxu0 0
    %2494 = vmatpush1.bf16.msra.mxu0 0
    %2495 = vmatprep.mubr.bf16.mxu0 0
    %2496 = vmatmul.mubr.bf16.gmra.mrb[0].mxu0 %v2458
    %v2497 = vpop.f32.mrb[0].mxu0
    %v2498 = vadd.f32 0.0, %v2497
    %v2499 = vpop.f32.mrb[0].mxu0
    %v2500 = vpop.f32.mrb[0].mxu0
    %v2501 = vpop.f32.mrb[0].mxu0
    %2502 = vdwg.mxu0
    %2503 = vrot.lane.b32.xlu0 %v1664, 40
    %v2504 = vpop.permute.xlu0 %2503
    %v2506 = vsel %vm362, %v2454, 0
    %v2509 = vsel %vm489, %v2504, 0
    %2511 = vmatprep.subr.bf16.mxu0 0
    %2512 = vmatpush1.bf16.msra.mxu0 %v2509
    %2513 = vmatprep.subr.bf16.mxu0 0
    %2514 = vmatpush1.bf16.msra.mxu0 0
    %2515 = vmatprep.subr.bf16.mxu0 0
    %2516 = vmatpush1.bf16.msra.mxu0 0
    %2517 = vmatprep.subr.bf16.mxu0 0
    %2518 = vmatpush1.bf16.msra.mxu0 0
    %2519 = vmatprep.subr.bf16.mxu0 0
    %2520 = vmatpush1.bf16.msra.mxu0 0
    %2521 = vmatprep.subr.bf16.mxu0 0
    %2522 = vmatpush1.bf16.msra.mxu0 0
    %2523 = vmatprep.subr.bf16.mxu0 0
    %2524 = vmatpush1.bf16.msra.mxu0 0
    %2525 = vmatprep.subr.bf16.mxu0 0
    %2526 = vmatpush1.bf16.msra.mxu0 0
    %2527 = vmatprep.subr.bf16.mxu0 0
    %2528 = vmatpush1.bf16.msra.mxu0 0
    %2529 = vmatprep.subr.bf16.mxu0 0
    %2530 = vmatpush1.bf16.msra.mxu0 0
    %2531 = vmatprep.subr.bf16.mxu0 0
    %2532 = vmatpush1.bf16.msra.mxu0 0
    %2533 = vmatprep.subr.bf16.mxu0 0
    %2534 = vmatpush1.bf16.msra.mxu0 0
    %2535 = vmatprep.subr.bf16.mxu0 0
    %2536 = vmatpush1.bf16.msra.mxu0 0
    %2537 = vmatprep.subr.bf16.mxu0 0
    %2538 = vmatpush1.bf16.msra.mxu0 0
    %2539 = vmatprep.subr.bf16.mxu0 0
    %2540 = vmatpush1.bf16.msra.mxu0 0
    %2541 = vmatprep.subr.bf16.mxu0 0
    %2542 = vmatpush1.bf16.msra.mxu0 0
    %2543 = vmatprep.mubr.bf16.mxu0 0
    %2544 = vmatmul.mubr.bf16.gmra.mrb[0].mxu0 %v2506
    %v2545 = vpop.f32.mrb[0].mxu0
    %v2546 = vadd.f32 0.0, %v2545
    %v2547 = vpop.f32.mrb[0].mxu0
    %v2548 = vpop.f32.mrb[0].mxu0
    %v2549 = vpop.f32.mrb[0].mxu0
    %2550 = vdwg.mxu0
    %2553 = vrot.lane.b32.xlu0 %v2054, 8
    %v2554 = vpop.permute.xlu0 %2553
    %2555 = vrot.lane.b32.xlu0 %v2102, 8
    %v2556 = vpop.permute.xlu0 %2555
    %2561 = vrot.lane.b32.xlu0 %v2276, 16
    %v2562 = vpop.permute.xlu0 %2561
    %2563 = vrot.lane.b32.xlu0 %v2324, 16
    %v2564 = vpop.permute.xlu0 %2563
    %2569 = vrot.lane.b32.xlu0 %v2498, 24
    %v2570 = vpop.permute.xlu0 %2569
    %2571 = vrot.lane.b32.xlu0 %v2546, 24
    %v2572 = vpop.permute.xlu0 %2571
    %v2575 = vsel %vm362, %v1832, %v2554
    %v2576 = vsel %vm362, %v1880, %v2556
    %v2577 = vsel %vm192, %v2575, %v2562
    %v2578 = vsel %vm192, %v2576, %v2564
    %v2579 = vsel %vm1275, %v2577, %v2570
    %v2580 = vsel %vm1275, %v2578, %v2572
    %s2581 = scalar_lea.vmem %s8, 16
    %v2582 = vld [vmem:[%s2581] sm:$0xf]
    %v2583 = vld [vmem:[%s2581 + $0x4] sm:$0xf]
    %v2584 = vld [vmem:[%s2581 + $0x8] sm:$0xf]
    %v2585 = vld [vmem:[%s2581 + $0xc] sm:$0xf]
    %v2586 = vpack.c.bf16 %v2580, %v2579
    %s2587 = scalar_lea.vmem %s9, 1
    %v2588 = vld [vmem:[%s2587] sm:$0x1]
    %v2590 = vlaneseq
    %v2591 = vshrl.u32 %v2590, 7
    %v2592 = vsub.s32 0, %v2591
    %v2593 = vrot.slane %v2588, %v2592
    %v2599 = vunpack.c.l.b16 %v2582
    %v2600 = vunpack.c.l.b16 %v2583
    %v2601 = vunpack.c.l.b16 %v2584
    %v2602 = vunpack.c.l.b16 %v2585
    %v2603 = vpack.c.b16 %v2600, %v2599
    %v2604 = vpack.c.b16 %v2602, %v2601
    %v2608 = vsel %vm239, %v2586, 0
    %2610 = vmatprep.subr.bf16.mxu0 0
    %2611 = vmatpush1.bf16.msra.mxu0 %v2603
    %2612 = vmatprep.subr.bf16.mxu0 0
    %2613 = vmatpush1.bf16.msra.mxu0 %v2604
    %2614 = vmatprep.subr.bf16.mxu0 0
    %2615 = vmatpush1.bf16.msra.mxu0 0
    %2616 = vmatprep.subr.bf16.mxu0 0
    %2617 = vmatpush1.bf16.msra.mxu0 0
    %2618 = vmatprep.subr.bf16.mxu0 0
    %2619 = vmatpush1.bf16.msra.mxu0 0
    %2620 = vmatprep.subr.bf16.mxu0 0
    %2621 = vmatpush1.bf16.msra.mxu0 0
    %2622 = vmatprep.subr.bf16.mxu0 0
    %2623 = vmatpush1.bf16.msra.mxu0 0
    %2624 = vmatprep.subr.bf16.mxu0 0
    %2625 = vmatpush1.bf16.msra.mxu0 0
    %2626 = vmatprep.subr.bf16.mxu0 0
    %2627 = vmatpush1.bf16.msra.mxu0 0
    %2628 = vmatprep.subr.bf16.mxu0 0
    %2629 = vmatpush1.bf16.msra.mxu0 0
    %2630 = vmatprep.subr.bf16.mxu0 0
    %2631 = vmatpush1.bf16.msra.mxu0 0
    %2632 = vmatprep.subr.bf16.mxu0 0
    %2633 = vmatpush1.bf16.msra.mxu0 0
    %2634 = vmatprep.subr.bf16.mxu0 0
    %2635 = vmatpush1.bf16.msra.mxu0 0
    %2636 = vmatprep.subr.bf16.mxu0 0
    %2637 = vmatpush1.bf16.msra.mxu0 0
    %2638 = vmatprep.subr.bf16.mxu0 0
    %2639 = vmatpush1.bf16.msra.mxu0 0
    %2640 = vmatprep.subr.bf16.mxu0 0
    %2641 = vmatpush1.bf16.msra.mxu0 0
    %2642 = vmatprep.mubr.bf16.mxu0 0
    %2643 = vmatmul.mubr.bf16.gmra.mrb[0].mxu0 %v2608
    %v2644 = vpop.f32.mrb[0].mxu0
    %v2645 = vadd.f32 %v2593, %v2644
    %v2646 = vpop.f32.mrb[0].mxu0
    %v2647 = vpop.f32.mrb[0].mxu0
    %v2648 = vadd.f32 %v2593, %v2647
    %v2649 = vpop.f32.mrb[0].mxu0
    %2650 = vdwg.mxu0
    %v2651 = vadd.f32 %v1591, %v2645
    %v2652 = vadd.f32 %v1592, %v2648
    %s2653 = scalar_lea.vmem [#allocation11], 1
    %v2654 = vld [vmem:[%s2653] sm:$0x1]
    %s2655 = scalar_lea.vmem [#allocation13], 1
    %v2656 = vld [vmem:[%s2655] sm:$0x1]
    %v2657 = vsel %vm239, %v2651, 0.0
    %2658 = vadd.xlane.f32.xlu0 %v2657
    %v2659 = vpop.xlane.xlu0 %2658
    %v2660 = vsel %vm239, %v2652, 0.0
    %2661 = vadd.xlane.f32.xlu0 %v2660
    %v2662 = vpop.xlane.xlu0 %2661
    %v2663 = vmul.f32 %v2659, %v246
    %v2664 = vmul.f32 %v2662, %v246
    %v2665 = vsub.f32 %v2651, %v2663
    %v2666 = vsub.f32 %v2652, %v2664
    %v2667 = vmul.f32 %v2665, %v2665
    %v2668 = vmul.f32 %v2666, %v2666
    %v2669 = vsel %vm239, %v2667, 0.0
    %2670 = vadd.xlane.f32.xlu0 %v2669
    %v2671 = vpop.xlane.xlu0 %2670
    %v2672 = vsel %vm239, %v2668, 0.0
    %2673 = vadd.xlane.f32.xlu0 %v2672
    %v2674 = vpop.xlane.xlu0 %2673
    %v2675 = vmul.f32 %v2671, %v246
    %v2676 = vmul.f32 %v2674, %v246
    %v2677 = vadd.f32 %v2675, 1e-12
    %v2678 = vadd.f32 %v2676, 1e-12
    %v2679 = vrsqrt.pop %v2677
    %v2680 = vrsqrt.pop %v2678
    %v2681 = vmul.f32 %v2665, %v2679
    %v2682 = vmul.f32 %v2666, %v2680
    %v2684 = vlaneseq
    %v2685 = vshrl.u32 %v2684, 7
    %v2686 = vsub.s32 0, %v2685
    %v2687 = vrot.slane %v2654, %v2686
    %v2689 = vmul.f32 %v2681, %v2687
    %v2690 = vmul.f32 %v2682, %v2687
    %v2692 = vlaneseq
    %v2693 = vshrl.u32 %v2692, 7
    %v2694 = vsub.s32 0, %v2693
    %v2695 = vrot.slane %v2656, %v2694
    %v2697 = vadd.f32 %v2689, %v2695
    %v2698 = vadd.f32 %v2690, %v2695
    %s2699 = scalar_lea.vmem %s12, 16
    %v2700 = vld [vmem:[%s2699] sm:$0xf]
    %v2701 = vld [vmem:[%s2699 + $0x4] sm:$0xf]
    %v2702 = vld [vmem:[%s2699 + $0x8] sm:$0xf]
    %v2703 = vld [vmem:[%s2699 + $0xc] sm:$0xf]
    %v2704 = vpack.c.bf16 %v2698, %v2697
    %s2705 = scalar_lea.vmem [#allocation14], 1
    %v2706 = vld [vmem:[%s2705] sm:$0x1]
    %v2708 = vlaneseq
    %v2709 = vshrl.u32 %v2708, 7
    %v2710 = vsub.s32 0, %v2709
    %v2711 = vrot.slane %v2706, %v2710
    %v2717 = vunpack.c.l.b16 %v2700
    %v2718 = vunpack.c.l.b16 %v2701
    %v2719 = vunpack.c.l.b16 %v2702
    %v2720 = vunpack.c.l.b16 %v2703
    %v2721 = vpack.c.b16 %v2718, %v2717
    %v2722 = vpack.c.b16 %v2720, %v2719
    %v2726 = vsel %vm239, %v2704, 0
    %2728 = vmatprep.subr.bf16.mxu0 0
    %2729 = vmatpush1.bf16.msra.mxu0 %v2721
    %2730 = vmatprep.subr.bf16.mxu0 0
    %2731 = vmatpush1.bf16.msra.mxu0 %v2722
    %2732 = vmatprep.subr.bf16.mxu0 0
    %2733 = vmatpush1.bf16.msra.mxu0 0
    %2734 = vmatprep.subr.bf16.mxu0 0
    %2735 = vmatpush1.bf16.msra.mxu0 0
    %2736 = vmatprep.subr.bf16.mxu0 0
    %2737 = vmatpush1.bf16.msra.mxu0 0
    %2738 = vmatprep.subr.bf16.mxu0 0
    %2739 = vmatpush1.bf16.msra.mxu0 0
    %2740 = vmatprep.subr.bf16.mxu0 0
    %2741 = vmatpush1.bf16.msra.mxu0 0
    %2742 = vmatprep.subr.bf16.mxu0 0
    %2743 = vmatpush1.bf16.msra.mxu0 0
    %2744 = vmatprep.subr.bf16.mxu0 0
    %2745 = vmatpush1.bf16.msra.mxu0 0
    %2746 = vmatprep.subr.bf16.mxu0 0
    %2747 = vmatpush1.bf16.msra.mxu0 0
    %2748 = vmatprep.subr.bf16.mxu0 0
    %2749 = vmatpush1.bf16.msra.mxu0 0
    %2750 = vmatprep.subr.bf16.mxu0 0
    %2751 = vmatpush1.bf16.msra.mxu0 0
    %2752 = vmatprep.subr.bf16.mxu0 0
    %2753 = vmatpush1.bf16.msra.mxu0 0
    %2754 = vmatprep.subr.bf16.mxu0 0
    %2755 = vmatpush1.bf16.msra.mxu0 0
    %2756 = vmatprep.subr.bf16.mxu0 0
    %2757 = vmatpush1.bf16.msra.mxu0 0
    %2758 = vmatprep.subr.bf16.mxu0 0
    %2759 = vmatpush1.bf16.msra.mxu0 0
    %2760 = vmatprep.mubr.bf16.mxu0 0
    %2761 = vmatmul.mubr.bf16.gmra.mrb[0].mxu0 %v2726
    %v2762 = vpop.f32.mrb[0].mxu0
    %v2763 = vadd.f32 %v2711, %v2762
    %v2764 = vpop.f32.mrb[0].mxu0
    %v2765 = vpop.f32.mrb[0].mxu0
    %v2766 = vadd.f32 %v2711, %v2765
    %v2767 = vpop.f32.mrb[0].mxu0
    %2768 = vdwg.mxu0
    %v2769 = vmax.f32 %v2763, 0.0
    %v2770 = vmax.f32 %v2766, 0.0
    %s2771 = scalar_lea.vmem %s14, 32
    %v2772 = vld [vmem:[%s2771] sm:$0xf]
    %v2773 = vld [vmem:[%s2771 + $0x4] sm:$0xf]
    %v2774 = vld [vmem:[%s2771 + $0x8] sm:$0xf]
    %v2775 = vld [vmem:[%s2771 + $0xc] sm:$0xf]
    %v2776 = vld [vmem:[%s2771 + $0x10] sm:$0xf]
    %v2777 = vld [vmem:[%s2771 + $0x14] sm:$0xf]
    %v2778 = vld [vmem:[%s2771 + $0x18] sm:$0xf]
    %v2779 = vld [vmem:[%s2771 + $0x1c] sm:$0xf]
    %v2780 = vpack.c.bf16 %v2770, %v2769
    %s2781 = scalar_lea.vmem %s15, 1
    %v2782 = vld [vmem:[%s2781] sm:$0x1]
    %v2784 = vlaneseq
    %v2785 = vshrl.u32 %v2784, 7
    %v2786 = vsub.s32 0, %v2785
    %v2787 = vrot.slane %v2782, %v2786
    %v2797 = vunpack.c.l.b16 %v2772
    %v2798 = vunpack.c.l.b16 %v2773
    %v2799 = vunpack.c.l.b16 %v2774
    %v2800 = vunpack.c.l.b16 %v2775
    %v2801 = vunpack.c.l.b16 %v2776
    %v2802 = vunpack.c.l.b16 %v2777
    %v2803 = vunpack.c.l.b16 %v2778
    %v2804 = vunpack.c.l.b16 %v2779
    %v2805 = vpack.c.b16 %v2798, %v2797
    %v2806 = vpack.c.b16 %v2800, %v2799
    %v2807 = vpack.c.b16 %v2802, %v2801
    %v2808 = vpack.c.b16 %v2804, %v2803
    %v2814 = vsel %vm1502, %v2780, 0
    %2816 = vmatprep.subr.bf16.mxu0 0
    %2817 = vmatpush1.bf16.msra.mxu0 %v2805
    %2818 = vmatprep.subr.bf16.mxu0 0
    %2819 = vmatpush1.bf16.msra.mxu0 %v2806
    %2820 = vmatprep.subr.bf16.mxu0 0
    %2821 = vmatpush1.bf16.msra.mxu0 %v2807
    %2822 = vmatprep.subr.bf16.mxu0 0
    %2823 = vmatpush1.bf16.msra.mxu0 %v2808
    %2824 = vmatprep.subr.bf16.mxu0 0
    %2825 = vmatpush1.bf16.msra.mxu0 0
    %2826 = vmatprep.subr.bf16.mxu0 0
    %2827 = vmatpush1.bf16.msra.mxu0 0
    %2828 = vmatprep.subr.bf16.mxu0 0
    %2829 = vmatpush1.bf16.msra.mxu0 0
    %2830 = vmatprep.subr.bf16.mxu0 0
    %2831 = vmatpush1.bf16.msra.mxu0 0
    %2832 = vmatprep.subr.bf16.mxu0 0
    %2833 = vmatpush1.bf16.msra.mxu0 0
    %2834 = vmatprep.subr.bf16.mxu0 0
    %2835 = vmatpush1.bf16.msra.mxu0 0
    %2836 = vmatprep.subr.bf16.mxu0 0
    %2837 = vmatpush1.bf16.msra.mxu0 0
    %2838 = vmatprep.subr.bf16.mxu0 0
    %2839 = vmatpush1.bf16.msra.mxu0 0
    %2840 = vmatprep.subr.bf16.mxu0 0
    %2841 = vmatpush1.bf16.msra.mxu0 0
    %2842 = vmatprep.subr.bf16.mxu0 0
    %2843 = vmatpush1.bf16.msra.mxu0 0
    %2844 = vmatprep.subr.bf16.mxu0 0
    %2845 = vmatpush1.bf16.msra.mxu0 0
    %2846 = vmatprep.subr.bf16.mxu0 0
    %2847 = vmatpush1.bf16.msra.mxu0 0
    %2848 = vmatprep.mubr.bf16.mxu0 0
    %2849 = vmatmul.mubr.bf16.gmra.mrb[0].mxu0 %v2814
    %v2850 = vpop.f32.mrb[0].mxu0
    %v2851 = vadd.f32 %v2787, %v2850
    %v2852 = vpop.f32.mrb[0].mxu0
    %v2853 = vpop.f32.mrb[0].mxu0
    %v2854 = vadd.f32 %v2787, %v2853
    %v2855 = vpop.f32.mrb[0].mxu0
    %2856 = vdwg.mxu0
    %v2857 = vadd.f32 %v2697, %v2851
    %v2858 = vadd.f32 %v2698, %v2854
    %s2859 = scalar_lea.vmem %s16, 1
    %v2860 = vld [vmem:[%s2859] sm:$0x1]
    %s2861 = scalar_lea.vmem %s17, 1
    %v2862 = vld [vmem:[%s2861] sm:$0x1]
    %v2863 = vsel %vm239, %v2857, 0.0
    %2864 = vadd.xlane.f32.xlu0 %v2863
    %v2865 = vpop.xlane.xlu0 %2864
    %v2866 = vsel %vm239, %v2858, 0.0
    %2867 = vadd.xlane.f32.xlu0 %v2866
    %v2868 = vpop.xlane.xlu0 %2867
    %v2869 = vmul.f32 %v2865, %v246
    %v2870 = vmul.f32 %v2868, %v246
    %v2871 = vsub.f32 %v2857, %v2869
    %v2872 = vsub.f32 %v2858, %v2870
    %v2873 = vmul.f32 %v2871, %v2871
    %v2874 = vmul.f32 %v2872, %v2872
    %v2875 = vsel %vm239, %v2873, 0.0
    %2876 = vadd.xlane.f32.xlu0 %v2875
    %v2877 = vpop.xlane.xlu0 %2876
    %v2878 = vsel %vm239, %v2874, 0.0
    %2879 = vadd.xlane.f32.xlu0 %v2878
    %v2880 = vpop.xlane.xlu0 %2879
    %v2881 = vmul.f32 %v2877, %v246
    %v2882 = vmul.f32 %v2880, %v246
    %v2883 = vadd.f32 %v2881, 1e-12
    %v2884 = vadd.f32 %v2882, 1e-12
    %v2885 = vrsqrt.pop %v2883
    %v2886 = vrsqrt.pop %v2884
    %v2887 = vmul.f32 %v2871, %v2885
    %v2888 = vmul.f32 %v2872, %v2886
    %v2890 = vlaneseq
    %v2891 = vshrl.u32 %v2890, 7
    %v2892 = vsub.s32 0, %v2891
    %v2893 = vrot.slane %v2860, %v2892
    %v2895 = vmul.f32 %v2887, %v2893
    %v2896 = vmul.f32 %v2888, %v2893
    %v2898 = vlaneseq
    %v2899 = vshrl.u32 %v2898, 7
    %v2900 = vsub.s32 0, %v2899
    %v2901 = vrot.slane %v2862, %v2900
    %v2903 = vadd.f32 %v2895, %v2901
    %v2904 = vadd.f32 %v2896, %v2901
    %v2905 = vld [vmem:[%s18] sm:$0x1]
    %v2906 = vld [vmem:[%s19] sm:$0x1]
    %v2907 = vsel %vm239, %v2903, 0.0
    %2908 = vadd.xlane.f32.xlu0 %v2907
    %v2909 = vpop.xlane.xlu0 %2908
    %v2910 = vsel %vm239, %v2904, 0.0
    %2911 = vadd.xlane.f32.xlu0 %v2910
    %v2912 = vpop.xlane.xlu0 %2911
    %v2913 = vmul.f32 %v2909, %v246
    %v2914 = vmul.f32 %v2912, %v246
    %v2915 = vsub.f32 %v2903, %v2913
    %v2916 = vsub.f32 %v2904, %v2914
    %v2917 = vmul.f32 %v2915, %v2915
    %v2918 = vmul.f32 %v2916, %v2916
    %v2919 = vsel %vm239, %v2917, 0.0
    %2920 = vadd.xlane.f32.xlu0 %v2919
    %v2921 = vpop.xlane.xlu0 %2920
    %v2922 = vsel %vm239, %v2918, 0.0
    %2923 = vadd.xlane.f32.xlu0 %v2922
    %v2924 = vpop.xlane.xlu0 %2923
    %v2925 = vmul.f32 %v2921, %v246
    %v2926 = vmul.f32 %v2924, %v246
    %v2927 = vadd.f32 %v2925, 1e-12
    %v2928 = vadd.f32 %v2926, 1e-12
    %v2929 = vrsqrt.pop %v2927
    %v2930 = vrsqrt.pop %v2928
    %v2931 = vmul.f32 %v2915, %v2929
    %v2932 = vmul.f32 %v2916, %v2930
    %v2934 = vlaneseq
    %v2935 = vshrl.u32 %v2934, 7
    %v2936 = vsub.s32 0, %v2935
    %v2937 = vrot.slane %v2905, %v2936
    %v2939 = vmul.f32 %v2931, %v2937
    %v2940 = vmul.f32 %v2932, %v2937
    %v2942 = vlaneseq
    %v2943 = vshrl.u32 %v2942, 7
    %v2944 = vsub.s32 0, %v2943
    %v2945 = vrot.slane %v2906, %v2944
    %v2947 = vadd.f32 %v2939, %v2945
    %v2948 = vadd.f32 %v2940, %v2945
    %2949 = vst.msk [vmem:[#allocation16] sm:$0xff] %vm239, %v2947
    %2950 = vst.msk [vmem:[#allocation16 + $0x8] sm:$0xff] %vm239, %v2948
    // Predicated region
    $region114: #{tpu_custom_call.1} parent=1 // pred_check
      _
    $region115: #{tpu_custom_call.1} parent=1 // pred_check_branch
      %2952 = sbr.rel (0) target = $region117
    $region116: #{tpu_custom_call.1} parent=1 // pred_region
      %s2954 = ssub.s32 256, 256
      %2955 = vsyncadd [#allocation4], %s2954
      %s2956 = sshll.u32 [#allocation16], 4
      %s2957 = int_to_ptr.vmem [resolvable:$true] %s2956
      %2962 = dma.vmem_to_hbm [thread:$0]  %s2957, 256, %s20, [#allocation4], 128, 128, 8
    $region117: #{tpu_custom_call.1} parent=1 // pred_fallthru
      _
    // Predicated region
    $region118: #{tpu_custom_call.1} parent=1 // pred_check
      _
    $region119: #{tpu_custom_call.1} parent=1 // pred_check_branch
      %2964 = sbr.rel (0) target = $region121
    $region120: #{tpu_custom_call.1} parent=1 // pred_region
      %2965 = dma.done [#allocation4], 256
    $region121: #{tpu_custom_call.1} parent=1 // pred_fallthru
      _
    %2966 = vsyncpa [#allocation3], 1
    %2967 = vsyncpa [#allocation6], 1
    %2968 = vsyncpa [#allocation9], 1
    %2969 = vsyncpa [#allocation12], 1
    %2970 = vsyncpa [#allocation15], 1
    %2971 = vsyncpa [#allocation4], 1

// kernel: tpu_custom_call.1
$region0: #{tpu_custom_call.1}
  #allocation0 [shape = 'u32[]', space=smem, size = 0x4, offset = 0x4, fixed_abs, tag = 'smem constant byte address 0x4 - core index']
  #allocation1 [shape = 'u32[144,128]{1,0:T(1,128)}', space=vmem, size = 0x12000, scoped, tag = 'internal scratch']
  %s0 = inlined_call_operand.hbm [shape: bf16[16,16], index: 0, kind: input, shape index: {}]
  %s1 = inlined_call_operand.hbm [shape: bf16[16,32], index: 1, kind: input, shape index: {}]
  %s2 = inlined_call_operand.hbm [shape: f32[1,32], index: 2, kind: input, shape index: {}]
  %s3 = inlined_call_operand.hbm [shape: f32[1,32], index: 3, kind: input, shape index: {}]
  %s4 = inlined_call_operand.hbm [shape: f32[1,32], index: 4, kind: input, shape index: {}]
  %s5 = inlined_call_operand.vmem [shape: f32[16,32], index: 5, kind: input, shape index: {}]
  %s6 = inlined_call_operand.vmem [shape: bf16[2,32,96], index: 6, kind: input, shape index: {}]
  %s7 = inlined_call_operand.vmem [shape: f32[2,1,96], index: 7, kind: input, shape index: {}]
  %s8 = inlined_call_operand.vmem [shape: bf16[2,32,32], index: 8, kind: input, shape index: {}]
  %s9 = inlined_call_operand.vmem [shape: f32[2,1,32], index: 9, kind: input, shape index: {}]
  %s10 = inlined_call_operand.hbm [shape: f32[2,1,32], index: 10, kind: input, shape index: {}]
  %s11 = inlined_call_operand.hbm [shape: f32[2,1,32], index: 11, kind: input, shape index: {}]
  %s12 = inlined_call_operand.vmem [shape: bf16[2,32,64], index: 12, kind: input, shape index: {}]
  %s13 = inlined_call_operand.hbm [shape: f32[2,1,64], index: 13, kind: input, shape index: {}]
  %s14 = inlined_call_operand.vmem [shape: bf16[2,64,32], index: 14, kind: input, shape index: {}]
  %s15 = inlined_call_operand.vmem [shape: f32[2,1,32], index: 15, kind: input, shape index: {}]
  %s16 = inlined_call_operand.vmem [shape: f32[2,1,32], index: 16, kind: input, shape index: {}]
  %s17 = inlined_call_operand.vmem [shape: f32[2,1,32], index: 17, kind: input, shape index: {}]
  %s18 = inlined_call_operand.vmem [shape: f32[1,32], index: 18, kind: input, shape index: {}]
  %s19 = inlined_call_operand.vmem [shape: f32[1,32], index: 19, kind: input, shape index: {}]
  %s20 = inlined_call_operand.hbm [shape: f32[16,32], index: 20, kind: output, shape index: {}]
  %s21 = sld [smem:[#allocation0]]
  $region122: #{tpu_custom_call.1} parent=0
    _
  %s23 = ssub.s32 1, %s21
  %s24 = scalar_select 0, %s23, %s21
  $region1: #{tpu_custom_call.1} parent=0
    #allocation2 [shape = 'u8[4096]{0}', space=vmem, size = 0x1000, scoped, tag = 'input window, operand 0, single buffered']
    #allocation3 [shape = 's32[1]{0}', space=sflag, size = 0x4, scoped, tag = 'scoped memory for tpu_custom_call.1']
    #allocation4 [shape = 's32[1]{0}', space=sflag, size = 0x4, scoped, tag = 'scoped memory for tpu_custom_call.1']
    #allocation5 [shape = 'u8[4096]{0}', space=vmem, size = 0x1000, scoped, tag = 'input window, operand 1, single buffered']
    #allocation6 [shape = 's32[1]{0}', space=sflag, size = 0x4, scoped, tag = 'scoped memory for tpu_custom_call.1']
    #allocation7 [shape = 'u8[512]{0}', space=vmem, size = 0x400, scoped, tag = 'input window, operand 2, single buffered']
    #allocation8 [shape = 'u8[512]{0}', space=vmem, size = 0x400, scoped, tag = 'input window, operand 3, single buffered']
    #allocation9 [shape = 's32[1]{0}', space=sflag, size = 0x4, scoped, tag = 'scoped memory for tpu_custom_call.1']
    #allocation10 [shape = 'u8[512]{0}', space=vmem, size = 0x400, scoped, tag = 'input window, operand 4, single buffered']
    #allocation11 [shape = 'u8[1024]{0}', space=vmem, size = 0x400, scoped, tag = 'input window, operand 10, single buffered']
    #allocation12 [shape = 's32[1]{0}', space=sflag, size = 0x4, scoped, tag = 'scoped memory for tpu_custom_call.1']
    #allocation13 [shape = 'u8[1024]{0}', space=vmem, size = 0x400, scoped, tag = 'input window, operand 11, single buffered']
    #allocation14 [shape = 'u8[1024]{0}', space=vmem, size = 0x400, scoped, tag = 'input window, operand 13, single buffered']
    #allocation15 [shape = 's32[1]{0}', space=sflag, size = 0x4, scoped, tag = 'scoped memory for tpu_custom_call.1']
    #allocation16 [shape = 'u8[8192]{0}', space=vmem, size = 0x2000, scoped, tag = 'output window, operand 0, single buffered']
    %25 = vsyncpa [#allocation3], 0
    %26 = vsyncpa [#allocation6], 0
    %27 = vsyncpa [#allocation9], 0
    %28 = vsyncpa [#allocation12], 0
    %29 = vsyncpa [#allocation15], 0
    %30 = vsyncpa [#allocation4], 0
    // Predicated region
    $region2: #{tpu_custom_call.1} parent=1 // pred_check
      _
    $region3: #{tpu_custom_call.1} parent=1 // pred_check_branch
      %32 = sbr.rel (0) target = $region5
    $region4: #{tpu_custom_call.1} parent=1 // pred_region
      %s34 = ssub.s32 128, 128
      %35 = vsyncadd [#allocation3], %s34
      %s36 = sshll.u32 [#allocation2], 4
      %s37 = int_to_ptr.vmem [resolvable:$true] %s36
      %42 = dma.hbm_to_vmem [thread:$0]  %s0, 128, %s37, [#allocation3], 64, 64, 4
    $region5: #{tpu_custom_call.1} parent=1 // pred_fallthru
      _
    // Predicated region
    $region6: #{tpu_custom_call.1} parent=1 // pred_check
      _
    $region7: #{tpu_custom_call.1} parent=1 // pred_check_branch
      %44 = sbr.rel (0) target = $region9
    $region8: #{tpu_custom_call.1} parent=1 // pred_region
      %s46 = ssub.s32 128, 128
      %47 = vsyncadd [#allocation6], %s46
      %s48 = sshll.u32 [#allocation5], 4
      %s49 = int_to_ptr.vmem [resolvable:$true] %s48
      %54 = dma.hbm_to_vmem [thread:$0]  %s1, 128, %s49, [#allocation6], 64, 64, 4
    $region9: #{tpu_custom_call.1} parent=1 // pred_fallthru
      _
    // Predicated region
    $region10: #{tpu_custom_call.1} parent=1 // pred_check
      _
    $region11: #{tpu_custom_call.1} parent=1 // pred_check_branch
      %56 = sbr.rel (0) target = $region13
    $region12: #{tpu_custom_call.1} parent=1 // pred_region
      %s58 = ssub.s32 16, 16
      %59 = vsyncadd [#allocation6], %s58
      %s61 = sshll.u32 [#allocation7], 4
      %s62 = int_to_ptr.vmem [resolvable:$true] %s61
      %64 = dma.hbm_to_vmem [thread:$0]  %s2, 16, %s62, [#allocation6]
    $region13: #{tpu_custom_call.1} parent=1 // pred_fallthru
      _
    // Predicated region
    $region14: #{tpu_custom_call.1} parent=1 // pred_check
      _
    $region15: #{tpu_custom_call.1} parent=1 // pred_check_branch
      %66 = sbr.rel (0) target = $region17
    $region16: #{tpu_custom_call.1} parent=1 // pred_region
      %s68 = ssub.s32 16, 16
      %69 = vsyncadd [#allocation9], %s68
      %s71 = sshll.u32 [#allocation8], 4
      %s72 = int_to_ptr.vmem [resolvable:$true] %s71
      %74 = dma.hbm_to_vmem [thread:$0]  %s3, 16, %s72, [#allocation9]
    $region17: #{tpu_custom_call.1} parent=1 // pred_fallthru
      _
    // Predicated region
    $region18: #{tpu_custom_call.1} parent=1 // pred_check
      _
    $region19: #{tpu_custom_call.1} parent=1 // pred_check_branch
      %76 = sbr.rel (0) target = $region21
    $region20: #{tpu_custom_call.1} parent=1 // pred_region
      %s78 = ssub.s32 16, 16
      %79 = vsyncadd [#allocation9], %s78
      %s81 = sshll.u32 [#allocation10], 4
      %s82 = int_to_ptr.vmem [resolvable:$true] %s81
      %84 = dma.hbm_to_vmem [thread:$0]  %s4, 16, %s82, [#allocation9]
    $region21: #{tpu_custom_call.1} parent=1 // pred_fallthru
      _
    // Predicated region
    $region22: #{tpu_custom_call.1} parent=1 // pred_check
      _
    $region23: #{tpu_custom_call.1} parent=1 // pred_check_branch
      %86 = sbr.rel (0) target = $region25
    $region24: #{tpu_custom_call.1} parent=1 // pred_region
      _
    $region25: #{tpu_custom_call.1} parent=1 // pred_fallthru
      _
    // Predicated region
    $region26: #{tpu_custom_call.1} parent=1 // pred_check
      _
    $region27: #{tpu_custom_call.1} parent=1 // pred_check_branch
      %88 = sbr.rel (0) target = $region29
    $region28: #{tpu_custom_call.1} parent=1 // pred_region
      _
    $region29: #{tpu_custom_call.1} parent=1 // pred_fallthru
      _
    // Predicated region
    $region30: #{tpu_custom_call.1} parent=1 // pred_check
      _
    $region31: #{tpu_custom_call.1} parent=1 // pred_check_branch
      %90 = sbr.rel (0) target = $region33
    $region32: #{tpu_custom_call.1} parent=1 // pred_region
      _
    $region33: #{tpu_custom_call.1} parent=1 // pred_fallthru
      _
    // Predicated region
    $region34: #{tpu_custom_call.1} parent=1 // pred_check
      _
    $region35: #{tpu_custom_call.1} parent=1 // pred_check_branch
      %92 = sbr.rel (0) target = $region37
    $region36: #{tpu_custom_call.1} parent=1 // pred_region
      _
    $region37: #{tpu_custom_call.1} parent=1 // pred_fallthru
      _
    // Predicated region
    $region38: #{tpu_custom_call.1} parent=1 // pred_check
      _
    $region39: #{tpu_custom_call.1} parent=1 // pred_check_branch
      %94 = sbr.rel (0) target = $region41
    $region40: #{tpu_custom_call.1} parent=1 // pred_region
      _
    $region41: #{tpu_custom_call.1} parent=1 // pred_fallthru
      _
    // Predicated region
    $region42: #{tpu_custom_call.1} parent=1 // pred_check
      _
    $region43: #{tpu_custom_call.1} parent=1 // pred_check_branch
      %96 = sbr.rel (0) target = $region45
    $region44: #{tpu_custom_call.1} parent=1 // pred_region
      %s98 = ssub.s32 32, 32
      %99 = vsyncadd [#allocation12], %s98
      %s100 = sshll.u32 [#allocation11], 4
      %s101 = int_to_ptr.vmem [resolvable:$true] %s100
      %106 = dma.hbm_to_vmem [thread:$0]  %s10, 32, %s101, [#allocation12], 16, 16, 1
    $region45: #{tpu_custom_call.1} parent=1 // pred_fallthru
      _
    // Predicated region
    $region46: #{tpu_custom_call.1} parent=1 // pred_check
      _
    $region47: #{tpu_custom_call.1} parent=1 // pred_check_branch
      %108 = sbr.rel (0) target = $region49
    $region48: #{tpu_custom_call.1} parent=1 // pred_region
      %s110 = ssub.s32 32, 32
      %111 = vsyncadd [#allocation12], %s110
      %s112 = sshll.u32 [#allocation13], 4
      %s113 = int_to_ptr.vmem [resolvable:$true] %s112
      %118 = dma.hbm_to_vmem [thread:$0]  %s11, 32, %s113, [#allocation12], 16, 16, 1
    $region49: #{tpu_custom_call.1} parent=1 // pred_fallthru
      _
    // Predicated region
    $region50: #{tpu_custom_call.1} parent=1 // pred_check
      _
    $region51: #{tpu_custom_call.1} parent=1 // pred_check_branch
      %120 = sbr.rel (0) target = $region53
    $region52: #{tpu_custom_call.1} parent=1 // pred_region
      _
    $region53: #{tpu_custom_call.1} parent=1 // pred_fallthru
      _
    // Predicated region
    $region54: #{tpu_custom_call.1} parent=1 // pred_check
      _
    $region55: #{tpu_custom_call.1} parent=1 // pred_check_branch
      %122 = sbr.rel (0) target = $region57
    $region56: #{tpu_custom_call.1} parent=1 // pred_region
      %s124 = ssub.s32 32, 32
      %125 = vsyncadd [#allocation15], %s124
      %s126 = sshll.u32 [#allocation14], 4
      %s127 = int_to_ptr.vmem [resolvable:$true] %s126
      %132 = dma.hbm_to_vmem [thread:$0]  %s13, 32, %s127, [#allocation15], 16, 16, 1
    $region57: #{tpu_custom_call.1} parent=1 // pred_fallthru
      _
    // Predicated region
    $region58: #{tpu_custom_call.1} parent=1 // pred_check
      _
    $region59: #{tpu_custom_call.1} parent=1 // pred_check_branch
      %134 = sbr.rel (0) target = $region61
    $region60: #{tpu_custom_call.1} parent=1 // pred_region
      _
    $region61: #{tpu_custom_call.1} parent=1 // pred_fallthru
      _
    // Predicated region
    $region62: #{tpu_custom_call.1} parent=1 // pred_check
      _
    $region63: #{tpu_custom_call.1} parent=1 // pred_check_branch
      %136 = sbr.rel (0) target = $region65
    $region64: #{tpu_custom_call.1} parent=1 // pred_region
      _
    $region65: #{tpu_custom_call.1} parent=1 // pred_fallthru
      _
    // Predicated region
    $region66: #{tpu_custom_call.1} parent=1 // pred_check
      _
    $region67: #{tpu_custom_call.1} parent=1 // pred_check_branch
      %138 = sbr.rel (0) target = $region69
    $region68: #{tpu_custom_call.1} parent=1 // pred_region
      _
    $region69: #{tpu_custom_call.1} parent=1 // pred_fallthru
      _
    // Predicated region
    $region70: #{tpu_custom_call.1} parent=1 // pred_check
      _
    $region71: #{tpu_custom_call.1} parent=1 // pred_check_branch
      %140 = sbr.rel (0) target = $region73
    $region72: #{tpu_custom_call.1} parent=1 // pred_region
      _
    $region73: #{tpu_custom_call.1} parent=1 // pred_fallthru
      _
    // Predicated region
    $region74: #{tpu_custom_call.1} parent=1 // pred_check
      _
    $region75: #{tpu_custom_call.1} parent=1 // pred_check_branch
      %142 = sbr.rel (0) target = $region77
    $region76: #{tpu_custom_call.1} parent=1 // pred_region
      _
    $region77: #{tpu_custom_call.1} parent=1 // pred_fallthru
      _
    // Predicated region
    $region78: #{tpu_custom_call.1} parent=1 // pred_check
      _
    $region79: #{tpu_custom_call.1} parent=1 // pred_check_branch
      %144 = sbr.rel (0) target = $region81
    $region80: #{tpu_custom_call.1} parent=1 // pred_region
      _
    $region81: #{tpu_custom_call.1} parent=1 // pred_fallthru
      _
    // Predicated region
    $region82: #{tpu_custom_call.1} parent=1 // pred_check
      _
    $region83: #{tpu_custom_call.1} parent=1 // pred_check_branch
      %146 = sbr.rel (0) target = $region85
    $region84: #{tpu_custom_call.1} parent=1 // pred_region
      %147 = dma.done [#allocation3], 128
    $region85: #{tpu_custom_call.1} parent=1 // pred_fallthru
      _
    // Predicated region
    $region86: #{tpu_custom_call.1} parent=1 // pred_check
      _
    $region87: #{tpu_custom_call.1} parent=1 // pred_check_branch
      %149 = sbr.rel (0) target = $region89
    $region88: #{tpu_custom_call.1} parent=1 // pred_region
      %150 = dma.done [#allocation6], 128
    $region89: #{tpu_custom_call.1} parent=1 // pred_fallthru
      _
    // Predicated region
    $region90: #{tpu_custom_call.1} parent=1 // pred_check
      _
    $region91: #{tpu_custom_call.1} parent=1 // pred_check_branch
      %152 = sbr.rel (0) target = $region93
    $region92: #{tpu_custom_call.1} parent=1 // pred_region
      %153 = dma.done [#allocation6], 16
    $region93: #{tpu_custom_call.1} parent=1 // pred_fallthru
      _
    // Predicated region
    $region94: #{tpu_custom_call.1} parent=1 // pred_check
      _
    $region95: #{tpu_custom_call.1} parent=1 // pred_check_branch
      %155 = sbr.rel (0) target = $region97
    $region96: #{tpu_custom_call.1} parent=1 // pred_region
      %156 = dma.done [#allocation9], 16
    $region97: #{tpu_custom_call.1} parent=1 // pred_fallthru
      _
    // Predicated region
    $region98: #{tpu_custom_call.1} parent=1 // pred_check
      _
    $region99: #{tpu_custom_call.1} parent=1 // pred_check_branch
      %158 = sbr.rel (0) target = $region101
    $region100: #{tpu_custom_call.1} parent=1 // pred_region
      %159 = dma.done [#allocation9], 16
    $region101: #{tpu_custom_call.1} parent=1 // pred_fallthru
      _
    // Predicated region
    $region102: #{tpu_custom_call.1} parent=1 // pred_check
      _
    $region103: #{tpu_custom_call.1} parent=1 // pred_check_branch
      %161 = sbr.rel (0) target = $region105
    $region104: #{tpu_custom_call.1} parent=1 // pred_region
      %162 = dma.done [#allocation12], 32
    $region105: #{tpu_custom_call.1} parent=1 // pred_fallthru
      _
    // Predicated region
    $region106: #{tpu_custom_call.1} parent=1 // pred_check
      _
    $region107: #{tpu_custom_call.1} parent=1 // pred_check_branch
      %164 = sbr.rel (0) target = $region109
    $region108: #{tpu_custom_call.1} parent=1 // pred_region
      %165 = dma.done [#allocation12], 32
    $region109: #{tpu_custom_call.1} parent=1 // pred_fallthru
      _
    // Predicated region
    $region110: #{tpu_custom_call.1} parent=1 // pred_check
      _
    $region111: #{tpu_custom_call.1} parent=1 // pred_check_branch
      %167 = sbr.rel (0) target = $region113
    $region112: #{tpu_custom_call.1} parent=1 // pred_region
      %168 = dma.done [#allocation15], 32
    $region113: #{tpu_custom_call.1} parent=1 // pred_fallthru
      _
    %v170 = vld [vmem:[#allocation2] sm:$0xf]
    %v171 = vld [vmem:[#allocation2 + $0x4] sm:$0xf]
    %v172 = vld [vmem:[#allocation5] sm:$0xf]
    %v173 = vld [vmem:[#allocation5 + $0x4] sm:$0xf]
    %v174 = vld [vmem:[#allocation7] sm:$0x1]
    %v176 = vlaneseq
    %v177 = vshrl.u32 %v176, 7
    %v178 = vsub.s32 0, %v177
    %v179 = vrot.slane %v174, %v178
    %v183 = vunpack.c.l.b16 %v170
    %v184 = vunpack.c.l.b16 %v171
    %v185 = vpack.c.b16 %v184, %v183
    %v188 = vunpack.c.l.b16 %v172
    %v189 = vunpack.c.l.b16 %v173
    %v190 = vpack.c.b16 %v189, %v188
    %vm192 = vcmask 130048
    %v194 = vsel %vm192, %v185, 0
    %196 = vmatprep.subr.bf16.mxu0 0
    %197 = vmatpush1.bf16.msra.mxu0 %v190
    %198 = vmatprep.subr.bf16.mxu0 0
    %199 = vmatpush1.bf16.msra.mxu0 0
    %200 = vmatprep.subr.bf16.mxu0 0
    %201 = vmatpush1.bf16.msra.mxu0 0
    %202 = vmatprep.subr.bf16.mxu0 0
    %203 = vmatpush1.bf16.msra.mxu0 0
    %204 = vmatprep.subr.bf16.mxu0 0
    %205 = vmatpush1.bf16.msra.mxu0 0
    %206 = vmatprep.subr.bf16.mxu0 0
    %207 = vmatpush1.bf16.msra.mxu0 0
    %208 = vmatprep.subr.bf16.mxu0 0
    %209 = vmatpush1.bf16.msra.mxu0 0
    %210 = vmatprep.subr.bf16.mxu0 0
    %211 = vmatpush1.bf16.msra.mxu0 0
    %212 = vmatprep.subr.bf16.mxu0 0
    %213 = vmatpush1.bf16.msra.mxu0 0
    %214 = vmatprep.subr.bf16.mxu0 0
    %215 = vmatpush1.bf16.msra.mxu0 0
    %216 = vmatprep.subr.bf16.mxu0 0
    %217 = vmatpush1.bf16.msra.mxu0 0
    %218 = vmatprep.subr.bf16.mxu0 0
    %219 = vmatpush1.bf16.msra.mxu0 0
    %220 = vmatprep.subr.bf16.mxu0 0
    %221 = vmatpush1.bf16.msra.mxu0 0
    %222 = vmatprep.subr.bf16.mxu0 0
    %223 = vmatpush1.bf16.msra.mxu0 0
    %224 = vmatprep.subr.bf16.mxu0 0
    %225 = vmatpush1.bf16.msra.mxu0 0
    %226 = vmatprep.subr.bf16.mxu0 0
    %227 = vmatpush1.bf16.msra.mxu0 0
    %228 = vmatprep.mubr.bf16.mxu0 0
    %229 = vmatmul.mubr.bf16.gmra.mrb[0].mxu0 %v194
    %v230 = vpop.f32.mrb[0].mxu0
    %v231 = vadd.f32 %v179, %v230
    %v232 = vpop.f32.mrb[0].mxu0
    %v233 = vpop.f32.mrb[0].mxu0
    %v234 = vadd.f32 %v179, %v233
    %v235 = vpop.f32.mrb[0].mxu0
    %236 = vdwg.mxu0
    %v237 = vld [vmem:[#allocation8] sm:$0x1]
    %v238 = vld [vmem:[#allocation10] sm:$0x1]
    %vm239 = vcmask 261120
    %v240 = vsel %vm239, %v231, 0.0
    %241 = vadd.xlane.f32.xlu0 %v240
    %v242 = vpop.xlane.xlu0 %241
    %v243 = vsel %vm239, %v234, 0.0
    %244 = vadd.xlane.f32.xlu0 %v243
    %v245 = vpop.xlane.xlu0 %244
    %v246 = vrcp.pop 32.0
    %v247 = vmul.f32 %v242, %v246
    %v248 = vmul.f32 %v245, %v246
    %v249 = vsub.f32 %v231, %v247
    %v250 = vsub.f32 %v234, %v248
    %v251 = vmul.f32 %v249, %v249
    %v252 = vmul.f32 %v250, %v250
    %v253 = vsel %vm239, %v251, 0.0
    %254 = vadd.xlane.f32.xlu0 %v253
    %v255 = vpop.xlane.xlu0 %254
    %v256 = vsel %vm239, %v252, 0.0
    %257 = vadd.xlane.f32.xlu0 %v256
    %v258 = vpop.xlane.xlu0 %257
    %v259 = vmul.f32 %v255, %v246
    %v260 = vmul.f32 %v258, %v246
    %v261 = vadd.f32 %v259, 1e-05
    %v262 = vadd.f32 %v260, 1e-05
    %v263 = vrsqrt.pop %v261
    %v264 = vrsqrt.pop %v262
    %v265 = vmul.f32 %v249, %v263
    %v266 = vmul.f32 %v250, %v264
    %v268 = vlaneseq
    %v269 = vshrl.u32 %v268, 7
    %v270 = vsub.s32 0, %v269
    %v271 = vrot.slane %v237, %v270
    %v273 = vmul.f32 %v265, %v271
    %v274 = vmul.f32 %v266, %v271
    %v276 = vlaneseq
    %v277 = vshrl.u32 %v276, 7
    %v278 = vsub.s32 0, %v277
    %v279 = vrot.slane %v238, %v278
    %v281 = vadd.f32 %v273, %v279
    %v282 = vadd.f32 %v274, %v279
    %v283 = vmax.f32 %v281, 0.0
    %v284 = vmax.f32 %v282, 0.0
    %v285 = vld [vmem:[%s5] sm:$0xff]
    %v286 = vld [vmem:[%s5 + $0x8] sm:$0xff]
    %v287 = vadd.f32 %v283, %v285
    %v288 = vadd.f32 %v284, %v286
    %v289 = vld [vmem:[%s6] sm:$0xf]
    %v290 = vld [vmem:[%s6 + $0x4] sm:$0xf]
    %v291 = vld [vmem:[%s6 + $0x8] sm:$0xf]
    %v292 = vld [vmem:[%s6 + $0xc] sm:$0xf]
    %v293 = vpack.c.bf16 %v288, %v287
    %v294 = vld [vmem:[%s7] sm:$0x1]
    %v296 = vlaneseq
    %v297 = vshrl.u32 %v296, 7
    %v298 = vsub.s32 0, %v297
    %v299 = vrot.slane %v294, %v298
    %v305 = vunpack.c.l.b16 %v289
    %v306 = vunpack.c.l.b16 %v290
    %v307 = vunpack.c.l.b16 %v291
    %v308 = vunpack.c.l.b16 %v292
    %v309 = vpack.c.b16 %v306, %v305
    %v310 = vpack.c.b16 %v308, %v307
    %v314 = vsel %vm239, %v293, 0
    %316 = vmatprep.subr.bf16.mxu0 0
    %317 = vmatpush1.bf16.msra.mxu0 %v309
    %318 = vmatprep.subr.bf16.mxu0 0
    %319 = vmatpush1.bf16.msra.mxu0 %v310
    %320 = vmatprep.subr.bf16.mxu0 0
    %321 = vmatpush1.bf16.msra.mxu0 0
    %322 = vmatprep.subr.bf16.mxu0 0
    %323 = vmatpush1.bf16.msra.mxu0 0
    %324 = vmatprep.subr.bf16.mxu0 0
    %325 = vmatpush1.bf16.msra.mxu0 0
    %326 = vmatprep.subr.bf16.mxu0 0
    %327 = vmatpush1.bf16.msra.mxu0 0
    %328 = vmatprep.subr.bf16.mxu0 0
    %329 = vmatpush1.bf16.msra.mxu0 0
    %330 = vmatprep.subr.bf16.mxu0 0
    %331 = vmatpush1.bf16.msra.mxu0 0
    %332 = vmatprep.subr.bf16.mxu0 0
    %333 = vmatpush1.bf16.msra.mxu0 0
    %334 = vmatprep.subr.bf16.mxu0 0
    %335 = vmatpush1.bf16.msra.mxu0 0
    %336 = vmatprep.subr.bf16.mxu0 0
    %337 = vmatpush1.bf16.msra.mxu0 0
    %338 = vmatprep.subr.bf16.mxu0 0
    %339 = vmatpush1.bf16.msra.mxu0 0
    %340 = vmatprep.subr.bf16.mxu0 0
    %341 = vmatpush1.bf16.msra.mxu0 0
    %342 = vmatprep.subr.bf16.mxu0 0
    %343 = vmatpush1.bf16.msra.mxu0 0
    %344 = vmatprep.subr.bf16.mxu0 0
    %345 = vmatpush1.bf16.msra.mxu0 0
    %346 = vmatprep.subr.bf16.mxu0 0
    %347 = vmatpush1.bf16.msra.mxu0 0
    %348 = vmatprep.mubr.bf16.mxu0 0
    %349 = vmatmul.mubr.bf16.gmra.mrb[0].mxu0 %v314
    %v350 = vpop.f32.mrb[0].mxu0
    %v351 = vadd.f32 %v299, %v350
    %v352 = vpop.f32.mrb[0].mxu0
    %v353 = vpop.f32.mrb[0].mxu0
    %v354 = vadd.f32 %v299, %v353
    %v355 = vpop.f32.mrb[0].mxu0
    %356 = vdwg.mxu0
    %v357 = vpack.c.bf16 %v351, %v351
    %v358 = vpack.c.bf16 %v354, %v354
    %360 = vrot.lane.b32.xlu0 %v357, 96
    %v361 = vpop.permute.xlu0 %360
    %vm362 = vcmask 64512
    %v364 = vsel %vm362, %v357, 0
    %v367 = vsel %vm362, %v361, 0
    %369 = vmatprep.subr.bf16.mxu0 0
    %370 = vmatpush1.bf16.xpose.msra.mxu0 %v367
    %371 = vmatprep.subr.bf16.mxu0 0
    %372 = vmatpush1.bf16.xpose.msra.mxu0 0
    %373 = vmatprep.subr.bf16.mxu0 0
    %374 = vmatpush1.bf16.xpose.msra.mxu0 0
    %375 = vmatprep.subr.bf16.mxu0 0
    %376 = vmatpush1.bf16.xpose.msra.mxu0 0
    %377 = vmatprep.subr.bf16.mxu0 0
    %378 = vmatpush1.bf16.xpose.msra.mxu0 0
    %379 = vmatprep.subr.bf16.mxu0 0
    %380 = vmatpush1.bf16.xpose.msra.mxu0 0
    %381 = vmatprep.subr.bf16.mxu0 0
    %382 = vmatpush1.bf16.xpose.msra.mxu0 0
    %383 = vmatprep.subr.bf16.mxu0 0
    %384 = vmatpush1.bf16.xpose.msra.mxu0 0
    %385 = vmatprep.subr.bf16.mxu0 0
    %386 = vmatpush1.bf16.xpose.msra.mxu0 0
    %387 = vmatprep.subr.bf16.mxu0 0
    %388 = vmatpush1.bf16.xpose.msra.mxu0 0
    %389 = vmatprep.subr.bf16.mxu0 0
    %390 = vmatpush1.bf16.xpose.msra.mxu0 0
    %391 = vmatprep.subr.bf16.mxu0 0
    %392 = vmatpush1.bf16.xpose.msra.mxu0 0
    %393 = vmatprep.subr.bf16.mxu0 0
    %394 = vmatpush1.bf16.xpose.msra.mxu0 0
    %395 = vmatprep.subr.bf16.mxu0 0
    %396 = vmatpush1.bf16.xpose.msra.mxu0 0
    %397 = vmatprep.subr.bf16.mxu0 0
    %398 = vmatpush1.bf16.xpose.msra.mxu0 0
    %399 = vmatprep.subr.bf16.mxu0 0
    %400 = vmatpush1.bf16.xpose.msra.mxu0 0
    %401 = vmatprep.mubr.bf16.mxu0 0
    %402 = vmatmul.mubr.bf16.gmra.mrb[0].mxu0 %v364
    %v403 = vpop.f32.mrb[0].mxu0
    %v404 = vadd.f32 0.0, %v403
    %v405 = vpop.f32.mrb[0].mxu0
    %v406 = vpop.f32.mrb[0].mxu0
    %v407 = vpop.f32.mrb[0].mxu0
    %408 = vdwg.mxu0
    %410 = vrot.lane.b32.xlu0 %v358, 96
    %v411 = vpop.permute.xlu0 %410
    %v413 = vsel %vm362, %v358, 0
    %v416 = vsel %vm362, %v411, 0
    %418 = vmatprep.subr.bf16.mxu0 0
    %419 = vmatpush1.bf16.xpose.msra.mxu0 %v416
    %420 = vmatprep.subr.bf16.mxu0 0
    %421 = vmatpush1.bf16.xpose.msra.mxu0 0
    %422 = vmatprep.subr.bf16.mxu0 0
    %423 = vmatpush1.bf16.xpose.msra.mxu0 0
    %424 = vmatprep.subr.bf16.mxu0 0
    %425 = vmatpush1.bf16.xpose.msra.mxu0 0
    %426 = vmatprep.subr.bf16.mxu0 0
    %427 = vmatpush1.bf16.xpose.msra.mxu0 0
    %428 = vmatprep.subr.bf16.mxu0 0
    %429 = vmatpush1.bf16.xpose.msra.mxu0 0
    %430 = vmatprep.subr.bf16.mxu0 0
    %431 = vmatpush1.bf16.xpose.msra.mxu0 0
    %432 = vmatprep.subr.bf16.mxu0 0
    %433 = vmatpush1.bf16.xpose.msra.mxu0 0
    %434 = vmatprep.subr.bf16.mxu0 0
    %435 = vmatpush1.bf16.xpose.msra.mxu0 0
    %436 = vmatprep.subr.bf16.mxu0 0
    %437 = vmatpush1.bf16.xpose.msra.mxu0 0
    %438 = vmatprep.subr.bf16.mxu0 0
    %439 = vmatpush1.bf16.xpose.msra.mxu0 0
    %440 = vmatprep.subr.bf16.mxu0 0
    %441 = vmatpush1.bf16.xpose.msra.mxu0 0
    %442 = vmatprep.subr.bf16.mxu0 0
    %443 = vmatpush1.bf16.xpose.msra.mxu0 0
    %444 = vmatprep.subr.bf16.mxu0 0
    %445 = vmatpush1.bf16.xpose.msra.mxu0 0
    %446 = vmatprep.subr.bf16.mxu0 0
    %447 = vmatpush1.bf16.xpose.msra.mxu0 0
    %448 = vmatprep.subr.bf16.mxu0 0
    %449 = vmatpush1.bf16.xpose.msra.mxu0 0
    %450 = vmatprep.mubr.bf16.mxu0 0
    %451 = vmatmul.mubr.bf16.gmra.mrb[0].mxu0 %v413
    %v452 = vpop.f32.mrb[0].mxu0
    %v453 = vadd.f32 0.0, %v452
    %v454 = vpop.f32.mrb[0].mxu0
    %v455 = vpop.f32.mrb[0].mxu0
    %v456 = vpop.f32.mrb[0].mxu0
    %457 = vdwg.mxu0
    %v458 = vmul.f32 %v404, 0.35355338
    %v459 = vmul.f32 %v453, 0.35355338
    %v460 = vsel %vm362, %v458, -inf
    %461 = vmax.xlane.f32.xlu0 %v460
    %v462 = vpop.xlane.xlu0 %461
    %v463 = vsel %vm362, %v459, -inf
    %464 = vmax.xlane.f32.xlu0 %v463
    %v465 = vpop.xlane.xlu0 %464
    %v466 = vsub.f32 %v458, %v462
    %v467 = vsub.f32 %v459, %v465
    %v468 = vmul.f32 %v466, 1.442695
    %v469 = vpow.pop %v468
    %v470 = vmul.f32 %v467, 1.442695
    %v471 = vpow.pop %v470
    %v472 = vsel %vm362, %v469, 0.0
    %473 = vadd.xlane.f32.xlu0 %v472
    %v474 = vpop.xlane.xlu0 %473
    %v475 = vsel %vm362, %v471, 0.0
    %476 = vadd.xlane.f32.xlu0 %v475
    %v477 = vpop.xlane.xlu0 %476
    %v478 = vrcp.pop %v474
    %v479 = vrcp.pop %v477
    %v480 = vmul.f32 %v469, %v478
    %v481 = vmul.f32 %v471, %v479
    %v482 = vpack.c.bf16 %v480, %v480
    %v483 = vpack.c.bf16 %v481, %v481
    %484 = vrot.lane.b32.xlu0 %v357, 64
    %v485 = vpop.permute.xlu0 %484
    %v487 = vsel %vm362, %v482, 0
    %vm489 = vcmask 1043456
    %v491 = vsel %vm489, %v485, 0
    %493 = vmatprep.subr.bf16.mxu0 0
    %494 = vmatpush1.bf16.msra.mxu0 %v491
    %495 = vmatprep.subr.bf16.mxu0 0
    %496 = vmatpush1.bf16.msra.mxu0 0
    %497 = vmatprep.subr.bf16.mxu0 0
    %498 = vmatpush1.bf16.msra.mxu0 0
    %499 = vmatprep.subr.bf16.mxu0 0
    %500 = vmatpush1.bf16.msra.mxu0 0
    %501 = vmatprep.subr.bf16.mxu0 0
    %502 = vmatpush1.bf16.msra.mxu0 0
    %503 = vmatprep.subr.bf16.mxu0 0
    %504 = vmatpush1.bf16.msra.mxu0 0
    %505 = vmatprep.subr.bf16.mxu0 0
    %506 = vmatpush1.bf16.msra.mxu0 0
    %507 = vmatprep.subr.bf16.mxu0 0
    %508 = vmatpush1.bf16.msra.mxu0 0
    %509 = vmatprep.subr.bf16.mxu0 0
    %510 = vmatpush1.bf16.msra.mxu0 0
    %511 = vmatprep.subr.bf16.mxu0 0
    %512 = vmatpush1.bf16.msra.mxu0 0
    %513 = vmatprep.subr.bf16.mxu0 0
    %514 = vmatpush1.bf16.msra.mxu0 0
    %515 = vmatprep.subr.bf16.mxu0 0
    %516 = vmatpush1.bf16.msra.mxu0 0
    %517 = vmatprep.subr.bf16.mxu0 0
    %518 = vmatpush1.bf16.msra.mxu0 0
    %519 = vmatprep.subr.bf16.mxu0 0
    %520 = vmatpush1.bf16.msra.mxu0 0
    %521 = vmatprep.subr.bf16.mxu0 0
    %522 = vmatpush1.bf16.msra.mxu0 0
    %523 = vmatprep.subr.bf16.mxu0 0
    %524 = vmatpush1.bf16.msra.mxu0 0
    %525 = vmatprep.mubr.bf16.mxu0 0
    %526 = vmatmul.mubr.bf16.gmra.mrb[0].mxu0 %v487
    %v527 = vpop.f32.mrb[0].mxu0
    %v528 = vadd.f32 0.0, %v527
    %v529 = vpop.f32.mrb[0].mxu0
    %v530 = vpop.f32.mrb[0].mxu0
    %v531 = vpop.f32.mrb[0].mxu0
    %532 = vdwg.mxu0
    %533 = vrot.lane.b32.xlu0 %v358, 64
    %v534 = vpop.permute.xlu0 %533
    %v536 = vsel %vm362, %v483, 0
    %v539 = vsel %vm489, %v534, 0
    %541 = vmatprep.subr.bf16.mxu0 0
    %542 = vmatpush1.bf16.msra.mxu0 %v539
    %543 = vmatprep.subr.bf16.mxu0 0
    %544 = vmatpush1.bf16.msra.mxu0 0
    %545 = vmatprep.subr.bf16.mxu0 0
    %546 = vmatpush1.bf16.msra.mxu0 0
    %547 = vmatprep.subr.bf16.mxu0 0
    %548 = vmatpush1.bf16.msra.mxu0 0
    %549 = vmatprep.subr.bf16.mxu0 0
    %550 = vmatpush1.bf16.msra.mxu0 0
    %551 = vmatprep.subr.bf16.mxu0 0
    %552 = vmatpush1.bf16.msra.mxu0 0
    %553 = vmatprep.subr.bf16.mxu0 0
    %554 = vmatpush1.bf16.msra.mxu0 0
    %555 = vmatprep.subr.bf16.mxu0 0
    %556 = vmatpush1.bf16.msra.mxu0 0
    %557 = vmatprep.subr.bf16.mxu0 0
    %558 = vmatpush1.bf16.msra.mxu0 0
    %559 = vmatprep.subr.bf16.mxu0 0
    %560 = vmatpush1.bf16.msra.mxu0 0
    %561 = vmatprep.subr.bf16.mxu0 0
    %562 = vmatpush1.bf16.msra.mxu0 0
    %563 = vmatprep.subr.bf16.mxu0 0
    %564 = vmatpush1.bf16.msra.mxu0 0
    %565 = vmatprep.subr.bf16.mxu0 0
    %566 = vmatpush1.bf16.msra.mxu0 0
    %567 = vmatprep.subr.bf16.mxu0 0
    %568 = vmatpush1.bf16.msra.mxu0 0
    %569 = vmatprep.subr.bf16.mxu0 0
    %570 = vmatpush1.bf16.msra.mxu0 0
    %571 = vmatprep.subr.bf16.mxu0 0
    %572 = vmatpush1.bf16.msra.mxu0 0
    %573 = vmatprep.mubr.bf16.mxu0 0
    %574 = vmatmul.mubr.bf16.gmra.mrb[0].mxu0 %v536
    %v575 = vpop.f32.mrb[0].mxu0
    %v576 = vadd.f32 0.0, %v575
    %v577 = vpop.f32.mrb[0].mxu0
    %v578 = vpop.f32.mrb[0].mxu0
    %v579 = vpop.f32.mrb[0].mxu0
    %580 = vdwg.mxu0
    %581 = vrot.lane.b32.xlu0 %v357, 120
    %v582 = vpop.permute.xlu0 %581
    %583 = vrot.lane.b32.xlu0 %v357, 88
    %v584 = vpop.permute.xlu0 %583
    %v586 = vsel %vm362, %v582, 0
    %v589 = vsel %vm362, %v584, 0
    %591 = vmatprep.subr.bf16.mxu0 0
    %592 = vmatpush1.bf16.xpose.msra.mxu0 %v589
    %593 = vmatprep.subr.bf16.mxu0 0
    %594 = vmatpush1.bf16.xpose.msra.mxu0 0
    %595 = vmatprep.subr.bf16.mxu0 0
    %596 = vmatpush1.bf16.xpose.msra.mxu0 0
    %597 = vmatprep.subr.bf16.mxu0 0
    %598 = vmatpush1.bf16.xpose.msra.mxu0 0
    %599 = vmatprep.subr.bf16.mxu0 0
    %600 = vmatpush1.bf16.xpose.msra.mxu0 0
    %601 = vmatprep.subr.bf16.mxu0 0
    %602 = vmatpush1.bf16.xpose.msra.mxu0 0
    %603 = vmatprep.subr.bf16.mxu0 0
    %604 = vmatpush1.bf16.xpose.msra.mxu0 0
    %605 = vmatprep.subr.bf16.mxu0 0
    %606 = vmatpush1.bf16.xpose.msra.mxu0 0
    %607 = vmatprep.subr.bf16.mxu0 0
    %608 = vmatpush1.bf16.xpose.msra.mxu0 0
    %609 = vmatprep.subr.bf16.mxu0 0
    %610 = vmatpush1.bf16.xpose.msra.mxu0 0
    %611 = vmatprep.subr.bf16.mxu0 0
    %612 = vmatpush1.bf16.xpose.msra.mxu0 0
    %613 = vmatprep.subr.bf16.mxu0 0
    %614 = vmatpush1.bf16.xpose.msra.mxu0 0
    %615 = vmatprep.subr.bf16.mxu0 0
    %616 = vmatpush1.bf16.xpose.msra.mxu0 0
    %617 = vmatprep.subr.bf16.mxu0 0
    %618 = vmatpush1.bf16.xpose.msra.mxu0 0
    %619 = vmatprep.subr.bf16.mxu0 0
    %620 = vmatpush1.bf16.xpose.msra.mxu0 0
    %621 = vmatprep.subr.bf16.mxu0 0
    %622 = vmatpush1.bf16.xpose.msra.mxu0 0
    %623 = vmatprep.mubr.bf16.mxu0 0
    %624 = vmatmul.mubr.bf16.gmra.mrb[0].mxu0 %v586
    %v625 = vpop.f32.mrb[0].mxu0
    %v626 = vadd.f32 0.0, %v625
    %v627 = vpop.f32.mrb[0].mxu0
    %v628 = vpop.f32.mrb[0].mxu0
    %v629 = vpop.f32.mrb[0].mxu0
    %630 = vdwg.mxu0
    %631 = vrot.lane.b32.xlu0 %v358, 120
    %v632 = vpop.permute.xlu0 %631
    %633 = vrot.lane.b32.xlu0 %v358, 88
    %v634 = vpop.permute.xlu0 %633
    %v636 = vsel %vm362, %v632, 0
    %v639 = vsel %vm362, %v634, 0
    %641 = vmatprep.subr.bf16.mxu0 0
    %642 = vmatpush1.bf16.xpose.msra.mxu0 %v639
    %643 = vmatprep.subr.bf16.mxu0 0
    %644 = vmatpush1.bf16.xpose.msra.mxu0 0
    %645 = vmatprep.subr.bf16.mxu0 0
    %646 = vmatpush1.bf16.xpose.msra.mxu0 0
    %647 = vmatprep.subr.bf16.mxu0 0
    %648 = vmatpush1.bf16.xpose.msra.mxu0 0
    %649 = vmatprep.subr.bf16.mxu0 0
    %650 = vmatpush1.bf16.xpose.msra.mxu0 0
    %651 = vmatprep.subr.bf16.mxu0 0
    %652 = vmatpush1.bf16.xpose.msra.mxu0 0
    %653 = vmatprep.subr.bf16.mxu0 0
    %654 = vmatpush1.bf16.xpose.msra.mxu0 0
    %655 = vmatprep.subr.bf16.mxu0 0
    %656 = vmatpush1.bf16.xpose.msra.mxu0 0
    %657 = vmatprep.subr.bf16.mxu0 0
    %658 = vmatpush1.bf16.xpose.msra.mxu0 0
    %659 = vmatprep.subr.bf16.mxu0 0
    %660 = vmatpush1.bf16.xpose.msra.mxu0 0
    %661 = vmatprep.subr.bf16.mxu0 0
    %662 = vmatpush1.bf16.xpose.msra.mxu0 0
    %663 = vmatprep.subr.bf16.mxu0 0
    %664 = vmatpush1.bf16.xpose.msra.mxu0 0
    %665 = vmatprep.subr.bf16.mxu0 0
    %666 = vmatpush1.bf16.xpose.msra.mxu0 0
    %667 = vmatprep.subr.bf16.mxu0 0
    %668 = vmatpush1.bf16.xpose.msra.mxu0 0
    %669 = vmatprep.subr.bf16.mxu0 0
    %670 = vmatpush1.bf16.xpose.msra.mxu0 0
    %671 = vmatprep.subr.bf16.mxu0 0
    %672 = vmatpush1.bf16.xpose.msra.mxu0 0
    %673 = vmatprep.mubr.bf16.mxu0 0
    %674 = vmatmul.mubr.bf16.gmra.mrb[0].mxu0 %v636
    %v675 = vpop.f32.mrb[0].mxu0
    %v676 = vadd.f32 0.0, %v675
    %v677 = vpop.f32.mrb[0].mxu0
    %v678 = vpop.f32.mrb[0].mxu0
    %v679 = vpop.f32.mrb[0].mxu0
    %680 = vdwg.mxu0
    %v681 = vmul.f32 %v626, 0.35355338
    %v682 = vmul.f32 %v676, 0.35355338
    %v683 = vsel %vm362, %v681, -inf
    %684 = vmax.xlane.f32.xlu0 %v683
    %v685 = vpop.xlane.xlu0 %684
    %v686 = vsel %vm362, %v682, -inf
    %687 = vmax.xlane.f32.xlu0 %v686
    %v688 = vpop.xlane.xlu0 %687
    %v689 = vsub.f32 %v681, %v685
    %v690 = vsub.f32 %v682, %v688
    %v691 = vmul.f32 %v689, 1.442695
    %v692 = vpow.pop %v691
    %v693 = vmul.f32 %v690, 1.442695
    %v694 = vpow.pop %v693
    %v695 = vsel %vm362, %v692, 0.0
    %696 = vadd.xlane.f32.xlu0 %v695
    %v697 = vpop.xlane.xlu0 %696
    %v698 = vsel %vm362, %v694, 0.0
    %699 = vadd.xlane.f32.xlu0 %v698
    %v700 = vpop.xlane.xlu0 %699
    %v701 = vrcp.pop %v697
    %v702 = vrcp.pop %v700
    %v703 = vmul.f32 %v692, %v701
    %v704 = vmul.f32 %v694, %v702
    %v705 = vpack.c.bf16 %v703, %v703
    %v706 = vpack.c.bf16 %v704, %v704
    %707 = vrot.lane.b32.xlu0 %v357, 56
    %v708 = vpop.permute.xlu0 %707
    %v710 = vsel %vm362, %v705, 0
    %v713 = vsel %vm489, %v708, 0
    %715 = vmatprep.subr.bf16.mxu0 0
    %716 = vmatpush1.bf16.msra.mxu0 %v713
    %717 = vmatprep.subr.bf16.mxu0 0
    %718 = vmatpush1.bf16.msra.mxu0 0
    %719 = vmatprep.subr.bf16.mxu0 0
    %720 = vmatpush1.bf16.msra.mxu0 0
    %721 = vmatprep.subr.bf16.mxu0 0
    %722 = vmatpush1.bf16.msra.mxu0 0
    %723 = vmatprep.subr.bf16.mxu0 0
    %724 = vmatpush1.bf16.msra.mxu0 0
    %725 = vmatprep.subr.bf16.mxu0 0
    %726 = vmatpush1.bf16.msra.mxu0 0
    %727 = vmatprep.subr.bf16.mxu0 0
    %728 = vmatpush1.bf16.msra.mxu0 0
    %729 = vmatprep.subr.bf16.mxu0 0
    %730 = vmatpush1.bf16.msra.mxu0 0
    %731 = vmatprep.subr.bf16.mxu0 0
    %732 = vmatpush1.bf16.msra.mxu0 0
    %733 = vmatprep.subr.bf16.mxu0 0
    %734 = vmatpush1.bf16.msra.mxu0 0
    %735 = vmatprep.subr.bf16.mxu0 0
    %736 = vmatpush1.bf16.msra.mxu0 0
    %737 = vmatprep.subr.bf16.mxu0 0
    %738 = vmatpush1.bf16.msra.mxu0 0
    %739 = vmatprep.subr.bf16.mxu0 0
    %740 = vmatpush1.bf16.msra.mxu0 0
    %741 = vmatprep.subr.bf16.mxu0 0
    %742 = vmatpush1.bf16.msra.mxu0 0
    %743 = vmatprep.subr.bf16.mxu0 0
    %744 = vmatpush1.bf16.msra.mxu0 0
    %745 = vmatprep.subr.bf16.mxu0 0
    %746 = vmatpush1.bf16.msra.mxu0 0
    %747 = vmatprep.mubr.bf16.mxu0 0
    %748 = vmatmul.mubr.bf16.gmra.mrb[0].mxu0 %v710
    %v749 = vpop.f32.mrb[0].mxu0
    %v750 = vadd.f32 0.0, %v749
    %v751 = vpop.f32.mrb[0].mxu0
    %v752 = vpop.f32.mrb[0].mxu0
    %v753 = vpop.f32.mrb[0].mxu0
    %754 = vdwg.mxu0
    %755 = vrot.lane.b32.xlu0 %v358, 56
    %v756 = vpop.permute.xlu0 %755
    %v758 = vsel %vm362, %v706, 0
    %v761 = vsel %vm489, %v756, 0
    %763 = vmatprep.subr.bf16.mxu0 0
    %764 = vmatpush1.bf16.msra.mxu0 %v761
    %765 = vmatprep.subr.bf16.mxu0 0
    %766 = vmatpush1.bf16.msra.mxu0 0
    %767 = vmatprep.subr.bf16.mxu0 0
    %768 = vmatpush1.bf16.msra.mxu0 0
    %769 = vmatprep.subr.bf16.mxu0 0
    %770 = vmatpush1.bf16.msra.mxu0 0
    %771 = vmatprep.subr.bf16.mxu0 0
    %772 = vmatpush1.bf16.msra.mxu0 0
    %773 = vmatprep.subr.bf16.mxu0 0
    %774 = vmatpush1.bf16.msra.mxu0 0
    %775 = vmatprep.subr.bf16.mxu0 0
    %776 = vmatpush1.bf16.msra.mxu0 0
    %777 = vmatprep.subr.bf16.mxu0 0
    %778 = vmatpush1.bf16.msra.mxu0 0
    %779 = vmatprep.subr.bf16.mxu0 0
    %780 = vmatpush1.bf16.msra.mxu0 0
    %781 = vmatprep.subr.bf16.mxu0 0
    %782 = vmatpush1.bf16.msra.mxu0 0
    %783 = vmatprep.subr.bf16.mxu0 0
    %784 = vmatpush1.bf16.msra.mxu0 0
    %785 = vmatprep.subr.bf16.mxu0 0
    %786 = vmatpush1.bf16.msra.mxu0 0
    %787 = vmatprep.subr.bf16.mxu0 0
    %788 = vmatpush1.bf16.msra.mxu0 0
    %789 = vmatprep.subr.bf16.mxu0 0
    %790 = vmatpush1.bf16.msra.mxu0 0
    %791 = vmatprep.subr.bf16.mxu0 0
    %792 = vmatpush1.bf16.msra.mxu0 0
    %793 = vmatprep.subr.bf16.mxu0 0
    %794 = vmatpush1.bf16.msra.mxu0 0
    %795 = vmatprep.mubr.bf16.mxu0 0
    %796 = vmatmul.mubr.bf16.gmra.mrb[0].mxu0 %v758
    %v797 = vpop.f32.mrb[0].mxu0
    %v798 = vadd.f32 0.0, %v797
    %v799 = vpop.f32.mrb[0].mxu0
    %v800 = vpop.f32.mrb[0].mxu0
    %v801 = vpop.f32.mrb[0].mxu0
    %802 = vdwg.mxu0
    %803 = vrot.lane.b32.xlu0 %v357, 112
    %v804 = vpop.permute.xlu0 %803
    %805 = vrot.lane.b32.xlu0 %v357, 80
    %v806 = vpop.permute.xlu0 %805
    %v808 = vsel %vm362, %v804, 0
    %v811 = vsel %vm362, %v806, 0
    %813 = vmatprep.subr.bf16.mxu0 0
    %814 = vmatpush1.bf16.xpose.msra.mxu0 %v811
    %815 = vmatprep.subr.bf16.mxu0 0
    %816 = vmatpush1.bf16.xpose.msra.mxu0 0
    %817 = vmatprep.subr.bf16.mxu0 0
    %818 = vmatpush1.bf16.xpose.msra.mxu0 0
    %819 = vmatprep.subr.bf16.mxu0 0
    %820 = vmatpush1.bf16.xpose.msra.mxu0 0
    %821 = vmatprep.subr.bf16.mxu0 0
    %822 = vmatpush1.bf16.xpose.msra.mxu0 0
    %823 = vmatprep.subr.bf16.mxu0 0
    %824 = vmatpush1.bf16.xpose.msra.mxu0 0
    %825 = vmatprep.subr.bf16.mxu0 0
    %826 = vmatpush1.bf16.xpose.msra.mxu0 0
    %827 = vmatprep.subr.bf16.mxu0 0
    %828 = vmatpush1.bf16.xpose.msra.mxu0 0
    %829 = vmatprep.subr.bf16.mxu0 0
    %830 = vmatpush1.bf16.xpose.msra.mxu0 0
    %831 = vmatprep.subr.bf16.mxu0 0
    %832 = vmatpush1.bf16.xpose.msra.mxu0 0
    %833 = vmatprep.subr.bf16.mxu0 0
    %834 = vmatpush1.bf16.xpose.msra.mxu0 0
    %835 = vmatprep.subr.bf16.mxu0 0
    %836 = vmatpush1.bf16.xpose.msra.mxu0 0
    %837 = vmatprep.subr.bf16.mxu0 0
    %838 = vmatpush1.bf16.xpose.msra.mxu0 0
    %839 = vmatprep.subr.bf16.mxu0 0
    %840 = vmatpush1.bf16.xpose.msra.mxu0 0
    %841 = vmatprep.subr.bf16.mxu0 0
    %842 = vmatpush1.bf16.xpose.msra.mxu0 0
    %843 = vmatprep.subr.bf16.mxu0 0
    %844 = vmatpush1.bf16.xpose.msra.mxu0 0
    %845 = vmatprep.mubr.bf16.mxu0 0
    %846 = vmatmul.mubr.bf16.gmra.mrb[0].mxu0 %v808
    %v847 = vpop.f32.mrb[0].mxu0
    %v848 = vadd.f32 0.0, %v847
    %v849 = vpop.f32.mrb[0].mxu0
    %v850 = vpop.f32.mrb[0].mxu0
    %v851 = vpop.f32.mrb[0].mxu0
    %852 = vdwg.mxu0
    %853 = vrot.lane.b32.xlu0 %v358, 112
    %v854 = vpop.permute.xlu0 %853
    %855 = vrot.lane.b32.xlu0 %v358, 80
    %v856 = vpop.permute.xlu0 %855
    %v858 = vsel %vm362, %v854, 0
    %v861 = vsel %vm362, %v856, 0
    %863 = vmatprep.subr.bf16.mxu0 0
    %864 = vmatpush1.bf16.xpose.msra.mxu0 %v861
    %865 = vmatprep.subr.bf16.mxu0 0
    %866 = vmatpush1.bf16.xpose.msra.mxu0 0
    %867 = vmatprep.subr.bf16.mxu0 0
    %868 = vmatpush1.bf16.xpose.msra.mxu0 0
    %869 = vmatprep.subr.bf16.mxu0 0
    %870 = vmatpush1.bf16.xpose.msra.mxu0 0
    %871 = vmatprep.subr.bf16.mxu0 0
    %872 = vmatpush1.bf16.xpose.msra.mxu0 0
    %873 = vmatprep.subr.bf16.mxu0 0
    %874 = vmatpush1.bf16.xpose.msra.mxu0 0
    %875 = vmatprep.subr.bf16.mxu0 0
    %876 = vmatpush1.bf16.xpose.msra.mxu0 0
    %877 = vmatprep.subr.bf16.mxu0 0
    %878 = vmatpush1.bf16.xpose.msra.mxu0 0
    %879 = vmatprep.subr.bf16.mxu0 0
    %880 = vmatpush1.bf16.xpose.msra.mxu0 0
    %881 = vmatprep.subr.bf16.mxu0 0
    %882 = vmatpush1.bf16.xpose.msra.mxu0 0
    %883 = vmatprep.subr.bf16.mxu0 0
    %884 = vmatpush1.bf16.xpose.msra.mxu0 0
    %885 = vmatprep.subr.bf16.mxu0 0
    %886 = vmatpush1.bf16.xpose.msra.mxu0 0
    %887 = vmatprep.subr.bf16.mxu0 0
    %888 = vmatpush1.bf16.xpose.msra.mxu0 0
    %889 = vmatprep.subr.bf16.mxu0 0
    %890 = vmatpush1.bf16.xpose.msra.mxu0 0
    %891 = vmatprep.subr.bf16.mxu0 0
    %892 = vmatpush1.bf16.xpose.msra.mxu0 0
    %893 = vmatprep.subr.bf16.mxu0 0
    %894 = vmatpush1.bf16.xpose.msra.mxu0 0
    %895 = vmatprep.mubr.bf16.mxu0 0
    %896 = vmatmul.mubr.bf16.gmra.mrb[0].mxu0 %v858
    %v897 = vpop.f32.mrb[0].mxu0
    %v898 = vadd.f32 0.0, %v897
    %v899 = vpop.f32.mrb[0].mxu0
    %v900 = vpop.f32.mrb[0].mxu0
    %v901 = vpop.f32.mrb[0].mxu0
    %902 = vdwg.mxu0
    %v903 = vmul.f32 %v848, 0.35355338
    %v904 = vmul.f32 %v898, 0.35355338
    %v905 = vsel %vm362, %v903, -inf
    %906 = vmax.xlane.f32.xlu0 %v905
    %v907 = vpop.xlane.xlu0 %906
    %v908 = vsel %vm362, %v904, -inf
    %909 = vmax.xlane.f32.xlu0 %v908
    %v910 = vpop.xlane.xlu0 %909
    %v911 = vsub.f32 %v903, %v907
    %v912 = vsub.f32 %v904, %v910
    %v913 = vmul.f32 %v911, 1.442695
    %v914 = vpow.pop %v913
    %v915 = vmul.f32 %v912, 1.442695
    %v916 = vpow.pop %v915
    %v917 = vsel %vm362, %v914, 0.0
    %918 = vadd.xlane.f32.xlu0 %v917
    %v919 = vpop.xlane.xlu0 %918
    %v920 = vsel %vm362, %v916, 0.0
    %921 = vadd.xlane.f32.xlu0 %v920
    %v922 = vpop.xlane.xlu0 %921
    %v923 = vrcp.pop %v919
    %v924 = vrcp.pop %v922
    %v925 = vmul.f32 %v914, %v923
    %v926 = vmul.f32 %v916, %v924
    %v927 = vpack.c.bf16 %v925, %v925
    %v928 = vpack.c.bf16 %v926, %v926
    %929 = vrot.lane.b32.xlu0 %v357, 48
    %v930 = vpop.permute.xlu0 %929
    %v932 = vsel %vm362, %v927, 0
    %v935 = vsel %vm489, %v930, 0
    %937 = vmatprep.subr.bf16.mxu0 0
    %938 = vmatpush1.bf16.msra.mxu0 %v935
    %939 = vmatprep.subr.bf16.mxu0 0
    %940 = vmatpush1.bf16.msra.mxu0 0
    %941 = vmatprep.subr.bf16.mxu0 0
    %942 = vmatpush1.bf16.msra.mxu0 0
    %943 = vmatprep.subr.bf16.mxu0 0
    %944 = vmatpush1.bf16.msra.mxu0 0
    %945 = vmatprep.subr.bf16.mxu0 0
    %946 = vmatpush1.bf16.msra.mxu0 0
    %947 = vmatprep.subr.bf16.mxu0 0
    %948 = vmatpush1.bf16.msra.mxu0 0
    %949 = vmatprep.subr.bf16.mxu0 0
    %950 = vmatpush1.bf16.msra.mxu0 0
    %951 = vmatprep.subr.bf16.mxu0 0
    %952 = vmatpush1.bf16.msra.mxu0 0
    %953 = vmatprep.subr.bf16.mxu0 0
    %954 = vmatpush1.bf16.msra.mxu0 0
    %955 = vmatprep.subr.bf16.mxu0 0
    %956 = vmatpush1.bf16.msra.mxu0 0
    %957 = vmatprep.subr.bf16.mxu0 0
    %958 = vmatpush1.bf16.msra.mxu0 0
    %959 = vmatprep.subr.bf16.mxu0 0
    %960 = vmatpush1.bf16.msra.mxu0 0
    %961 = vmatprep.subr.bf16.mxu0 0
    %962 = vmatpush1.bf16.msra.mxu0 0
    %963 = vmatprep.subr.bf16.mxu0 0
    %964 = vmatpush1.bf16.msra.mxu0 0
    %965 = vmatprep.subr.bf16.mxu0 0
    %966 = vmatpush1.bf16.msra.mxu0 0
    %967 = vmatprep.subr.bf16.mxu0 0
    %968 = vmatpush1.bf16.msra.mxu0 0
    %969 = vmatprep.mubr.bf16.mxu0 0
    %970 = vmatmul.mubr.bf16.gmra.mrb[0].mxu0 %v932
    %v971 = vpop.f32.mrb[0].mxu0
    %v972 = vadd.f32 0.0, %v971
    %v973 = vpop.f32.mrb[0].mxu0
    %v974 = vpop.f32.mrb[0].mxu0
    %v975 = vpop.f32.mrb[0].mxu0
    %976 = vdwg.mxu0
    %977 = vrot.lane.b32.xlu0 %v358, 48
    %v978 = vpop.permute.xlu0 %977
    %v980 = vsel %vm362, %v928, 0
    %v983 = vsel %vm489, %v978, 0
    %985 = vmatprep.subr.bf16.mxu0 0
    %986 = vmatpush1.bf16.msra.mxu0 %v983
    %987 = vmatprep.subr.bf16.mxu0 0
    %988 = vmatpush1.bf16.msra.mxu0 0
    %989 = vmatprep.subr.bf16.mxu0 0
    %990 = vmatpush1.bf16.msra.mxu0 0
    %991 = vmatprep.subr.bf16.mxu0 0
    %992 = vmatpush1.bf16.msra.mxu0 0
    %993 = vmatprep.subr.bf16.mxu0 0
    %994 = vmatpush1.bf16.msra.mxu0 0
    %995 = vmatprep.subr.bf16.mxu0 0
    %996 = vmatpush1.bf16.msra.mxu0 0
    %997 = vmatprep.subr.bf16.mxu0 0
    %998 = vmatpush1.bf16.msra.mxu0 0
    %999 = vmatprep.subr.bf16.mxu0 0
    %1000 = vmatpush1.bf16.msra.mxu0 0
    %1001 = vmatprep.subr.bf16.mxu0 0
    %1002 = vmatpush1.bf16.msra.mxu0 0
    %1003 = vmatprep.subr.bf16.mxu0 0
    %1004 = vmatpush1.bf16.msra.mxu0 0
    %1005 = vmatprep.subr.bf16.mxu0 0
    %1006 = vmatpush1.bf16.msra.mxu0 0
    %1007 = vmatprep.subr.bf16.mxu0 0
    %1008 = vmatpush1.bf16.msra.mxu0 0
    %1009 = vmatprep.subr.bf16.mxu0 0
    %1010 = vmatpush1.bf16.msra.mxu0 0
    %1011 = vmatprep.subr.bf16.mxu0 0
    %1012 = vmatpush1.bf16.msra.mxu0 0
    %1013 = vmatprep.subr.bf16.mxu0 0
    %1014 = vmatpush1.bf16.msra.mxu0 0
    %1015 = vmatprep.subr.bf16.mxu0 0
    %1016 = vmatpush1.bf16.msra.mxu0 0
    %1017 = vmatprep.mubr.bf16.mxu0 0
    %1018 = vmatmul.mubr.bf16.gmra.mrb[0].mxu0 %v980
    %v1019 = vpop.f32.mrb[0].mxu0
    %v1020 = vadd.f32 0.0, %v1019
    %v1021 = vpop.f32.mrb[0].mxu0
    %v1022 = vpop.f32.mrb[0].mxu0
    %v1023 = vpop.f32.mrb[0].mxu0
    %1024 = vdwg.mxu0
    %1025 = vrot.lane.b32.xlu0 %v357, 104
    %v1026 = vpop.permute.xlu0 %1025
    %1027 = vrot.lane.b32.xlu0 %v357, 72
    %v1028 = vpop.permute.xlu0 %1027
    %v1030 = vsel %vm362, %v1026, 0
    %v1033 = vsel %vm362, %v1028, 0
    %1035 = vmatprep.subr.bf16.mxu0 0
    %1036 = vmatpush1.bf16.xpose.msra.mxu0 %v1033
    %1037 = vmatprep.subr.bf16.mxu0 0
    %1038 = vmatpush1.bf16.xpose.msra.mxu0 0
    %1039 = vmatprep.subr.bf16.mxu0 0
    %1040 = vmatpush1.bf16.xpose.msra.mxu0 0
    %1041 = vmatprep.subr.bf16.mxu0 0
    %1042 = vmatpush1.bf16.xpose.msra.mxu0 0
    %1043 = vmatprep.subr.bf16.mxu0 0
    %1044 = vmatpush1.bf16.xpose.msra.mxu0 0
    %1045 = vmatprep.subr.bf16.mxu0 0
    %1046 = vmatpush1.bf16.xpose.msra.mxu0 0
    %1047 = vmatprep.subr.bf16.mxu0 0
    %1048 = vmatpush1.bf16.xpose.msra.mxu0 0
    %1049 = vmatprep.subr.bf16.mxu0 0
    %1050 = vmatpush1.bf16.xpose.msra.mxu0 0
    %1051 = vmatprep.subr.bf16.mxu0 0
    %1052 = vmatpush1.bf16.xpose.msra.mxu0 0
    %1053 = vmatprep.subr.bf16.mxu0 0
    %1054 = vmatpush1.bf16.xpose.msra.mxu0 0
    %1055 = vmatprep.subr.bf16.mxu0 0
    %1056 = vmatpush1.bf16.xpose.msra.mxu0 0
    %1057 = vmatprep.subr.bf16.mxu0 0
    %1058 = vmatpush1.bf16.xpose.msra.mxu0 0
    %1059 = vmatprep.subr.bf16.mxu0 0
    %1060 = vmatpush1.bf16.xpose.msra.mxu0 0
    %1061 = vmatprep.subr.bf16.mxu0 0
    %1062 = vmatpush1.bf16.xpose.msra.mxu0 0
    %1063 = vmatprep.subr.bf16.mxu0 0
    %1064 = vmatpush1.bf16.xpose.msra.mxu0 0
    %1065 = vmatprep.subr.bf16.mxu0 0
    %1066 = vmatpush1.bf16.xpose.msra.mxu0 0
    %1067 = vmatprep.mubr.bf16.mxu0 0
    %1068 = vmatmul.mubr.bf16.gmra.mrb[0].mxu0 %v1030
    %v1069 = vpop.f32.mrb[0].mxu0
    %v1070 = vadd.f32 0.0, %v1069
    %v1071 = vpop.f32.mrb[0].mxu0
    %v1072 = vpop.f32.mrb[0].mxu0
    %v1073 = vpop.f32.mrb[0].mxu0
    %1074 = vdwg.mxu0
    %1075 = vrot.lane.b32.xlu0 %v358, 104
    %v1076 = vpop.permute.xlu0 %1075
    %1077 = vrot.lane.b32.xlu0 %v358, 72
    %v1078 = vpop.permute.xlu0 %1077
    %v1080 = vsel %vm362, %v1076, 0
    %v1083 = vsel %vm362, %v1078, 0
    %1085 = vmatprep.subr.bf16.mxu0 0
    %1086 = vmatpush1.bf16.xpose.msra.mxu0 %v1083
    %1087 = vmatprep.subr.bf16.mxu0 0
    %1088 = vmatpush1.bf16.xpose.msra.mxu0 0
    %1089 = vmatprep.subr.bf16.mxu0 0
    %1090 = vmatpush1.bf16.xpose.msra.mxu0 0
    %1091 = vmatprep.subr.bf16.mxu0 0
    %1092 = vmatpush1.bf16.xpose.msra.mxu0 0
    %1093 = vmatprep.subr.bf16.mxu0 0
    %1094 = vmatpush1.bf16.xpose.msra.mxu0 0
    %1095 = vmatprep.subr.bf16.mxu0 0
    %1096 = vmatpush1.bf16.xpose.msra.mxu0 0
    %1097 = vmatprep.subr.bf16.mxu0 0
    %1098 = vmatpush1.bf16.xpose.msra.mxu0 0
    %1099 = vmatprep.subr.bf16.mxu0 0
    %1100 = vmatpush1.bf16.xpose.msra.mxu0 0
    %1101 = vmatprep.subr.bf16.mxu0 0
    %1102 = vmatpush1.bf16.xpose.msra.mxu0 0
    %1103 = vmatprep.subr.bf16.mxu0 0
    %1104 = vmatpush1.bf16.xpose.msra.mxu0 0
    %1105 = vmatprep.subr.bf16.mxu0 0
    %1106 = vmatpush1.bf16.xpose.msra.mxu0 0
    %1107 = vmatprep.subr.bf16.mxu0 0
    %1108 = vmatpush1.bf16.xpose.msra.mxu0 0
    %1109 = vmatprep.subr.bf16.mxu0 0
    %1110 = vmatpush1.bf16.xpose.msra.mxu0 0
    %1111 = vmatprep.subr.bf16.mxu0 0
    %1112 = vmatpush1.bf16.xpose.msra.mxu0 0
    %1113 = vmatprep.subr.bf16.mxu0 0
    %1114 = vmatpush1.bf16.xpose.msra.mxu0 0
    %1115 = vmatprep.subr.bf16.mxu0 0
    %1116 = vmatpush1.bf16.xpose.msra.mxu0 0
    %1117 = vmatprep.mubr.bf16.mxu0 0
    %1118 = vmatmul.mubr.bf16.gmra.mrb[0].mxu0 %v1080
    %v1119 = vpop.f32.mrb[0].mxu0
    %v1120 = vadd.f32 0.0, %v1119
    %v1121 = vpop.f32.mrb[0].mxu0
    %v1122 = vpop.f32.mrb[0].mxu0
    %v1123 = vpop.f32.mrb[0].mxu0
    %1124 = vdwg.mxu0
    %v1125 = vmul.f32 %v1070, 0.35355338
    %v1126 = vmul.f32 %v1120, 0.35355338
    %v1127 = vsel %vm362, %v1125, -inf
    %1128 = vmax.xlane.f32.xlu0 %v1127
    %v1129 = vpop.xlane.xlu0 %1128
    %v1130 = vsel %vm362, %v1126, -inf
    %1131 = vmax.xlane.f32.xlu0 %v1130
    %v1132 = vpop.xlane.xlu0 %1131
    %v1133 = vsub.f32 %v1125, %v1129
    %v1134 = vsub.f32 %v1126, %v1132
    %v1135 = vmul.f32 %v1133, 1.442695
    %v1136 = vpow.pop %v1135
    %v1137 = vmul.f32 %v1134, 1.442695
    %v1138 = vpow.pop %v1137
    %v1139 = vsel %vm362, %v1136, 0.0
    %1140 = vadd.xlane.f32.xlu0 %v1139
    %v1141 = vpop.xlane.xlu0 %1140
    %v1142 = vsel %vm362, %v1138, 0.0
    %1143 = vadd.xlane.f32.xlu0 %v1142
    %v1144 = vpop.xlane.xlu0 %1143
    %v1145 = vrcp.pop %v1141
    %v1146 = vrcp.pop %v1144
    %v1147 = vmul.f32 %v1136, %v1145
    %v1148 = vmul.f32 %v1138, %v1146
    %v1149 = vpack.c.bf16 %v1147, %v1147
    %v1150 = vpack.c.bf16 %v1148, %v1148
    %1151 = vrot.lane.b32.xlu0 %v357, 40
    %v1152 = vpop.permute.xlu0 %1151
    %v1154 = vsel %vm362, %v1149, 0
    %v1157 = vsel %vm489, %v1152, 0
    %1159 = vmatprep.subr.bf16.mxu0 0
    %1160 = vmatpush1.bf16.msra.mxu0 %v1157
    %1161 = vmatprep.subr.bf16.mxu0 0
    %1162 = vmatpush1.bf16.msra.mxu0 0
    %1163 = vmatprep.subr.bf16.mxu0 0
    %1164 = vmatpush1.bf16.msra.mxu0 0
    %1165 = vmatprep.subr.bf16.mxu0 0
    %1166 = vmatpush1.bf16.msra.mxu0 0
    %1167 = vmatprep.subr.bf16.mxu0 0
    %1168 = vmatpush1.bf16.msra.mxu0 0
    %1169 = vmatprep.subr.bf16.mxu0 0
    %1170 = vmatpush1.bf16.msra.mxu0 0
    %1171 = vmatprep.subr.bf16.mxu0 0
    %1172 = vmatpush1.bf16.msra.mxu0 0
    %1173 = vmatprep.subr.bf16.mxu0 0
    %1174 = vmatpush1.bf16.msra.mxu0 0
    %1175 = vmatprep.subr.bf16.mxu0 0
    %1176 = vmatpush1.bf16.msra.mxu0 0
    %1177 = vmatprep.subr.bf16.mxu0 0
    %1178 = vmatpush1.bf16.msra.mxu0 0
    %1179 = vmatprep.subr.bf16.mxu0 0
    %1180 = vmatpush1.bf16.msra.mxu0 0
    %1181 = vmatprep.subr.bf16.mxu0 0
    %1182 = vmatpush1.bf16.msra.mxu0 0
    %1183 = vmatprep.subr.bf16.mxu0 0
    %1184 = vmatpush1.bf16.msra.mxu0 0
    %1185 = vmatprep.subr.bf16.mxu0 0
    %1186 = vmatpush1.bf16.msra.mxu0 0
    %1187 = vmatprep.subr.bf16.mxu0 0
    %1188 = vmatpush1.bf16.msra.mxu0 0
    %1189 = vmatprep.subr.bf16.mxu0 0
    %1190 = vmatpush1.bf16.msra.mxu0 0
    %1191 = vmatprep.mubr.bf16.mxu0 0
    %1192 = vmatmul.mubr.bf16.gmra.mrb[0].mxu0 %v1154
    %v1193 = vpop.f32.mrb[0].mxu0
    %v1194 = vadd.f32 0.0, %v1193
    %v1195 = vpop.f32.mrb[0].mxu0
    %v1196 = vpop.f32.mrb[0].mxu0
    %v1197 = vpop.f32.mrb[0].mxu0
    %1198 = vdwg.mxu0
    %1199 = vrot.lane.b32.xlu0 %v358, 40
    %v1200 = vpop.permute.xlu0 %1199
    %v1202 = vsel %vm362, %v1150, 0
    %v1205 = vsel %vm489, %v1200, 0
    %1207 = vmatprep.subr.bf16.mxu0 0
    %1208 = vmatpush1.bf16.msra.mxu0 %v1205
    %1209 = vmatprep.subr.bf16.mxu0 0
    %1210 = vmatpush1.bf16.msra.mxu0 0
    %1211 = vmatprep.subr.bf16.mxu0 0
    %1212 = vmatpush1.bf16.msra.mxu0 0
    %1213 = vmatprep.subr.bf16.mxu0 0
    %1214 = vmatpush1.bf16.msra.mxu0 0
    %1215 = vmatprep.subr.bf16.mxu0 0
    %1216 = vmatpush1.bf16.msra.mxu0 0
    %1217 = vmatprep.subr.bf16.mxu0 0
    %1218 = vmatpush1.bf16.msra.mxu0 0
    %1219 = vmatprep.subr.bf16.mxu0 0
    %1220 = vmatpush1.bf16.msra.mxu0 0
    %1221 = vmatprep.subr.bf16.mxu0 0
    %1222 = vmatpush1.bf16.msra.mxu0 0
    %1223 = vmatprep.subr.bf16.mxu0 0
    %1224 = vmatpush1.bf16.msra.mxu0 0
    %1225 = vmatprep.subr.bf16.mxu0 0
    %1226 = vmatpush1.bf16.msra.mxu0 0
    %1227 = vmatprep.subr.bf16.mxu0 0
    %1228 = vmatpush1.bf16.msra.mxu0 0
    %1229 = vmatprep.subr.bf16.mxu0 0
    %1230 = vmatpush1.bf16.msra.mxu0 0
    %1231 = vmatprep.subr.bf16.mxu0 0
    %1232 = vmatpush1.bf16.msra.mxu0 0
    %1233 = vmatprep.subr.bf16.mxu0 0
    %1234 = vmatpush1.bf16.msra.mxu0 0
    %1235 = vmatprep.subr.bf16.mxu0 0
    %1236 = vmatpush1.bf16.msra.mxu0 0
    %1237 = vmatprep.subr.bf16.mxu0 0
    %1238 = vmatpush1.bf16.msra.mxu0 0
    %1239 = vmatprep.mubr.bf16.mxu0 0
    %1240 = vmatmul.mubr.bf16.gmra.mrb[0].mxu0 %v1202
    %v1241 = vpop.f32.mrb[0].mxu0
    %v1242 = vadd.f32 0.0, %v1241
    %v1243 = vpop.f32.mrb[0].mxu0
    %v1244 = vpop.f32.mrb[0].mxu0
    %v1245 = vpop.f32.mrb[0].mxu0
    %1246 = vdwg.mxu0
    %1249 = vrot.lane.b32.xlu0 %v750, 8
    %v1250 = vpop.permute.xlu0 %1249
    %1251 = vrot.lane.b32.xlu0 %v798, 8
    %v1252 = vpop.permute.xlu0 %1251
    %1257 = vrot.lane.b32.xlu0 %v972, 16
    %v1258 = vpop.permute.xlu0 %1257
    %1259 = vrot.lane.b32.xlu0 %v1020, 16
    %v1260 = vpop.permute.xlu0 %1259
    %1265 = vrot.lane.b32.xlu0 %v1194, 24
    %v1266 = vpop.permute.xlu0 %1265
    %1267 = vrot.lane.b32.xlu0 %v1242, 24
    %v1268 = vpop.permute.xlu0 %1267
    %v1271 = vsel %vm362, %v528, %v1250
    %v1272 = vsel %vm362, %v576, %v1252
    %v1273 = vsel %vm192, %v1271, %v1258
    %v1274 = vsel %vm192, %v1272, %v1260
    %vm1275 = vcmask 195584
    %v1276 = vsel %vm1275, %v1273, %v1266
    %v1277 = vsel %vm1275, %v1274, %v1268
    %v1278 = vld [vmem:[%s8] sm:$0xf]
    %v1279 = vld [vmem:[%s8 + $0x4] sm:$0xf]
    %v1280 = vld [vmem:[%s8 + $0x8] sm:$0xf]
    %v1281 = vld [vmem:[%s8 + $0xc] sm:$0xf]
    %v1282 = vpack.c.bf16 %v1277, %v1276
    %v1283 = vld [vmem:[%s9] sm:$0x1]
    %v1285 = vlaneseq
    %v1286 = vshrl.u32 %v1285, 7
    %v1287 = vsub.s32 0, %v1286
    %v1288 = vrot.slane %v1283, %v1287
    %v1294 = vunpack.c.l.b16 %v1278
    %v1295 = vunpack.c.l.b16 %v1279
    %v1296 = vunpack.c.l.b16 %v1280
    %v1297 = vunpack.c.l.b16 %v1281
    %v1298 = vpack.c.b16 %v1295, %v1294
    %v1299 = vpack.c.b16 %v1297, %v1296
    %v1303 = vsel %vm239, %v1282, 0
    %1305 = vmatprep.subr.bf16.mxu0 0
    %1306 = vmatpush1.bf16.msra.mxu0 %v1298
    %1307 = vmatprep.subr.bf16.mxu0 0
    %1308 = vmatpush1.bf16.msra.mxu0 %v1299
    %1309 = vmatprep.subr.bf16.mxu0 0
    %1310 = vmatpush1.bf16.msra.mxu0 0
    %1311 = vmatprep.subr.bf16.mxu0 0
    %1312 = vmatpush1.bf16.msra.mxu0 0
    %1313 = vmatprep.subr.bf16.mxu0 0
    %1314 = vmatpush1.bf16.msra.mxu0 0
    %1315 = vmatprep.subr.bf16.mxu0 0
    %1316 = vmatpush1.bf16.msra.mxu0 0
    %1317 = vmatprep.subr.bf16.mxu0 0
    %1318 = vmatpush1.bf16.msra.mxu0 0
    %1319 = vmatprep.subr.bf16.mxu0 0
    %1320 = vmatpush1.bf16.msra.mxu0 0
    %1321 = vmatprep.subr.bf16.mxu0 0
    %1322 = vmatpush1.bf16.msra.mxu0 0
    %1323 = vmatprep.subr.bf16.mxu0 0
    %1324 = vmatpush1.bf16.msra.mxu0 0
    %1325 = vmatprep.subr.bf16.mxu0 0
    %1326 = vmatpush1.bf16.msra.mxu0 0
    %1327 = vmatprep.subr.bf16.mxu0 0
    %1328 = vmatpush1.bf16.msra.mxu0 0
    %1329 = vmatprep.subr.bf16.mxu0 0
    %1330 = vmatpush1.bf16.msra.mxu0 0
    %1331 = vmatprep.subr.bf16.mxu0 0
    %1332 = vmatpush1.bf16.msra.mxu0 0
    %1333 = vmatprep.subr.bf16.mxu0 0
    %1334 = vmatpush1.bf16.msra.mxu0 0
    %1335 = vmatprep.subr.bf16.mxu0 0
    %1336 = vmatpush1.bf16.msra.mxu0 0
    %1337 = vmatprep.mubr.bf16.mxu0 0
    %1338 = vmatmul.mubr.bf16.gmra.mrb[0].mxu0 %v1303
    %v1339 = vpop.f32.mrb[0].mxu0
    %v1340 = vadd.f32 %v1288, %v1339
    %v1341 = vpop.f32.mrb[0].mxu0
    %v1342 = vpop.f32.mrb[0].mxu0
    %v1343 = vadd.f32 %v1288, %v1342
    %v1344 = vpop.f32.mrb[0].mxu0
    %1345 = vdwg.mxu0
    %v1346 = vadd.f32 %v287, %v1340
    %v1347 = vadd.f32 %v288, %v1343
    %v1348 = vld [vmem:[#allocation11] sm:$0x1]
    %v1349 = vld [vmem:[#allocation13] sm:$0x1]
    %v1350 = vsel %vm239, %v1346, 0.0
    %1351 = vadd.xlane.f32.xlu0 %v1350
    %v1352 = vpop.xlane.xlu0 %1351
    %v1353 = vsel %vm239, %v1347, 0.0
    %1354 = vadd.xlane.f32.xlu0 %v1353
    %v1355 = vpop.xlane.xlu0 %1354
    %v1356 = vmul.f32 %v1352, %v246
    %v1357 = vmul.f32 %v1355, %v246
    %v1358 = vsub.f32 %v1346, %v1356
    %v1359 = vsub.f32 %v1347, %v1357
    %v1360 = vmul.f32 %v1358, %v1358
    %v1361 = vmul.f32 %v1359, %v1359
    %v1362 = vsel %vm239, %v1360, 0.0
    %1363 = vadd.xlane.f32.xlu0 %v1362
    %v1364 = vpop.xlane.xlu0 %1363
    %v1365 = vsel %vm239, %v1361, 0.0
    %1366 = vadd.xlane.f32.xlu0 %v1365
    %v1367 = vpop.xlane.xlu0 %1366
    %v1368 = vmul.f32 %v1364, %v246
    %v1369 = vmul.f32 %v1367, %v246
    %v1370 = vadd.f32 %v1368, 1e-12
    %v1371 = vadd.f32 %v1369, 1e-12
    %v1372 = vrsqrt.pop %v1370
    %v1373 = vrsqrt.pop %v1371
    %v1374 = vmul.f32 %v1358, %v1372
    %v1375 = vmul.f32 %v1359, %v1373
    %v1377 = vlaneseq
    %v1378 = vshrl.u32 %v1377, 7
    %v1379 = vsub.s32 0, %v1378
    %v1380 = vrot.slane %v1348, %v1379
    %v1382 = vmul.f32 %v1374, %v1380
    %v1383 = vmul.f32 %v1375, %v1380
    %v1385 = vlaneseq
    %v1386 = vshrl.u32 %v1385, 7
    %v1387 = vsub.s32 0, %v1386
    %v1388 = vrot.slane %v1349, %v1387
    %v1390 = vadd.f32 %v1382, %v1388
    %v1391 = vadd.f32 %v1383, %v1388
    %v1392 = vld [vmem:[%s12] sm:$0xf]
    %v1393 = vld [vmem:[%s12 + $0x4] sm:$0xf]
    %v1394 = vld [vmem:[%s12 + $0x8] sm:$0xf]
    %v1395 = vld [vmem:[%s12 + $0xc] sm:$0xf]
    %v1396 = vpack.c.bf16 %v1391, %v1390
    %v1397 = vld [vmem:[#allocation14] sm:$0x1]
    %v1399 = vlaneseq
    %v1400 = vshrl.u32 %v1399, 7
    %v1401 = vsub.s32 0, %v1400
    %v1402 = vrot.slane %v1397, %v1401
    %v1408 = vunpack.c.l.b16 %v1392
    %v1409 = vunpack.c.l.b16 %v1393
    %v1410 = vunpack.c.l.b16 %v1394
    %v1411 = vunpack.c.l.b16 %v1395
    %v1412 = vpack.c.b16 %v1409, %v1408
    %v1413 = vpack.c.b16 %v1411, %v1410
    %v1417 = vsel %vm239, %v1396, 0
    %1419 = vmatprep.subr.bf16.mxu0 0
    %1420 = vmatpush1.bf16.msra.mxu0 %v1412
    %1421 = vmatprep.subr.bf16.mxu0 0
    %1422 = vmatpush1.bf16.msra.mxu0 %v1413
    %1423 = vmatprep.subr.bf16.mxu0 0
    %1424 = vmatpush1.bf16.msra.mxu0 0
    %1425 = vmatprep.subr.bf16.mxu0 0
    %1426 = vmatpush1.bf16.msra.mxu0 0
    %1427 = vmatprep.subr.bf16.mxu0 0
    %1428 = vmatpush1.bf16.msra.mxu0 0
    %1429 = vmatprep.subr.bf16.mxu0 0
    %1430 = vmatpush1.bf16.msra.mxu0 0
    %1431 = vmatprep.subr.bf16.mxu0 0
    %1432 = vmatpush1.bf16.msra.mxu0 0
    %1433 = vmatprep.subr.bf16.mxu0 0
    %1434 = vmatpush1.bf16.msra.mxu0 0
    %1435 = vmatprep.subr.bf16.mxu0 0
    %1436 = vmatpush1.bf16.msra.mxu0 0
    %1437 = vmatprep.subr.bf16.mxu0 0
    %1438 = vmatpush1.bf16.msra.mxu0 0
    %1439 = vmatprep.subr.bf16.mxu0 0
    %1440 = vmatpush1.bf16.msra.mxu0 0
    %1441 = vmatprep.subr.bf16.mxu0 0
    %1442 = vmatpush1.bf16.msra.mxu0 0
    %1443 = vmatprep.subr.bf16.mxu0 0
    %1444 = vmatpush1.bf16.msra.mxu0 0
    %1445 = vmatprep.subr.bf16.mxu0 0
    %1446 = vmatpush1.bf16.msra.mxu0 0
    %1447 = vmatprep.subr.bf16.mxu0 0
    %1448 = vmatpush1.bf16.msra.mxu0 0
    %1449 = vmatprep.subr.bf16.mxu0 0
    %1450 = vmatpush1.bf16.msra.mxu0 0
    %1451 = vmatprep.mubr.bf16.mxu0 0
    %1452 = vmatmul.mubr.bf16.gmra.mrb[0].mxu0 %v1417
    %v1453 = vpop.f32.mrb[0].mxu0
    %v1454 = vadd.f32 %v1402, %v1453
    %v1455 = vpop.f32.mrb[0].mxu0
    %v1456 = vpop.f32.mrb[0].mxu0
    %v1457 = vadd.f32 %v1402, %v1456
    %v1458 = vpop.f32.mrb[0].mxu0
    %1459 = vdwg.mxu0
    %v1460 = vmax.f32 %v1454, 0.0
    %v1461 = vmax.f32 %v1457, 0.0
    %v1462 = vld [vmem:[%s14] sm:$0xf]
    %v1463 = vld [vmem:[%s14 + $0x4] sm:$0xf]
    %v1464 = vld [vmem:[%s14 + $0x8] sm:$0xf]
    %v1465 = vld [vmem:[%s14 + $0xc] sm:$0xf]
    %v1466 = vld [vmem:[%s14 + $0x10] sm:$0xf]
    %v1467 = vld [vmem:[%s14 + $0x14] sm:$0xf]
    %v1468 = vld [vmem:[%s14 + $0x18] sm:$0xf]
    %v1469 = vld [vmem:[%s14 + $0x1c] sm:$0xf]
    %v1470 = vpack.c.bf16 %v1461, %v1460
    %v1471 = vld [vmem:[%s15] sm:$0x1]
    %v1473 = vlaneseq
    %v1474 = vshrl.u32 %v1473, 7
    %v1475 = vsub.s32 0, %v1474
    %v1476 = vrot.slane %v1471, %v1475
    %v1486 = vunpack.c.l.b16 %v1462
    %v1487 = vunpack.c.l.b16 %v1463
    %v1488 = vunpack.c.l.b16 %v1464
    %v1489 = vunpack.c.l.b16 %v1465
    %v1490 = vunpack.c.l.b16 %v1466
    %v1491 = vunpack.c.l.b16 %v1467
    %v1492 = vunpack.c.l.b16 %v1468
    %v1493 = vunpack.c.l.b16 %v1469
    %v1494 = vpack.c.b16 %v1487, %v1486
    %v1495 = vpack.c.b16 %v1489, %v1488
    %v1496 = vpack.c.b16 %v1491, %v1490
    %v1497 = vpack.c.b16 %v1493, %v1492
    %vm1502 = vcmask 523264
    %v1504 = vsel %vm1502, %v1470, 0
    %1506 = vmatprep.subr.bf16.mxu0 0
    %1507 = vmatpush1.bf16.msra.mxu0 %v1494
    %1508 = vmatprep.subr.bf16.mxu0 0
    %1509 = vmatpush1.bf16.msra.mxu0 %v1495
    %1510 = vmatprep.subr.bf16.mxu0 0
    %1511 = vmatpush1.bf16.msra.mxu0 %v1496
    %1512 = vmatprep.subr.bf16.mxu0 0
    %1513 = vmatpush1.bf16.msra.mxu0 %v1497
    %1514 = vmatprep.subr.bf16.mxu0 0
    %1515 = vmatpush1.bf16.msra.mxu0 0
    %1516 = vmatprep.subr.bf16.mxu0 0
    %1517 = vmatpush1.bf16.msra.mxu0 0
    %1518 = vmatprep.subr.bf16.mxu0 0
    %1519 = vmatpush1.bf16.msra.mxu0 0
    %1520 = vmatprep.subr.bf16.mxu0 0
    %1521 = vmatpush1.bf16.msra.mxu0 0
    %1522 = vmatprep.subr.bf16.mxu0 0
    %1523 = vmatpush1.bf16.msra.mxu0 0
    %1524 = vmatprep.subr.bf16.mxu0 0
    %1525 = vmatpush1.bf16.msra.mxu0 0
    %1526 = vmatprep.subr.bf16.mxu0 0
    %1527 = vmatpush1.bf16.msra.mxu0 0
    %1528 = vmatprep.subr.bf16.mxu0 0
    %1529 = vmatpush1.bf16.msra.mxu0 0
    %1530 = vmatprep.subr.bf16.mxu0 0
    %1531 = vmatpush1.bf16.msra.mxu0 0
    %1532 = vmatprep.subr.bf16.mxu0 0
    %1533 = vmatpush1.bf16.msra.mxu0 0
    %1534 = vmatprep.subr.bf16.mxu0 0
    %1535 = vmatpush1.bf16.msra.mxu0 0
    %1536 = vmatprep.subr.bf16.mxu0 0
    %1537 = vmatpush1.bf16.msra.mxu0 0
    %1538 = vmatprep.mubr.bf16.mxu0 0
    %1539 = vmatmul.mubr.bf16.gmra.mrb[0].mxu0 %v1504
    %v1540 = vpop.f32.mrb[0].mxu0
    %v1541 = vadd.f32 %v1476, %v1540
    %v1542 = vpop.f32.mrb[0].mxu0
    %v1543 = vpop.f32.mrb[0].mxu0
    %v1544 = vadd.f32 %v1476, %v1543
    %v1545 = vpop.f32.mrb[0].mxu0
    %1546 = vdwg.mxu0
    %v1547 = vadd.f32 %v1390, %v1541
    %v1548 = vadd.f32 %v1391, %v1544
    %v1549 = vld [vmem:[%s16] sm:$0x1]
    %v1550 = vld [vmem:[%s17] sm:$0x1]
    %v1551 = vsel %vm239, %v1547, 0.0
    %1552 = vadd.xlane.f32.xlu0 %v1551
    %v1553 = vpop.xlane.xlu0 %1552
    %v1554 = vsel %vm239, %v1548, 0.0
    %1555 = vadd.xlane.f32.xlu0 %v1554
    %v1556 = vpop.xlane.xlu0 %1555
    %v1557 = vmul.f32 %v1553, %v246
    %v1558 = vmul.f32 %v1556, %v246
    %v1559 = vsub.f32 %v1547, %v1557
    %v1560 = vsub.f32 %v1548, %v1558
    %v1561 = vmul.f32 %v1559, %v1559
    %v1562 = vmul.f32 %v1560, %v1560
    %v1563 = vsel %vm239, %v1561, 0.0
    %1564 = vadd.xlane.f32.xlu0 %v1563
    %v1565 = vpop.xlane.xlu0 %1564
    %v1566 = vsel %vm239, %v1562, 0.0
    %1567 = vadd.xlane.f32.xlu0 %v1566
    %v1568 = vpop.xlane.xlu0 %1567
    %v1569 = vmul.f32 %v1565, %v246
    %v1570 = vmul.f32 %v1568, %v246
    %v1571 = vadd.f32 %v1569, 1e-12
    %v1572 = vadd.f32 %v1570, 1e-12
    %v1573 = vrsqrt.pop %v1571
    %v1574 = vrsqrt.pop %v1572
    %v1575 = vmul.f32 %v1559, %v1573
    %v1576 = vmul.f32 %v1560, %v1574
    %v1578 = vlaneseq
    %v1579 = vshrl.u32 %v1578, 7
    %v1580 = vsub.s32 0, %v1579
    %v1581 = vrot.slane %v1549, %v1580
    %v1583 = vmul.f32 %v1575, %v1581
    %v1584 = vmul.f32 %v1576, %v1581
    %v1586 = vlaneseq
    %v1587 = vshrl.u32 %v1586, 7
    %v1588 = vsub.s32 0, %v1587
    %v1589 = vrot.slane %v1550, %v1588
    %v1591 = vadd.f32 %v1583, %v1589
    %v1592 = vadd.f32 %v1584, %v1589
    %s1593 = scalar_lea.vmem %s6, 16
    %v1594 = vld [vmem:[%s1593] sm:$0xf]
    %v1595 = vld [vmem:[%s1593 + $0x4] sm:$0xf]
    %v1596 = vld [vmem:[%s1593 + $0x8] sm:$0xf]
    %v1597 = vld [vmem:[%s1593 + $0xc] sm:$0xf]
    %v1598 = vpack.c.bf16 %v1592, %v1591
    %s1599 = scalar_lea.vmem %s7, 1
    %v1600 = vld [vmem:[%s1599] sm:$0x1]
    %v1602 = vlaneseq
    %v1603 = vshrl.u32 %v1602, 7
    %v1604 = vsub.s32 0, %v1603
    %v1605 = vrot.slane %v1600, %v1604
    %v1611 = vunpack.c.l.b16 %v1594
    %v1612 = vunpack.c.l.b16 %v1595
    %v1613 = vunpack.c.l.b16 %v1596
    %v1614 = vunpack.c.l.b16 %v1597
    %v1615 = vpack.c.b16 %v1612, %v1611
    %v1616 = vpack.c.b16 %v1614, %v1613
    %v1620 = vsel %vm239, %v1598, 0
    %1622 = vmatprep.subr.bf16.mxu0 0
    %1623 = vmatpush1.bf16.msra.mxu0 %v1615
    %1624 = vmatprep.subr.bf16.mxu0 0
    %1625 = vmatpush1.bf16.msra.mxu0 %v1616
    %1626 = vmatprep.subr.bf16.mxu0 0
    %1627 = vmatpush1.bf16.msra.mxu0 0
    %1628 = vmatprep.subr.bf16.mxu0 0
    %1629 = vmatpush1.bf16.msra.mxu0 0
    %1630 = vmatprep.subr.bf16.mxu0 0
    %1631 = vmatpush1.bf16.msra.mxu0 0
    %1632 = vmatprep.subr.bf16.mxu0 0
    %1633 = vmatpush1.bf16.msra.mxu0 0
    %1634 = vmatprep.subr.bf16.mxu0 0
    %1635 = vmatpush1.bf16.msra.mxu0 0
    %1636 = vmatprep.subr.bf16.mxu0 0
    %1637 = vmatpush1.bf16.msra.mxu0 0
    %1638 = vmatprep.subr.bf16.mxu0 0
    %1639 = vmatpush1.bf16.msra.mxu0 0
    %1640 = vmatprep.subr.bf16.mxu0 0
    %1641 = vmatpush1.bf16.msra.mxu0 0
    %1642 = vmatprep.subr.bf16.mxu0 0
    %1643 = vmatpush1.bf16.msra.mxu0 0
    %1644 = vmatprep.subr.bf16.mxu0 0
    %1645 = vmatpush1.bf16.msra.mxu0 0
    %1646 = vmatprep.subr.bf16.mxu0 0
    %1647 = vmatpush1.bf16.msra.mxu0 0
    %1648 = vmatprep.subr.bf16.mxu0 0
    %1649 = vmatpush1.bf16.msra.mxu0 0
    %1650 = vmatprep.subr.bf16.mxu0 0
    %1651 = vmatpush1.bf16.msra.mxu0 0
    %1652 = vmatprep.subr.bf16.mxu0 0
    %1653 = vmatpush1.bf16.msra.mxu0 0
    %1654 = vmatprep.mubr.bf16.mxu0 0
    %1655 = vmatmul.mubr.bf16.gmra.mrb[0].mxu0 %v1620
    %v1656 = vpop.f32.mrb[0].mxu0
    %v1657 = vadd.f32 %v1605, %v1656
    %v1658 = vpop.f32.mrb[0].mxu0
    %v1659 = vpop.f32.mrb[0].mxu0
    %v1660 = vadd.f32 %v1605, %v1659
    %v1661 = vpop.f32.mrb[0].mxu0
    %1662 = vdwg.mxu0
    %v1663 = vpack.c.bf16 %v1657, %v1657
    %v1664 = vpack.c.bf16 %v1660, %v1660
    %1666 = vrot.lane.b32.xlu0 %v1663, 96
    %v1667 = vpop.permute.xlu0 %1666
    %v1669 = vsel %vm362, %v1663, 0
    %v1672 = vsel %vm362, %v1667, 0
    %1674 = vmatprep.subr.bf16.mxu0 0
    %1675 = vmatpush1.bf16.xpose.msra.mxu0 %v1672
    %1676 = vmatprep.subr.bf16.mxu0 0
    %1677 = vmatpush1.bf16.xpose.msra.mxu0 0
    %1678 = vmatprep.subr.bf16.mxu0 0
    %1679 = vmatpush1.bf16.xpose.msra.mxu0 0
    %1680 = vmatprep.subr.bf16.mxu0 0
    %1681 = vmatpush1.bf16.xpose.msra.mxu0 0
    %1682 = vmatprep.subr.bf16.mxu0 0
    %1683 = vmatpush1.bf16.xpose.msra.mxu0 0
    %1684 = vmatprep.subr.bf16.mxu0 0
    %1685 = vmatpush1.bf16.xpose.msra.mxu0 0
    %1686 = vmatprep.subr.bf16.mxu0 0
    %1687 = vmatpush1.bf16.xpose.msra.mxu0 0
    %1688 = vmatprep.subr.bf16.mxu0 0
    %1689 = vmatpush1.bf16.xpose.msra.mxu0 0
    %1690 = vmatprep.subr.bf16.mxu0 0
    %1691 = vmatpush1.bf16.xpose.msra.mxu0 0
    %1692 = vmatprep.subr.bf16.mxu0 0
    %1693 = vmatpush1.bf16.xpose.msra.mxu0 0
    %1694 = vmatprep.subr.bf16.mxu0 0
    %1695 = vmatpush1.bf16.xpose.msra.mxu0 0
    %1696 = vmatprep.subr.bf16.mxu0 0
    %1697 = vmatpush1.bf16.xpose.msra.mxu0 0
    %1698 = vmatprep.subr.bf16.mxu0 0
    %1699 = vmatpush1.bf16.xpose.msra.mxu0 0
    %1700 = vmatprep.subr.bf16.mxu0 0
    %1701 = vmatpush1.bf16.xpose.msra.mxu0 0
    %1702 = vmatprep.subr.bf16.mxu0 0
    %1703 = vmatpush1.bf16.xpose.msra.mxu0 0
    %1704 = vmatprep.subr.bf16.mxu0 0
    %1705 = vmatpush1.bf16.xpose.msra.mxu0 0
    %1706 = vmatprep.mubr.bf16.mxu0 0
    %1707 = vmatmul.mubr.bf16.gmra.mrb[0].mxu0 %v1669
    %v1708 = vpop.f32.mrb[0].mxu0
    %v1709 = vadd.f32 0.0, %v1708
    %v1710 = vpop.f32.mrb[0].mxu0
    %v1711 = vpop.f32.mrb[0].mxu0
    %v1712 = vpop.f32.mrb[0].mxu0
    %1713 = vdwg.mxu0
    %1715 = vrot.lane.b32.xlu0 %v1664, 96
    %v1716 = vpop.permute.xlu0 %1715
    %v1718 = vsel %vm362, %v1664, 0
    %v1721 = vsel %vm362, %v1716, 0
    %1723 = vmatprep.subr.bf16.mxu0 0
    %1724 = vmatpush1.bf16.xpose.msra.mxu0 %v1721
    %1725 = vmatprep.subr.bf16.mxu0 0
    %1726 = vmatpush1.bf16.xpose.msra.mxu0 0
    %1727 = vmatprep.subr.bf16.mxu0 0
    %1728 = vmatpush1.bf16.xpose.msra.mxu0 0
    %1729 = vmatprep.subr.bf16.mxu0 0
    %1730 = vmatpush1.bf16.xpose.msra.mxu0 0
    %1731 = vmatprep.subr.bf16.mxu0 0
    %1732 = vmatpush1.bf16.xpose.msra.mxu0 0
    %1733 = vmatprep.subr.bf16.mxu0 0
    %1734 = vmatpush1.bf16.xpose.msra.mxu0 0
    %1735 = vmatprep.subr.bf16.mxu0 0
    %1736 = vmatpush1.bf16.xpose.msra.mxu0 0
    %1737 = vmatprep.subr.bf16.mxu0 0
    %1738 = vmatpush1.bf16.xpose.msra.mxu0 0
    %1739 = vmatprep.subr.bf16.mxu0 0
    %1740 = vmatpush1.bf16.xpose.msra.mxu0 0
    %1741 = vmatprep.subr.bf16.mxu0 0
    %1742 = vmatpush1.bf16.xpose.msra.mxu0 0
    %1743 = vmatprep.subr.bf16.mxu0 0
    %1744 = vmatpush1.bf16.xpose.msra.mxu0 0
    %1745 = vmatprep.subr.bf16.mxu0 0
    %1746 = vmatpush1.bf16.xpose.msra.mxu0 0
    %1747 = vmatprep.subr.bf16.mxu0 0
    %1748 = vmatpush1.bf16.xpose.msra.mxu0 0
    %1749 = vmatprep.subr.bf16.mxu0 0
    %1750 = vmatpush1.bf16.xpose.msra.mxu0 0
    %1751 = vmatprep.subr.bf16.mxu0 0
    %1752 = vmatpush1.bf16.xpose.msra.mxu0 0
    %1753 = vmatprep.subr.bf16.mxu0 0
    %1754 = vmatpush1.bf16.xpose.msra.mxu0 0
    %1755 = vmatprep.mubr.bf16.mxu0 0
    %1756 = vmatmul.mubr.bf16.gmra.mrb[0].mxu0 %v1718
    %v1757 = vpop.f32.mrb[0].mxu0
    %v1758 = vadd.f32 0.0, %v1757
    %v1759 = vpop.f32.mrb[0].mxu0
    %v1760 = vpop.f32.mrb[0].mxu0
    %v1761 = vpop.f32.mrb[0].mxu0
    %1762 = vdwg.mxu0
    %v1763 = vmul.f32 %v1709, 0.35355338
    %v1764 = vmul.f32 %v1758, 0.35355338
    %v1765 = vsel %vm362, %v1763, -inf
    %1766 = vmax.xlane.f32.xlu0 %v1765
    %v1767 = vpop.xlane.xlu0 %1766
    %v1768 = vsel %vm362, %v1764, -inf
    %1769 = vmax.xlane.f32.xlu0 %v1768
    %v1770 = vpop.xlane.xlu0 %1769
    %v1771 = vsub.f32 %v1763, %v1767
    %v1772 = vsub.f32 %v1764, %v1770
    %v1773 = vmul.f32 %v1771, 1.442695
    %v1774 = vpow.pop %v1773
    %v1775 = vmul.f32 %v1772, 1.442695
    %v1776 = vpow.pop %v1775
    %v1777 = vsel %vm362, %v1774, 0.0
    %1778 = vadd.xlane.f32.xlu0 %v1777
    %v1779 = vpop.xlane.xlu0 %1778
    %v1780 = vsel %vm362, %v1776, 0.0
    %1781 = vadd.xlane.f32.xlu0 %v1780
    %v1782 = vpop.xlane.xlu0 %1781
    %v1783 = vrcp.pop %v1779
    %v1784 = vrcp.pop %v1782
    %v1785 = vmul.f32 %v1774, %v1783
    %v1786 = vmul.f32 %v1776, %v1784
    %v1787 = vpack.c.bf16 %v1785, %v1785
    %v1788 = vpack.c.bf16 %v1786, %v1786
    %1789 = vrot.lane.b32.xlu0 %v1663, 64
    %v1790 = vpop.permute.xlu0 %1789
    %v1792 = vsel %vm362, %v1787, 0
    %v1795 = vsel %vm489, %v1790, 0
    %1797 = vmatprep.subr.bf16.mxu0 0
    %1798 = vmatpush1.bf16.msra.mxu0 %v1795
    %1799 = vmatprep.subr.bf16.mxu0 0
    %1800 = vmatpush1.bf16.msra.mxu0 0
    %1801 = vmatprep.subr.bf16.mxu0 0
    %1802 = vmatpush1.bf16.msra.mxu0 0
    %1803 = vmatprep.subr.bf16.mxu0 0
    %1804 = vmatpush1.bf16.msra.mxu0 0
    %1805 = vmatprep.subr.bf16.mxu0 0
    %1806 = vmatpush1.bf16.msra.mxu0 0
    %1807 = vmatprep.subr.bf16.mxu0 0
    %1808 = vmatpush1.bf16.msra.mxu0 0
    %1809 = vmatprep.subr.bf16.mxu0 0
    %1810 = vmatpush1.bf16.msra.mxu0 0
    %1811 = vmatprep.subr.bf16.mxu0 0
    %1812 = vmatpush1.bf16.msra.mxu0 0
    %1813 = vmatprep.subr.bf16.mxu0 0
    %1814 = vmatpush1.bf16.msra.mxu0 0
    %1815 = vmatprep.subr.bf16.mxu0 0
    %1816 = vmatpush1.bf16.msra.mxu0 0
    %1817 = vmatprep.subr.bf16.mxu0 0
    %1818 = vmatpush1.bf16.msra.mxu0 0
    %1819 = vmatprep.subr.bf16.mxu0 0
    %1820 = vmatpush1.bf16.msra.mxu0 0
    %1821 = vmatprep.subr.bf16.mxu0 0
    %1822 = vmatpush1.bf16.msra.mxu0 0
    %1823 = vmatprep.subr.bf16.mxu0 0
    %1824 = vmatpush1.bf16.msra.mxu0 0
    %1825 = vmatprep.subr.bf16.mxu0 0
    %1826 = vmatpush1.bf16.msra.mxu0 0
    %1827 = vmatprep.subr.bf16.mxu0 0
    %1828 = vmatpush1.bf16.msra.mxu0 0
    %1829 = vmatprep.mubr.bf16.mxu0 0
    %1830 = vmatmul.mubr.bf16.gmra.mrb[0].mxu0 %v1792
    %v1831 = vpop.f32.mrb[0].mxu0
    %v1832 = vadd.f32 0.0, %v1831
    %v1833 = vpop.f32.mrb[0].mxu0
    %v1834 = vpop.f32.mrb[0].mxu0
    %v1835 = vpop.f32.mrb[0].mxu0
    %1836 = vdwg.mxu0
    %1837 = vrot.lane.b32.xlu0 %v1664, 64
    %v1838 = vpop.permute.xlu0 %1837
    %v1840 = vsel %vm362, %v1788, 0
    %v1843 = vsel %vm489, %v1838, 0
    %1845 = vmatprep.subr.bf16.mxu0 0
    %1846 = vmatpush1.bf16.msra.mxu0 %v1843
    %1847 = vmatprep.subr.bf16.mxu0 0
    %1848 = vmatpush1.bf16.msra.mxu0 0
    %1849 = vmatprep.subr.bf16.mxu0 0
    %1850 = vmatpush1.bf16.msra.mxu0 0
    %1851 = vmatprep.subr.bf16.mxu0 0
    %1852 = vmatpush1.bf16.msra.mxu0 0
    %1853 = vmatprep.subr.bf16.mxu0 0
    %1854 = vmatpush1.bf16.msra.mxu0 0
    %1855 = vmatprep.subr.bf16.mxu0 0
    %1856 = vmatpush1.bf16.msra.mxu0 0
    %1857 = vmatprep.subr.bf16.mxu0 0
    %1858 = vmatpush1.bf16.msra.mxu0 0
    %1859 = vmatprep.subr.bf16.mxu0 0
    %1860 = vmatpush1.bf16.msra.mxu0 0
    %1861 = vmatprep.subr.bf16.mxu0 0
    %1862 = vmatpush1.bf16.msra.mxu0 0
    %1863 = vmatprep.subr.bf16.mxu0 0
    %1864 = vmatpush1.bf16.msra.mxu0 0
    %1865 = vmatprep.subr.bf16.mxu0 0
    %1866 = vmatpush1.bf16.msra.mxu0 0
    %1867 = vmatprep.subr.bf16.mxu0 0
    %1868 = vmatpush1.bf16.msra.mxu0 0
    %1869 = vmatprep.subr.bf16.mxu0 0
    %1870 = vmatpush1.bf16.msra.mxu0 0
    %1871 = vmatprep.subr.bf16.mxu0 0
    %1872 = vmatpush1.bf16.msra.mxu0 0
    %1873 = vmatprep.subr.bf16.mxu0 0
    %1874 = vmatpush1.bf16.msra.mxu0 0
    %1875 = vmatprep.subr.bf16.mxu0 0
    %1876 = vmatpush1.bf16.msra.mxu0 0
    %1877 = vmatprep.mubr.bf16.mxu0 0
    %1878 = vmatmul.mubr.bf16.gmra.mrb[0].mxu0 %v1840
    %v1879 = vpop.f32.mrb[0].mxu0
    %v1880 = vadd.f32 0.0, %v1879
    %v1881 = vpop.f32.mrb[0].mxu0
    %v1882 = vpop.f32.mrb[0].mxu0
    %v1883 = vpop.f32.mrb[0].mxu0
    %1884 = vdwg.mxu0
    %1885 = vrot.lane.b32.xlu0 %v1663, 120
    %v1886 = vpop.permute.xlu0 %1885
    %1887 = vrot.lane.b32.xlu0 %v1663, 88
    %v1888 = vpop.permute.xlu0 %1887
    %v1890 = vsel %vm362, %v1886, 0
    %v1893 = vsel %vm362, %v1888, 0
    %1895 = vmatprep.subr.bf16.mxu0 0
    %1896 = vmatpush1.bf16.xpose.msra.mxu0 %v1893
    %1897 = vmatprep.subr.bf16.mxu0 0
    %1898 = vmatpush1.bf16.xpose.msra.mxu0 0
    %1899 = vmatprep.subr.bf16.mxu0 0
    %1900 = vmatpush1.bf16.xpose.msra.mxu0 0
    %1901 = vmatprep.subr.bf16.mxu0 0
    %1902 = vmatpush1.bf16.xpose.msra.mxu0 0
    %1903 = vmatprep.subr.bf16.mxu0 0
    %1904 = vmatpush1.bf16.xpose.msra.mxu0 0
    %1905 = vmatprep.subr.bf16.mxu0 0
    %1906 = vmatpush1.bf16.xpose.msra.mxu0 0
    %1907 = vmatprep.subr.bf16.mxu0 0
    %1908 = vmatpush1.bf16.xpose.msra.mxu0 0
    %1909 = vmatprep.subr.bf16.mxu0 0
    %1910 = vmatpush1.bf16.xpose.msra.mxu0 0
    %1911 = vmatprep.subr.bf16.mxu0 0
    %1912 = vmatpush1.bf16.xpose.msra.mxu0 0
    %1913 = vmatprep.subr.bf16.mxu0 0
    %1914 = vmatpush1.bf16.xpose.msra.mxu0 0
    %1915 = vmatprep.subr.bf16.mxu0 0
    %1916 = vmatpush1.bf16.xpose.msra.mxu0 0
    %1917 = vmatprep.subr.bf16.mxu0 0
    %1918 = vmatpush1.bf16.xpose.msra.mxu0 0
    %1919 = vmatprep.subr.bf16.mxu0 0
    %1920 = vmatpush1.bf16.xpose.msra.mxu0 0
    %1921 = vmatprep.subr.bf16.mxu0 0
    %1922 = vmatpush1.bf16.xpose.msra.mxu0 0
    %1923 = vmatprep.subr.bf16.mxu0 0
    %1924 = vmatpush1.bf16.xpose.msra.mxu0 0
    %1925 = vmatprep.subr.bf16.mxu0 0
    %1926 = vmatpush1.bf16.xpose.msra.mxu0 0
    %1927 = vmatprep.mubr.bf16.mxu0 0
    %1928 = vmatmul.mubr.bf16.gmra.mrb[0].mxu0 %v1890
    %v1929 = vpop.f32.mrb[0].mxu0
    %v1930 = vadd.f32 0.0, %v1929
    %v1931 = vpop.f32.mrb[0].mxu0
    %v1932 = vpop.f32.mrb[0].mxu0
    %v1933 = vpop.f32.mrb[0].mxu0
    %1934 = vdwg.mxu0
    %1935 = vrot.lane.b32.xlu0 %v1664, 120
    %v1936 = vpop.permute.xlu0 %1935
    %1937 = vrot.lane.b32.xlu0 %v1664, 88
    %v1938 = vpop.permute.xlu0 %1937
    %v1940 = vsel %vm362, %v1936, 0
    %v1943 = vsel %vm362, %v1938, 0
    %1945 = vmatprep.subr.bf16.mxu0 0
    %1946 = vmatpush1.bf16.xpose.msra.mxu0 %v1943
    %1947 = vmatprep.subr.bf16.mxu0 0
    %1948 = vmatpush1.bf16.xpose.msra.mxu0 0
    %1949 = vmatprep.subr.bf16.mxu0 0
    %1950 = vmatpush1.bf16.xpose.msra.mxu0 0
    %1951 = vmatprep.subr.bf16.mxu0 0
    %1952 = vmatpush1.bf16.xpose.msra.mxu0 0
    %1953 = vmatprep.subr.bf16.mxu0 0
    %1954 = vmatpush1.bf16.xpose.msra.mxu0 0
    %1955 = vmatprep.subr.bf16.mxu0 0
    %1956 = vmatpush1.bf16.xpose.msra.mxu0 0
    %1957 = vmatprep.subr.bf16.mxu0 0
    %1958 = vmatpush1.bf16.xpose.msra.mxu0 0
    %1959 = vmatprep.subr.bf16.mxu0 0
    %1960 = vmatpush1.bf16.xpose.msra.mxu0 0
    %1961 = vmatprep.subr.bf16.mxu0 0
    %1962 = vmatpush1.bf16.xpose.msra.mxu0 0
    %1963 = vmatprep.subr.bf16.mxu0 0
    %1964 = vmatpush1.bf16.xpose.msra.mxu0 0
    %1965 = vmatprep.subr.bf16.mxu0 0
    %1966 = vmatpush1.bf16.xpose.msra.mxu0 0
    %1967 = vmatprep.subr.bf16.mxu0 0
    %1968 = vmatpush1.bf16.xpose.msra.mxu0 0
    %1969 = vmatprep.subr.bf16.mxu0 0
    %1970 = vmatpush1.bf16.xpose.msra.mxu0 0
    %1971 = vmatprep.subr.bf16.mxu0 0
    %1972 = vmatpush1.bf16.xpose.msra.mxu0 0
    %1973 = vmatprep.subr.bf16.mxu0 0
    %1974 = vmatpush1.bf16.xpose.msra.mxu0 0
    %1975 = vmatprep.subr.bf16.mxu0 0
    %1976 = vmatpush1.bf16.xpose.msra.mxu0 0
    %1977 = vmatprep.mubr.bf16.mxu0 0
    %1978 = vmatmul.mubr.bf16.gmra.mrb[0].mxu0 %v1940
    %v1979 = vpop.f32.mrb[0].mxu0
    %v1980 = vadd.f32 0.0, %v1979
    %v1981 = vpop.f32.mrb[0].mxu0
    %v1982 = vpop.f32.mrb[0].mxu0
    %v1983 = vpop.f32.mrb[0].mxu0
    %1984 = vdwg.mxu0
    %v1985 = vmul.f32 %v1930, 0.35355338
    %v1986 = vmul.f32 %v1980, 0.35355338
    %v1987 = vsel %vm362, %v1985, -inf
    %1988 = vmax.xlane.f32.xlu0 %v1987
    %v1989 = vpop.xlane.xlu0 %1988
    %v1990 = vsel %vm362, %v1986, -inf
    %1991 = vmax.xlane.f32.xlu0 %v1990
    %v1992 = vpop.xlane.xlu0 %1991
    %v1993 = vsub.f32 %v1985, %v1989
    %v1994 = vsub.f32 %v1986, %v1992
    %v1995 = vmul.f32 %v1993, 1.442695
    %v1996 = vpow.pop %v1995
    %v1997 = vmul.f32 %v1994, 1.442695
    %v1998 = vpow.pop %v1997
    %v1999 = vsel %vm362, %v1996, 0.0
    %2000 = vadd.xlane.f32.xlu0 %v1999
    %v2001 = vpop.xlane.xlu0 %2000
    %v2002 = vsel %vm362, %v1998, 0.0
    %2003 = vadd.xlane.f32.xlu0 %v2002
    %v2004 = vpop.xlane.xlu0 %2003
    %v2005 = vrcp.pop %v2001
    %v2006 = vrcp.pop %v2004
    %v2007 = vmul.f32 %v1996, %v2005
    %v2008 = vmul.f32 %v1998, %v2006
    %v2009 = vpack.c.bf16 %v2007, %v2007
    %v2010 = vpack.c.bf16 %v2008, %v2008
    %2011 = vrot.lane.b32.xlu0 %v1663, 56
    %v2012 = vpop.permute.xlu0 %2011
    %v2014 = vsel %vm362, %v2009, 0
    %v2017 = vsel %vm489, %v2012, 0
    %2019 = vmatprep.subr.bf16.mxu0 0
    %2020 = vmatpush1.bf16.msra.mxu0 %v2017
    %2021 = vmatprep.subr.bf16.mxu0 0
    %2022 = vmatpush1.bf16.msra.mxu0 0
    %2023 = vmatprep.subr.bf16.mxu0 0
    %2024 = vmatpush1.bf16.msra.mxu0 0
    %2025 = vmatprep.subr.bf16.mxu0 0
    %2026 = vmatpush1.bf16.msra.mxu0 0
    %2027 = vmatprep.subr.bf16.mxu0 0
    %2028 = vmatpush1.bf16.msra.mxu0 0
    %2029 = vmatprep.subr.bf16.mxu0 0
    %2030 = vmatpush1.bf16.msra.mxu0 0
    %2031 = vmatprep.subr.bf16.mxu0 0
    %2032 = vmatpush1.bf16.msra.mxu0 0
    %2033 = vmatprep.subr.bf16.mxu0 0
    %2034 = vmatpush1.bf16.msra.mxu0 0
    %2035 = vmatprep.subr.bf16.mxu0 0
    %2036 = vmatpush1.bf16.msra.mxu0 0
    %2037 = vmatprep.subr.bf16.mxu0 0
    %2038 = vmatpush1.bf16.msra.mxu0 0
    %2039 = vmatprep.subr.bf16.mxu0 0
    %2040 = vmatpush1.bf16.msra.mxu0 0
    %2041 = vmatprep.subr.bf16.mxu0 0
    %2042 = vmatpush1.bf16.msra.mxu0 0
    %2043 = vmatprep.subr.bf16.mxu0 0
    %2044 = vmatpush1.bf16.msra.mxu0 0
    %2045 = vmatprep.subr.bf16.mxu0 0
    %2046 = vmatpush1.bf16.msra.mxu0 0
    %2047 = vmatprep.subr.bf16.mxu0 0
    %2048 = vmatpush1.bf16.msra.mxu0 0
    %2049 = vmatprep.subr.bf16.mxu0 0
    %2050 = vmatpush1.bf16.msra.mxu0 0
    %2051 = vmatprep.mubr.bf16.mxu0 0
    %2052 = vmatmul.mubr.bf16.gmra.mrb[0].mxu0 %v2014
    %v2053 = vpop.f32.mrb[0].mxu0
    %v2054 = vadd.f32 0.0, %v2053
    %v2055 = vpop.f32.mrb[0].mxu0
    %v2056 = vpop.f32.mrb[0].mxu0
    %v2057 = vpop.f32.mrb[0].mxu0
    %2058 = vdwg.mxu0
    %2059 = vrot.lane.b32.xlu0 %v1664, 56
    %v2060 = vpop.permute.xlu0 %2059
    %v2062 = vsel %vm362, %v2010, 0
    %v2065 = vsel %vm489, %v2060, 0
    %2067 = vmatprep.subr.bf16.mxu0 0
    %2068 = vmatpush1.bf16.msra.mxu0 %v2065
    %2069 = vmatprep.subr.bf16.mxu0 0
    %2070 = vmatpush1.bf16.msra.mxu0 0
    %2071 = vmatprep.subr.bf16.mxu0 0
    %2072 = vmatpush1.bf16.msra.mxu0 0
    %2073 = vmatprep.subr.bf16.mxu0 0
    %2074 = vmatpush1.bf16.msra.mxu0 0
    %2075 = vmatprep.subr.bf16.mxu0 0
    %2076 = vmatpush1.bf16.msra.mxu0 0
    %2077 = vmatprep.subr.bf16.mxu0 0
    %2078 = vmatpush1.bf16.msra.mxu0 0
    %2079 = vmatprep.subr.bf16.mxu0 0
    %2080 = vmatpush1.bf16.msra.mxu0 0
    %2081 = vmatprep.subr.bf16.mxu0 0
    %2082 = vmatpush1.bf16.msra.mxu0 0
    %2083 = vmatprep.subr.bf16.mxu0 0
    %2084 = vmatpush1.bf16.msra.mxu0 0
    %2085 = vmatprep.subr.bf16.mxu0 0
    %2086 = vmatpush1.bf16.msra.mxu0 0
    %2087 = vmatprep.subr.bf16.mxu0 0
    %2088 = vmatpush1.bf16.msra.mxu0 0
    %2089 = vmatprep.subr.bf16.mxu0 0
    %2090 = vmatpush1.bf16.msra.mxu0 0
    %2091 = vmatprep.subr.bf16.mxu0 0
    %2092 = vmatpush1.bf16.msra.mxu0 0
    %2093 = vmatprep.subr.bf16.mxu0 0
    %2094 = vmatpush1.bf16.msra.mxu0 0
    %2095 = vmatprep.subr.bf16.mxu0 0
    %2096 = vmatpush1.bf16.msra.mxu0 0
    %2097 = vmatprep.subr.bf16.mxu0 0
    %2098 = vmatpush1.bf16.msra.mxu0 0
    %2099 = vmatprep.mubr.bf16.mxu0 0
    %2100 = vmatmul.mubr.bf16.gmra.mrb[0].mxu0 %v2062
    %v2101 = vpop.f32.mrb[0].mxu0
    %v2102 = vadd.f32 0.0, %v2101
    %v2103 = vpop.f32.mrb[0].mxu0
    %v2104 = vpop.f32.mrb[0].mxu0
    %v2105 = vpop.f32.mrb[0].mxu0
    %2106 = vdwg.mxu0
    %2107 = vrot.lane.b32.xlu0 %v1663, 112
    %v2108 = vpop.permute.xlu0 %2107
    %2109 = vrot.lane.b32.xlu0 %v1663, 80
    %v2110 = vpop.permute.xlu0 %2109
    %v2112 = vsel %vm362, %v2108, 0
    %v2115 = vsel %vm362, %v2110, 0
    %2117 = vmatprep.subr.bf16.mxu0 0
    %2118 = vmatpush1.bf16.xpose.msra.mxu0 %v2115
    %2119 = vmatprep.subr.bf16.mxu0 0
    %2120 = vmatpush1.bf16.xpose.msra.mxu0 0
    %2121 = vmatprep.subr.bf16.mxu0 0
    %2122 = vmatpush1.bf16.xpose.msra.mxu0 0
    %2123 = vmatprep.subr.bf16.mxu0 0
    %2124 = vmatpush1.bf16.xpose.msra.mxu0 0
    %2125 = vmatprep.subr.bf16.mxu0 0
    %2126 = vmatpush1.bf16.xpose.msra.mxu0 0
    %2127 = vmatprep.subr.bf16.mxu0 0
    %2128 = vmatpush1.bf16.xpose.msra.mxu0 0
    %2129 = vmatprep.subr.bf16.mxu0 0
    %2130 = vmatpush1.bf16.xpose.msra.mxu0 0
    %2131 = vmatprep.subr.bf16.mxu0 0
    %2132 = vmatpush1.bf16.xpose.msra.mxu0 0
    %2133 = vmatprep.subr.bf16.mxu0 0
    %2134 = vmatpush1.bf16.xpose.msra.mxu0 0
    %2135 = vmatprep.subr.bf16.mxu0 0
    %2136 = vmatpush1.bf16.xpose.msra.mxu0 0
    %2137 = vmatprep.subr.bf16.mxu0 0
    %2138 = vmatpush1.bf16.xpose.msra.mxu0 0
    %2139 = vmatprep.subr.bf16.mxu0 0
    %2140 = vmatpush1.bf16.xpose.msra.mxu0 0
    %2141 = vmatprep.subr.bf16.mxu0 0
    %2142 = vmatpush1.bf16.xpose.msra.mxu0 0
    %2143 = vmatprep.subr.bf16.mxu0 0
    %2144 = vmatpush1.bf16.xpose.msra.mxu0 0
    %2145 = vmatprep.subr.bf16.mxu0 0
    %2146 = vmatpush1.bf16.xpose.msra.mxu0 0
    %2147 = vmatprep.subr.bf16.mxu0 0
    %2148 = vmatpush1.bf16.xpose.msra.mxu0 0
    %2149 = vmatprep.mubr.bf16.mxu0 0
    %2150 = vmatmul.mubr.bf16.gmra.mrb[0].mxu0 %v2112
    %v2151 = vpop.f32.mrb[0].mxu0
    %v2152 = vadd.f32 0.0, %v2151
    %v2153 = vpop.f32.mrb[0].mxu0
    %v2154 = vpop.f32.mrb[0].mxu0
    %v2155 = vpop.f32.mrb[0].mxu0
    %2156 = vdwg.mxu0
    %2157 = vrot.lane.b32.xlu0 %v1664, 112
    %v2158 = vpop.permute.xlu0 %2157
    %2159 = vrot.lane.b32.xlu0 %v1664, 80
    %v2160 = vpop.permute.xlu0 %2159
    %v2162 = vsel %vm362, %v2158, 0
    %v2165 = vsel %vm362, %v2160, 0
    %2167 = vmatprep.subr.bf16.mxu0 0
    %2168 = vmatpush1.bf16.xpose.msra.mxu0 %v2165
    %2169 = vmatprep.subr.bf16.mxu0 0
    %2170 = vmatpush1.bf16.xpose.msra.mxu0 0
    %2171 = vmatprep.subr.bf16.mxu0 0
    %2172 = vmatpush1.bf16.xpose.msra.mxu0 0
    %2173 = vmatprep.subr.bf16.mxu0 0
    %2174 = vmatpush1.bf16.xpose.msra.mxu0 0
    %2175 = vmatprep.subr.bf16.mxu0 0
    %2176 = vmatpush1.bf16.xpose.msra.mxu0 0
    %2177 = vmatprep.subr.bf16.mxu0 0
    %2178 = vmatpush1.bf16.xpose.msra.mxu0 0
    %2179 = vmatprep.subr.bf16.mxu0 0
    %2180 = vmatpush1.bf16.xpose.msra.mxu0 0
    %2181 = vmatprep.subr.bf16.mxu0 0
    %2182 = vmatpush1.bf16.xpose.msra.mxu0 0
    %2183 = vmatprep.subr.bf16.mxu0 0
    %2184 = vmatpush1.bf16.xpose.msra.mxu0 0
    %2185 = vmatprep.subr.bf16.mxu0 0
    %2186 = vmatpush1.bf16.xpose.msra.mxu0 0
    %2187 = vmatprep.subr.bf16.mxu0 0
    %2188 = vmatpush1.bf16.xpose.msra.mxu0 0
    %2189 = vmatprep.subr.bf16.mxu0 0
    %2190 = vmatpush1.bf16.xpose.msra.mxu0 0
    %2191 = vmatprep.subr.bf16.mxu0 0
    %2192 = vmatpush1.bf16.xpose.msra.mxu0 0
    %2193 = vmatprep.subr.bf16.mxu0 0
    %2194 = vmatpush1.bf16.xpose.msra.mxu0 0
    %2195 = vmatprep.subr.bf16.mxu0 0
    %2196 = vmatpush1.bf16.xpose.msra.mxu0 0
    %2197 = vmatprep.subr.bf16.mxu0 0
    %2198 = vmatpush1.bf16.xpose.msra.mxu0 0
    %2199 = vmatprep.mubr.bf16.mxu0 0
    %2200 = vmatmul.mubr.bf16.gmra.mrb[0].mxu0 %v2162
    %v2201 = vpop.f32.mrb[0].mxu0
    %v2202 = vadd.f32 0.0, %v2201
    %v2203 = vpop.f32.mrb[0].mxu0
    %v2204 = vpop.f32.mrb[0].mxu0
    %v2205 = vpop.f32.mrb[0].mxu0
    %2206 = vdwg.mxu0
    %v2207 = vmul.f32 %v2152, 0.35355338
    %v2208 = vmul.f32 %v2202, 0.35355338
    %v2209 = vsel %vm362, %v2207, -inf
    %2210 = vmax.xlane.f32.xlu0 %v2209
    %v2211 = vpop.xlane.xlu0 %2210
    %v2212 = vsel %vm362, %v2208, -inf
    %2213 = vmax.xlane.f32.xlu0 %v2212
    %v2214 = vpop.xlane.xlu0 %2213
    %v2215 = vsub.f32 %v2207, %v2211
    %v2216 = vsub.f32 %v2208, %v2214
    %v2217 = vmul.f32 %v2215, 1.442695
    %v2218 = vpow.pop %v2217
    %v2219 = vmul.f32 %v2216, 1.442695
    %v2220 = vpow.pop %v2219
    %v2221 = vsel %vm362, %v2218, 0.0
    %2222 = vadd.xlane.f32.xlu0 %v2221
    %v2223 = vpop.xlane.xlu0 %2222
    %v2224 = vsel %vm362, %v2220, 0.0
    %2225 = vadd.xlane.f32.xlu0 %v2224
    %v2226 = vpop.xlane.xlu0 %2225
    %v2227 = vrcp.pop %v2223
    %v2228 = vrcp.pop %v2226
    %v2229 = vmul.f32 %v2218, %v2227
    %v2230 = vmul.f32 %v2220, %v2228
    %v2231 = vpack.c.bf16 %v2229, %v2229
    %v2232 = vpack.c.bf16 %v2230, %v2230
    %2233 = vrot.lane.b32.xlu0 %v1663, 48
    %v2234 = vpop.permute.xlu0 %2233
    %v2236 = vsel %vm362, %v2231, 0
    %v2239 = vsel %vm489, %v2234, 0
    %2241 = vmatprep.subr.bf16.mxu0 0
    %2242 = vmatpush1.bf16.msra.mxu0 %v2239
    %2243 = vmatprep.subr.bf16.mxu0 0
    %2244 = vmatpush1.bf16.msra.mxu0 0
    %2245 = vmatprep.subr.bf16.mxu0 0
    %2246 = vmatpush1.bf16.msra.mxu0 0
    %2247 = vmatprep.subr.bf16.mxu0 0
    %2248 = vmatpush1.bf16.msra.mxu0 0
    %2249 = vmatprep.subr.bf16.mxu0 0
    %2250 = vmatpush1.bf16.msra.mxu0 0
    %2251 = vmatprep.subr.bf16.mxu0 0
    %2252 = vmatpush1.bf16.msra.mxu0 0
    %2253 = vmatprep.subr.bf16.mxu0 0
    %2254 = vmatpush1.bf16.msra.mxu0 0
    %2255 = vmatprep.subr.bf16.mxu0 0
    %2256 = vmatpush1.bf16.msra.mxu0 0
    %2257 = vmatprep.subr.bf16.mxu0 0
    %2258 = vmatpush1.bf16.msra.mxu0 0
    %2259 = vmatprep.subr.bf16.mxu0 0
    %2260 = vmatpush1.bf16.msra.mxu0 0
    %2261 = vmatprep.subr.bf16.mxu0 0
    %2262 = vmatpush1.bf16.msra.mxu0 0
    %2263 = vmatprep.subr.bf16.mxu0 0
    %2264 = vmatpush1.bf16.msra.mxu0 0
    %2265 = vmatprep.subr.bf16.mxu0 0
    %2266 = vmatpush1.bf16.msra.mxu0 0
    %2267 = vmatprep.subr.bf16.mxu0 0
    %2268 = vmatpush1.bf16.msra.mxu0 0
    %2269 = vmatprep.subr.bf16.mxu0 0
    %2270 = vmatpush1.bf16.msra.mxu0 0
    %2271 = vmatprep.subr.bf16.mxu0 0
    %2272 = vmatpush1.bf16.msra.mxu0 0
    %2273 = vmatprep.mubr.bf16.mxu0 0
    %2274 = vmatmul.mubr.bf16.gmra.mrb[0].mxu0 %v2236
    %v2275 = vpop.f32.mrb[0].mxu0
    %v2276 = vadd.f32 0.0, %v2275
    %v2277 = vpop.f32.mrb[0].mxu0
    %v2278 = vpop.f32.mrb[0].mxu0
    %v2279 = vpop.f32.mrb[0].mxu0
    %2280 = vdwg.mxu0
    %2281 = vrot.lane.b32.xlu0 %v1664, 48
    %v2282 = vpop.permute.xlu0 %2281
    %v2284 = vsel %vm362, %v2232, 0
    %v2287 = vsel %vm489, %v2282, 0
    %2289 = vmatprep.subr.bf16.mxu0 0
    %2290 = vmatpush1.bf16.msra.mxu0 %v2287
    %2291 = vmatprep.subr.bf16.mxu0 0
    %2292 = vmatpush1.bf16.msra.mxu0 0
    %2293 = vmatprep.subr.bf16.mxu0 0
    %2294 = vmatpush1.bf16.msra.mxu0 0
    %2295 = vmatprep.subr.bf16.mxu0 0
    %2296 = vmatpush1.bf16.msra.mxu0 0
    %2297 = vmatprep.subr.bf16.mxu0 0
    %2298 = vmatpush1.bf16.msra.mxu0 0
    %2299 = vmatprep.subr.bf16.mxu0 0
    %2300 = vmatpush1.bf16.msra.mxu0 0
    %2301 = vmatprep.subr.bf16.mxu0 0
    %2302 = vmatpush1.bf16.msra.mxu0 0
    %2303 = vmatprep.subr.bf16.mxu0 0
    %2304 = vmatpush1.bf16.msra.mxu0 0
    %2305 = vmatprep.subr.bf16.mxu0 0
    %2306 = vmatpush1.bf16.msra.mxu0 0
    %2307 = vmatprep.subr.bf16.mxu0 0
    %2308 = vmatpush1.bf16.msra.mxu0 0
    %2309 = vmatprep.subr.bf16.mxu0 0
    %2310 = vmatpush1.bf16.msra.mxu0 0
    %2311 = vmatprep.subr.bf16.mxu0 0
    %2312 = vmatpush1.bf16.msra.mxu0 0
    %2313 = vmatprep.subr.bf16.mxu0 0
    %2314 = vmatpush1.bf16.msra.mxu0 0
    %2315 = vmatprep.subr.bf16.mxu0 0
    %2316 = vmatpush1.bf16.msra.mxu0 0
    %2317 = vmatprep.subr.bf16.mxu0 0
    %2318 = vmatpush1.bf16.msra.mxu0 0
    %2319 = vmatprep.subr.bf16.mxu0 0
    %2320 = vmatpush1.bf16.msra.mxu0 0
    %2321 = vmatprep.mubr.bf16.mxu0 0
    %2322 = vmatmul.mubr.bf16.gmra.mrb[0].mxu0 %v2284
    %v2323 = vpop.f32.mrb[0].mxu0
    %v2324 = vadd.f32 0.0, %v2323
    %v2325 = vpop.f32.mrb[0].mxu0
    %v2326 = vpop.f32.mrb[0].mxu0
    %v2327 = vpop.f32.mrb[0].mxu0
    %2328 = vdwg.mxu0
    %2329 = vrot.lane.b32.xlu0 %v1663, 104
    %v2330 = vpop.permute.xlu0 %2329
    %2331 = vrot.lane.b32.xlu0 %v1663, 72
    %v2332 = vpop.permute.xlu0 %2331
    %v2334 = vsel %vm362, %v2330, 0
    %v2337 = vsel %vm362, %v2332, 0
    %2339 = vmatprep.subr.bf16.mxu0 0
    %2340 = vmatpush1.bf16.xpose.msra.mxu0 %v2337
    %2341 = vmatprep.subr.bf16.mxu0 0
    %2342 = vmatpush1.bf16.xpose.msra.mxu0 0
    %2343 = vmatprep.subr.bf16.mxu0 0
    %2344 = vmatpush1.bf16.xpose.msra.mxu0 0
    %2345 = vmatprep.subr.bf16.mxu0 0
    %2346 = vmatpush1.bf16.xpose.msra.mxu0 0
    %2347 = vmatprep.subr.bf16.mxu0 0
    %2348 = vmatpush1.bf16.xpose.msra.mxu0 0
    %2349 = vmatprep.subr.bf16.mxu0 0
    %2350 = vmatpush1.bf16.xpose.msra.mxu0 0
    %2351 = vmatprep.subr.bf16.mxu0 0
    %2352 = vmatpush1.bf16.xpose.msra.mxu0 0
    %2353 = vmatprep.subr.bf16.mxu0 0
    %2354 = vmatpush1.bf16.xpose.msra.mxu0 0
    %2355 = vmatprep.subr.bf16.mxu0 0
    %2356 = vmatpush1.bf16.xpose.msra.mxu0 0
    %2357 = vmatprep.subr.bf16.mxu0 0
    %2358 = vmatpush1.bf16.xpose.msra.mxu0 0
    %2359 = vmatprep.subr.bf16.mxu0 0
    %2360 = vmatpush1.bf16.xpose.msra.mxu0 0
    %2361 = vmatprep.subr.bf16.mxu0 0
    %2362 = vmatpush1.bf16.xpose.msra.mxu0 0
    %2363 = vmatprep.subr.bf16.mxu0 0
    %2364 = vmatpush1.bf16.xpose.msra.mxu0 0
    %2365 = vmatprep.subr.bf16.mxu0 0
    %2366 = vmatpush1.bf16.xpose.msra.mxu0 0
    %2367 = vmatprep.subr.bf16.mxu0 0
    %2368 = vmatpush1.bf16.xpose.msra.mxu0 0
    %2369 = vmatprep.subr.bf16.mxu0 0
    %2370 = vmatpush1.bf16.xpose.msra.mxu0 0
    %2371 = vmatprep.mubr.bf16.mxu0 0
    %2372 = vmatmul.mubr.bf16.gmra.mrb[0].mxu0 %v2334
    %v2373 = vpop.f32.mrb[0].mxu0
    %v2374 = vadd.f32 0.0, %v2373
    %v2375 = vpop.f32.mrb[0].mxu0
    %v2376 = vpop.f32.mrb[0].mxu0
    %v2377 = vpop.f32.mrb[0].mxu0
    %2378 = vdwg.mxu0
    %2379 = vrot.lane.b32.xlu0 %v1664, 104
    %v2380 = vpop.permute.xlu0 %2379
    %2381 = vrot.lane.b32.xlu0 %v1664, 72
    %v2382 = vpop.permute.xlu0 %2381
    %v2384 = vsel %vm362, %v2380, 0
    %v2387 = vsel %vm362, %v2382, 0
    %2389 = vmatprep.subr.bf16.mxu0 0
    %2390 = vmatpush1.bf16.xpose.msra.mxu0 %v2387
    %2391 = vmatprep.subr.bf16.mxu0 0
    %2392 = vmatpush1.bf16.xpose.msra.mxu0 0
    %2393 = vmatprep.subr.bf16.mxu0 0
    %2394 = vmatpush1.bf16.xpose.msra.mxu0 0
    %2395 = vmatprep.subr.bf16.mxu0 0
    %2396 = vmatpush1.bf16.xpose.msra.mxu0 0
    %2397 = vmatprep.subr.bf16.mxu0 0
    %2398 = vmatpush1.bf16.xpose.msra.mxu0 0
    %2399 = vmatprep.subr.bf16.mxu0 0
    %2400 = vmatpush1.bf16.xpose.msra.mxu0 0
    %2401 = vmatprep.subr.bf16.mxu0 0
    %2402 = vmatpush1.bf16.xpose.msra.mxu0 0
    %2403 = vmatprep.subr.bf16.mxu0 0
    %2404 = vmatpush1.bf16.xpose.msra.mxu0 0
    %2405 = vmatprep.subr.bf16.mxu0 0
    %2406 = vmatpush1.bf16.xpose.msra.mxu0 0
    %2407 = vmatprep.subr.bf16.mxu0 0
    %2408 = vmatpush1.bf16.xpose.msra.mxu0 0
    %2409 = vmatprep.subr.bf16.mxu0 0
    %2410 = vmatpush1.bf16.xpose.msra.mxu0 0
    %2411 = vmatprep.subr.bf16.mxu0 0
    %2412 = vmatpush1.bf16.xpose.msra.mxu0 0
    %2413 = vmatprep.subr.bf16.mxu0 0
    %2414 = vmatpush1.bf16.xpose.msra.mxu0 0
    %2415 = vmatprep.subr.bf16.mxu0 0
    %2416 = vmatpush1.bf16.xpose.msra.mxu0 0
    %2417 = vmatprep.subr.bf16.mxu0 0
    %2418 = vmatpush1.bf16.xpose.msra.mxu0 0
    %2419 = vmatprep.subr.bf16.mxu0 0
    %2420 = vmatpush1.bf16.xpose.msra.mxu0 0
    %2421 = vmatprep.mubr.bf16.mxu0 0
    %2422 = vmatmul.mubr.bf16.gmra.mrb[0].mxu0 %v2384
    %v2423 = vpop.f32.mrb[0].mxu0
    %v2424 = vadd.f32 0.0, %v2423
    %v2425 = vpop.f32.mrb[0].mxu0
    %v2426 = vpop.f32.mrb[0].mxu0
    %v2427 = vpop.f32.mrb[0].mxu0
    %2428 = vdwg.mxu0
    %v2429 = vmul.f32 %v2374, 0.35355338
    %v2430 = vmul.f32 %v2424, 0.35355338
    %v2431 = vsel %vm362, %v2429, -inf
    %2432 = vmax.xlane.f32.xlu0 %v2431
    %v2433 = vpop.xlane.xlu0 %2432
    %v2434 = vsel %vm362, %v2430, -inf
    %2435 = vmax.xlane.f32.xlu0 %v2434
    %v2436 = vpop.xlane.xlu0 %2435
    %v2437 = vsub.f32 %v2429, %v2433
    %v2438 = vsub.f32 %v2430, %v2436
    %v2439 = vmul.f32 %v2437, 1.442695
    %v2440 = vpow.pop %v2439
    %v2441 = vmul.f32 %v2438, 1.442695
    %v2442 = vpow.pop %v2441
    %v2443 = vsel %vm362, %v2440, 0.0
    %2444 = vadd.xlane.f32.xlu0 %v2443
    %v2445 = vpop.xlane.xlu0 %2444
    %v2446 = vsel %vm362, %v2442, 0.0
    %2447 = vadd.xlane.f32.xlu0 %v2446
    %v2448 = vpop.xlane.xlu0 %2447
    %v2449 = vrcp.pop %v2445
    %v2450 = vrcp.pop %v2448
    %v2451 = vmul.f32 %v2440, %v2449
    %v2452 = vmul.f32 %v2442, %v2450
    %v2453 = vpack.c.bf16 %v2451, %v2451
    %v2454 = vpack.c.bf16 %v2452, %v2452
    %2455 = vrot.lane.b32.xlu0 %v1663, 40
    %v2456 = vpop.permute.xlu0 %2455
    %v2458 = vsel %vm362, %v2453, 0
    %v2461 = vsel %vm489, %v2456, 0
    %2463 = vmatprep.subr.bf16.mxu0 0
    %2464 = vmatpush1.bf16.msra.mxu0 %v2461
    %2465 = vmatprep.subr.bf16.mxu0 0
    %2466 = vmatpush1.bf16.msra.mxu0 0
    %2467 = vmatprep.subr.bf16.mxu0 0
    %2468 = vmatpush1.bf16.msra.mxu0 0
    %2469 = vmatprep.subr.bf16.mxu0 0
    %2470 = vmatpush1.bf16.msra.mxu0 0
    %2471 = vmatprep.subr.bf16.mxu0 0
    %2472 = vmatpush1.bf16.msra.mxu0 0
    %2473 = vmatprep.subr.bf16.mxu0 0
    %2474 = vmatpush1.bf16.msra.mxu0 0
    %2475 = vmatprep.subr.bf16.mxu0 0
    %2476 = vmatpush1.bf16.msra.mxu0 0
    %2477 = vmatprep.subr.bf16.mxu0 0
    %2478 = vmatpush1.bf16.msra.mxu0 0
    %2479 = vmatprep.subr.bf16.mxu0 0
    %2480 = vmatpush1.bf16.msra.mxu0 0
    %2481 = vmatprep.subr.bf16.mxu0 0
    %2482 = vmatpush1.bf16.msra.mxu0 0
    %2483 = vmatprep.subr.bf16.mxu0 0
    %2484 = vmatpush1.bf16.msra.mxu0 0
    %2485 = vmatprep.subr.bf16.mxu0 0
    %2486 = vmatpush1.bf16.msra.mxu0 0
    %2487 = vmatprep.subr.bf16.mxu0 0
    %2488 = vmatpush1.bf16.msra.mxu0 0
    %2489 = vmatprep.subr.bf16.mxu0 0
    %2490 = vmatpush1.bf16.msra.mxu0 0
    %2491 = vmatprep.subr.bf16.mxu0 0
    %2492 = vmatpush1.bf16.msra.mxu0 0
    %2493 = vmatprep.subr.bf16.mxu0 0
    %2494 = vmatpush1.bf16.msra.mxu0 0
    %2495 = vmatprep.mubr.bf16.mxu0 0
    %2496 = vmatmul.mubr.bf16.gmra.mrb[0].mxu0 %v2458
    %v2497 = vpop.f32.mrb[0].mxu0
    %v2498 = vadd.f32 0.0, %v2497
    %v2499 = vpop.f32.mrb[0].mxu0
    %v2500 = vpop.f32.mrb[0].mxu0
    %v2501 = vpop.f32.mrb[0].mxu0
    %2502 = vdwg.mxu0
    %2503 = vrot.lane.b32.xlu0 %v1664, 40
    %v2504 = vpop.permute.xlu0 %2503
    %v2506 = vsel %vm362, %v2454, 0
    %v2509 = vsel %vm489, %v2504, 0
    %2511 = vmatprep.subr.bf16.mxu0 0
    %2512 = vmatpush1.bf16.msra.mxu0 %v2509
    %2513 = vmatprep.subr.bf16.mxu0 0
    %2514 = vmatpush1.bf16.msra.mxu0 0
    %2515 = vmatprep.subr.bf16.mxu0 0
    %2516 = vmatpush1.bf16.msra.mxu0 0
    %2517 = vmatprep.subr.bf16.mxu0 0
    %2518 = vmatpush1.bf16.msra.mxu0 0
    %2519 = vmatprep.subr.bf16.mxu0 0
    %2520 = vmatpush1.bf16.msra.mxu0 0
    %2521 = vmatprep.subr.bf16.mxu0 0
    %2522 = vmatpush1.bf16.msra.mxu0 0
    %2523 = vmatprep.subr.bf16.mxu0 0
    %2524 = vmatpush1.bf16.msra.mxu0 0
    %2525 = vmatprep.subr.bf16.mxu0 0
    %2526 = vmatpush1.bf16.msra.mxu0 0
    %2527 = vmatprep.subr.bf16.mxu0 0
    %2528 = vmatpush1.bf16.msra.mxu0 0
    %2529 = vmatprep.subr.bf16.mxu0 0
    %2530 = vmatpush1.bf16.msra.mxu0 0
    %2531 = vmatprep.subr.bf16.mxu0 0
    %2532 = vmatpush1.bf16.msra.mxu0 0
    %2533 = vmatprep.subr.bf16.mxu0 0
    %2534 = vmatpush1.bf16.msra.mxu0 0
    %2535 = vmatprep.subr.bf16.mxu0 0
    %2536 = vmatpush1.bf16.msra.mxu0 0
    %2537 = vmatprep.subr.bf16.mxu0 0
    %2538 = vmatpush1.bf16.msra.mxu0 0
    %2539 = vmatprep.subr.bf16.mxu0 0
    %2540 = vmatpush1.bf16.msra.mxu0 0
    %2541 = vmatprep.subr.bf16.mxu0 0
    %2542 = vmatpush1.bf16.msra.mxu0 0
    %2543 = vmatprep.mubr.bf16.mxu0 0
    %2544 = vmatmul.mubr.bf16.gmra.mrb[0].mxu0 %v2506
    %v2545 = vpop.f32.mrb[0].mxu0
    %v2546 = vadd.f32 0.0, %v2545
    %v2547 = vpop.f32.mrb[0].mxu0
    %v2548 = vpop.f32.mrb[0].mxu0
    %v2549 = vpop.f32.mrb[0].mxu0
    %2550 = vdwg.mxu0
    %2553 = vrot.lane.b32.xlu0 %v2054, 8
    %v2554 = vpop.permute.xlu0 %2553
    %2555 = vrot.lane.b32.xlu0 %v2102, 8
    %v2556 = vpop.permute.xlu0 %2555
    %2561 = vrot.lane.b32.xlu0 %v2276, 16
    %v2562 = vpop.permute.xlu0 %2561
    %2563 = vrot.lane.b32.xlu0 %v2324, 16
    %v2564 = vpop.permute.xlu0 %2563
    %2569 = vrot.lane.b32.xlu0 %v2498, 24
    %v2570 = vpop.permute.xlu0 %2569
    %2571 = vrot.lane.b32.xlu0 %v2546, 24
    %v2572 = vpop.permute.xlu0 %2571
    %v2575 = vsel %vm362, %v1832, %v2554
    %v2576 = vsel %vm362, %v1880, %v2556
    %v2577 = vsel %vm192, %v2575, %v2562
    %v2578 = vsel %vm192, %v2576, %v2564
    %v2579 = vsel %vm1275, %v2577, %v2570
    %v2580 = vsel %vm1275, %v2578, %v2572
    %s2581 = scalar_lea.vmem %s8, 16
    %v2582 = vld [vmem:[%s2581] sm:$0xf]
    %v2583 = vld [vmem:[%s2581 + $0x4] sm:$0xf]
    %v2584 = vld [vmem:[%s2581 + $0x8] sm:$0xf]
    %v2585 = vld [vmem:[%s2581 + $0xc] sm:$0xf]
    %v2586 = vpack.c.bf16 %v2580, %v2579
    %s2587 = scalar_lea.vmem %s9, 1
    %v2588 = vld [vmem:[%s2587] sm:$0x1]
    %v2590 = vlaneseq
    %v2591 = vshrl.u32 %v2590, 7
    %v2592 = vsub.s32 0, %v2591
    %v2593 = vrot.slane %v2588, %v2592
    %v2599 = vunpack.c.l.b16 %v2582
    %v2600 = vunpack.c.l.b16 %v2583
    %v2601 = vunpack.c.l.b16 %v2584
    %v2602 = vunpack.c.l.b16 %v2585
    %v2603 = vpack.c.b16 %v2600, %v2599
    %v2604 = vpack.c.b16 %v2602, %v2601
    %v2608 = vsel %vm239, %v2586, 0
    %2610 = vmatprep.subr.bf16.mxu0 0
    %2611 = vmatpush1.bf16.msra.mxu0 %v2603
    %2612 = vmatprep.subr.bf16.mxu0 0
    %2613 = vmatpush1.bf16.msra.mxu0 %v2604
    %2614 = vmatprep.subr.bf16.mxu0 0
    %2615 = vmatpush1.bf16.msra.mxu0 0
    %2616 = vmatprep.subr.bf16.mxu0 0
    %2617 = vmatpush1.bf16.msra.mxu0 0
    %2618 = vmatprep.subr.bf16.mxu0 0
    %2619 = vmatpush1.bf16.msra.mxu0 0
    %2620 = vmatprep.subr.bf16.mxu0 0
    %2621 = vmatpush1.bf16.msra.mxu0 0
    %2622 = vmatprep.subr.bf16.mxu0 0
    %2623 = vmatpush1.bf16.msra.mxu0 0
    %2624 = vmatprep.subr.bf16.mxu0 0
    %2625 = vmatpush1.bf16.msra.mxu0 0
    %2626 = vmatprep.subr.bf16.mxu0 0
    %2627 = vmatpush1.bf16.msra.mxu0 0
    %2628 = vmatprep.subr.bf16.mxu0 0
    %2629 = vmatpush1.bf16.msra.mxu0 0
    %2630 = vmatprep.subr.bf16.mxu0 0
    %2631 = vmatpush1.bf16.msra.mxu0 0
    %2632 = vmatprep.subr.bf16.mxu0 0
    %2633 = vmatpush1.bf16.msra.mxu0 0
    %2634 = vmatprep.subr.bf16.mxu0 0
    %2635 = vmatpush1.bf16.msra.mxu0 0
    %2636 = vmatprep.subr.bf16.mxu0 0
    %2637 = vmatpush1.bf16.msra.mxu0 0
    %2638 = vmatprep.subr.bf16.mxu0 0
    %2639 = vmatpush1.bf16.msra.mxu0 0
    %2640 = vmatprep.subr.bf16.mxu0 0
    %2641 = vmatpush1.bf16.msra.mxu0 0
    %2642 = vmatprep.mubr.bf16.mxu0 0
    %2643 = vmatmul.mubr.bf16.gmra.mrb[0].mxu0 %v2608
    %v2644 = vpop.f32.mrb[0].mxu0
    %v2645 = vadd.f32 %v2593, %v2644
    %v2646 = vpop.f32.mrb[0].mxu0
    %v2647 = vpop.f32.mrb[0].mxu0
    %v2648 = vadd.f32 %v2593, %v2647
    %v2649 = vpop.f32.mrb[0].mxu0
    %2650 = vdwg.mxu0
    %v2651 = vadd.f32 %v1591, %v2645
    %v2652 = vadd.f32 %v1592, %v2648
    %s2653 = scalar_lea.vmem [#allocation11], 1
    %v2654 = vld [vmem:[%s2653] sm:$0x1]
    %s2655 = scalar_lea.vmem [#allocation13], 1
    %v2656 = vld [vmem:[%s2655] sm:$0x1]
    %v2657 = vsel %vm239, %v2651, 0.0
    %2658 = vadd.xlane.f32.xlu0 %v2657
    %v2659 = vpop.xlane.xlu0 %2658
    %v2660 = vsel %vm239, %v2652, 0.0
    %2661 = vadd.xlane.f32.xlu0 %v2660
    %v2662 = vpop.xlane.xlu0 %2661
    %v2663 = vmul.f32 %v2659, %v246
    %v2664 = vmul.f32 %v2662, %v246
    %v2665 = vsub.f32 %v2651, %v2663
    %v2666 = vsub.f32 %v2652, %v2664
    %v2667 = vmul.f32 %v2665, %v2665
    %v2668 = vmul.f32 %v2666, %v2666
    %v2669 = vsel %vm239, %v2667, 0.0
    %2670 = vadd.xlane.f32.xlu0 %v2669
    %v2671 = vpop.xlane.xlu0 %2670
    %v2672 = vsel %vm239, %v2668, 0.0
    %2673 = vadd.xlane.f32.xlu0 %v2672
    %v2674 = vpop.xlane.xlu0 %2673
    %v2675 = vmul.f32 %v2671, %v246
    %v2676 = vmul.f32 %v2674, %v246
    %v2677 = vadd.f32 %v2675, 1e-12
    %v2678 = vadd.f32 %v2676, 1e-12
    %v2679 = vrsqrt.pop %v2677
    %v2680 = vrsqrt.pop %v2678
    %v2681 = vmul.f32 %v2665, %v2679
    %v2682 = vmul.f32 %v2666, %v2680
    %v2684 = vlaneseq
    %v2685 = vshrl.u32 %v2684, 7
    %v2686 = vsub.s32 0, %v2685
    %v2687 = vrot.slane %v2654, %v2686
    %v2689 = vmul.f32 %v2681, %v2687
    %v2690 = vmul.f32 %v2682, %v2687
    %v2692 = vlaneseq
    %v2693 = vshrl.u32 %v2692, 7
    %v2694 = vsub.s32 0, %v2693
    %v2695 = vrot.slane %v2656, %v2694
    %v2697 = vadd.f32 %v2689, %v2695
    %v2698 = vadd.f32 %v2690, %v2695
    %s2699 = scalar_lea.vmem %s12, 16
    %v2700 = vld [vmem:[%s2699] sm:$0xf]
    %v2701 = vld [vmem:[%s2699 + $0x4] sm:$0xf]
    %v2702 = vld [vmem:[%s2699 + $0x8] sm:$0xf]
    %v2703 = vld [vmem:[%s2699 + $0xc] sm:$0xf]
    %v2704 = vpack.c.bf16 %v2698, %v2697
    %s2705 = scalar_lea.vmem [#allocation14], 1
    %v2706 = vld [vmem:[%s2705] sm:$0x1]
    %v2708 = vlaneseq
    %v2709 = vshrl.u32 %v2708, 7
    %v2710 = vsub.s32 0, %v2709
    %v2711 = vrot.slane %v2706, %v2710
    %v2717 = vunpack.c.l.b16 %v2700
    %v2718 = vunpack.c.l.b16 %v2701
    %v2719 = vunpack.c.l.b16 %v2702
    %v2720 = vunpack.c.l.b16 %v2703
    %v2721 = vpack.c.b16 %v2718, %v2717
    %v2722 = vpack.c.b16 %v2720, %v2719
    %v2726 = vsel %vm239, %v2704, 0
    %2728 = vmatprep.subr.bf16.mxu0 0
    %2729 = vmatpush1.bf16.msra.mxu0 %v2721
    %2730 = vmatprep.subr.bf16.mxu0 0
    %2731 = vmatpush1.bf16.msra.mxu0 %v2722
    %2732 = vmatprep.subr.bf16.mxu0 0
    %2733 = vmatpush1.bf16.msra.mxu0 0
    %2734 = vmatprep.subr.bf16.mxu0 0
    %2735 = vmatpush1.bf16.msra.mxu0 0
    %2736 = vmatprep.subr.bf16.mxu0 0
    %2737 = vmatpush1.bf16.msra.mxu0 0
    %2738 = vmatprep.subr.bf16.mxu0 0
    %2739 = vmatpush1.bf16.msra.mxu0 0
    %2740 = vmatprep.subr.bf16.mxu0 0
    %2741 = vmatpush1.bf16.msra.mxu0 0
    %2742 = vmatprep.subr.bf16.mxu0 0
    %2743 = vmatpush1.bf16.msra.mxu0 0
    %2744 = vmatprep.subr.bf16.mxu0 0
    %2745 = vmatpush1.bf16.msra.mxu0 0
    %2746 = vmatprep.subr.bf16.mxu0 0
    %2747 = vmatpush1.bf16.msra.mxu0 0
    %2748 = vmatprep.subr.bf16.mxu0 0
    %2749 = vmatpush1.bf16.msra.mxu0 0
    %2750 = vmatprep.subr.bf16.mxu0 0
    %2751 = vmatpush1.bf16.msra.mxu0 0
    %2752 = vmatprep.subr.bf16.mxu0 0
    %2753 = vmatpush1.bf16.msra.mxu0 0
    %2754 = vmatprep.subr.bf16.mxu0 0
    %2755 = vmatpush1.bf16.msra.mxu0 0
    %2756 = vmatprep.subr.bf16.mxu0 0
    %2757 = vmatpush1.bf16.msra.mxu0 0
    %2758 = vmatprep.subr.bf16.mxu0 0
    %2759 = vmatpush1.bf16.msra.mxu0 0
    %2760 = vmatprep.mubr.bf16.mxu0 0
    %2761 = vmatmul.mubr.bf16.gmra.mrb[0].mxu0 %v2726
    %v2762 = vpop.f32.mrb[0].mxu0
    %v2763 = vadd.f32 %v2711, %v2762
    %v2764 = vpop.f32.mrb[0].mxu0
    %v2765 = vpop.f32.mrb[0].mxu0
    %v2766 = vadd.f32 %v2711, %v2765
    %v2767 = vpop.f32.mrb[0].mxu0
    %2768 = vdwg.mxu0
    %v2769 = vmax.f32 %v2763, 0.0
    %v2770 = vmax.f32 %v2766, 0.0
    %s2771 = scalar_lea.vmem %s14, 32
    %v2772 = vld [vmem:[%s2771] sm:$0xf]
    %v2773 = vld [vmem:[%s2771 + $0x4] sm:$0xf]
    %v2774 = vld [vmem:[%s2771 + $0x8] sm:$0xf]
    %v2775 = vld [vmem:[%s2771 + $0xc] sm:$0xf]
    %v2776 = vld [vmem:[%s2771 + $0x10] sm:$0xf]
    %v2777 = vld [vmem:[%s2771 + $0x14] sm:$0xf]
    %v2778 = vld [vmem:[%s2771 + $0x18] sm:$0xf]
    %v2779 = vld [vmem:[%s2771 + $0x1c] sm:$0xf]
    %v2780 = vpack.c.bf16 %v2770, %v2769
    %s2781 = scalar_lea.vmem %s15, 1
    %v2782 = vld [vmem:[%s2781] sm:$0x1]
    %v2784 = vlaneseq
    %v2785 = vshrl.u32 %v2784, 7
    %v2786 = vsub.s32 0, %v2785
    %v2787 = vrot.slane %v2782, %v2786
    %v2797 = vunpack.c.l.b16 %v2772
    %v2798 = vunpack.c.l.b16 %v2773
    %v2799 = vunpack.c.l.b16 %v2774
    %v2800 = vunpack.c.l.b16 %v2775
    %v2801 = vunpack.c.l.b16 %v2776
    %v2802 = vunpack.c.l.b16 %v2777
    %v2803 = vunpack.c.l.b16 %v2778
    %v2804 = vunpack.c.l.b16 %v2779
    %v2805 = vpack.c.b16 %v2798, %v2797
    %v2806 = vpack.c.b16 %v2800, %v2799
    %v2807 = vpack.c.b16 %v2802, %v2801
    %v2808 = vpack.c.b16 %v2804, %v2803
    %v2814 = vsel %vm1502, %v2780, 0
    %2816 = vmatprep.subr.bf16.mxu0 0
    %2817 = vmatpush1.bf16.msra.mxu0 %v2805
    %2818 = vmatprep.subr.bf16.mxu0 0
    %2819 = vmatpush1.bf16.msra.mxu0 %v2806
    %2820 = vmatprep.subr.bf16.mxu0 0
    %2821 = vmatpush1.bf16.msra.mxu0 %v2807
    %2822 = vmatprep.subr.bf16.mxu0 0
    %2823 = vmatpush1.bf16.msra.mxu0 %v2808
    %2824 = vmatprep.subr.bf16.mxu0 0
    %2825 = vmatpush1.bf16.msra.mxu0 0
    %2826 = vmatprep.subr.bf16.mxu0 0
    %2827 = vmatpush1.bf16.msra.mxu0 0
    %2828 = vmatprep.subr.bf16.mxu0 0
    %2829 = vmatpush1.bf16.msra.mxu0 0
    %2830 = vmatprep.subr.bf16.mxu0 0
    %2831 = vmatpush1.bf16.msra.mxu0 0
    %2832 = vmatprep.subr.bf16.mxu0 0
    %2833 = vmatpush1.bf16.msra.mxu0 0
    %2834 = vmatprep.subr.bf16.mxu0 0
    %2835 = vmatpush1.bf16.msra.mxu0 0
    %2836 = vmatprep.subr.bf16.mxu0 0
    %2837 = vmatpush1.bf16.msra.mxu0 0
    %2838 = vmatprep.subr.bf16.mxu0 0
    %2839 = vmatpush1.bf16.msra.mxu0 0
    %2840 = vmatprep.subr.bf16.mxu0 0
    %2841 = vmatpush1.bf16.msra.mxu0 0
    %2842 = vmatprep.subr.bf16.mxu0 0
    %2843 = vmatpush1.bf16.msra.mxu0 0
    %2844 = vmatprep.subr.bf16.mxu0 0
    %2845 = vmatpush1.bf16.msra.mxu0 0
    %2846 = vmatprep.subr.bf16.mxu0 0
    %2847 = vmatpush1.bf16.msra.mxu0 0
    %2848 = vmatprep.mubr.bf16.mxu0 0
    %2849 = vmatmul.mubr.bf16.gmra.mrb[0].mxu0 %v2814
    %v2850 = vpop.f32.mrb[0].mxu0
    %v2851 = vadd.f32 %v2787, %v2850
    %v2852 = vpop.f32.mrb[0].mxu0
    %v2853 = vpop.f32.mrb[0].mxu0
    %v2854 = vadd.f32 %v2787, %v2853
    %v2855 = vpop.f32.mrb[0].mxu0
    %2856 = vdwg.mxu0
    %v2857 = vadd.f32 %v2697, %v2851
    %v2858 = vadd.f32 %v2698, %v2854
    %s2859 = scalar_lea.vmem %s16, 1
    %v2860 = vld [vmem:[%s2859] sm:$0x1]
    %s2861 = scalar_lea.vmem %s17, 1
    %v2862 = vld [vmem:[%s2861] sm:$0x1]
    %v2863 = vsel %vm239, %v2857, 0.0
    %2864 = vadd.xlane.f32.xlu0 %v2863
    %v2865 = vpop.xlane.xlu0 %2864
    %v2866 = vsel %vm239, %v2858, 0.0
    %2867 = vadd.xlane.f32.xlu0 %v2866
    %v2868 = vpop.xlane.xlu0 %2867
    %v2869 = vmul.f32 %v2865, %v246
    %v2870 = vmul.f32 %v2868, %v246
    %v2871 = vsub.f32 %v2857, %v2869
    %v2872 = vsub.f32 %v2858, %v2870
    %v2873 = vmul.f32 %v2871, %v2871
    %v2874 = vmul.f32 %v2872, %v2872
    %v2875 = vsel %vm239, %v2873, 0.0
    %2876 = vadd.xlane.f32.xlu0 %v2875
    %v2877 = vpop.xlane.xlu0 %2876
    %v2878 = vsel %vm239, %v2874, 0.0
    %2879 = vadd.xlane.f32.xlu0 %v2878
    %v2880 = vpop.xlane.xlu0 %2879
    %v2881 = vmul.f32 %v2877, %v246
    %v2882 = vmul.f32 %v2880, %v246
    %v2883 = vadd.f32 %v2881, 1e-12
    %v2884 = vadd.f32 %v2882, 1e-12
    %v2885 = vrsqrt.pop %v2883
    %v2886 = vrsqrt.pop %v2884
    %v2887 = vmul.f32 %v2871, %v2885
    %v2888 = vmul.f32 %v2872, %v2886
    %v2890 = vlaneseq
    %v2891 = vshrl.u32 %v2890, 7
    %v2892 = vsub.s32 0, %v2891
    %v2893 = vrot.slane %v2860, %v2892
    %v2895 = vmul.f32 %v2887, %v2893
    %v2896 = vmul.f32 %v2888, %v2893
    %v2898 = vlaneseq
    %v2899 = vshrl.u32 %v2898, 7
    %v2900 = vsub.s32 0, %v2899
    %v2901 = vrot.slane %v2862, %v2900
    %v2903 = vadd.f32 %v2895, %v2901
    %v2904 = vadd.f32 %v2896, %v2901
    %v2905 = vld [vmem:[%s18] sm:$0x1]
    %v2906 = vld [vmem:[%s19] sm:$0x1]
    %v2907 = vsel %vm239, %v2903, 0.0
    %2908 = vadd.xlane.f32.xlu0 %v2907
    %v2909 = vpop.xlane.xlu0 %2908
    %v2910 = vsel %vm239, %v2904, 0.0
    %2911 = vadd.xlane.f32.xlu0 %v2910
    %v2912 = vpop.xlane.xlu0 %2911
    %v2913 = vmul.f32 %v2909, %v246
    %v2914 = vmul.f32 %v2912, %v246
    %v2915 = vsub.f32 %v2903, %v2913
    %v2916 = vsub.f32 %v2904, %v2914
    %v2917 = vmul.f32 %v2915, %v2915
    %v2918 = vmul.f32 %v2916, %v2916
    %v2919 = vsel %vm239, %v2917, 0.0
    %2920 = vadd.xlane.f32.xlu0 %v2919
    %v2921 = vpop.xlane.xlu0 %2920
    %v2922 = vsel %vm239, %v2918, 0.0
    %2923 = vadd.xlane.f32.xlu0 %v2922
    %v2924 = vpop.xlane.xlu0 %2923
    %v2925 = vmul.f32 %v2921, %v246
    %v2926 = vmul.f32 %v2924, %v246
    %v2927 = vadd.f32 %v2925, 1e-12
    %v2928 = vadd.f32 %v2926, 1e-12
    %v2929 = vrsqrt.pop %v2927
    %v2930 = vrsqrt.pop %v2928
    %v2931 = vmul.f32 %v2915, %v2929
    %v2932 = vmul.f32 %v2916, %v2930
    %v2934 = vlaneseq
    %v2935 = vshrl.u32 %v2934, 7
    %v2936 = vsub.s32 0, %v2935
    %v2937 = vrot.slane %v2905, %v2936
    %v2939 = vmul.f32 %v2931, %v2937
    %v2940 = vmul.f32 %v2932, %v2937
    %v2942 = vlaneseq
    %v2943 = vshrl.u32 %v2942, 7
    %v2944 = vsub.s32 0, %v2943
    %v2945 = vrot.slane %v2906, %v2944
    %v2947 = vadd.f32 %v2939, %v2945
    %v2948 = vadd.f32 %v2940, %v2945
    %2949 = vst.msk [vmem:[#allocation16] sm:$0xff] %vm239, %v2947
    %2950 = vst.msk [vmem:[#allocation16 + $0x8] sm:$0xff] %vm239, %v2948
    // Predicated region
    $region114: #{tpu_custom_call.1} parent=1 // pred_check
      _
    $region115: #{tpu_custom_call.1} parent=1 // pred_check_branch
      %2952 = sbr.rel (0) target = $region117
    $region116: #{tpu_custom_call.1} parent=1 // pred_region
      %s2954 = ssub.s32 256, 256
      %2955 = vsyncadd [#allocation4], %s2954
      %s2956 = sshll.u32 [#allocation16], 4
      %s2957 = int_to_ptr.vmem [resolvable:$true] %s2956
      %2962 = dma.vmem_to_hbm [thread:$0]  %s2957, 256, %s20, [#allocation4], 128, 128, 8
    $region117: #{tpu_custom_call.1} parent=1 // pred_fallthru
      _
    // Predicated region
    $region118: #{tpu_custom_call.1} parent=1 // pred_check
      _
    $region119: #{tpu_custom_call.1} parent=1 // pred_check_branch
      %2964 = sbr.rel (0) target = $region121
    $region120: #{tpu_custom_call.1} parent=1 // pred_region
      %2965 = dma.done [#allocation4], 256
    $region121: #{tpu_custom_call.1} parent=1 // pred_fallthru
      _
    %2966 = vsyncpa [#allocation3], 1
    %2967 = vsyncpa [#allocation6], 1
    %2968 = vsyncpa [#allocation9], 1
    %2969 = vsyncpa [#allocation12], 1
    %2970 = vsyncpa [#allocation15], 1
    %2971 = vsyncpa [#allocation4], 1

</llo_original>
